<compile_context>
chip_gen: v7x
topology: tpu7x:2x2x1
jax: 0.10.0
libtpu: 0.0.40
codegen_flags: <defaults>
</compile_context>

<pallas_src>
import functools

import jax
import jax.numpy as jnp
import numpy as np
from jax.experimental import pallas as pl
from jax.experimental.pallas import tpu as pltpu

EPS = 1e-5
# Set to jnp.bfloat16 to trade ~1e-2 relative accuracy for 2x MXU throughput;
# kept at f32 so the result matches the PyTorch float32 module to 1e-4.
MXU_DTYPE = jnp.float32
VMEM_LIMIT = 32 * 1024 * 1024  # safe on v5e/v6e/v7x at these block sizes


def _double_conv_kernel(x_ref, w1_ref, w2_ref, g1_ref, b1_ref, g2_ref, b2_ref,
                        o_ref, xp1_ref, xp2_ref, ybuf_ref,
                        *, N, H, W, Cin, Cout):
    # x_ref    : (N, H, W, Cin)        whole input batch (NHWC)
    # w1_ref   : (9*Cin, Cout)         im2col weights, K order (dy, dx, ci)
    # w2_ref   : (9*Cout, Cout)
    # g*/b*    : (1, Cout)             BatchNorm gamma / beta
    # o_ref    : (N, H, W, Cout)       final output
    # xp1_ref  : (H+2, W+2, Cin)       zero-padded activation scratch, conv1
    # xp2_ref  : (H+2, W+2, Cout)      zero-padded activation scratch, conv2
    # ybuf_ref : (N, H*W, Cout)        holds conv1 outputs, then reused for conv2
    HW = H * W
    inv_count = 1.0 / float(N * HW)

    def conv3x3(xp_ref, w_ref, C):
        # im2col: one MXU push with K = 9*C instead of nine K=C matmuls.
        patches = jnp.concatenate(
            [xp_ref[dy:dy + H, dx:dx + W, :].reshape(HW, C)
             for dy in range(3) for dx in range(3)],
            axis=-1)                                        # (HW, 9*C)
        return jnp.dot(patches, w_ref[...],
                       preferred_element_type=jnp.float32)  # (HW, Cout), f32 acc

    def fold_bn(s, sq, gamma, beta):
        # training-mode batch stats, biased variance, folded into scale/shift
        mean = s * inv_count
        var = jnp.maximum(sq * inv_count - mean * mean, 0.0)  # guard cancellation
        scale = gamma * jax.lax.rsqrt(var + EPS)
        shift = beta - mean * scale
        return scale, shift

    # ---------- stage 1: conv1 per image + BN1 batch statistics ----------
    xp1_ref[...] = jnp.zeros_like(xp1_ref)   # halo written once; interior overwritten
    s1 = jnp.zeros((1, Cout), jnp.float32)
    sq1 = jnp.zeros((1, Cout), jnp.float32)
    for n in range(N):                        # static unroll (small N)
        xp1_ref[1:H + 1, 1:W + 1, :] = x_ref[n].astype(xp1_ref.dtype)
        y = conv3x3(xp1_ref, w1_ref, Cin)
        ybuf_ref[n] = y
        s1 = s1 + jnp.sum(y, axis=0, keepdims=True)
        sq1 = sq1 + jnp.sum(y * y, axis=0, keepdims=True)
    scale1, shift1 = fold_bn(s1, sq1, g1_ref[...], b1_ref[...])

    # ---- stage 2: BN1-apply + ReLU fused into conv2 prologue + BN2 stats ----
    xp2_ref[...] = jnp.zeros_like(xp2_ref)
    s2 = jnp.zeros((1, Cout), jnp.float32)
    sq2 = jnp.zeros((1, Cout), jnp.float32)
    for n in range(N):
        a = jnp.maximum(ybuf_ref[n] * scale1 + shift1, 0.0)          # (HW, Cout)
        xp2_ref[1:H + 1, 1:W + 1, :] = a.reshape(H, W, Cout).astype(xp2_ref.dtype)
        y = conv3x3(xp2_ref, w2_ref, Cout)
        ybuf_ref[n] = y            # conv1 output for image n no longer needed
        s2 = s2 + jnp.sum(y, axis=0, keepdims=True)
        sq2 = sq2 + jnp.sum(y * y, axis=0, keepdims=True)
    scale2, shift2 = fold_bn(s2, sq2, g2_ref[...], b2_ref[...])

    # ---------------- stage 3: BN2-apply + ReLU, write output ----------------
    for n in range(N):
        z = jnp.maximum(ybuf_ref[n] * scale2 + shift2, 0.0)
        o_ref[n] = z.reshape(H, W, Cout).astype(o_ref.dtype)


def double_conv_fused_nhwc(x_nhwc, params):
    N, H, W, Cin = x_nhwc.shape
    Cout = params["w1"].shape[-1]
    w1 = params["w1"].reshape(9 * Cin, Cout).astype(MXU_DTYPE)    # K = (dy, dx, ci)
    w2 = params["w2"].reshape(9 * Cout, Cout).astype(MXU_DTYPE)
    g1 = params["g1"].reshape(1, Cout).astype(jnp.float32)
    b1 = params["b1"].reshape(1, Cout).astype(jnp.float32)
    g2 = params["g2"].reshape(1, Cout).astype(jnp.float32)
    b2 = params["b2"].reshape(1, Cout).astype(jnp.float32)

    kernel = functools.partial(_double_conv_kernel,
                               N=N, H=H, W=W, Cin=Cin, Cout=Cout)

    return pl.pallas_call(
        kernel,
        out_shape=jax.ShapeDtypeStruct((N, H, W, Cout), jnp.float32),
        grid_spec=pltpu.PrefetchScalarGridSpec(
            num_scalar_prefetch=0,
            grid=(1,),
            in_specs=[
                pl.BlockSpec((N, H, W, Cin), lambda i: (0, 0, 0, 0)),
                pl.BlockSpec((9 * Cin, Cout), lambda i: (0, 0)),
                pl.BlockSpec((9 * Cout, Cout), lambda i: (0, 0)),
                pl.BlockSpec((1, Cout), lambda i: (0, 0)),
                pl.BlockSpec((1, Cout), lambda i: (0, 0)),
                pl.BlockSpec((1, Cout), lambda i: (0, 0)),
                pl.BlockSpec((1, Cout), lambda i: (0, 0)),
            ],
            out_specs=pl.BlockSpec((N, H, W, Cout), lambda i: (0, 0, 0, 0)),
            scratch_shapes=[
                pltpu.VMEM((H + 2, W + 2, Cin), MXU_DTYPE),
                pltpu.VMEM((H + 2, W + 2, Cout), MXU_DTYPE),
                pltpu.VMEM((N, H * W, Cout), jnp.float32),
            ],
        ),
        compiler_params=pltpu.CompilerParams(
            dimension_semantics=("arbitrary",),
            vmem_limit_bytes=VMEM_LIMIT),
    )(x_nhwc.astype(MXU_DTYPE), w1, w2, g1, b1, g2, b2)


# ----------------------------------- module -----------------------------------
@jax.jit
def double_conv(x_nchw, params):
    x = jnp.transpose(x_nchw, (0, 2, 3, 1))                 # NCHW -> NHWC (tiny XLA op)
    out = double_conv_fused_nhwc(x, params)
    return jnp.transpose(out, (0, 3, 1, 2))                 # NHWC -> NCHW


# pure-JAX reference (same semantics) for correctness checking
def ref_double_conv(x_nchw, params):
    x = jnp.transpose(x_nchw, (0, 2, 3, 1))

    def conv(x, w):
        return jax.lax.conv_general_dilated(
            x, w, (1, 1), "SAME",
            dimension_numbers=("NHWC", "HWIO", "NHWC"))

    def bn_relu_ref(x, g, b):
        mean = jnp.mean(x, axis=(0, 1, 2))
        var = jnp.mean((x - mean) ** 2, axis=(0, 1, 2))
        y = (x - mean) * jax.lax.rsqrt(var + EPS) * g + b
        return jnp.maximum(y, 0.0)

    y = bn_relu_ref(conv(x, params["w1"]), params["g1"], params["b1"])
    y = bn_relu_ref(conv(y, params["w2"]), params["g2"], params["b2"])
    return jnp.transpose(y, (0, 3, 1, 2))


if __name__ == "__main__":
    in_channels, out_channels = 4, 8
    N, H, W = 2, 16, 16

    keys = jax.random.split(jax.random.PRNGKey(0), 7)
    params = {
        "w1": 0.1 * jax.random.normal(keys[0], (3, 3, in_channels, out_channels), jnp.float32),
        "g1": 1.0 + 0.1 * jax.random.normal(keys[1], (out_channels,), jnp.float32),
        "b1": 0.1 * jax.random.normal(keys[2], (out_channels,), jnp.float32),
        "w2": 0.1 * jax.random.normal(keys[3], (3, 3, out_channels, out_channels), jnp.float32),
        "g2": 1.0 + 0.1 * jax.random.normal(keys[4], (out_channels,), jnp.float32),
        "b2": 0.1 * jax.random.normal(keys[5], (out_channels,), jnp.float32),
    }
    x = jax.random.normal(keys[6], (N, in_channels, H, W), jnp.float32)

    y = jax.block_until_ready(double_conv(x, params))
    y_ref = jax.block_until_ready(ref_double_conv(x, params))

    assert y.shape == (N, out_channels, H, W)
    np.testing.assert_allclose(np.asarray(y), np.asarray(y_ref),
                               rtol=1e-4, atol=1e-4)
    print("KERNEL_OK")
</pallas_src>

<mosaic_0001>
module attributes {stable_mosaic.version = 11 : i64} {
  func.func @_double_conv_kernel(%arg0: i32, %arg1: memref<2x16x16x4xf32, #tpu.memory_space<vmem>>, %arg2: memref<36x8xf32, #tpu.memory_space<vmem>>, %arg3: memref<72x8xf32, #tpu.memory_space<vmem>>, %arg4: memref<1x8xf32, #tpu.memory_space<vmem>>, %arg5: memref<1x8xf32, #tpu.memory_space<vmem>>, %arg6: memref<1x8xf32, #tpu.memory_space<vmem>>, %arg7: memref<1x8xf32, #tpu.memory_space<vmem>>, %arg8: memref<2x16x16x8xf32, #tpu.memory_space<vmem>>, %arg9: memref<18x18x4xf32, #tpu.memory_space<vmem>>, %arg10: memref<18x18x8xf32, #tpu.memory_space<vmem>>, %arg11: memref<2x256x8xf32, #tpu.memory_space<vmem>>) attributes {dimension_semantics = [#tpu.dimension_semantics<arbitrary>], iteration_bounds = array<i64: 1>, scalar_prefetch = 0 : i64, scratch_operands = 3 : i64, tpu.core_type = #tpu.core_type<tc>, window_params = [{pipeline_mode = #tpu.pipeline_mode<synchronous>, transform_indices = @transform_0, window_bounds = array<i64: 2, 16, 16, 4>}, {pipeline_mode = #tpu.pipeline_mode<synchronous>, transform_indices = @transform_1, window_bounds = array<i64: 36, 8>}, {pipeline_mode = #tpu.pipeline_mode<synchronous>, transform_indices = @transform_2, window_bounds = array<i64: 72, 8>}, {pipeline_mode = #tpu.pipeline_mode<synchronous>, transform_indices = @transform_3, window_bounds = array<i64: 1, 8>}, {pipeline_mode = #tpu.pipeline_mode<synchronous>, transform_indices = @transform_4, window_bounds = array<i64: 1, 8>}, {pipeline_mode = #tpu.pipeline_mode<synchronous>, transform_indices = @transform_5, window_bounds = array<i64: 1, 8>}, {pipeline_mode = #tpu.pipeline_mode<synchronous>, transform_indices = @transform_6, window_bounds = array<i64: 1, 8>}, {pipeline_mode = #tpu.pipeline_mode<synchronous>, transform_indices = @transform_7, window_bounds = array<i64: 2, 16, 16, 8>}]} {
    %cst = arith.constant 0.000000e+00 : f32
    %0 = vector.broadcast %cst : f32 to vector<18x18x4xf32>
    %c0 = arith.constant 0 : index
    %c0_0 = arith.constant 0 : index
    %c0_1 = arith.constant 0 : index
    %1 = vector.load %arg9[%c0, %c0_0, %c0_1] : memref<18x18x4xf32, #tpu.memory_space<vmem>>, vector<18x18x4xf32>
    tpu.vector_store %arg9[%c0, %c0_0, %c0_1], %0 {strides = array<i32>} : memref<18x18x4xf32, #tpu.memory_space<vmem>>, vector<18x18x4xf32>,
    %cst_2 = arith.constant 0.000000e+00 : f32
    %2 = vector.broadcast %cst_2 : f32 to vector<1x8xf32>
    %cst_3 = arith.constant 0.000000e+00 : f32
    %3 = vector.broadcast %cst_3 : f32 to vector<1x8xf32>
    %c0_4 = arith.constant 0 : index
    %c0_5 = arith.constant 0 : index
    %c0_6 = arith.constant 0 : index
    %c0_7 = arith.constant 0 : index
    %4 = vector.load %arg1[%c0_4, %c0_5, %c0_6, %c0_7] : memref<2x16x16x4xf32, #tpu.memory_space<vmem>>, vector<1x16x16x4xf32>
    %5 = vector.shape_cast %4 : vector<1x16x16x4xf32> to vector<16x16x4xf32>
    %c1 = arith.constant 1 : index
    %c1_8 = arith.constant 1 : index
    %c0_9 = arith.constant 0 : index
    %6 = vector.load %arg9[%c1, %c1_8, %c0_9] : memref<18x18x4xf32, #tpu.memory_space<vmem>>, vector<16x16x4xf32>
    tpu.vector_store %arg9[%c1, %c1_8, %c0_9], %5 {strides = array<i32>} : memref<18x18x4xf32, #tpu.memory_space<vmem>>, vector<16x16x4xf32>,
    %c0_10 = arith.constant 0 : index
    %c0_11 = arith.constant 0 : index
    %c0_12 = arith.constant 0 : index
    %7 = vector.load %arg9[%c0_10, %c0_11, %c0_12] : memref<18x18x4xf32, #tpu.memory_space<vmem>>, vector<16x16x4xf32>
    %8 = vector.shape_cast %7 : vector<16x16x4xf32> to vector<256x4xf32>
    %c0_13 = arith.constant 0 : index
    %c1_14 = arith.constant 1 : index
    %c0_15 = arith.constant 0 : index
    %9 = vector.load %arg9[%c0_13, %c1_14, %c0_15] : memref<18x18x4xf32, #tpu.memory_space<vmem>>, vector<16x16x4xf32>
    %10 = vector.shape_cast %9 : vector<16x16x4xf32> to vector<256x4xf32>
    %c0_16 = arith.constant 0 : index
    %c2 = arith.constant 2 : index
    %c0_17 = arith.constant 0 : index
    %11 = vector.load %arg9[%c0_16, %c2, %c0_17] : memref<18x18x4xf32, #tpu.memory_space<vmem>>, vector<16x16x4xf32>
    %12 = vector.shape_cast %11 : vector<16x16x4xf32> to vector<256x4xf32>
    %c1_18 = arith.constant 1 : index
    %c0_19 = arith.constant 0 : index
    %c0_20 = arith.constant 0 : index
    %13 = vector.load %arg9[%c1_18, %c0_19, %c0_20] : memref<18x18x4xf32, #tpu.memory_space<vmem>>, vector<16x16x4xf32>
    %14 = vector.shape_cast %13 : vector<16x16x4xf32> to vector<256x4xf32>
    %c1_21 = arith.constant 1 : index
    %c1_22 = arith.constant 1 : index
    %c0_23 = arith.constant 0 : index
    %15 = vector.load %arg9[%c1_21, %c1_22, %c0_23] : memref<18x18x4xf32, #tpu.memory_space<vmem>>, vector<16x16x4xf32>
    %16 = vector.shape_cast %15 : vector<16x16x4xf32> to vector<256x4xf32>
    %c1_24 = arith.constant 1 : index
    %c2_25 = arith.constant 2 : index
    %c0_26 = arith.constant 0 : index
    %17 = vector.load %arg9[%c1_24, %c2_25, %c0_26] : memref<18x18x4xf32, #tpu.memory_space<vmem>>, vector<16x16x4xf32>
    %18 = vector.shape_cast %17 : vector<16x16x4xf32> to vector<256x4xf32>
    %c2_27 = arith.constant 2 : index
    %c0_28 = arith.constant 0 : index
    %c0_29 = arith.constant 0 : index
    %19 = vector.load %arg9[%c2_27, %c0_28, %c0_29] : memref<18x18x4xf32, #tpu.memory_space<vmem>>, vector<16x16x4xf32>
    %20 = vector.shape_cast %19 : vector<16x16x4xf32> to vector<256x4xf32>
    %c2_30 = arith.constant 2 : index
    %c1_31 = arith.constant 1 : index
    %c0_32 = arith.constant 0 : index
    %21 = vector.load %arg9[%c2_30, %c1_31, %c0_32] : memref<18x18x4xf32, #tpu.memory_space<vmem>>, vector<16x16x4xf32>
    %22 = vector.shape_cast %21 : vector<16x16x4xf32> to vector<256x4xf32>
    %c2_33 = arith.constant 2 : index
    %c2_34 = arith.constant 2 : index
    %c0_35 = arith.constant 0 : index
    %23 = vector.load %arg9[%c2_33, %c2_34, %c0_35] : memref<18x18x4xf32, #tpu.memory_space<vmem>>, vector<16x16x4xf32>
    %24 = vector.shape_cast %23 : vector<16x16x4xf32> to vector<256x4xf32>
    %25 = tpu.concatenate %8, %10, %12, %14, %16, %18, %20, %22, %24 in 1 : vector<256x4xf32>, vector<256x4xf32>, vector<256x4xf32>, vector<256x4xf32>, vector<256x4xf32>, vector<256x4xf32>, vector<256x4xf32>, vector<256x4xf32>, vector<256x4xf32> -> vector<256x36xf32>
    %c0_36 = arith.constant 0 : index
    %c0_37 = arith.constant 0 : index
    %26 = vector.load %arg2[%c0_36, %c0_37] : memref<36x8xf32, #tpu.memory_space<vmem>>, vector<36x8xf32>
    %cst_38 = arith.constant dense<0.000000e+00> : vector<256x8xf32>
    %27 = tpu.matmul %25, %26, %cst_38 {dimension_numbers = #tpu.dot_dimension_numbers<[1], [0], [0], [1], [0, 0, 1, 1], [], []>} : vector<256x36xf32>, vector<36x8xf32>, vector<256x8xf32> -> vector<256x8xf32>
    %c0_39 = arith.constant 0 : index
    %c0_40 = arith.constant 0 : index
    %c0_41 = arith.constant 0 : index
    %28 = vector.load %arg11[%c0_39, %c0_40, %c0_41] : memref<2x256x8xf32, #tpu.memory_space<vmem>>, vector<1x256x8xf32>
    %29 = vector.shape_cast %28 : vector<1x256x8xf32> to vector<256x8xf32>
    %30 = vector.shape_cast %27 : vector<256x8xf32> to vector<1x256x8xf32>
    tpu.vector_store %arg11[%c0_39, %c0_40, %c0_41], %30 {strides = array<i32>} : memref<2x256x8xf32, #tpu.memory_space<vmem>>, vector<1x256x8xf32>,
    %cst_42 = arith.constant dense<0.000000e+00> : vector<8xf32>
    %31 = vector.multi_reduction <add>, %27, %cst_42 [0] : vector<256x8xf32> to vector<8xf32>
    %32 = vector.shape_cast %31 : vector<8xf32> to vector<1x8xf32>
    %33 = arith.addf %2, %32 : vector<1x8xf32>
    %34 = arith.mulf %27, %27 : vector<256x8xf32>
    %cst_43 = arith.constant dense<0.000000e+00> : vector<8xf32>
    %35 = vector.multi_reduction <add>, %34, %cst_43 [0] : vector<256x8xf32> to vector<8xf32>
    %36 = vector.shape_cast %35 : vector<8xf32> to vector<1x8xf32>
    %37 = arith.addf %3, %36 : vector<1x8xf32>
    %c1_44 = arith.constant 1 : index
    %c0_45 = arith.constant 0 : index
    %c0_46 = arith.constant 0 : index
    %c0_47 = arith.constant 0 : index
    %38 = vector.load %arg1[%c1_44, %c0_45, %c0_46, %c0_47] : memref<2x16x16x4xf32, #tpu.memory_space<vmem>>, vector<1x16x16x4xf32>
    %39 = vector.shape_cast %38 : vector<1x16x16x4xf32> to vector<16x16x4xf32>
    %c1_48 = arith.constant 1 : index
    %c1_49 = arith.constant 1 : index
    %c0_50 = arith.constant 0 : index
    %40 = vector.load %arg9[%c1_48, %c1_49, %c0_50] : memref<18x18x4xf32, #tpu.memory_space<vmem>>, vector<16x16x4xf32>
    tpu.vector_store %arg9[%c1_48, %c1_49, %c0_50], %39 {strides = array<i32>} : memref<18x18x4xf32, #tpu.memory_space<vmem>>, vector<16x16x4xf32>,
    %c0_51 = arith.constant 0 : index
    %c0_52 = arith.constant 0 : index
    %c0_53 = arith.constant 0 : index
    %41 = vector.load %arg9[%c0_51, %c0_52, %c0_53] : memref<18x18x4xf32, #tpu.memory_space<vmem>>, vector<16x16x4xf32>
    %42 = vector.shape_cast %41 : vector<16x16x4xf32> to vector<256x4xf32>
    %c0_54 = arith.constant 0 : index
    %c1_55 = arith.constant 1 : index
    %c0_56 = arith.constant 0 : index
    %43 = vector.load %arg9[%c0_54, %c1_55, %c0_56] : memref<18x18x4xf32, #tpu.memory_space<vmem>>, vector<16x16x4xf32>
    %44 = vector.shape_cast %43 : vector<16x16x4xf32> to vector<256x4xf32>
    %c0_57 = arith.constant 0 : index
    %c2_58 = arith.constant 2 : index
    %c0_59 = arith.constant 0 : index
    %45 = vector.load %arg9[%c0_57, %c2_58, %c0_59] : memref<18x18x4xf32, #tpu.memory_space<vmem>>, vector<16x16x4xf32>
    %46 = vector.shape_cast %45 : vector<16x16x4xf32> to vector<256x4xf32>
    %c1_60 = arith.constant 1 : index
    %c0_61 = arith.constant 0 : index
    %c0_62 = arith.constant 0 : index
    %47 = vector.load %arg9[%c1_60, %c0_61, %c0_62] : memref<18x18x4xf32, #tpu.memory_space<vmem>>, vector<16x16x4xf32>
    %48 = vector.shape_cast %47 : vector<16x16x4xf32> to vector<256x4xf32>
    %c1_63 = arith.constant 1 : index
    %c1_64 = arith.constant 1 : index
    %c0_65 = arith.constant 0 : index
    %49 = vector.load %arg9[%c1_63, %c1_64, %c0_65] : memref<18x18x4xf32, #tpu.memory_space<vmem>>, vector<16x16x4xf32>
    %50 = vector.shape_cast %49 : vector<16x16x4xf32> to vector<256x4xf32>
    %c1_66 = arith.constant 1 : index
    %c2_67 = arith.constant 2 : index
    %c0_68 = arith.constant 0 : index
    %51 = vector.load %arg9[%c1_66, %c2_67, %c0_68] : memref<18x18x4xf32, #tpu.memory_space<vmem>>, vector<16x16x4xf32>
    %52 = vector.shape_cast %51 : vector<16x16x4xf32> to vector<256x4xf32>
    %c2_69 = arith.constant 2 : index
    %c0_70 = arith.constant 0 : index
    %c0_71 = arith.constant 0 : index
    %53 = vector.load %arg9[%c2_69, %c0_70, %c0_71] : memref<18x18x4xf32, #tpu.memory_space<vmem>>, vector<16x16x4xf32>
    %54 = vector.shape_cast %53 : vector<16x16x4xf32> to vector<256x4xf32>
    %c2_72 = arith.constant 2 : index
    %c1_73 = arith.constant 1 : index
    %c0_74 = arith.constant 0 : index
    %55 = vector.load %arg9[%c2_72, %c1_73, %c0_74] : memref<18x18x4xf32, #tpu.memory_space<vmem>>, vector<16x16x4xf32>
    %56 = vector.shape_cast %55 : vector<16x16x4xf32> to vector<256x4xf32>
    %c2_75 = arith.constant 2 : index
    %c2_76 = arith.constant 2 : index
    %c0_77 = arith.constant 0 : index
    %57 = vector.load %arg9[%c2_75, %c2_76, %c0_77] : memref<18x18x4xf32, #tpu.memory_space<vmem>>, vector<16x16x4xf32>
    %58 = vector.shape_cast %57 : vector<16x16x4xf32> to vector<256x4xf32>
    %59 = tpu.concatenate %42, %44, %46, %48, %50, %52, %54, %56, %58 in 1 : vector<256x4xf32>, vector<256x4xf32>, vector<256x4xf32>, vector<256x4xf32>, vector<256x4xf32>, vector<256x4xf32>, vector<256x4xf32>, vector<256x4xf32>, vector<256x4xf32> -> vector<256x36xf32>
    %c0_78 = arith.constant 0 : index
    %c0_79 = arith.constant 0 : index
    %60 = vector.load %arg2[%c0_78, %c0_79] : memref<36x8xf32, #tpu.memory_space<vmem>>, vector<36x8xf32>
    %cst_80 = arith.constant dense<0.000000e+00> : vector<256x8xf32>
    %61 = tpu.matmul %59, %60, %cst_80 {dimension_numbers = #tpu.dot_dimension_numbers<[1], [0], [0], [1], [0, 0, 1, 1], [], []>} : vector<256x36xf32>, vector<36x8xf32>, vector<256x8xf32> -> vector<256x8xf32>
    %c1_81 = arith.constant 1 : index
    %c0_82 = arith.constant 0 : index
    %c0_83 = arith.constant 0 : index
    %62 = vector.load %arg11[%c1_81, %c0_82, %c0_83] : memref<2x256x8xf32, #tpu.memory_space<vmem>>, vector<1x256x8xf32>
    %63 = vector.shape_cast %62 : vector<1x256x8xf32> to vector<256x8xf32>
    %64 = vector.shape_cast %61 : vector<256x8xf32> to vector<1x256x8xf32>
    tpu.vector_store %arg11[%c1_81, %c0_82, %c0_83], %64 {strides = array<i32>} : memref<2x256x8xf32, #tpu.memory_space<vmem>>, vector<1x256x8xf32>,
    %cst_84 = arith.constant dense<0.000000e+00> : vector<8xf32>
    %65 = vector.multi_reduction <add>, %61, %cst_84 [0] : vector<256x8xf32> to vector<8xf32>
    %66 = vector.shape_cast %65 : vector<8xf32> to vector<1x8xf32>
    %67 = arith.addf %33, %66 : vector<1x8xf32>
    %68 = arith.mulf %61, %61 : vector<256x8xf32>
    %cst_85 = arith.constant dense<0.000000e+00> : vector<8xf32>
    %69 = vector.multi_reduction <add>, %68, %cst_85 [0] : vector<256x8xf32> to vector<8xf32>
    %70 = vector.shape_cast %69 : vector<8xf32> to vector<1x8xf32>
    %71 = arith.addf %37, %70 : vector<1x8xf32>
    %c0_86 = arith.constant 0 : index
    %c0_87 = arith.constant 0 : index
    %72 = vector.load %arg4[%c0_86, %c0_87] : memref<1x8xf32, #tpu.memory_space<vmem>>, vector<1x8xf32>
    %c0_88 = arith.constant 0 : index
    %c0_89 = arith.constant 0 : index
    %73 = vector.load %arg5[%c0_88, %c0_89] : memref<1x8xf32, #tpu.memory_space<vmem>>, vector<1x8xf32>
    %cst_90 = arith.constant 0.001953125 : f32
    %74 = vector.broadcast %cst_90 : f32 to vector<1x8xf32>
    %75 = arith.mulf %67, %74 : vector<1x8xf32>
    %cst_91 = arith.constant 0.001953125 : f32
    %76 = vector.broadcast %cst_91 : f32 to vector<1x8xf32>
    %77 = arith.mulf %71, %76 : vector<1x8xf32>
    %78 = arith.mulf %75, %75 : vector<1x8xf32>
    %79 = arith.subf %77, %78 : vector<1x8xf32>
    %cst_92 = arith.constant 0.000000e+00 : f32
    %80 = vector.broadcast %cst_92 : f32 to vector<1x8xf32>
    %81 = arith.maximumf %79, %80 : vector<1x8xf32>
    %cst_93 = arith.constant 9.99999974E-6 : f32
    %82 = vector.broadcast %cst_93 : f32 to vector<1x8xf32>
    %83 = arith.addf %81, %82 : vector<1x8xf32>
    %84 = math.rsqrt %83 : vector<1x8xf32>
    %85 = arith.mulf %72, %84 : vector<1x8xf32>
    %86 = arith.mulf %75, %85 : vector<1x8xf32>
    %87 = arith.subf %73, %86 : vector<1x8xf32>
    %cst_94 = arith.constant 0.000000e+00 : f32
    %88 = vector.broadcast %cst_94 : f32 to vector<18x18x8xf32>
    %c0_95 = arith.constant 0 : index
    %c0_96 = arith.constant 0 : index
    %c0_97 = arith.constant 0 : index
    %89 = vector.load %arg10[%c0_95, %c0_96, %c0_97] : memref<18x18x8xf32, #tpu.memory_space<vmem>>, vector<18x18x8xf32>
    tpu.vector_store %arg10[%c0_95, %c0_96, %c0_97], %88 {strides = array<i32>} : memref<18x18x8xf32, #tpu.memory_space<vmem>>, vector<18x18x8xf32>,
    %cst_98 = arith.constant 0.000000e+00 : f32
    %90 = vector.broadcast %cst_98 : f32 to vector<1x8xf32>
    %cst_99 = arith.constant 0.000000e+00 : f32
    %91 = vector.broadcast %cst_99 : f32 to vector<1x8xf32>
    %c0_100 = arith.constant 0 : index
    %c0_101 = arith.constant 0 : index
    %c0_102 = arith.constant 0 : index
    %92 = vector.load %arg11[%c0_100, %c0_101, %c0_102] : memref<2x256x8xf32, #tpu.memory_space<vmem>>, vector<1x256x8xf32>
    %93 = vector.shape_cast %92 : vector<1x256x8xf32> to vector<256x8xf32>
    %94 = vector.broadcast %85 : vector<1x8xf32> to vector<256x8xf32>
    %95 = arith.mulf %93, %94 : vector<256x8xf32>
    %96 = vector.broadcast %87 : vector<1x8xf32> to vector<256x8xf32>
    %97 = arith.addf %95, %96 : vector<256x8xf32>
    %cst_103 = arith.constant 0.000000e+00 : f32
    %98 = vector.broadcast %cst_103 : f32 to vector<256x8xf32>
    %99 = arith.maximumf %97, %98 : vector<256x8xf32>
    %100 = vector.shape_cast %99 : vector<256x8xf32> to vector<16x16x8xf32>
    %c1_104 = arith.constant 1 : index
    %c1_105 = arith.constant 1 : index
    %c0_106 = arith.constant 0 : index
    %101 = vector.load %arg10[%c1_104, %c1_105, %c0_106] : memref<18x18x8xf32, #tpu.memory_space<vmem>>, vector<16x16x8xf32>
    tpu.vector_store %arg10[%c1_104, %c1_105, %c0_106], %100 {strides = array<i32>} : memref<18x18x8xf32, #tpu.memory_space<vmem>>, vector<16x16x8xf32>,
    %c0_107 = arith.constant 0 : index
    %c0_108 = arith.constant 0 : index
    %c0_109 = arith.constant 0 : index
    %102 = vector.load %arg10[%c0_107, %c0_108, %c0_109] : memref<18x18x8xf32, #tpu.memory_space<vmem>>, vector<16x16x8xf32>
    %103 = vector.shape_cast %102 : vector<16x16x8xf32> to vector<256x8xf32>
    %c0_110 = arith.constant 0 : index
    %c1_111 = arith.constant 1 : index
    %c0_112 = arith.constant 0 : index
    %104 = vector.load %arg10[%c0_110, %c1_111, %c0_112] : memref<18x18x8xf32, #tpu.memory_space<vmem>>, vector<16x16x8xf32>
    %105 = vector.shape_cast %104 : vector<16x16x8xf32> to vector<256x8xf32>
    %c0_113 = arith.constant 0 : index
    %c2_114 = arith.constant 2 : index
    %c0_115 = arith.constant 0 : index
    %106 = vector.load %arg10[%c0_113, %c2_114, %c0_115] : memref<18x18x8xf32, #tpu.memory_space<vmem>>, vector<16x16x8xf32>
    %107 = vector.shape_cast %106 : vector<16x16x8xf32> to vector<256x8xf32>
    %c1_116 = arith.constant 1 : index
    %c0_117 = arith.constant 0 : index
    %c0_118 = arith.constant 0 : index
    %108 = vector.load %arg10[%c1_116, %c0_117, %c0_118] : memref<18x18x8xf32, #tpu.memory_space<vmem>>, vector<16x16x8xf32>
    %109 = vector.shape_cast %108 : vector<16x16x8xf32> to vector<256x8xf32>
    %c1_119 = arith.constant 1 : index
    %c1_120 = arith.constant 1 : index
    %c0_121 = arith.constant 0 : index
    %110 = vector.load %arg10[%c1_119, %c1_120, %c0_121] : memref<18x18x8xf32, #tpu.memory_space<vmem>>, vector<16x16x8xf32>
    %111 = vector.shape_cast %110 : vector<16x16x8xf32> to vector<256x8xf32>
    %c1_122 = arith.constant 1 : index
    %c2_123 = arith.constant 2 : index
    %c0_124 = arith.constant 0 : index
    %112 = vector.load %arg10[%c1_122, %c2_123, %c0_124] : memref<18x18x8xf32, #tpu.memory_space<vmem>>, vector<16x16x8xf32>
    %113 = vector.shape_cast %112 : vector<16x16x8xf32> to vector<256x8xf32>
    %c2_125 = arith.constant 2 : index
    %c0_126 = arith.constant 0 : index
    %c0_127 = arith.constant 0 : index
    %114 = vector.load %arg10[%c2_125, %c0_126, %c0_127] : memref<18x18x8xf32, #tpu.memory_space<vmem>>, vector<16x16x8xf32>
    %115 = vector.shape_cast %114 : vector<16x16x8xf32> to vector<256x8xf32>
    %c2_128 = arith.constant 2 : index
    %c1_129 = arith.constant 1 : index
    %c0_130 = arith.constant 0 : index
    %116 = vector.load %arg10[%c2_128, %c1_129, %c0_130] : memref<18x18x8xf32, #tpu.memory_space<vmem>>, vector<16x16x8xf32>
    %117 = vector.shape_cast %116 : vector<16x16x8xf32> to vector<256x8xf32>
    %c2_131 = arith.constant 2 : index
    %c2_132 = arith.constant 2 : index
    %c0_133 = arith.constant 0 : index
    %118 = vector.load %arg10[%c2_131, %c2_132, %c0_133] : memref<18x18x8xf32, #tpu.memory_space<vmem>>, vector<16x16x8xf32>
    %119 = vector.shape_cast %118 : vector<16x16x8xf32> to vector<256x8xf32>
    %120 = tpu.concatenate %103, %105, %107, %109, %111, %113, %115, %117, %119 in 1 : vector<256x8xf32>, vector<256x8xf32>, vector<256x8xf32>, vector<256x8xf32>, vector<256x8xf32>, vector<256x8xf32>, vector<256x8xf32>, vector<256x8xf32>, vector<256x8xf32> -> vector<256x72xf32>
    %c0_134 = arith.constant 0 : index
    %c0_135 = arith.constant 0 : index
    %121 = vector.load %arg3[%c0_134, %c0_135] : memref<72x8xf32, #tpu.memory_space<vmem>>, vector<72x8xf32>
    %cst_136 = arith.constant dense<0.000000e+00> : vector<256x8xf32>
    %122 = tpu.matmul %120, %121, %cst_136 {dimension_numbers = #tpu.dot_dimension_numbers<[1], [0], [0], [1], [0, 0, 1, 1], [], []>} : vector<256x72xf32>, vector<72x8xf32>, vector<256x8xf32> -> vector<256x8xf32>
    %c0_137 = arith.constant 0 : index
    %c0_138 = arith.constant 0 : index
    %c0_139 = arith.constant 0 : index
    %123 = vector.load %arg11[%c0_137, %c0_138, %c0_139] : memref<2x256x8xf32, #tpu.memory_space<vmem>>, vector<1x256x8xf32>
    %124 = vector.shape_cast %123 : vector<1x256x8xf32> to vector<256x8xf32>
    %125 = vector.shape_cast %122 : vector<256x8xf32> to vector<1x256x8xf32>
    tpu.vector_store %arg11[%c0_137, %c0_138, %c0_139], %125 {strides = array<i32>} : memref<2x256x8xf32, #tpu.memory_space<vmem>>, vector<1x256x8xf32>,
    %cst_140 = arith.constant dense<0.000000e+00> : vector<8xf32>
    %126 = vector.multi_reduction <add>, %122, %cst_140 [0] : vector<256x8xf32> to vector<8xf32>
    %127 = vector.shape_cast %126 : vector<8xf32> to vector<1x8xf32>
    %128 = arith.addf %90, %127 : vector<1x8xf32>
    %129 = arith.mulf %122, %122 : vector<256x8xf32>
    %cst_141 = arith.constant dense<0.000000e+00> : vector<8xf32>
    %130 = vector.multi_reduction <add>, %129, %cst_141 [0] : vector<256x8xf32> to vector<8xf32>
    %131 = vector.shape_cast %130 : vector<8xf32> to vector<1x8xf32>
    %132 = arith.addf %91, %131 : vector<1x8xf32>
    %c1_142 = arith.constant 1 : index
    %c0_143 = arith.constant 0 : index
    %c0_144 = arith.constant 0 : index
    %133 = vector.load %arg11[%c1_142, %c0_143, %c0_144] : memref<2x256x8xf32, #tpu.memory_space<vmem>>, vector<1x256x8xf32>
    %134 = vector.shape_cast %133 : vector<1x256x8xf32> to vector<256x8xf32>
    %135 = vector.broadcast %85 : vector<1x8xf32> to vector<256x8xf32>
    %136 = arith.mulf %134, %135 : vector<256x8xf32>
    %137 = vector.broadcast %87 : vector<1x8xf32> to vector<256x8xf32>
    %138 = arith.addf %136, %137 : vector<256x8xf32>
    %cst_145 = arith.constant 0.000000e+00 : f32
    %139 = vector.broadcast %cst_145 : f32 to vector<256x8xf32>
    %140 = arith.maximumf %138, %139 : vector<256x8xf32>
    %141 = vector.shape_cast %140 : vector<256x8xf32> to vector<16x16x8xf32>
    %c1_146 = arith.constant 1 : index
    %c1_147 = arith.constant 1 : index
    %c0_148 = arith.constant 0 : index
    %142 = vector.load %arg10[%c1_146, %c1_147, %c0_148] : memref<18x18x8xf32, #tpu.memory_space<vmem>>, vector<16x16x8xf32>
    tpu.vector_store %arg10[%c1_146, %c1_147, %c0_148], %141 {strides = array<i32>} : memref<18x18x8xf32, #tpu.memory_space<vmem>>, vector<16x16x8xf32>,
    %c0_149 = arith.constant 0 : index
    %c0_150 = arith.constant 0 : index
    %c0_151 = arith.constant 0 : index
    %143 = vector.load %arg10[%c0_149, %c0_150, %c0_151] : memref<18x18x8xf32, #tpu.memory_space<vmem>>, vector<16x16x8xf32>
    %144 = vector.shape_cast %143 : vector<16x16x8xf32> to vector<256x8xf32>
    %c0_152 = arith.constant 0 : index
    %c1_153 = arith.constant 1 : index
    %c0_154 = arith.constant 0 : index
    %145 = vector.load %arg10[%c0_152, %c1_153, %c0_154] : memref<18x18x8xf32, #tpu.memory_space<vmem>>, vector<16x16x8xf32>
    %146 = vector.shape_cast %145 : vector<16x16x8xf32> to vector<256x8xf32>
    %c0_155 = arith.constant 0 : index
    %c2_156 = arith.constant 2 : index
    %c0_157 = arith.constant 0 : index
    %147 = vector.load %arg10[%c0_155, %c2_156, %c0_157] : memref<18x18x8xf32, #tpu.memory_space<vmem>>, vector<16x16x8xf32>
    %148 = vector.shape_cast %147 : vector<16x16x8xf32> to vector<256x8xf32>
    %c1_158 = arith.constant 1 : index
    %c0_159 = arith.constant 0 : index
    %c0_160 = arith.constant 0 : index
    %149 = vector.load %arg10[%c1_158, %c0_159, %c0_160] : memref<18x18x8xf32, #tpu.memory_space<vmem>>, vector<16x16x8xf32>
    %150 = vector.shape_cast %149 : vector<16x16x8xf32> to vector<256x8xf32>
    %c1_161 = arith.constant 1 : index
    %c1_162 = arith.constant 1 : index
    %c0_163 = arith.constant 0 : index
    %151 = vector.load %arg10[%c1_161, %c1_162, %c0_163] : memref<18x18x8xf32, #tpu.memory_space<vmem>>, vector<16x16x8xf32>
    %152 = vector.shape_cast %151 : vector<16x16x8xf32> to vector<256x8xf32>
    %c1_164 = arith.constant 1 : index
    %c2_165 = arith.constant 2 : index
    %c0_166 = arith.constant 0 : index
    %153 = vector.load %arg10[%c1_164, %c2_165, %c0_166] : memref<18x18x8xf32, #tpu.memory_space<vmem>>, vector<16x16x8xf32>
    %154 = vector.shape_cast %153 : vector<16x16x8xf32> to vector<256x8xf32>
    %c2_167 = arith.constant 2 : index
    %c0_168 = arith.constant 0 : index
    %c0_169 = arith.constant 0 : index
    %155 = vector.load %arg10[%c2_167, %c0_168, %c0_169] : memref<18x18x8xf32, #tpu.memory_space<vmem>>, vector<16x16x8xf32>
    %156 = vector.shape_cast %155 : vector<16x16x8xf32> to vector<256x8xf32>
    %c2_170 = arith.constant 2 : index
    %c1_171 = arith.constant 1 : index
    %c0_172 = arith.constant 0 : index
    %157 = vector.load %arg10[%c2_170, %c1_171, %c0_172] : memref<18x18x8xf32, #tpu.memory_space<vmem>>, vector<16x16x8xf32>
    %158 = vector.shape_cast %157 : vector<16x16x8xf32> to vector<256x8xf32>
    %c2_173 = arith.constant 2 : index
    %c2_174 = arith.constant 2 : index
    %c0_175 = arith.constant 0 : index
    %159 = vector.load %arg10[%c2_173, %c2_174, %c0_175] : memref<18x18x8xf32, #tpu.memory_space<vmem>>, vector<16x16x8xf32>
    %160 = vector.shape_cast %159 : vector<16x16x8xf32> to vector<256x8xf32>
    %161 = tpu.concatenate %144, %146, %148, %150, %152, %154, %156, %158, %160 in 1 : vector<256x8xf32>, vector<256x8xf32>, vector<256x8xf32>, vector<256x8xf32>, vector<256x8xf32>, vector<256x8xf32>, vector<256x8xf32>, vector<256x8xf32>, vector<256x8xf32> -> vector<256x72xf32>
    %c0_176 = arith.constant 0 : index
    %c0_177 = arith.constant 0 : index
    %162 = vector.load %arg3[%c0_176, %c0_177] : memref<72x8xf32, #tpu.memory_space<vmem>>, vector<72x8xf32>
    %cst_178 = arith.constant dense<0.000000e+00> : vector<256x8xf32>
    %163 = tpu.matmul %161, %162, %cst_178 {dimension_numbers = #tpu.dot_dimension_numbers<[1], [0], [0], [1], [0, 0, 1, 1], [], []>} : vector<256x72xf32>, vector<72x8xf32>, vector<256x8xf32> -> vector<256x8xf32>
    %c1_179 = arith.constant 1 : index
    %c0_180 = arith.constant 0 : index
    %c0_181 = arith.constant 0 : index
    %164 = vector.load %arg11[%c1_179, %c0_180, %c0_181] : memref<2x256x8xf32, #tpu.memory_space<vmem>>, vector<1x256x8xf32>
    %165 = vector.shape_cast %164 : vector<1x256x8xf32> to vector<256x8xf32>
    %166 = vector.shape_cast %163 : vector<256x8xf32> to vector<1x256x8xf32>
    tpu.vector_store %arg11[%c1_179, %c0_180, %c0_181], %166 {strides = array<i32>} : memref<2x256x8xf32, #tpu.memory_space<vmem>>, vector<1x256x8xf32>,
    %cst_182 = arith.constant dense<0.000000e+00> : vector<8xf32>
    %167 = vector.multi_reduction <add>, %163, %cst_182 [0] : vector<256x8xf32> to vector<8xf32>
    %168 = vector.shape_cast %167 : vector<8xf32> to vector<1x8xf32>
    %169 = arith.addf %128, %168 : vector<1x8xf32>
    %170 = arith.mulf %163, %163 : vector<256x8xf32>
    %cst_183 = arith.constant dense<0.000000e+00> : vector<8xf32>
    %171 = vector.multi_reduction <add>, %170, %cst_183 [0] : vector<256x8xf32> to vector<8xf32>
    %172 = vector.shape_cast %171 : vector<8xf32> to vector<1x8xf32>
    %173 = arith.addf %132, %172 : vector<1x8xf32>
    %c0_184 = arith.constant 0 : index
    %c0_185 = arith.constant 0 : index
    %174 = vector.load %arg6[%c0_184, %c0_185] : memref<1x8xf32, #tpu.memory_space<vmem>>, vector<1x8xf32>
    %c0_186 = arith.constant 0 : index
    %c0_187 = arith.constant 0 : index
    %175 = vector.load %arg7[%c0_186, %c0_187] : memref<1x8xf32, #tpu.memory_space<vmem>>, vector<1x8xf32>
    %cst_188 = arith.constant 0.001953125 : f32
    %176 = vector.broadcast %cst_188 : f32 to vector<1x8xf32>
    %177 = arith.mulf %169, %176 : vector<1x8xf32>
    %cst_189 = arith.constant 0.001953125 : f32
    %178 = vector.broadcast %cst_189 : f32 to vector<1x8xf32>
    %179 = arith.mulf %173, %178 : vector<1x8xf32>
    %180 = arith.mulf %177, %177 : vector<1x8xf32>
    %181 = arith.subf %179, %180 : vector<1x8xf32>
    %cst_190 = arith.constant 0.000000e+00 : f32
    %182 = vector.broadcast %cst_190 : f32 to vector<1x8xf32>
    %183 = arith.maximumf %181, %182 : vector<1x8xf32>
    %cst_191 = arith.constant 9.99999974E-6 : f32
    %184 = vector.broadcast %cst_191 : f32 to vector<1x8xf32>
    %185 = arith.addf %183, %184 : vector<1x8xf32>
    %186 = math.rsqrt %185 : vector<1x8xf32>
    %187 = arith.mulf %174, %186 : vector<1x8xf32>
    %188 = arith.mulf %177, %187 : vector<1x8xf32>
    %189 = arith.subf %175, %188 : vector<1x8xf32>
    %c0_192 = arith.constant 0 : index
    %c0_193 = arith.constant 0 : index
    %c0_194 = arith.constant 0 : index
    %190 = vector.load %arg11[%c0_192, %c0_193, %c0_194] : memref<2x256x8xf32, #tpu.memory_space<vmem>>, vector<1x256x8xf32>
    %191 = vector.shape_cast %190 : vector<1x256x8xf32> to vector<256x8xf32>
    %192 = vector.broadcast %187 : vector<1x8xf32> to vector<256x8xf32>
    %193 = arith.mulf %191, %192 : vector<256x8xf32>
    %194 = vector.broadcast %189 : vector<1x8xf32> to vector<256x8xf32>
    %195 = arith.addf %193, %194 : vector<256x8xf32>
    %cst_195 = arith.constant 0.000000e+00 : f32
    %196 = vector.broadcast %cst_195 : f32 to vector<256x8xf32>
    %197 = arith.maximumf %195, %196 : vector<256x8xf32>
    %198 = vector.shape_cast %197 : vector<256x8xf32> to vector<16x16x8xf32>
    %c0_196 = arith.constant 0 : index
    %c0_197 = arith.constant 0 : index
    %c0_198 = arith.constant 0 : index
    %c0_199 = arith.constant 0 : index
    %199 = vector.load %arg8[%c0_196, %c0_197, %c0_198, %c0_199] : memref<2x16x16x8xf32, #tpu.memory_space<vmem>>, vector<1x16x16x8xf32>
    %200 = vector.shape_cast %199 : vector<1x16x16x8xf32> to vector<16x16x8xf32>
    %201 = vector.shape_cast %198 : vector<16x16x8xf32> to vector<1x16x16x8xf32>
    tpu.vector_store %arg8[%c0_196, %c0_197, %c0_198, %c0_199], %201 {strides = array<i32>} : memref<2x16x16x8xf32, #tpu.memory_space<vmem>>, vector<1x16x16x8xf32>,
    %c1_200 = arith.constant 1 : index
    %c0_201 = arith.constant 0 : index
    %c0_202 = arith.constant 0 : index
    %202 = vector.load %arg11[%c1_200, %c0_201, %c0_202] : memref<2x256x8xf32, #tpu.memory_space<vmem>>, vector<1x256x8xf32>
    %203 = vector.shape_cast %202 : vector<1x256x8xf32> to vector<256x8xf32>
    %204 = vector.broadcast %187 : vector<1x8xf32> to vector<256x8xf32>
    %205 = arith.mulf %203, %204 : vector<256x8xf32>
    %206 = vector.broadcast %189 : vector<1x8xf32> to vector<256x8xf32>
    %207 = arith.addf %205, %206 : vector<256x8xf32>
    %cst_203 = arith.constant 0.000000e+00 : f32
    %208 = vector.broadcast %cst_203 : f32 to vector<256x8xf32>
    %209 = arith.maximumf %207, %208 : vector<256x8xf32>
    %210 = vector.shape_cast %209 : vector<256x8xf32> to vector<16x16x8xf32>
    %c1_204 = arith.constant 1 : index
    %c0_205 = arith.constant 0 : index
    %c0_206 = arith.constant 0 : index
    %c0_207 = arith.constant 0 : index
    %211 = vector.load %arg8[%c1_204, %c0_205, %c0_206, %c0_207] : memref<2x16x16x8xf32, #tpu.memory_space<vmem>>, vector<1x16x16x8xf32>
    %212 = vector.shape_cast %211 : vector<1x16x16x8xf32> to vector<16x16x8xf32>
    %213 = vector.shape_cast %210 : vector<16x16x8xf32> to vector<1x16x16x8xf32>
    tpu.vector_store %arg8[%c1_204, %c0_205, %c0_206, %c0_207], %213 {strides = array<i32>} : memref<2x16x16x8xf32, #tpu.memory_space<vmem>>, vector<1x16x16x8xf32>,
    return
  }
  func.func @transform_0(%arg0: i32) -> (i32, i32, i32, i32) {
    %c0_i32 = arith.constant 0 : i32
    %c0_i32_0 = arith.constant 0 : i32
    %c0_i32_1 = arith.constant 0 : i32
    %c0_i32_2 = arith.constant 0 : i32
    %c0_i32_3 = arith.constant 0 : i32
    return %c0_i32, %c0_i32_0, %c0_i32_1, %c0_i32_2 : i32, i32, i32, i32
  }
  func.func @transform_1(%arg0: i32) -> (i32, i32) {
    %c0_i32 = arith.constant 0 : i32
    %c0_i32_0 = arith.constant 0 : i32
    %c0_i32_1 = arith.constant 0 : i32
    return %c0_i32, %c0_i32_0 : i32, i32
  }
  func.func @transform_2(%arg0: i32) -> (i32, i32) {
    %c0_i32 = arith.constant 0 : i32
    %c0_i32_0 = arith.constant 0 : i32
    %c0_i32_1 = arith.constant 0 : i32
    return %c0_i32, %c0_i32_0 : i32, i32
  }
  func.func @transform_3(%arg0: i32) -> (i32, i32) {
    %c0_i32 = arith.constant 0 : i32
    %c0_i32_0 = arith.constant 0 : i32
    %c0_i32_1 = arith.constant 0 : i32
    return %c0_i32, %c0_i32_0 : i32, i32
  }
  func.func @transform_4(%arg0: i32) -> (i32, i32) {
    %c0_i32 = arith.constant 0 : i32
    %c0_i32_0 = arith.constant 0 : i32
    %c0_i32_1 = arith.constant 0 : i32
    return %c0_i32, %c0_i32_0 : i32, i32
  }
  func.func @transform_5(%arg0: i32) -> (i32, i32) {
    %c0_i32 = arith.constant 0 : i32
    %c0_i32_0 = arith.constant 0 : i32
    %c0_i32_1 = arith.constant 0 : i32
    return %c0_i32, %c0_i32_0 : i32, i32
  }
  func.func @transform_6(%arg0: i32) -> (i32, i32) {
    %c0_i32 = arith.constant 0 : i32
    %c0_i32_0 = arith.constant 0 : i32
    %c0_i32_1 = arith.constant 0 : i32
    return %c0_i32, %c0_i32_0 : i32, i32
  }
  func.func @transform_7(%arg0: i32) -> (i32, i32, i32, i32) {
    %c0_i32 = arith.constant 0 : i32
    %c0_i32_0 = arith.constant 0 : i32
    %c0_i32_1 = arith.constant 0 : i32
    %c0_i32_2 = arith.constant 0 : i32
    %c0_i32_3 = arith.constant 0 : i32
    return %c0_i32, %c0_i32_0, %c0_i32_1, %c0_i32_2 : i32, i32, i32, i32
  }
}

</mosaic_0001>

<llo_original>
// kernel: double_conv.1
$region0: #{double_conv.1}
  #allocation0 [shape = 'u32[]', space=smem, size = 0x4, offset = 0x4, fixed_abs, tag = 'smem constant byte address 0x4 - core index']
  #allocation1 [shape = 'u32[144,128]{1,0:T(1,128)}', space=vmem, size = 0x12000, scoped, tag = 'internal scratch']
  #allocation2 [shape = 'f32[18,18,4]{2,1,0:T(8,128)}', space=vmem, size = 0x36000, scoped, tag = 'scratch operand']
  #allocation3 [shape = 'f32[18,18,8]{2,1,0:T(8,128)}', space=vmem, size = 0x36000, scoped, tag = 'scratch operand']
  #allocation4 [shape = 'f32[2,256,8]{2,1,0:T(8,128)}', space=vmem, size = 0x40000, scoped, tag = 'scratch operand']
  %s0 = inlined_call_operand.vmem [shape: f32[2,16,16,4], index: 0, kind: input, shape index: {}]
  %s1 = inlined_call_operand.vmem [shape: f32[36,8], index: 1, kind: input, shape index: {}]
  %s2 = inlined_call_operand.vmem [shape: f32[72,8], index: 2, kind: input, shape index: {}]
  %s3 = inlined_call_operand.vmem [shape: f32[1,8], index: 3, kind: input, shape index: {}]
  %s4 = inlined_call_operand.vmem [shape: f32[1,8], index: 4, kind: input, shape index: {}]
  %s5 = inlined_call_operand.vmem [shape: f32[1,8], index: 5, kind: input, shape index: {}]
  %s6 = inlined_call_operand.vmem [shape: f32[1,8], index: 6, kind: input, shape index: {}]
  %s7 = inlined_call_operand.vmem [shape: f32[2,16,16,8], index: 7, kind: output, shape index: {}]
  %s8 = sld [smem:[#allocation0]]
  $region38: #{double_conv.1} parent=0
    _
  %s10 = ssub.s32 1, %s8
  %s11 = scalar_select 0, %s10, %s8
  // Predicated region
  $region2: #{double_conv.1} parent=0 // pred_check
    _
  $region3: #{double_conv.1} parent=0 // pred_check_branch
    %13 = sbr.rel (0) target = $region5
  $region4: #{double_conv.1} parent=0 // pred_region
    _
  $region5: #{double_conv.1} parent=0 // pred_fallthru
    _
  // Predicated region
  $region6: #{double_conv.1} parent=0 // pred_check
    _
  $region7: #{double_conv.1} parent=0 // pred_check_branch
    %15 = sbr.rel (0) target = $region9
  $region8: #{double_conv.1} parent=0 // pred_region
    _
  $region9: #{double_conv.1} parent=0 // pred_fallthru
    _
  // Predicated region
  $region10: #{double_conv.1} parent=0 // pred_check
    _
  $region11: #{double_conv.1} parent=0 // pred_check_branch
    %17 = sbr.rel (0) target = $region13
  $region12: #{double_conv.1} parent=0 // pred_region
    _
  $region13: #{double_conv.1} parent=0 // pred_fallthru
    _
  // Predicated region
  $region14: #{double_conv.1} parent=0 // pred_check
    _
  $region15: #{double_conv.1} parent=0 // pred_check_branch
    %19 = sbr.rel (0) target = $region17
  $region16: #{double_conv.1} parent=0 // pred_region
    _
  $region17: #{double_conv.1} parent=0 // pred_fallthru
    _
  // Predicated region
  $region18: #{double_conv.1} parent=0 // pred_check
    _
  $region19: #{double_conv.1} parent=0 // pred_check_branch
    %21 = sbr.rel (0) target = $region21
  $region20: #{double_conv.1} parent=0 // pred_region
    _
  $region21: #{double_conv.1} parent=0 // pred_fallthru
    _
  // Predicated region
  $region22: #{double_conv.1} parent=0 // pred_check
    _
  $region23: #{double_conv.1} parent=0 // pred_check_branch
    %23 = sbr.rel (0) target = $region25
  $region24: #{double_conv.1} parent=0 // pred_region
    _
  $region25: #{double_conv.1} parent=0 // pred_fallthru
    _
  // Predicated region
  $region26: #{double_conv.1} parent=0 // pred_check
    _
  $region27: #{double_conv.1} parent=0 // pred_check_branch
    %25 = sbr.rel (0) target = $region29
  $region28: #{double_conv.1} parent=0 // pred_region
    _
  $region29: #{double_conv.1} parent=0 // pred_fallthru
    _
  %vm26 = vcmask 31744
  %27 = vst.msk [vmem:[#allocation2] sm:$0xff] %vm26, 0.0
  %28 = vst.msk [vmem:[#allocation2 + $0x8] sm:$0xff] %vm26, 0.0
  %vm29 = vcmask 25600
  %30 = vst.msk [vmem:[#allocation2 + $0x10] sm:$0x3] %vm29, 0.0
  %31 = vst.msk [vmem:[#allocation2 + $0x18] sm:$0xff] %vm26, 0.0
  %32 = vst.msk [vmem:[#allocation2 + $0x20] sm:$0xff] %vm26, 0.0
  %33 = vst.msk [vmem:[#allocation2 + $0x28] sm:$0x3] %vm29, 0.0
  %34 = vst.msk [vmem:[#allocation2 + $0x30] sm:$0xff] %vm26, 0.0
  %35 = vst.msk [vmem:[#allocation2 + $0x38] sm:$0xff] %vm26, 0.0
  %36 = vst.msk [vmem:[#allocation2 + $0x40] sm:$0x3] %vm29, 0.0
  %37 = vst.msk [vmem:[#allocation2 + $0x48] sm:$0xff] %vm26, 0.0
  %38 = vst.msk [vmem:[#allocation2 + $0x50] sm:$0xff] %vm26, 0.0
  %39 = vst.msk [vmem:[#allocation2 + $0x58] sm:$0x3] %vm29, 0.0
  %40 = vst.msk [vmem:[#allocation2 + $0x60] sm:$0xff] %vm26, 0.0
  %41 = vst.msk [vmem:[#allocation2 + $0x68] sm:$0xff] %vm26, 0.0
  %42 = vst.msk [vmem:[#allocation2 + $0x70] sm:$0x3] %vm29, 0.0
  %43 = vst.msk [vmem:[#allocation2 + $0x78] sm:$0xff] %vm26, 0.0
  %44 = vst.msk [vmem:[#allocation2 + $0x80] sm:$0xff] %vm26, 0.0
  %45 = vst.msk [vmem:[#allocation2 + $0x88] sm:$0x3] %vm29, 0.0
  %46 = vst.msk [vmem:[#allocation2 + $0x90] sm:$0xff] %vm26, 0.0
  %47 = vst.msk [vmem:[#allocation2 + $0x98] sm:$0xff] %vm26, 0.0
  %48 = vst.msk [vmem:[#allocation2 + $0xa0] sm:$0x3] %vm29, 0.0
  %49 = vst.msk [vmem:[#allocation2 + $0xa8] sm:$0xff] %vm26, 0.0
  %50 = vst.msk [vmem:[#allocation2 + $0xb0] sm:$0xff] %vm26, 0.0
  %51 = vst.msk [vmem:[#allocation2 + $0xb8] sm:$0x3] %vm29, 0.0
  %52 = vst.msk [vmem:[#allocation2 + $0xc0] sm:$0xff] %vm26, 0.0
  %53 = vst.msk [vmem:[#allocation2 + $0xc8] sm:$0xff] %vm26, 0.0
  %54 = vst.msk [vmem:[#allocation2 + $0xd0] sm:$0x3] %vm29, 0.0
  %55 = vst.msk [vmem:[#allocation2 + $0xd8] sm:$0xff] %vm26, 0.0
  %56 = vst.msk [vmem:[#allocation2 + $0xe0] sm:$0xff] %vm26, 0.0
  %57 = vst.msk [vmem:[#allocation2 + $0xe8] sm:$0x3] %vm29, 0.0
  %58 = vst.msk [vmem:[#allocation2 + $0xf0] sm:$0xff] %vm26, 0.0
  %59 = vst.msk [vmem:[#allocation2 + $0xf8] sm:$0xff] %vm26, 0.0
  %60 = vst.msk [vmem:[#allocation2 + $0x100] sm:$0x3] %vm29, 0.0
  %61 = vst.msk [vmem:[#allocation2 + $0x108] sm:$0xff] %vm26, 0.0
  %62 = vst.msk [vmem:[#allocation2 + $0x110] sm:$0xff] %vm26, 0.0
  %63 = vst.msk [vmem:[#allocation2 + $0x118] sm:$0x3] %vm29, 0.0
  %64 = vst.msk [vmem:[#allocation2 + $0x120] sm:$0xff] %vm26, 0.0
  %65 = vst.msk [vmem:[#allocation2 + $0x128] sm:$0xff] %vm26, 0.0
  %66 = vst.msk [vmem:[#allocation2 + $0x130] sm:$0x3] %vm29, 0.0
  %67 = vst.msk [vmem:[#allocation2 + $0x138] sm:$0xff] %vm26, 0.0
  %68 = vst.msk [vmem:[#allocation2 + $0x140] sm:$0xff] %vm26, 0.0
  %69 = vst.msk [vmem:[#allocation2 + $0x148] sm:$0x3] %vm29, 0.0
  %70 = vst.msk [vmem:[#allocation2 + $0x150] sm:$0xff] %vm26, 0.0
  %71 = vst.msk [vmem:[#allocation2 + $0x158] sm:$0xff] %vm26, 0.0
  %72 = vst.msk [vmem:[#allocation2 + $0x160] sm:$0x3] %vm29, 0.0
  %73 = vst.msk [vmem:[#allocation2 + $0x168] sm:$0xff] %vm26, 0.0
  %74 = vst.msk [vmem:[#allocation2 + $0x170] sm:$0xff] %vm26, 0.0
  %75 = vst.msk [vmem:[#allocation2 + $0x178] sm:$0x3] %vm29, 0.0
  %76 = vst.msk [vmem:[#allocation2 + $0x180] sm:$0xff] %vm26, 0.0
  %77 = vst.msk [vmem:[#allocation2 + $0x188] sm:$0xff] %vm26, 0.0
  %78 = vst.msk [vmem:[#allocation2 + $0x190] sm:$0x3] %vm29, 0.0
  %79 = vst.msk [vmem:[#allocation2 + $0x198] sm:$0xff] %vm26, 0.0
  %80 = vst.msk [vmem:[#allocation2 + $0x1a0] sm:$0xff] %vm26, 0.0
  %81 = vst.msk [vmem:[#allocation2 + $0x1a8] sm:$0x3] %vm29, 0.0
  %v82 = vld [vmem:[%s0] sm:$0xff]
  %v83 = vld [vmem:[%s0 + $0x8] sm:$0xff]
  %v84 = vld [vmem:[%s0 + $0x10] sm:$0xff]
  %v85 = vld [vmem:[%s0 + $0x18] sm:$0xff]
  %v86 = vld [vmem:[%s0 + $0x20] sm:$0xff]
  %v87 = vld [vmem:[%s0 + $0x28] sm:$0xff]
  %v88 = vld [vmem:[%s0 + $0x30] sm:$0xff]
  %v89 = vld [vmem:[%s0 + $0x38] sm:$0xff]
  %v90 = vld [vmem:[%s0 + $0x40] sm:$0xff]
  %v91 = vld [vmem:[%s0 + $0x48] sm:$0xff]
  %v92 = vld [vmem:[%s0 + $0x50] sm:$0xff]
  %v93 = vld [vmem:[%s0 + $0x58] sm:$0xff]
  %v94 = vld [vmem:[%s0 + $0x60] sm:$0xff]
  %v95 = vld [vmem:[%s0 + $0x68] sm:$0xff]
  %v96 = vld [vmem:[%s0 + $0x70] sm:$0xff]
  %v97 = vld [vmem:[%s0 + $0x78] sm:$0xff]
  %v98 = vld [vmem:[%s0 + $0x80] sm:$0xff]
  %v99 = vld [vmem:[%s0 + $0x88] sm:$0xff]
  %v100 = vld [vmem:[%s0 + $0x90] sm:$0xff]
  %v101 = vld [vmem:[%s0 + $0x98] sm:$0xff]
  %v102 = vld [vmem:[%s0 + $0xa0] sm:$0xff]
  %v103 = vld [vmem:[%s0 + $0xa8] sm:$0xff]
  %v104 = vld [vmem:[%s0 + $0xb0] sm:$0xff]
  %v105 = vld [vmem:[%s0 + $0xb8] sm:$0xff]
  %v106 = vld [vmem:[%s0 + $0xc0] sm:$0xff]
  %v107 = vld [vmem:[%s0 + $0xc8] sm:$0xff]
  %v108 = vld [vmem:[%s0 + $0xd0] sm:$0xff]
  %v109 = vld [vmem:[%s0 + $0xd8] sm:$0xff]
  %v110 = vld [vmem:[%s0 + $0xe0] sm:$0xff]
  %v111 = vld [vmem:[%s0 + $0xe8] sm:$0xff]
  %v112 = vld [vmem:[%s0 + $0xf0] sm:$0xff]
  %v113 = vld [vmem:[%s0 + $0xf8] sm:$0xff]
  %s114 = scalar_lea.vmem [#allocation2], 24
  %115 = vst.msk [vmem:[%s114 + $0x1] sm:$0xff] %vm26, %v82
  %116 = vst.msk [vmem:[%s114 + $0x9] sm:$0xff] %vm26, %v83
  %117 = vst.msk [vmem:[%s114 + $0x19] sm:$0xff] %vm26, %v84
  %118 = vst.msk [vmem:[%s114 + $0x21] sm:$0xff] %vm26, %v85
  %119 = vst.msk [vmem:[%s114 + $0x31] sm:$0xff] %vm26, %v86
  %120 = vst.msk [vmem:[%s114 + $0x39] sm:$0xff] %vm26, %v87
  %121 = vst.msk [vmem:[%s114 + $0x49] sm:$0xff] %vm26, %v88
  %122 = vst.msk [vmem:[%s114 + $0x51] sm:$0xff] %vm26, %v89
  %123 = vst.msk [vmem:[%s114 + $0x61] sm:$0xff] %vm26, %v90
  %124 = vst.msk [vmem:[%s114 + $0x69] sm:$0xff] %vm26, %v91
  %125 = vst.msk [vmem:[%s114 + $0x79] sm:$0xff] %vm26, %v92
  %126 = vst.msk [vmem:[%s114 + $0x81] sm:$0xff] %vm26, %v93
  %127 = vst.msk [vmem:[%s114 + $0x91] sm:$0xff] %vm26, %v94
  %128 = vst.msk [vmem:[%s114 + $0x99] sm:$0xff] %vm26, %v95
  %129 = vst.msk [vmem:[%s114 + $0xa9] sm:$0xff] %vm26, %v96
  %130 = vst.msk [vmem:[%s114 + $0xb1] sm:$0xff] %vm26, %v97
  %131 = vst.msk [vmem:[%s114 + $0xc1] sm:$0xff] %vm26, %v98
  %132 = vst.msk [vmem:[%s114 + $0xc9] sm:$0xff] %vm26, %v99
  %133 = vst.msk [vmem:[%s114 + $0xd9] sm:$0xff] %vm26, %v100
  %134 = vst.msk [vmem:[%s114 + $0xe1] sm:$0xff] %vm26, %v101
  %135 = vst.msk [vmem:[%s114 + $0xf1] sm:$0xff] %vm26, %v102
  %136 = vst.msk [vmem:[%s114 + $0xf9] sm:$0xff] %vm26, %v103
  %137 = vst.msk [vmem:[%s114 + $0x109] sm:$0xff] %vm26, %v104
  %138 = vst.msk [vmem:[%s114 + $0x111] sm:$0xff] %vm26, %v105
  %139 = vst.msk [vmem:[%s114 + $0x121] sm:$0xff] %vm26, %v106
  %140 = vst.msk [vmem:[%s114 + $0x129] sm:$0xff] %vm26, %v107
  %141 = vst.msk [vmem:[%s114 + $0x139] sm:$0xff] %vm26, %v108
  %142 = vst.msk [vmem:[%s114 + $0x141] sm:$0xff] %vm26, %v109
  %143 = vst.msk [vmem:[%s114 + $0x151] sm:$0xff] %vm26, %v110
  %144 = vst.msk [vmem:[%s114 + $0x159] sm:$0xff] %vm26, %v111
  %145 = vst.msk [vmem:[%s114 + $0x169] sm:$0xff] %vm26, %v112
  %146 = vst.msk [vmem:[%s114 + $0x171] sm:$0xff] %vm26, %v113
  %v147 = vld [vmem:[#allocation2] sm:$0xff]
  %v148 = vld [vmem:[#allocation2 + $0x8] sm:$0xff]
  %v149 = vld [vmem:[#allocation2 + $0x18] sm:$0xff]
  %v150 = vld [vmem:[#allocation2 + $0x20] sm:$0xff]
  %v151 = vld [vmem:[#allocation2 + $0x30] sm:$0xff]
  %v152 = vld [vmem:[#allocation2 + $0x38] sm:$0xff]
  %v153 = vld [vmem:[#allocation2 + $0x48] sm:$0xff]
  %v154 = vld [vmem:[#allocation2 + $0x50] sm:$0xff]
  %v155 = vld [vmem:[#allocation2 + $0x60] sm:$0xff]
  %v156 = vld [vmem:[#allocation2 + $0x68] sm:$0xff]
  %v157 = vld [vmem:[#allocation2 + $0x78] sm:$0xff]
  %v158 = vld [vmem:[#allocation2 + $0x80] sm:$0xff]
  %v159 = vld [vmem:[#allocation2 + $0x90] sm:$0xff]
  %v160 = vld [vmem:[#allocation2 + $0x98] sm:$0xff]
  %v161 = vld [vmem:[#allocation2 + $0xa8] sm:$0xff]
  %v162 = vld [vmem:[#allocation2 + $0xb0] sm:$0xff]
  %v163 = vld [vmem:[#allocation2 + $0xc0] sm:$0xff]
  %v164 = vld [vmem:[#allocation2 + $0xc8] sm:$0xff]
  %v165 = vld [vmem:[#allocation2 + $0xd8] sm:$0xff]
  %v166 = vld [vmem:[#allocation2 + $0xe0] sm:$0xff]
  %v167 = vld [vmem:[#allocation2 + $0xf0] sm:$0xff]
  %v168 = vld [vmem:[#allocation2 + $0xf8] sm:$0xff]
  %v169 = vld [vmem:[#allocation2 + $0x108] sm:$0xff]
  %v170 = vld [vmem:[#allocation2 + $0x110] sm:$0xff]
  %v171 = vld [vmem:[#allocation2 + $0x120] sm:$0xff]
  %v172 = vld [vmem:[#allocation2 + $0x128] sm:$0xff]
  %v173 = vld [vmem:[#allocation2 + $0x138] sm:$0xff]
  %v174 = vld [vmem:[#allocation2 + $0x140] sm:$0xff]
  %v175 = vld [vmem:[#allocation2 + $0x150] sm:$0xff]
  %v176 = vld [vmem:[#allocation2 + $0x158] sm:$0xff]
  %v177 = vld [vmem:[#allocation2 + $0x168] sm:$0xff]
  %v178 = vld [vmem:[#allocation2 + $0x170] sm:$0xff]
  %v179 = vld [vmem:[#allocation2 + $0x1] sm:$0xff]
  %v180 = vld [vmem:[#allocation2 + $0x9] sm:$0xff]
  %v181 = vld [vmem:[#allocation2 + $0x19] sm:$0xff]
  %v182 = vld [vmem:[#allocation2 + $0x21] sm:$0xff]
  %v183 = vld [vmem:[#allocation2 + $0x31] sm:$0xff]
  %v184 = vld [vmem:[#allocation2 + $0x39] sm:$0xff]
  %v185 = vld [vmem:[#allocation2 + $0x49] sm:$0xff]
  %v186 = vld [vmem:[#allocation2 + $0x51] sm:$0xff]
  %v187 = vld [vmem:[#allocation2 + $0x61] sm:$0xff]
  %v188 = vld [vmem:[#allocation2 + $0x69] sm:$0xff]
  %v189 = vld [vmem:[#allocation2 + $0x79] sm:$0xff]
  %v190 = vld [vmem:[#allocation2 + $0x81] sm:$0xff]
  %v191 = vld [vmem:[#allocation2 + $0x91] sm:$0xff]
  %v192 = vld [vmem:[#allocation2 + $0x99] sm:$0xff]
  %v193 = vld [vmem:[#allocation2 + $0xa9] sm:$0xff]
  %v194 = vld [vmem:[#allocation2 + $0xb1] sm:$0xff]
  %v195 = vld [vmem:[#allocation2 + $0xc1] sm:$0xff]
  %v196 = vld [vmem:[#allocation2 + $0xc9] sm:$0xff]
  %v197 = vld [vmem:[#allocation2 + $0xd9] sm:$0xff]
  %v198 = vld [vmem:[#allocation2 + $0xe1] sm:$0xff]
  %v199 = vld [vmem:[#allocation2 + $0xf1] sm:$0xff]
  %v200 = vld [vmem:[#allocation2 + $0xf9] sm:$0xff]
  %v201 = vld [vmem:[#allocation2 + $0x109] sm:$0xff]
  %v202 = vld [vmem:[#allocation2 + $0x111] sm:$0xff]
  %v203 = vld [vmem:[#allocation2 + $0x121] sm:$0xff]
  %v204 = vld [vmem:[#allocation2 + $0x129] sm:$0xff]
  %v205 = vld [vmem:[#allocation2 + $0x139] sm:$0xff]
  %v206 = vld [vmem:[#allocation2 + $0x141] sm:$0xff]
  %v207 = vld [vmem:[#allocation2 + $0x151] sm:$0xff]
  %v208 = vld [vmem:[#allocation2 + $0x159] sm:$0xff]
  %v209 = vld [vmem:[#allocation2 + $0x169] sm:$0xff]
  %v210 = vld [vmem:[#allocation2 + $0x171] sm:$0xff]
  %v211 = vld [vmem:[#allocation2 + $0x2] sm:$0xff]
  %v212 = vld [vmem:[#allocation2 + $0xa] sm:$0xff]
  %v213 = vld [vmem:[#allocation2 + $0x1a] sm:$0xff]
  %v214 = vld [vmem:[#allocation2 + $0x22] sm:$0xff]
  %v215 = vld [vmem:[#allocation2 + $0x32] sm:$0xff]
  %v216 = vld [vmem:[#allocation2 + $0x3a] sm:$0xff]
  %v217 = vld [vmem:[#allocation2 + $0x4a] sm:$0xff]
  %v218 = vld [vmem:[#allocation2 + $0x52] sm:$0xff]
  %v219 = vld [vmem:[#allocation2 + $0x62] sm:$0xff]
  %v220 = vld [vmem:[#allocation2 + $0x6a] sm:$0xff]
  %v221 = vld [vmem:[#allocation2 + $0x7a] sm:$0xff]
  %v222 = vld [vmem:[#allocation2 + $0x82] sm:$0xff]
  %v223 = vld [vmem:[#allocation2 + $0x92] sm:$0xff]
  %v224 = vld [vmem:[#allocation2 + $0x9a] sm:$0xff]
  %v225 = vld [vmem:[#allocation2 + $0xaa] sm:$0xff]
  %v226 = vld [vmem:[#allocation2 + $0xb2] sm:$0xff]
  %v227 = vld [vmem:[#allocation2 + $0xc2] sm:$0xff]
  %v228 = vld [vmem:[#allocation2 + $0xca] sm:$0xff]
  %v229 = vld [vmem:[#allocation2 + $0xda] sm:$0xff]
  %v230 = vld [vmem:[#allocation2 + $0xe2] sm:$0xff]
  %v231 = vld [vmem:[#allocation2 + $0xf2] sm:$0xff]
  %v232 = vld [vmem:[#allocation2 + $0xfa] sm:$0xff]
  %v233 = vld [vmem:[#allocation2 + $0x10a] sm:$0xff]
  %v234 = vld [vmem:[#allocation2 + $0x112] sm:$0xff]
  %v235 = vld [vmem:[#allocation2 + $0x122] sm:$0xff]
  %v236 = vld [vmem:[#allocation2 + $0x12a] sm:$0xff]
  %v237 = vld [vmem:[#allocation2 + $0x13a] sm:$0xff]
  %v238 = vld [vmem:[#allocation2 + $0x142] sm:$0xff]
  %v239 = vld [vmem:[#allocation2 + $0x152] sm:$0xff]
  %v240 = vld [vmem:[#allocation2 + $0x15a] sm:$0xff]
  %v241 = vld [vmem:[#allocation2 + $0x16a] sm:$0xff]
  %v242 = vld [vmem:[#allocation2 + $0x172] sm:$0xff]
  %v243 = vld [vmem:[%s114] sm:$0xff]
  %v244 = vld [vmem:[%s114 + $0x8] sm:$0xff]
  %v245 = vld [vmem:[%s114 + $0x18] sm:$0xff]
  %v246 = vld [vmem:[%s114 + $0x20] sm:$0xff]
  %v247 = vld [vmem:[%s114 + $0x30] sm:$0xff]
  %v248 = vld [vmem:[%s114 + $0x38] sm:$0xff]
  %v249 = vld [vmem:[%s114 + $0x48] sm:$0xff]
  %v250 = vld [vmem:[%s114 + $0x50] sm:$0xff]
  %v251 = vld [vmem:[%s114 + $0x60] sm:$0xff]
  %v252 = vld [vmem:[%s114 + $0x68] sm:$0xff]
  %v253 = vld [vmem:[%s114 + $0x78] sm:$0xff]
  %v254 = vld [vmem:[%s114 + $0x80] sm:$0xff]
  %v255 = vld [vmem:[%s114 + $0x90] sm:$0xff]
  %v256 = vld [vmem:[%s114 + $0x98] sm:$0xff]
  %v257 = vld [vmem:[%s114 + $0xa8] sm:$0xff]
  %v258 = vld [vmem:[%s114 + $0xb0] sm:$0xff]
  %v259 = vld [vmem:[%s114 + $0xc0] sm:$0xff]
  %v260 = vld [vmem:[%s114 + $0xc8] sm:$0xff]
  %v261 = vld [vmem:[%s114 + $0xd8] sm:$0xff]
  %v262 = vld [vmem:[%s114 + $0xe0] sm:$0xff]
  %v263 = vld [vmem:[%s114 + $0xf0] sm:$0xff]
  %v264 = vld [vmem:[%s114 + $0xf8] sm:$0xff]
  %v265 = vld [vmem:[%s114 + $0x108] sm:$0xff]
  %v266 = vld [vmem:[%s114 + $0x110] sm:$0xff]
  %v267 = vld [vmem:[%s114 + $0x120] sm:$0xff]
  %v268 = vld [vmem:[%s114 + $0x128] sm:$0xff]
  %v269 = vld [vmem:[%s114 + $0x138] sm:$0xff]
  %v270 = vld [vmem:[%s114 + $0x140] sm:$0xff]
  %v271 = vld [vmem:[%s114 + $0x150] sm:$0xff]
  %v272 = vld [vmem:[%s114 + $0x158] sm:$0xff]
  %v273 = vld [vmem:[%s114 + $0x168] sm:$0xff]
  %v274 = vld [vmem:[%s114 + $0x170] sm:$0xff]
  %v275 = vld [vmem:[%s114 + $0x1] sm:$0xff]
  %v276 = vld [vmem:[%s114 + $0x9] sm:$0xff]
  %v277 = vld [vmem:[%s114 + $0x19] sm:$0xff]
  %v278 = vld [vmem:[%s114 + $0x21] sm:$0xff]
  %v279 = vld [vmem:[%s114 + $0x31] sm:$0xff]
  %v280 = vld [vmem:[%s114 + $0x39] sm:$0xff]
  %v281 = vld [vmem:[%s114 + $0x49] sm:$0xff]
  %v282 = vld [vmem:[%s114 + $0x51] sm:$0xff]
  %v283 = vld [vmem:[%s114 + $0x61] sm:$0xff]
  %v284 = vld [vmem:[%s114 + $0x69] sm:$0xff]
  %v285 = vld [vmem:[%s114 + $0x79] sm:$0xff]
  %v286 = vld [vmem:[%s114 + $0x81] sm:$0xff]
  %v287 = vld [vmem:[%s114 + $0x91] sm:$0xff]
  %v288 = vld [vmem:[%s114 + $0x99] sm:$0xff]
  %v289 = vld [vmem:[%s114 + $0xa9] sm:$0xff]
  %v290 = vld [vmem:[%s114 + $0xb1] sm:$0xff]
  %v291 = vld [vmem:[%s114 + $0xc1] sm:$0xff]
  %v292 = vld [vmem:[%s114 + $0xc9] sm:$0xff]
  %v293 = vld [vmem:[%s114 + $0xd9] sm:$0xff]
  %v294 = vld [vmem:[%s114 + $0xe1] sm:$0xff]
  %v295 = vld [vmem:[%s114 + $0xf1] sm:$0xff]
  %v296 = vld [vmem:[%s114 + $0xf9] sm:$0xff]
  %v297 = vld [vmem:[%s114 + $0x109] sm:$0xff]
  %v298 = vld [vmem:[%s114 + $0x111] sm:$0xff]
  %v299 = vld [vmem:[%s114 + $0x121] sm:$0xff]
  %v300 = vld [vmem:[%s114 + $0x129] sm:$0xff]
  %v301 = vld [vmem:[%s114 + $0x139] sm:$0xff]
  %v302 = vld [vmem:[%s114 + $0x141] sm:$0xff]
  %v303 = vld [vmem:[%s114 + $0x151] sm:$0xff]
  %v304 = vld [vmem:[%s114 + $0x159] sm:$0xff]
  %v305 = vld [vmem:[%s114 + $0x169] sm:$0xff]
  %v306 = vld [vmem:[%s114 + $0x171] sm:$0xff]
  %v307 = vld [vmem:[%s114 + $0x2] sm:$0xff]
  %v308 = vld [vmem:[%s114 + $0xa] sm:$0xff]
  %v309 = vld [vmem:[%s114 + $0x1a] sm:$0xff]
  %v310 = vld [vmem:[%s114 + $0x22] sm:$0xff]
  %v311 = vld [vmem:[%s114 + $0x32] sm:$0xff]
  %v312 = vld [vmem:[%s114 + $0x3a] sm:$0xff]
  %v313 = vld [vmem:[%s114 + $0x4a] sm:$0xff]
  %v314 = vld [vmem:[%s114 + $0x52] sm:$0xff]
  %v315 = vld [vmem:[%s114 + $0x62] sm:$0xff]
  %v316 = vld [vmem:[%s114 + $0x6a] sm:$0xff]
  %v317 = vld [vmem:[%s114 + $0x7a] sm:$0xff]
  %v318 = vld [vmem:[%s114 + $0x82] sm:$0xff]
  %v319 = vld [vmem:[%s114 + $0x92] sm:$0xff]
  %v320 = vld [vmem:[%s114 + $0x9a] sm:$0xff]
  %v321 = vld [vmem:[%s114 + $0xaa] sm:$0xff]
  %v322 = vld [vmem:[%s114 + $0xb2] sm:$0xff]
  %v323 = vld [vmem:[%s114 + $0xc2] sm:$0xff]
  %v324 = vld [vmem:[%s114 + $0xca] sm:$0xff]
  %v325 = vld [vmem:[%s114 + $0xda] sm:$0xff]
  %v326 = vld [vmem:[%s114 + $0xe2] sm:$0xff]
  %v327 = vld [vmem:[%s114 + $0xf2] sm:$0xff]
  %v328 = vld [vmem:[%s114 + $0xfa] sm:$0xff]
  %v329 = vld [vmem:[%s114 + $0x10a] sm:$0xff]
  %v330 = vld [vmem:[%s114 + $0x112] sm:$0xff]
  %v331 = vld [vmem:[%s114 + $0x122] sm:$0xff]
  %v332 = vld [vmem:[%s114 + $0x12a] sm:$0xff]
  %v333 = vld [vmem:[%s114 + $0x13a] sm:$0xff]
  %v334 = vld [vmem:[%s114 + $0x142] sm:$0xff]
  %v335 = vld [vmem:[%s114 + $0x152] sm:$0xff]
  %v336 = vld [vmem:[%s114 + $0x15a] sm:$0xff]
  %v337 = vld [vmem:[%s114 + $0x16a] sm:$0xff]
  %v338 = vld [vmem:[%s114 + $0x172] sm:$0xff]
  %s339 = scalar_lea.vmem [#allocation2], 48
  %v340 = vld [vmem:[%s339] sm:$0xff]
  %v341 = vld [vmem:[%s339 + $0x8] sm:$0xff]
  %v342 = vld [vmem:[%s339 + $0x18] sm:$0xff]
  %v343 = vld [vmem:[%s339 + $0x20] sm:$0xff]
  %v344 = vld [vmem:[%s339 + $0x30] sm:$0xff]
  %v345 = vld [vmem:[%s339 + $0x38] sm:$0xff]
  %v346 = vld [vmem:[%s339 + $0x48] sm:$0xff]
  %v347 = vld [vmem:[%s339 + $0x50] sm:$0xff]
  %v348 = vld [vmem:[%s339 + $0x60] sm:$0xff]
  %v349 = vld [vmem:[%s339 + $0x68] sm:$0xff]
  %v350 = vld [vmem:[%s339 + $0x78] sm:$0xff]
  %v351 = vld [vmem:[%s339 + $0x80] sm:$0xff]
  %v352 = vld [vmem:[%s339 + $0x90] sm:$0xff]
  %v353 = vld [vmem:[%s339 + $0x98] sm:$0xff]
  %v354 = vld [vmem:[%s339 + $0xa8] sm:$0xff]
  %v355 = vld [vmem:[%s339 + $0xb0] sm:$0xff]
  %v356 = vld [vmem:[%s339 + $0xc0] sm:$0xff]
  %v357 = vld [vmem:[%s339 + $0xc8] sm:$0xff]
  %v358 = vld [vmem:[%s339 + $0xd8] sm:$0xff]
  %v359 = vld [vmem:[%s339 + $0xe0] sm:$0xff]
  %v360 = vld [vmem:[%s339 + $0xf0] sm:$0xff]
  %v361 = vld [vmem:[%s339 + $0xf8] sm:$0xff]
  %v362 = vld [vmem:[%s339 + $0x108] sm:$0xff]
  %v363 = vld [vmem:[%s339 + $0x110] sm:$0xff]
  %v364 = vld [vmem:[%s339 + $0x120] sm:$0xff]
  %v365 = vld [vmem:[%s339 + $0x128] sm:$0xff]
  %v366 = vld [vmem:[%s339 + $0x138] sm:$0xff]
  %v367 = vld [vmem:[%s339 + $0x140] sm:$0xff]
  %v368 = vld [vmem:[%s339 + $0x150] sm:$0xff]
  %v369 = vld [vmem:[%s339 + $0x158] sm:$0xff]
  %v370 = vld [vmem:[%s339 + $0x168] sm:$0xff]
  %v371 = vld [vmem:[%s339 + $0x170] sm:$0xff]
  %v372 = vld [vmem:[%s339 + $0x1] sm:$0xff]
  %v373 = vld [vmem:[%s339 + $0x9] sm:$0xff]
  %v374 = vld [vmem:[%s339 + $0x19] sm:$0xff]
  %v375 = vld [vmem:[%s339 + $0x21] sm:$0xff]
  %v376 = vld [vmem:[%s339 + $0x31] sm:$0xff]
  %v377 = vld [vmem:[%s339 + $0x39] sm:$0xff]
  %v378 = vld [vmem:[%s339 + $0x49] sm:$0xff]
  %v379 = vld [vmem:[%s339 + $0x51] sm:$0xff]
  %v380 = vld [vmem:[%s339 + $0x61] sm:$0xff]
  %v381 = vld [vmem:[%s339 + $0x69] sm:$0xff]
  %v382 = vld [vmem:[%s339 + $0x79] sm:$0xff]
  %v383 = vld [vmem:[%s339 + $0x81] sm:$0xff]
  %v384 = vld [vmem:[%s339 + $0x91] sm:$0xff]
  %v385 = vld [vmem:[%s339 + $0x99] sm:$0xff]
  %v386 = vld [vmem:[%s339 + $0xa9] sm:$0xff]
  %v387 = vld [vmem:[%s339 + $0xb1] sm:$0xff]
  %v388 = vld [vmem:[%s339 + $0xc1] sm:$0xff]
  %v389 = vld [vmem:[%s339 + $0xc9] sm:$0xff]
  %v390 = vld [vmem:[%s339 + $0xd9] sm:$0xff]
  %v391 = vld [vmem:[%s339 + $0xe1] sm:$0xff]
  %v392 = vld [vmem:[%s339 + $0xf1] sm:$0xff]
  %v393 = vld [vmem:[%s339 + $0xf9] sm:$0xff]
  %v394 = vld [vmem:[%s339 + $0x109] sm:$0xff]
  %v395 = vld [vmem:[%s339 + $0x111] sm:$0xff]
  %v396 = vld [vmem:[%s339 + $0x121] sm:$0xff]
  %v397 = vld [vmem:[%s339 + $0x129] sm:$0xff]
  %v398 = vld [vmem:[%s339 + $0x139] sm:$0xff]
  %v399 = vld [vmem:[%s339 + $0x141] sm:$0xff]
  %v400 = vld [vmem:[%s339 + $0x151] sm:$0xff]
  %v401 = vld [vmem:[%s339 + $0x159] sm:$0xff]
  %v402 = vld [vmem:[%s339 + $0x169] sm:$0xff]
  %v403 = vld [vmem:[%s339 + $0x171] sm:$0xff]
  %v404 = vld [vmem:[%s339 + $0x2] sm:$0xff]
  %v405 = vld [vmem:[%s339 + $0xa] sm:$0xff]
  %v406 = vld [vmem:[%s339 + $0x1a] sm:$0xff]
  %v407 = vld [vmem:[%s339 + $0x22] sm:$0xff]
  %v408 = vld [vmem:[%s339 + $0x32] sm:$0xff]
  %v409 = vld [vmem:[%s339 + $0x3a] sm:$0xff]
  %v410 = vld [vmem:[%s339 + $0x4a] sm:$0xff]
  %v411 = vld [vmem:[%s339 + $0x52] sm:$0xff]
  %v412 = vld [vmem:[%s339 + $0x62] sm:$0xff]
  %v413 = vld [vmem:[%s339 + $0x6a] sm:$0xff]
  %v414 = vld [vmem:[%s339 + $0x7a] sm:$0xff]
  %v415 = vld [vmem:[%s339 + $0x82] sm:$0xff]
  %v416 = vld [vmem:[%s339 + $0x92] sm:$0xff]
  %v417 = vld [vmem:[%s339 + $0x9a] sm:$0xff]
  %v418 = vld [vmem:[%s339 + $0xaa] sm:$0xff]
  %v419 = vld [vmem:[%s339 + $0xb2] sm:$0xff]
  %v420 = vld [vmem:[%s339 + $0xc2] sm:$0xff]
  %v421 = vld [vmem:[%s339 + $0xca] sm:$0xff]
  %v422 = vld [vmem:[%s339 + $0xda] sm:$0xff]
  %v423 = vld [vmem:[%s339 + $0xe2] sm:$0xff]
  %v424 = vld [vmem:[%s339 + $0xf2] sm:$0xff]
  %v425 = vld [vmem:[%s339 + $0xfa] sm:$0xff]
  %v426 = vld [vmem:[%s339 + $0x10a] sm:$0xff]
  %v427 = vld [vmem:[%s339 + $0x112] sm:$0xff]
  %v428 = vld [vmem:[%s339 + $0x122] sm:$0xff]
  %v429 = vld [vmem:[%s339 + $0x12a] sm:$0xff]
  %v430 = vld [vmem:[%s339 + $0x13a] sm:$0xff]
  %v431 = vld [vmem:[%s339 + $0x142] sm:$0xff]
  %v432 = vld [vmem:[%s339 + $0x152] sm:$0xff]
  %v433 = vld [vmem:[%s339 + $0x15a] sm:$0xff]
  %v434 = vld [vmem:[%s339 + $0x16a] sm:$0xff]
  %v435 = vld [vmem:[%s339 + $0x172] sm:$0xff]
  %468 = vrot.lane.b32.xlu0 %v179, 4
  %v469 = vpop.permute.xlu0 %468
  %470 = vrot.lane.b32.xlu0 %v180, 4
  %v471 = vpop.permute.xlu0 %470
  %472 = vrot.lane.b32.xlu0 %v181, 4
  %v473 = vpop.permute.xlu0 %472
  %474 = vrot.lane.b32.xlu0 %v182, 4
  %v475 = vpop.permute.xlu0 %474
  %476 = vrot.lane.b32.xlu0 %v183, 4
  %v477 = vpop.permute.xlu0 %476
  %478 = vrot.lane.b32.xlu0 %v184, 4
  %v479 = vpop.permute.xlu0 %478
  %480 = vrot.lane.b32.xlu0 %v185, 4
  %v481 = vpop.permute.xlu0 %480
  %482 = vrot.lane.b32.xlu0 %v186, 4
  %v483 = vpop.permute.xlu0 %482
  %484 = vrot.lane.b32.xlu0 %v187, 4
  %v485 = vpop.permute.xlu0 %484
  %486 = vrot.lane.b32.xlu0 %v188, 4
  %v487 = vpop.permute.xlu0 %486
  %488 = vrot.lane.b32.xlu0 %v189, 4
  %v489 = vpop.permute.xlu0 %488
  %490 = vrot.lane.b32.xlu0 %v190, 4
  %v491 = vpop.permute.xlu0 %490
  %492 = vrot.lane.b32.xlu0 %v191, 4
  %v493 = vpop.permute.xlu0 %492
  %494 = vrot.lane.b32.xlu0 %v192, 4
  %v495 = vpop.permute.xlu0 %494
  %496 = vrot.lane.b32.xlu0 %v193, 4
  %v497 = vpop.permute.xlu0 %496
  %498 = vrot.lane.b32.xlu0 %v194, 4
  %v499 = vpop.permute.xlu0 %498
  %500 = vrot.lane.b32.xlu0 %v195, 4
  %v501 = vpop.permute.xlu0 %500
  %502 = vrot.lane.b32.xlu0 %v196, 4
  %v503 = vpop.permute.xlu0 %502
  %504 = vrot.lane.b32.xlu0 %v197, 4
  %v505 = vpop.permute.xlu0 %504
  %506 = vrot.lane.b32.xlu0 %v198, 4
  %v507 = vpop.permute.xlu0 %506
  %508 = vrot.lane.b32.xlu0 %v199, 4
  %v509 = vpop.permute.xlu0 %508
  %510 = vrot.lane.b32.xlu0 %v200, 4
  %v511 = vpop.permute.xlu0 %510
  %512 = vrot.lane.b32.xlu0 %v201, 4
  %v513 = vpop.permute.xlu0 %512
  %514 = vrot.lane.b32.xlu0 %v202, 4
  %v515 = vpop.permute.xlu0 %514
  %516 = vrot.lane.b32.xlu0 %v203, 4
  %v517 = vpop.permute.xlu0 %516
  %518 = vrot.lane.b32.xlu0 %v204, 4
  %v519 = vpop.permute.xlu0 %518
  %520 = vrot.lane.b32.xlu0 %v205, 4
  %v521 = vpop.permute.xlu0 %520
  %522 = vrot.lane.b32.xlu0 %v206, 4
  %v523 = vpop.permute.xlu0 %522
  %524 = vrot.lane.b32.xlu0 %v207, 4
  %v525 = vpop.permute.xlu0 %524
  %526 = vrot.lane.b32.xlu0 %v208, 4
  %v527 = vpop.permute.xlu0 %526
  %528 = vrot.lane.b32.xlu0 %v209, 4
  %v529 = vpop.permute.xlu0 %528
  %530 = vrot.lane.b32.xlu0 %v210, 4
  %v531 = vpop.permute.xlu0 %530
  %596 = vrot.lane.b32.xlu0 %v211, 8
  %v597 = vpop.permute.xlu0 %596
  %598 = vrot.lane.b32.xlu0 %v212, 8
  %v599 = vpop.permute.xlu0 %598
  %600 = vrot.lane.b32.xlu0 %v213, 8
  %v601 = vpop.permute.xlu0 %600
  %602 = vrot.lane.b32.xlu0 %v214, 8
  %v603 = vpop.permute.xlu0 %602
  %604 = vrot.lane.b32.xlu0 %v215, 8
  %v605 = vpop.permute.xlu0 %604
  %606 = vrot.lane.b32.xlu0 %v216, 8
  %v607 = vpop.permute.xlu0 %606
  %608 = vrot.lane.b32.xlu0 %v217, 8
  %v609 = vpop.permute.xlu0 %608
  %610 = vrot.lane.b32.xlu0 %v218, 8
  %v611 = vpop.permute.xlu0 %610
  %612 = vrot.lane.b32.xlu0 %v219, 8
  %v613 = vpop.permute.xlu0 %612
  %614 = vrot.lane.b32.xlu0 %v220, 8
  %v615 = vpop.permute.xlu0 %614
  %616 = vrot.lane.b32.xlu0 %v221, 8
  %v617 = vpop.permute.xlu0 %616
  %618 = vrot.lane.b32.xlu0 %v222, 8
  %v619 = vpop.permute.xlu0 %618
  %620 = vrot.lane.b32.xlu0 %v223, 8
  %v621 = vpop.permute.xlu0 %620
  %622 = vrot.lane.b32.xlu0 %v224, 8
  %v623 = vpop.permute.xlu0 %622
  %624 = vrot.lane.b32.xlu0 %v225, 8
  %v625 = vpop.permute.xlu0 %624
  %626 = vrot.lane.b32.xlu0 %v226, 8
  %v627 = vpop.permute.xlu0 %626
  %628 = vrot.lane.b32.xlu0 %v227, 8
  %v629 = vpop.permute.xlu0 %628
  %630 = vrot.lane.b32.xlu0 %v228, 8
  %v631 = vpop.permute.xlu0 %630
  %632 = vrot.lane.b32.xlu0 %v229, 8
  %v633 = vpop.permute.xlu0 %632
  %634 = vrot.lane.b32.xlu0 %v230, 8
  %v635 = vpop.permute.xlu0 %634
  %636 = vrot.lane.b32.xlu0 %v231, 8
  %v637 = vpop.permute.xlu0 %636
  %638 = vrot.lane.b32.xlu0 %v232, 8
  %v639 = vpop.permute.xlu0 %638
  %640 = vrot.lane.b32.xlu0 %v233, 8
  %v641 = vpop.permute.xlu0 %640
  %642 = vrot.lane.b32.xlu0 %v234, 8
  %v643 = vpop.permute.xlu0 %642
  %644 = vrot.lane.b32.xlu0 %v235, 8
  %v645 = vpop.permute.xlu0 %644
  %646 = vrot.lane.b32.xlu0 %v236, 8
  %v647 = vpop.permute.xlu0 %646
  %648 = vrot.lane.b32.xlu0 %v237, 8
  %v649 = vpop.permute.xlu0 %648
  %650 = vrot.lane.b32.xlu0 %v238, 8
  %v651 = vpop.permute.xlu0 %650
  %652 = vrot.lane.b32.xlu0 %v239, 8
  %v653 = vpop.permute.xlu0 %652
  %654 = vrot.lane.b32.xlu0 %v240, 8
  %v655 = vpop.permute.xlu0 %654
  %656 = vrot.lane.b32.xlu0 %v241, 8
  %v657 = vpop.permute.xlu0 %656
  %658 = vrot.lane.b32.xlu0 %v242, 8
  %v659 = vpop.permute.xlu0 %658
  %724 = vrot.lane.b32.xlu0 %v243, 12
  %v725 = vpop.permute.xlu0 %724
  %726 = vrot.lane.b32.xlu0 %v244, 12
  %v727 = vpop.permute.xlu0 %726
  %728 = vrot.lane.b32.xlu0 %v245, 12
  %v729 = vpop.permute.xlu0 %728
  %730 = vrot.lane.b32.xlu0 %v246, 12
  %v731 = vpop.permute.xlu0 %730
  %732 = vrot.lane.b32.xlu0 %v247, 12
  %v733 = vpop.permute.xlu0 %732
  %734 = vrot.lane.b32.xlu0 %v248, 12
  %v735 = vpop.permute.xlu0 %734
  %736 = vrot.lane.b32.xlu0 %v249, 12
  %v737 = vpop.permute.xlu0 %736
  %738 = vrot.lane.b32.xlu0 %v250, 12
  %v739 = vpop.permute.xlu0 %738
  %740 = vrot.lane.b32.xlu0 %v251, 12
  %v741 = vpop.permute.xlu0 %740
  %742 = vrot.lane.b32.xlu0 %v252, 12
  %v743 = vpop.permute.xlu0 %742
  %744 = vrot.lane.b32.xlu0 %v253, 12
  %v745 = vpop.permute.xlu0 %744
  %746 = vrot.lane.b32.xlu0 %v254, 12
  %v747 = vpop.permute.xlu0 %746
  %748 = vrot.lane.b32.xlu0 %v255, 12
  %v749 = vpop.permute.xlu0 %748
  %750 = vrot.lane.b32.xlu0 %v256, 12
  %v751 = vpop.permute.xlu0 %750
  %752 = vrot.lane.b32.xlu0 %v257, 12
  %v753 = vpop.permute.xlu0 %752
  %754 = vrot.lane.b32.xlu0 %v258, 12
  %v755 = vpop.permute.xlu0 %754
  %756 = vrot.lane.b32.xlu0 %v259, 12
  %v757 = vpop.permute.xlu0 %756
  %758 = vrot.lane.b32.xlu0 %v260, 12
  %v759 = vpop.permute.xlu0 %758
  %760 = vrot.lane.b32.xlu0 %v261, 12
  %v761 = vpop.permute.xlu0 %760
  %762 = vrot.lane.b32.xlu0 %v262, 12
  %v763 = vpop.permute.xlu0 %762
  %764 = vrot.lane.b32.xlu0 %v263, 12
  %v765 = vpop.permute.xlu0 %764
  %766 = vrot.lane.b32.xlu0 %v264, 12
  %v767 = vpop.permute.xlu0 %766
  %768 = vrot.lane.b32.xlu0 %v265, 12
  %v769 = vpop.permute.xlu0 %768
  %770 = vrot.lane.b32.xlu0 %v266, 12
  %v771 = vpop.permute.xlu0 %770
  %772 = vrot.lane.b32.xlu0 %v267, 12
  %v773 = vpop.permute.xlu0 %772
  %774 = vrot.lane.b32.xlu0 %v268, 12
  %v775 = vpop.permute.xlu0 %774
  %776 = vrot.lane.b32.xlu0 %v269, 12
  %v777 = vpop.permute.xlu0 %776
  %778 = vrot.lane.b32.xlu0 %v270, 12
  %v779 = vpop.permute.xlu0 %778
  %780 = vrot.lane.b32.xlu0 %v271, 12
  %v781 = vpop.permute.xlu0 %780
  %782 = vrot.lane.b32.xlu0 %v272, 12
  %v783 = vpop.permute.xlu0 %782
  %784 = vrot.lane.b32.xlu0 %v273, 12
  %v785 = vpop.permute.xlu0 %784
  %786 = vrot.lane.b32.xlu0 %v274, 12
  %v787 = vpop.permute.xlu0 %786
  %852 = vrot.lane.b32.xlu0 %v275, 16
  %v853 = vpop.permute.xlu0 %852
  %854 = vrot.lane.b32.xlu0 %v276, 16
  %v855 = vpop.permute.xlu0 %854
  %856 = vrot.lane.b32.xlu0 %v277, 16
  %v857 = vpop.permute.xlu0 %856
  %858 = vrot.lane.b32.xlu0 %v278, 16
  %v859 = vpop.permute.xlu0 %858
  %860 = vrot.lane.b32.xlu0 %v279, 16
  %v861 = vpop.permute.xlu0 %860
  %862 = vrot.lane.b32.xlu0 %v280, 16
  %v863 = vpop.permute.xlu0 %862
  %864 = vrot.lane.b32.xlu0 %v281, 16
  %v865 = vpop.permute.xlu0 %864
  %866 = vrot.lane.b32.xlu0 %v282, 16
  %v867 = vpop.permute.xlu0 %866
  %868 = vrot.lane.b32.xlu0 %v283, 16
  %v869 = vpop.permute.xlu0 %868
  %870 = vrot.lane.b32.xlu0 %v284, 16
  %v871 = vpop.permute.xlu0 %870
  %872 = vrot.lane.b32.xlu0 %v285, 16
  %v873 = vpop.permute.xlu0 %872
  %874 = vrot.lane.b32.xlu0 %v286, 16
  %v875 = vpop.permute.xlu0 %874
  %876 = vrot.lane.b32.xlu0 %v287, 16
  %v877 = vpop.permute.xlu0 %876
  %878 = vrot.lane.b32.xlu0 %v288, 16
  %v879 = vpop.permute.xlu0 %878
  %880 = vrot.lane.b32.xlu0 %v289, 16
  %v881 = vpop.permute.xlu0 %880
  %882 = vrot.lane.b32.xlu0 %v290, 16
  %v883 = vpop.permute.xlu0 %882
  %884 = vrot.lane.b32.xlu0 %v291, 16
  %v885 = vpop.permute.xlu0 %884
  %886 = vrot.lane.b32.xlu0 %v292, 16
  %v887 = vpop.permute.xlu0 %886
  %888 = vrot.lane.b32.xlu0 %v293, 16
  %v889 = vpop.permute.xlu0 %888
  %890 = vrot.lane.b32.xlu0 %v294, 16
  %v891 = vpop.permute.xlu0 %890
  %892 = vrot.lane.b32.xlu0 %v295, 16
  %v893 = vpop.permute.xlu0 %892
  %894 = vrot.lane.b32.xlu0 %v296, 16
  %v895 = vpop.permute.xlu0 %894
  %896 = vrot.lane.b32.xlu0 %v297, 16
  %v897 = vpop.permute.xlu0 %896
  %898 = vrot.lane.b32.xlu0 %v298, 16
  %v899 = vpop.permute.xlu0 %898
  %900 = vrot.lane.b32.xlu0 %v299, 16
  %v901 = vpop.permute.xlu0 %900
  %902 = vrot.lane.b32.xlu0 %v300, 16
  %v903 = vpop.permute.xlu0 %902
  %904 = vrot.lane.b32.xlu0 %v301, 16
  %v905 = vpop.permute.xlu0 %904
  %906 = vrot.lane.b32.xlu0 %v302, 16
  %v907 = vpop.permute.xlu0 %906
  %908 = vrot.lane.b32.xlu0 %v303, 16
  %v909 = vpop.permute.xlu0 %908
  %910 = vrot.lane.b32.xlu0 %v304, 16
  %v911 = vpop.permute.xlu0 %910
  %912 = vrot.lane.b32.xlu0 %v305, 16
  %v913 = vpop.permute.xlu0 %912
  %914 = vrot.lane.b32.xlu0 %v306, 16
  %v915 = vpop.permute.xlu0 %914
  %980 = vrot.lane.b32.xlu0 %v307, 20
  %v981 = vpop.permute.xlu0 %980
  %982 = vrot.lane.b32.xlu0 %v308, 20
  %v983 = vpop.permute.xlu0 %982
  %984 = vrot.lane.b32.xlu0 %v309, 20
  %v985 = vpop.permute.xlu0 %984
  %986 = vrot.lane.b32.xlu0 %v310, 20
  %v987 = vpop.permute.xlu0 %986
  %988 = vrot.lane.b32.xlu0 %v311, 20
  %v989 = vpop.permute.xlu0 %988
  %990 = vrot.lane.b32.xlu0 %v312, 20
  %v991 = vpop.permute.xlu0 %990
  %992 = vrot.lane.b32.xlu0 %v313, 20
  %v993 = vpop.permute.xlu0 %992
  %994 = vrot.lane.b32.xlu0 %v314, 20
  %v995 = vpop.permute.xlu0 %994
  %996 = vrot.lane.b32.xlu0 %v315, 20
  %v997 = vpop.permute.xlu0 %996
  %998 = vrot.lane.b32.xlu0 %v316, 20
  %v999 = vpop.permute.xlu0 %998
  %1000 = vrot.lane.b32.xlu0 %v317, 20
  %v1001 = vpop.permute.xlu0 %1000
  %1002 = vrot.lane.b32.xlu0 %v318, 20
  %v1003 = vpop.permute.xlu0 %1002
  %1004 = vrot.lane.b32.xlu0 %v319, 20
  %v1005 = vpop.permute.xlu0 %1004
  %1006 = vrot.lane.b32.xlu0 %v320, 20
  %v1007 = vpop.permute.xlu0 %1006
  %1008 = vrot.lane.b32.xlu0 %v321, 20
  %v1009 = vpop.permute.xlu0 %1008
  %1010 = vrot.lane.b32.xlu0 %v322, 20
  %v1011 = vpop.permute.xlu0 %1010
  %1012 = vrot.lane.b32.xlu0 %v323, 20
  %v1013 = vpop.permute.xlu0 %1012
  %1014 = vrot.lane.b32.xlu0 %v324, 20
  %v1015 = vpop.permute.xlu0 %1014
  %1016 = vrot.lane.b32.xlu0 %v325, 20
  %v1017 = vpop.permute.xlu0 %1016
  %1018 = vrot.lane.b32.xlu0 %v326, 20
  %v1019 = vpop.permute.xlu0 %1018
  %1020 = vrot.lane.b32.xlu0 %v327, 20
  %v1021 = vpop.permute.xlu0 %1020
  %1022 = vrot.lane.b32.xlu0 %v328, 20
  %v1023 = vpop.permute.xlu0 %1022
  %1024 = vrot.lane.b32.xlu0 %v329, 20
  %v1025 = vpop.permute.xlu0 %1024
  %1026 = vrot.lane.b32.xlu0 %v330, 20
  %v1027 = vpop.permute.xlu0 %1026
  %1028 = vrot.lane.b32.xlu0 %v331, 20
  %v1029 = vpop.permute.xlu0 %1028
  %1030 = vrot.lane.b32.xlu0 %v332, 20
  %v1031 = vpop.permute.xlu0 %1030
  %1032 = vrot.lane.b32.xlu0 %v333, 20
  %v1033 = vpop.permute.xlu0 %1032
  %1034 = vrot.lane.b32.xlu0 %v334, 20
  %v1035 = vpop.permute.xlu0 %1034
  %1036 = vrot.lane.b32.xlu0 %v335, 20
  %v1037 = vpop.permute.xlu0 %1036
  %1038 = vrot.lane.b32.xlu0 %v336, 20
  %v1039 = vpop.permute.xlu0 %1038
  %1040 = vrot.lane.b32.xlu0 %v337, 20
  %v1041 = vpop.permute.xlu0 %1040
  %1042 = vrot.lane.b32.xlu0 %v338, 20
  %v1043 = vpop.permute.xlu0 %1042
  %1108 = vrot.lane.b32.xlu0 %v340, 24
  %v1109 = vpop.permute.xlu0 %1108
  %1110 = vrot.lane.b32.xlu0 %v341, 24
  %v1111 = vpop.permute.xlu0 %1110
  %1112 = vrot.lane.b32.xlu0 %v342, 24
  %v1113 = vpop.permute.xlu0 %1112
  %1114 = vrot.lane.b32.xlu0 %v343, 24
  %v1115 = vpop.permute.xlu0 %1114
  %1116 = vrot.lane.b32.xlu0 %v344, 24
  %v1117 = vpop.permute.xlu0 %1116
  %1118 = vrot.lane.b32.xlu0 %v345, 24
  %v1119 = vpop.permute.xlu0 %1118
  %1120 = vrot.lane.b32.xlu0 %v346, 24
  %v1121 = vpop.permute.xlu0 %1120
  %1122 = vrot.lane.b32.xlu0 %v347, 24
  %v1123 = vpop.permute.xlu0 %1122
  %1124 = vrot.lane.b32.xlu0 %v348, 24
  %v1125 = vpop.permute.xlu0 %1124
  %1126 = vrot.lane.b32.xlu0 %v349, 24
  %v1127 = vpop.permute.xlu0 %1126
  %1128 = vrot.lane.b32.xlu0 %v350, 24
  %v1129 = vpop.permute.xlu0 %1128
  %1130 = vrot.lane.b32.xlu0 %v351, 24
  %v1131 = vpop.permute.xlu0 %1130
  %1132 = vrot.lane.b32.xlu0 %v352, 24
  %v1133 = vpop.permute.xlu0 %1132
  %1134 = vrot.lane.b32.xlu0 %v353, 24
  %v1135 = vpop.permute.xlu0 %1134
  %1136 = vrot.lane.b32.xlu0 %v354, 24
  %v1137 = vpop.permute.xlu0 %1136
  %1138 = vrot.lane.b32.xlu0 %v355, 24
  %v1139 = vpop.permute.xlu0 %1138
  %1140 = vrot.lane.b32.xlu0 %v356, 24
  %v1141 = vpop.permute.xlu0 %1140
  %1142 = vrot.lane.b32.xlu0 %v357, 24
  %v1143 = vpop.permute.xlu0 %1142
  %1144 = vrot.lane.b32.xlu0 %v358, 24
  %v1145 = vpop.permute.xlu0 %1144
  %1146 = vrot.lane.b32.xlu0 %v359, 24
  %v1147 = vpop.permute.xlu0 %1146
  %1148 = vrot.lane.b32.xlu0 %v360, 24
  %v1149 = vpop.permute.xlu0 %1148
  %1150 = vrot.lane.b32.xlu0 %v361, 24
  %v1151 = vpop.permute.xlu0 %1150
  %1152 = vrot.lane.b32.xlu0 %v362, 24
  %v1153 = vpop.permute.xlu0 %1152
  %1154 = vrot.lane.b32.xlu0 %v363, 24
  %v1155 = vpop.permute.xlu0 %1154
  %1156 = vrot.lane.b32.xlu0 %v364, 24
  %v1157 = vpop.permute.xlu0 %1156
  %1158 = vrot.lane.b32.xlu0 %v365, 24
  %v1159 = vpop.permute.xlu0 %1158
  %1160 = vrot.lane.b32.xlu0 %v366, 24
  %v1161 = vpop.permute.xlu0 %1160
  %1162 = vrot.lane.b32.xlu0 %v367, 24
  %v1163 = vpop.permute.xlu0 %1162
  %1164 = vrot.lane.b32.xlu0 %v368, 24
  %v1165 = vpop.permute.xlu0 %1164
  %1166 = vrot.lane.b32.xlu0 %v369, 24
  %v1167 = vpop.permute.xlu0 %1166
  %1168 = vrot.lane.b32.xlu0 %v370, 24
  %v1169 = vpop.permute.xlu0 %1168
  %1170 = vrot.lane.b32.xlu0 %v371, 24
  %v1171 = vpop.permute.xlu0 %1170
  %1236 = vrot.lane.b32.xlu0 %v372, 28
  %v1237 = vpop.permute.xlu0 %1236
  %1238 = vrot.lane.b32.xlu0 %v373, 28
  %v1239 = vpop.permute.xlu0 %1238
  %1240 = vrot.lane.b32.xlu0 %v374, 28
  %v1241 = vpop.permute.xlu0 %1240
  %1242 = vrot.lane.b32.xlu0 %v375, 28
  %v1243 = vpop.permute.xlu0 %1242
  %1244 = vrot.lane.b32.xlu0 %v376, 28
  %v1245 = vpop.permute.xlu0 %1244
  %1246 = vrot.lane.b32.xlu0 %v377, 28
  %v1247 = vpop.permute.xlu0 %1246
  %1248 = vrot.lane.b32.xlu0 %v378, 28
  %v1249 = vpop.permute.xlu0 %1248
  %1250 = vrot.lane.b32.xlu0 %v379, 28
  %v1251 = vpop.permute.xlu0 %1250
  %1252 = vrot.lane.b32.xlu0 %v380, 28
  %v1253 = vpop.permute.xlu0 %1252
  %1254 = vrot.lane.b32.xlu0 %v381, 28
  %v1255 = vpop.permute.xlu0 %1254
  %1256 = vrot.lane.b32.xlu0 %v382, 28
  %v1257 = vpop.permute.xlu0 %1256
  %1258 = vrot.lane.b32.xlu0 %v383, 28
  %v1259 = vpop.permute.xlu0 %1258
  %1260 = vrot.lane.b32.xlu0 %v384, 28
  %v1261 = vpop.permute.xlu0 %1260
  %1262 = vrot.lane.b32.xlu0 %v385, 28
  %v1263 = vpop.permute.xlu0 %1262
  %1264 = vrot.lane.b32.xlu0 %v386, 28
  %v1265 = vpop.permute.xlu0 %1264
  %1266 = vrot.lane.b32.xlu0 %v387, 28
  %v1267 = vpop.permute.xlu0 %1266
  %1268 = vrot.lane.b32.xlu0 %v388, 28
  %v1269 = vpop.permute.xlu0 %1268
  %1270 = vrot.lane.b32.xlu0 %v389, 28
  %v1271 = vpop.permute.xlu0 %1270
  %1272 = vrot.lane.b32.xlu0 %v390, 28
  %v1273 = vpop.permute.xlu0 %1272
  %1274 = vrot.lane.b32.xlu0 %v391, 28
  %v1275 = vpop.permute.xlu0 %1274
  %1276 = vrot.lane.b32.xlu0 %v392, 28
  %v1277 = vpop.permute.xlu0 %1276
  %1278 = vrot.lane.b32.xlu0 %v393, 28
  %v1279 = vpop.permute.xlu0 %1278
  %1280 = vrot.lane.b32.xlu0 %v394, 28
  %v1281 = vpop.permute.xlu0 %1280
  %1282 = vrot.lane.b32.xlu0 %v395, 28
  %v1283 = vpop.permute.xlu0 %1282
  %1284 = vrot.lane.b32.xlu0 %v396, 28
  %v1285 = vpop.permute.xlu0 %1284
  %1286 = vrot.lane.b32.xlu0 %v397, 28
  %v1287 = vpop.permute.xlu0 %1286
  %1288 = vrot.lane.b32.xlu0 %v398, 28
  %v1289 = vpop.permute.xlu0 %1288
  %1290 = vrot.lane.b32.xlu0 %v399, 28
  %v1291 = vpop.permute.xlu0 %1290
  %1292 = vrot.lane.b32.xlu0 %v400, 28
  %v1293 = vpop.permute.xlu0 %1292
  %1294 = vrot.lane.b32.xlu0 %v401, 28
  %v1295 = vpop.permute.xlu0 %1294
  %1296 = vrot.lane.b32.xlu0 %v402, 28
  %v1297 = vpop.permute.xlu0 %1296
  %1298 = vrot.lane.b32.xlu0 %v403, 28
  %v1299 = vpop.permute.xlu0 %1298
  %1364 = vrot.lane.b32.xlu0 %v404, 32
  %v1365 = vpop.permute.xlu0 %1364
  %1366 = vrot.lane.b32.xlu0 %v405, 32
  %v1367 = vpop.permute.xlu0 %1366
  %1368 = vrot.lane.b32.xlu0 %v406, 32
  %v1369 = vpop.permute.xlu0 %1368
  %1370 = vrot.lane.b32.xlu0 %v407, 32
  %v1371 = vpop.permute.xlu0 %1370
  %1372 = vrot.lane.b32.xlu0 %v408, 32
  %v1373 = vpop.permute.xlu0 %1372
  %1374 = vrot.lane.b32.xlu0 %v409, 32
  %v1375 = vpop.permute.xlu0 %1374
  %1376 = vrot.lane.b32.xlu0 %v410, 32
  %v1377 = vpop.permute.xlu0 %1376
  %1378 = vrot.lane.b32.xlu0 %v411, 32
  %v1379 = vpop.permute.xlu0 %1378
  %1380 = vrot.lane.b32.xlu0 %v412, 32
  %v1381 = vpop.permute.xlu0 %1380
  %1382 = vrot.lane.b32.xlu0 %v413, 32
  %v1383 = vpop.permute.xlu0 %1382
  %1384 = vrot.lane.b32.xlu0 %v414, 32
  %v1385 = vpop.permute.xlu0 %1384
  %1386 = vrot.lane.b32.xlu0 %v415, 32
  %v1387 = vpop.permute.xlu0 %1386
  %1388 = vrot.lane.b32.xlu0 %v416, 32
  %v1389 = vpop.permute.xlu0 %1388
  %1390 = vrot.lane.b32.xlu0 %v417, 32
  %v1391 = vpop.permute.xlu0 %1390
  %1392 = vrot.lane.b32.xlu0 %v418, 32
  %v1393 = vpop.permute.xlu0 %1392
  %1394 = vrot.lane.b32.xlu0 %v419, 32
  %v1395 = vpop.permute.xlu0 %1394
  %1396 = vrot.lane.b32.xlu0 %v420, 32
  %v1397 = vpop.permute.xlu0 %1396
  %1398 = vrot.lane.b32.xlu0 %v421, 32
  %v1399 = vpop.permute.xlu0 %1398
  %1400 = vrot.lane.b32.xlu0 %v422, 32
  %v1401 = vpop.permute.xlu0 %1400
  %1402 = vrot.lane.b32.xlu0 %v423, 32
  %v1403 = vpop.permute.xlu0 %1402
  %1404 = vrot.lane.b32.xlu0 %v424, 32
  %v1405 = vpop.permute.xlu0 %1404
  %1406 = vrot.lane.b32.xlu0 %v425, 32
  %v1407 = vpop.permute.xlu0 %1406
  %1408 = vrot.lane.b32.xlu0 %v426, 32
  %v1409 = vpop.permute.xlu0 %1408
  %1410 = vrot.lane.b32.xlu0 %v427, 32
  %v1411 = vpop.permute.xlu0 %1410
  %1412 = vrot.lane.b32.xlu0 %v428, 32
  %v1413 = vpop.permute.xlu0 %1412
  %1414 = vrot.lane.b32.xlu0 %v429, 32
  %v1415 = vpop.permute.xlu0 %1414
  %1416 = vrot.lane.b32.xlu0 %v430, 32
  %v1417 = vpop.permute.xlu0 %1416
  %1418 = vrot.lane.b32.xlu0 %v431, 32
  %v1419 = vpop.permute.xlu0 %1418
  %1420 = vrot.lane.b32.xlu0 %v432, 32
  %v1421 = vpop.permute.xlu0 %1420
  %1422 = vrot.lane.b32.xlu0 %v433, 32
  %v1423 = vpop.permute.xlu0 %1422
  %1424 = vrot.lane.b32.xlu0 %v434, 32
  %v1425 = vpop.permute.xlu0 %1424
  %1426 = vrot.lane.b32.xlu0 %v435, 32
  %v1427 = vpop.permute.xlu0 %1426
  %v1460 = vsel %vm26, %v147, %v469
  %v1461 = vsel %vm26, %v148, %v471
  %v1462 = vsel %vm26, %v149, %v473
  %v1463 = vsel %vm26, %v150, %v475
  %v1464 = vsel %vm26, %v151, %v477
  %v1465 = vsel %vm26, %v152, %v479
  %v1466 = vsel %vm26, %v153, %v481
  %v1467 = vsel %vm26, %v154, %v483
  %v1468 = vsel %vm26, %v155, %v485
  %v1469 = vsel %vm26, %v156, %v487
  %v1470 = vsel %vm26, %v157, %v489
  %v1471 = vsel %vm26, %v158, %v491
  %v1472 = vsel %vm26, %v159, %v493
  %v1473 = vsel %vm26, %v160, %v495
  %v1474 = vsel %vm26, %v161, %v497
  %v1475 = vsel %vm26, %v162, %v499
  %v1476 = vsel %vm26, %v163, %v501
  %v1477 = vsel %vm26, %v164, %v503
  %v1478 = vsel %vm26, %v165, %v505
  %v1479 = vsel %vm26, %v166, %v507
  %v1480 = vsel %vm26, %v167, %v509
  %v1481 = vsel %vm26, %v168, %v511
  %v1482 = vsel %vm26, %v169, %v513
  %v1483 = vsel %vm26, %v170, %v515
  %v1484 = vsel %vm26, %v171, %v517
  %v1485 = vsel %vm26, %v172, %v519
  %v1486 = vsel %vm26, %v173, %v521
  %v1487 = vsel %vm26, %v174, %v523
  %v1488 = vsel %vm26, %v175, %v525
  %v1489 = vsel %vm26, %v176, %v527
  %v1490 = vsel %vm26, %v177, %v529
  %v1491 = vsel %vm26, %v178, %v531
  %vm1492 = vcmask 64512
  %v1493 = vsel %vm1492, %v1460, %v597
  %v1494 = vsel %vm1492, %v1461, %v599
  %v1495 = vsel %vm1492, %v1462, %v601
  %v1496 = vsel %vm1492, %v1463, %v603
  %v1497 = vsel %vm1492, %v1464, %v605
  %v1498 = vsel %vm1492, %v1465, %v607
  %v1499 = vsel %vm1492, %v1466, %v609
  %v1500 = vsel %vm1492, %v1467, %v611
  %v1501 = vsel %vm1492, %v1468, %v613
  %v1502 = vsel %vm1492, %v1469, %v615
  %v1503 = vsel %vm1492, %v1470, %v617
  %v1504 = vsel %vm1492, %v1471, %v619
  %v1505 = vsel %vm1492, %v1472, %v621
  %v1506 = vsel %vm1492, %v1473, %v623
  %v1507 = vsel %vm1492, %v1474, %v625
  %v1508 = vsel %vm1492, %v1475, %v627
  %v1509 = vsel %vm1492, %v1476, %v629
  %v1510 = vsel %vm1492, %v1477, %v631
  %v1511 = vsel %vm1492, %v1478, %v633
  %v1512 = vsel %vm1492, %v1479, %v635
  %v1513 = vsel %vm1492, %v1480, %v637
  %v1514 = vsel %vm1492, %v1481, %v639
  %v1515 = vsel %vm1492, %v1482, %v641
  %v1516 = vsel %vm1492, %v1483, %v643
  %v1517 = vsel %vm1492, %v1484, %v645
  %v1518 = vsel %vm1492, %v1485, %v647
  %v1519 = vsel %vm1492, %v1486, %v649
  %v1520 = vsel %vm1492, %v1487, %v651
  %v1521 = vsel %vm1492, %v1488, %v653
  %v1522 = vsel %vm1492, %v1489, %v655
  %v1523 = vsel %vm1492, %v1490, %v657
  %v1524 = vsel %vm1492, %v1491, %v659
  %vm1525 = vcmask 97280
  %v1526 = vsel %vm1525, %v1493, %v725
  %v1527 = vsel %vm1525, %v1494, %v727
  %v1528 = vsel %vm1525, %v1495, %v729
  %v1529 = vsel %vm1525, %v1496, %v731
  %v1530 = vsel %vm1525, %v1497, %v733
  %v1531 = vsel %vm1525, %v1498, %v735
  %v1532 = vsel %vm1525, %v1499, %v737
  %v1533 = vsel %vm1525, %v1500, %v739
  %v1534 = vsel %vm1525, %v1501, %v741
  %v1535 = vsel %vm1525, %v1502, %v743
  %v1536 = vsel %vm1525, %v1503, %v745
  %v1537 = vsel %vm1525, %v1504, %v747
  %v1538 = vsel %vm1525, %v1505, %v749
  %v1539 = vsel %vm1525, %v1506, %v751
  %v1540 = vsel %vm1525, %v1507, %v753
  %v1541 = vsel %vm1525, %v1508, %v755
  %v1542 = vsel %vm1525, %v1509, %v757
  %v1543 = vsel %vm1525, %v1510, %v759
  %v1544 = vsel %vm1525, %v1511, %v761
  %v1545 = vsel %vm1525, %v1512, %v763
  %v1546 = vsel %vm1525, %v1513, %v765
  %v1547 = vsel %vm1525, %v1514, %v767
  %v1548 = vsel %vm1525, %v1515, %v769
  %v1549 = vsel %vm1525, %v1516, %v771
  %v1550 = vsel %vm1525, %v1517, %v773
  %v1551 = vsel %vm1525, %v1518, %v775
  %v1552 = vsel %vm1525, %v1519, %v777
  %v1553 = vsel %vm1525, %v1520, %v779
  %v1554 = vsel %vm1525, %v1521, %v781
  %v1555 = vsel %vm1525, %v1522, %v783
  %v1556 = vsel %vm1525, %v1523, %v785
  %v1557 = vsel %vm1525, %v1524, %v787
  %vm1558 = vcmask 130048
  %v1559 = vsel %vm1558, %v1526, %v853
  %v1560 = vsel %vm1558, %v1527, %v855
  %v1561 = vsel %vm1558, %v1528, %v857
  %v1562 = vsel %vm1558, %v1529, %v859
  %v1563 = vsel %vm1558, %v1530, %v861
  %v1564 = vsel %vm1558, %v1531, %v863
  %v1565 = vsel %vm1558, %v1532, %v865
  %v1566 = vsel %vm1558, %v1533, %v867
  %v1567 = vsel %vm1558, %v1534, %v869
  %v1568 = vsel %vm1558, %v1535, %v871
  %v1569 = vsel %vm1558, %v1536, %v873
  %v1570 = vsel %vm1558, %v1537, %v875
  %v1571 = vsel %vm1558, %v1538, %v877
  %v1572 = vsel %vm1558, %v1539, %v879
  %v1573 = vsel %vm1558, %v1540, %v881
  %v1574 = vsel %vm1558, %v1541, %v883
  %v1575 = vsel %vm1558, %v1542, %v885
  %v1576 = vsel %vm1558, %v1543, %v887
  %v1577 = vsel %vm1558, %v1544, %v889
  %v1578 = vsel %vm1558, %v1545, %v891
  %v1579 = vsel %vm1558, %v1546, %v893
  %v1580 = vsel %vm1558, %v1547, %v895
  %v1581 = vsel %vm1558, %v1548, %v897
  %v1582 = vsel %vm1558, %v1549, %v899
  %v1583 = vsel %vm1558, %v1550, %v901
  %v1584 = vsel %vm1558, %v1551, %v903
  %v1585 = vsel %vm1558, %v1552, %v905
  %v1586 = vsel %vm1558, %v1553, %v907
  %v1587 = vsel %vm1558, %v1554, %v909
  %v1588 = vsel %vm1558, %v1555, %v911
  %v1589 = vsel %vm1558, %v1556, %v913
  %v1590 = vsel %vm1558, %v1557, %v915
  %vm1591 = vcmask 162816
  %v1592 = vsel %vm1591, %v1559, %v981
  %v1593 = vsel %vm1591, %v1560, %v983
  %v1594 = vsel %vm1591, %v1561, %v985
  %v1595 = vsel %vm1591, %v1562, %v987
  %v1596 = vsel %vm1591, %v1563, %v989
  %v1597 = vsel %vm1591, %v1564, %v991
  %v1598 = vsel %vm1591, %v1565, %v993
  %v1599 = vsel %vm1591, %v1566, %v995
  %v1600 = vsel %vm1591, %v1567, %v997
  %v1601 = vsel %vm1591, %v1568, %v999
  %v1602 = vsel %vm1591, %v1569, %v1001
  %v1603 = vsel %vm1591, %v1570, %v1003
  %v1604 = vsel %vm1591, %v1571, %v1005
  %v1605 = vsel %vm1591, %v1572, %v1007
  %v1606 = vsel %vm1591, %v1573, %v1009
  %v1607 = vsel %vm1591, %v1574, %v1011
  %v1608 = vsel %vm1591, %v1575, %v1013
  %v1609 = vsel %vm1591, %v1576, %v1015
  %v1610 = vsel %vm1591, %v1577, %v1017
  %v1611 = vsel %vm1591, %v1578, %v1019
  %v1612 = vsel %vm1591, %v1579, %v1021
  %v1613 = vsel %vm1591, %v1580, %v1023
  %v1614 = vsel %vm1591, %v1581, %v1025
  %v1615 = vsel %vm1591, %v1582, %v1027
  %v1616 = vsel %vm1591, %v1583, %v1029
  %v1617 = vsel %vm1591, %v1584, %v1031
  %v1618 = vsel %vm1591, %v1585, %v1033
  %v1619 = vsel %vm1591, %v1586, %v1035
  %v1620 = vsel %vm1591, %v1587, %v1037
  %v1621 = vsel %vm1591, %v1588, %v1039
  %v1622 = vsel %vm1591, %v1589, %v1041
  %v1623 = vsel %vm1591, %v1590, %v1043
  %vm1624 = vcmask 195584
  %v1625 = vsel %vm1624, %v1592, %v1109
  %v1626 = vsel %vm1624, %v1593, %v1111
  %v1627 = vsel %vm1624, %v1594, %v1113
  %v1628 = vsel %vm1624, %v1595, %v1115
  %v1629 = vsel %vm1624, %v1596, %v1117
  %v1630 = vsel %vm1624, %v1597, %v1119
  %v1631 = vsel %vm1624, %v1598, %v1121
  %v1632 = vsel %vm1624, %v1599, %v1123
  %v1633 = vsel %vm1624, %v1600, %v1125
  %v1634 = vsel %vm1624, %v1601, %v1127
  %v1635 = vsel %vm1624, %v1602, %v1129
  %v1636 = vsel %vm1624, %v1603, %v1131
  %v1637 = vsel %vm1624, %v1604, %v1133
  %v1638 = vsel %vm1624, %v1605, %v1135
  %v1639 = vsel %vm1624, %v1606, %v1137
  %v1640 = vsel %vm1624, %v1607, %v1139
  %v1641 = vsel %vm1624, %v1608, %v1141
  %v1642 = vsel %vm1624, %v1609, %v1143
  %v1643 = vsel %vm1624, %v1610, %v1145
  %v1644 = vsel %vm1624, %v1611, %v1147
  %v1645 = vsel %vm1624, %v1612, %v1149
  %v1646 = vsel %vm1624, %v1613, %v1151
  %v1647 = vsel %vm1624, %v1614, %v1153
  %v1648 = vsel %vm1624, %v1615, %v1155
  %v1649 = vsel %vm1624, %v1616, %v1157
  %v1650 = vsel %vm1624, %v1617, %v1159
  %v1651 = vsel %vm1624, %v1618, %v1161
  %v1652 = vsel %vm1624, %v1619, %v1163
  %v1653 = vsel %vm1624, %v1620, %v1165
  %v1654 = vsel %vm1624, %v1621, %v1167
  %v1655 = vsel %vm1624, %v1622, %v1169
  %v1656 = vsel %vm1624, %v1623, %v1171
  %vm1657 = vcmask 228352
  %v1658 = vsel %vm1657, %v1625, %v1237
  %v1659 = vsel %vm1657, %v1626, %v1239
  %v1660 = vsel %vm1657, %v1627, %v1241
  %v1661 = vsel %vm1657, %v1628, %v1243
  %v1662 = vsel %vm1657, %v1629, %v1245
  %v1663 = vsel %vm1657, %v1630, %v1247
  %v1664 = vsel %vm1657, %v1631, %v1249
  %v1665 = vsel %vm1657, %v1632, %v1251
  %v1666 = vsel %vm1657, %v1633, %v1253
  %v1667 = vsel %vm1657, %v1634, %v1255
  %v1668 = vsel %vm1657, %v1635, %v1257
  %v1669 = vsel %vm1657, %v1636, %v1259
  %v1670 = vsel %vm1657, %v1637, %v1261
  %v1671 = vsel %vm1657, %v1638, %v1263
  %v1672 = vsel %vm1657, %v1639, %v1265
  %v1673 = vsel %vm1657, %v1640, %v1267
  %v1674 = vsel %vm1657, %v1641, %v1269
  %v1675 = vsel %vm1657, %v1642, %v1271
  %v1676 = vsel %vm1657, %v1643, %v1273
  %v1677 = vsel %vm1657, %v1644, %v1275
  %v1678 = vsel %vm1657, %v1645, %v1277
  %v1679 = vsel %vm1657, %v1646, %v1279
  %v1680 = vsel %vm1657, %v1647, %v1281
  %v1681 = vsel %vm1657, %v1648, %v1283
  %v1682 = vsel %vm1657, %v1649, %v1285
  %v1683 = vsel %vm1657, %v1650, %v1287
  %v1684 = vsel %vm1657, %v1651, %v1289
  %v1685 = vsel %vm1657, %v1652, %v1291
  %v1686 = vsel %vm1657, %v1653, %v1293
  %v1687 = vsel %vm1657, %v1654, %v1295
  %v1688 = vsel %vm1657, %v1655, %v1297
  %v1689 = vsel %vm1657, %v1656, %v1299
  %vm1690 = vcmask 261120
  %v1691 = vsel %vm1690, %v1658, %v1365
  %v1692 = vsel %vm1690, %v1659, %v1367
  %v1693 = vsel %vm1690, %v1660, %v1369
  %v1694 = vsel %vm1690, %v1661, %v1371
  %v1695 = vsel %vm1690, %v1662, %v1373
  %v1696 = vsel %vm1690, %v1663, %v1375
  %v1697 = vsel %vm1690, %v1664, %v1377
  %v1698 = vsel %vm1690, %v1665, %v1379
  %v1699 = vsel %vm1690, %v1666, %v1381
  %v1700 = vsel %vm1690, %v1667, %v1383
  %v1701 = vsel %vm1690, %v1668, %v1385
  %v1702 = vsel %vm1690, %v1669, %v1387
  %v1703 = vsel %vm1690, %v1670, %v1389
  %v1704 = vsel %vm1690, %v1671, %v1391
  %v1705 = vsel %vm1690, %v1672, %v1393
  %v1706 = vsel %vm1690, %v1673, %v1395
  %v1707 = vsel %vm1690, %v1674, %v1397
  %v1708 = vsel %vm1690, %v1675, %v1399
  %v1709 = vsel %vm1690, %v1676, %v1401
  %v1710 = vsel %vm1690, %v1677, %v1403
  %v1711 = vsel %vm1690, %v1678, %v1405
  %v1712 = vsel %vm1690, %v1679, %v1407
  %v1713 = vsel %vm1690, %v1680, %v1409
  %v1714 = vsel %vm1690, %v1681, %v1411
  %v1715 = vsel %vm1690, %v1682, %v1413
  %v1716 = vsel %vm1690, %v1683, %v1415
  %v1717 = vsel %vm1690, %v1684, %v1417
  %v1718 = vsel %vm1690, %v1685, %v1419
  %v1719 = vsel %vm1690, %v1686, %v1421
  %v1720 = vsel %vm1690, %v1687, %v1423
  %v1721 = vsel %vm1690, %v1688, %v1425
  %v1722 = vsel %vm1690, %v1689, %v1427
  %v1723 = vld [vmem:[%s1] sm:$0xff]
  %v1724 = vld [vmem:[%s1 + $0x8] sm:$0xff]
  %v1725 = vld [vmem:[%s1 + $0x10] sm:$0xff]
  %v1726 = vld [vmem:[%s1 + $0x18] sm:$0xff]
  %v1727 = vld [vmem:[%s1 + $0x20] sm:$0xf]
  %vm1728 = vcmask 293888
  %v1730 = vsel %vm1728, %v1691, 0
  %v1733 = vsel %vm1728, %v1692, 0
  %v1736 = vsel %vm1728, %v1693, 0
  %v1739 = vsel %vm1728, %v1694, 0
  %v1742 = vsel %vm1728, %v1695, 0
  %v1745 = vsel %vm1728, %v1696, 0
  %v1748 = vsel %vm1728, %v1697, 0
  %v1751 = vsel %vm1728, %v1698, 0
  %v1754 = vsel %vm1728, %v1699, 0
  %v1757 = vsel %vm1728, %v1700, 0
  %v1760 = vsel %vm1728, %v1701, 0
  %v1763 = vsel %vm1728, %v1702, 0
  %v1766 = vsel %vm1728, %v1703, 0
  %v1769 = vsel %vm1728, %v1704, 0
  %v1772 = vsel %vm1728, %v1705, 0
  %v1775 = vsel %vm1728, %v1706, 0
  %v1778 = vsel %vm1728, %v1707, 0
  %v1781 = vsel %vm1728, %v1708, 0
  %v1784 = vsel %vm1728, %v1709, 0
  %v1787 = vsel %vm1728, %v1710, 0
  %v1790 = vsel %vm1728, %v1711, 0
  %v1793 = vsel %vm1728, %v1712, 0
  %v1796 = vsel %vm1728, %v1713, 0
  %v1799 = vsel %vm1728, %v1714, 0
  %v1802 = vsel %vm1728, %v1715, 0
  %v1805 = vsel %vm1728, %v1716, 0
  %v1808 = vsel %vm1728, %v1717, 0
  %v1811 = vsel %vm1728, %v1718, 0
  %v1814 = vsel %vm1728, %v1719, 0
  %v1817 = vsel %vm1728, %v1720, 0
  %v1820 = vsel %vm1728, %v1721, 0
  %v1823 = vsel %vm1728, %v1722, 0
  %vm1825 = vcmask 1043456
  %v1827 = vsel %vm1825, %v1727, 0
  %1829 = vmatprep.subr.mxu0 0.0
  %1830 = vmatpush1.msra.mxu0 %v1723
  %1831 = vmatprep.subr.mxu0 0.0
  %1832 = vmatpush1.msra.mxu0 %v1724
  %1833 = vmatprep.subr.mxu0 0.0
  %1834 = vmatpush1.msra.mxu0 %v1725
  %1835 = vmatprep.subr.mxu0 0.0
  %1836 = vmatpush1.msra.mxu0 %v1726
  %1837 = vmatprep.subr.mxu0 0.0
  %1838 = vmatpush1.msra.mxu0 %v1827
  %1839 = vmatprep.subr.mxu0 0.0
  %1840 = vmatpush1.msra.mxu0 0.0
  %1841 = vmatprep.subr.mxu0 0.0
  %1842 = vmatpush1.msra.mxu0 0.0
  %1843 = vmatprep.subr.mxu0 0.0
  %1844 = vmatpush1.msra.mxu0 0.0
  %1845 = vmatprep.subr.mxu0 0.0
  %1846 = vmatpush1.msra.mxu0 0.0
  %1847 = vmatprep.subr.mxu0 0.0
  %1848 = vmatpush1.msra.mxu0 0.0
  %1849 = vmatprep.subr.mxu0 0.0
  %1850 = vmatpush1.msra.mxu0 0.0
  %1851 = vmatprep.subr.mxu0 0.0
  %1852 = vmatpush1.msra.mxu0 0.0
  %1853 = vmatprep.subr.mxu0 0.0
  %1854 = vmatpush1.msra.mxu0 0.0
  %1855 = vmatprep.subr.mxu0 0.0
  %1856 = vmatpush1.msra.mxu0 0.0
  %1857 = vmatprep.subr.mxu0 0.0
  %1858 = vmatpush1.msra.mxu0 0.0
  %1859 = vmatprep.subr.mxu0 0.0
  %1860 = vmatpush1.msra.mxu0 0.0
  %1861 = vmatprep.subr.mxu0 0.0
  %1862 = vmatpush1.msra.mxu0 0.0
  %1863 = vmatprep.subr.mxu0 0.0
  %1864 = vmatpush1.msra.mxu0 0.0
  %1865 = vmatprep.subr.mxu0 0.0
  %1866 = vmatpush1.msra.mxu0 0.0
  %1867 = vmatprep.subr.mxu0 0.0
  %1868 = vmatpush1.msra.mxu0 0.0
  %1869 = vmatprep.subr.mxu0 0.0
  %1870 = vmatpush1.msra.mxu0 0.0
  %1871 = vmatprep.subr.mxu0 0.0
  %1872 = vmatpush1.msra.mxu0 0.0
  %1873 = vmatprep.subr.mxu0 0.0
  %1874 = vmatpush1.msra.mxu0 0.0
  %1875 = vmatprep.subr.mxu0 0.0
  %1876 = vmatpush1.msra.mxu0 0.0
  %1877 = vmatprep.subr.mxu0 0.0
  %1878 = vmatpush1.msra.mxu0 0.0
  %1879 = vmatprep.subr.mxu0 0.0
  %1880 = vmatpush1.msra.mxu0 0.0
  %1881 = vmatprep.subr.mxu0 0.0
  %1882 = vmatpush1.msra.mxu0 0.0
  %1883 = vmatprep.subr.mxu0 0.0
  %1884 = vmatpush1.msra.mxu0 0.0
  %1885 = vmatprep.subr.mxu0 0.0
  %1886 = vmatpush1.msra.mxu0 0.0
  %1887 = vmatprep.subr.mxu0 0.0
  %1888 = vmatpush1.msra.mxu0 0.0
  %1889 = vmatprep.subr.mxu0 0.0
  %1890 = vmatpush1.msra.mxu0 0.0
  %1891 = vmatprep.subr.mxu0 0.0
  %1892 = vmatpush1.msra.mxu0 0.0
  %1893 = vmatprep.mubr.f32.mxu0 0.0
  %1894 = vmatmul.mubr.f32.gmra.mrb[0].mxu0 %v1730
  %v1895 = vpop.f32.mrb[0].mxu0
  %v1896 = vadd.f32 0.0, %v1895
  %v1897 = vpop.f32.mrb[0].mxu0
  %1898 = vmatprep.mubr.f32.mxu0 0.0
  %1899 = vmatmul.mubr.f32.gmra.mrb[0].mxu0 %v1733
  %v1900 = vpop.f32.mrb[0].mxu0
  %v1901 = vadd.f32 0.0, %v1900
  %v1902 = vpop.f32.mrb[0].mxu0
  %1903 = vmatprep.mubr.f32.mxu0 0.0
  %1904 = vmatmul.mubr.f32.gmra.mrb[0].mxu0 %v1736
  %v1905 = vpop.f32.mrb[0].mxu0
  %v1906 = vadd.f32 0.0, %v1905
  %v1907 = vpop.f32.mrb[0].mxu0
  %1908 = vmatprep.mubr.f32.mxu0 0.0
  %1909 = vmatmul.mubr.f32.gmra.mrb[0].mxu0 %v1739
  %v1910 = vpop.f32.mrb[0].mxu0
  %v1911 = vadd.f32 0.0, %v1910
  %v1912 = vpop.f32.mrb[0].mxu0
  %1913 = vmatprep.mubr.f32.mxu0 0.0
  %1914 = vmatmul.mubr.f32.gmra.mrb[0].mxu0 %v1742
  %v1915 = vpop.f32.mrb[0].mxu0
  %v1916 = vadd.f32 0.0, %v1915
  %v1917 = vpop.f32.mrb[0].mxu0
  %1918 = vmatprep.mubr.f32.mxu0 0.0
  %1919 = vmatmul.mubr.f32.gmra.mrb[0].mxu0 %v1745
  %v1920 = vpop.f32.mrb[0].mxu0
  %v1921 = vadd.f32 0.0, %v1920
  %v1922 = vpop.f32.mrb[0].mxu0
  %1923 = vmatprep.mubr.f32.mxu0 0.0
  %1924 = vmatmul.mubr.f32.gmra.mrb[0].mxu0 %v1748
  %v1925 = vpop.f32.mrb[0].mxu0
  %v1926 = vadd.f32 0.0, %v1925
  %v1927 = vpop.f32.mrb[0].mxu0
  %1928 = vmatprep.mubr.f32.mxu0 0.0
  %1929 = vmatmul.mubr.f32.gmra.mrb[0].mxu0 %v1751
  %v1930 = vpop.f32.mrb[0].mxu0
  %v1931 = vadd.f32 0.0, %v1930
  %v1932 = vpop.f32.mrb[0].mxu0
  %1933 = vmatprep.mubr.f32.mxu0 0.0
  %1934 = vmatmul.mubr.f32.gmra.mrb[0].mxu0 %v1754
  %v1935 = vpop.f32.mrb[0].mxu0
  %v1936 = vadd.f32 0.0, %v1935
  %v1937 = vpop.f32.mrb[0].mxu0
  %1938 = vmatprep.mubr.f32.mxu0 0.0
  %1939 = vmatmul.mubr.f32.gmra.mrb[0].mxu0 %v1757
  %v1940 = vpop.f32.mrb[0].mxu0
  %v1941 = vadd.f32 0.0, %v1940
  %v1942 = vpop.f32.mrb[0].mxu0
  %1943 = vmatprep.mubr.f32.mxu0 0.0
  %1944 = vmatmul.mubr.f32.gmra.mrb[0].mxu0 %v1760
  %v1945 = vpop.f32.mrb[0].mxu0
  %v1946 = vadd.f32 0.0, %v1945
  %v1947 = vpop.f32.mrb[0].mxu0
  %1948 = vmatprep.mubr.f32.mxu0 0.0
  %1949 = vmatmul.mubr.f32.gmra.mrb[0].mxu0 %v1763
  %v1950 = vpop.f32.mrb[0].mxu0
  %v1951 = vadd.f32 0.0, %v1950
  %v1952 = vpop.f32.mrb[0].mxu0
  %1953 = vmatprep.mubr.f32.mxu0 0.0
  %1954 = vmatmul.mubr.f32.gmra.mrb[0].mxu0 %v1766
  %v1955 = vpop.f32.mrb[0].mxu0
  %v1956 = vadd.f32 0.0, %v1955
  %v1957 = vpop.f32.mrb[0].mxu0
  %1958 = vmatprep.mubr.f32.mxu0 0.0
  %1959 = vmatmul.mubr.f32.gmra.mrb[0].mxu0 %v1769
  %v1960 = vpop.f32.mrb[0].mxu0
  %v1961 = vadd.f32 0.0, %v1960
  %v1962 = vpop.f32.mrb[0].mxu0
  %1963 = vmatprep.mubr.f32.mxu0 0.0
  %1964 = vmatmul.mubr.f32.gmra.mrb[0].mxu0 %v1772
  %v1965 = vpop.f32.mrb[0].mxu0
  %v1966 = vadd.f32 0.0, %v1965
  %v1967 = vpop.f32.mrb[0].mxu0
  %1968 = vmatprep.mubr.f32.mxu0 0.0
  %1969 = vmatmul.mubr.f32.gmra.mrb[0].mxu0 %v1775
  %v1970 = vpop.f32.mrb[0].mxu0
  %v1971 = vadd.f32 0.0, %v1970
  %v1972 = vpop.f32.mrb[0].mxu0
  %1973 = vmatprep.mubr.f32.mxu0 0.0
  %1974 = vmatmul.mubr.f32.gmra.mrb[0].mxu0 %v1778
  %v1975 = vpop.f32.mrb[0].mxu0
  %v1976 = vadd.f32 0.0, %v1975
  %v1977 = vpop.f32.mrb[0].mxu0
  %1978 = vmatprep.mubr.f32.mxu0 0.0
  %1979 = vmatmul.mubr.f32.gmra.mrb[0].mxu0 %v1781
  %v1980 = vpop.f32.mrb[0].mxu0
  %v1981 = vadd.f32 0.0, %v1980
  %v1982 = vpop.f32.mrb[0].mxu0
  %1983 = vmatprep.mubr.f32.mxu0 0.0
  %1984 = vmatmul.mubr.f32.gmra.mrb[0].mxu0 %v1784
  %v1985 = vpop.f32.mrb[0].mxu0
  %v1986 = vadd.f32 0.0, %v1985
  %v1987 = vpop.f32.mrb[0].mxu0
  %1988 = vmatprep.mubr.f32.mxu0 0.0
  %1989 = vmatmul.mubr.f32.gmra.mrb[0].mxu0 %v1787
  %v1990 = vpop.f32.mrb[0].mxu0
  %v1991 = vadd.f32 0.0, %v1990
  %v1992 = vpop.f32.mrb[0].mxu0
  %1993 = vmatprep.mubr.f32.mxu0 0.0
  %1994 = vmatmul.mubr.f32.gmra.mrb[0].mxu0 %v1790
  %v1995 = vpop.f32.mrb[0].mxu0
  %v1996 = vadd.f32 0.0, %v1995
  %v1997 = vpop.f32.mrb[0].mxu0
  %1998 = vmatprep.mubr.f32.mxu0 0.0
  %1999 = vmatmul.mubr.f32.gmra.mrb[0].mxu0 %v1793
  %v2000 = vpop.f32.mrb[0].mxu0
  %v2001 = vadd.f32 0.0, %v2000
  %v2002 = vpop.f32.mrb[0].mxu0
  %2003 = vmatprep.mubr.f32.mxu0 0.0
  %2004 = vmatmul.mubr.f32.gmra.mrb[0].mxu0 %v1796
  %v2005 = vpop.f32.mrb[0].mxu0
  %v2006 = vadd.f32 0.0, %v2005
  %v2007 = vpop.f32.mrb[0].mxu0
  %2008 = vmatprep.mubr.f32.mxu0 0.0
  %2009 = vmatmul.mubr.f32.gmra.mrb[0].mxu0 %v1799
  %v2010 = vpop.f32.mrb[0].mxu0
  %v2011 = vadd.f32 0.0, %v2010
  %v2012 = vpop.f32.mrb[0].mxu0
  %2013 = vmatprep.mubr.f32.mxu0 0.0
  %2014 = vmatmul.mubr.f32.gmra.mrb[0].mxu0 %v1802
  %v2015 = vpop.f32.mrb[0].mxu0
  %v2016 = vadd.f32 0.0, %v2015
  %v2017 = vpop.f32.mrb[0].mxu0
  %2018 = vmatprep.mubr.f32.mxu0 0.0
  %2019 = vmatmul.mubr.f32.gmra.mrb[0].mxu0 %v1805
  %v2020 = vpop.f32.mrb[0].mxu0
  %v2021 = vadd.f32 0.0, %v2020
  %v2022 = vpop.f32.mrb[0].mxu0
  %2023 = vmatprep.mubr.f32.mxu0 0.0
  %2024 = vmatmul.mubr.f32.gmra.mrb[0].mxu0 %v1808
  %v2025 = vpop.f32.mrb[0].mxu0
  %v2026 = vadd.f32 0.0, %v2025
  %v2027 = vpop.f32.mrb[0].mxu0
  %2028 = vmatprep.mubr.f32.mxu0 0.0
  %2029 = vmatmul.mubr.f32.gmra.mrb[0].mxu0 %v1811
  %v2030 = vpop.f32.mrb[0].mxu0
  %v2031 = vadd.f32 0.0, %v2030
  %v2032 = vpop.f32.mrb[0].mxu0
  %2033 = vmatprep.mubr.f32.mxu0 0.0
  %2034 = vmatmul.mubr.f32.gmra.mrb[0].mxu0 %v1814
  %v2035 = vpop.f32.mrb[0].mxu0
  %v2036 = vadd.f32 0.0, %v2035
  %v2037 = vpop.f32.mrb[0].mxu0
  %2038 = vmatprep.mubr.f32.mxu0 0.0
  %2039 = vmatmul.mubr.f32.gmra.mrb[0].mxu0 %v1817
  %v2040 = vpop.f32.mrb[0].mxu0
  %v2041 = vadd.f32 0.0, %v2040
  %v2042 = vpop.f32.mrb[0].mxu0
  %2043 = vmatprep.mubr.f32.mxu0 0.0
  %2044 = vmatmul.mubr.f32.gmra.mrb[0].mxu0 %v1820
  %v2045 = vpop.f32.mrb[0].mxu0
  %v2046 = vadd.f32 0.0, %v2045
  %v2047 = vpop.f32.mrb[0].mxu0
  %2048 = vmatprep.mubr.f32.mxu0 0.0
  %2049 = vmatmul.mubr.f32.gmra.mrb[0].mxu0 %v1823
  %v2050 = vpop.f32.mrb[0].mxu0
  %v2051 = vadd.f32 0.0, %v2050
  %v2052 = vpop.f32.mrb[0].mxu0
  %2053 = vdwg.mxu0
  %2054 = vst.msk [vmem:[#allocation4] sm:$0xff] %vm1492, %v1896
  %2055 = vst.msk [vmem:[#allocation4 + $0x8] sm:$0xff] %vm1492, %v1901
  %2056 = vst.msk [vmem:[#allocation4 + $0x10] sm:$0xff] %vm1492, %v1906
  %2057 = vst.msk [vmem:[#allocation4 + $0x18] sm:$0xff] %vm1492, %v1911
  %2058 = vst.msk [vmem:[#allocation4 + $0x20] sm:$0xff] %vm1492, %v1916
  %2059 = vst.msk [vmem:[#allocation4 + $0x28] sm:$0xff] %vm1492, %v1921
  %2060 = vst.msk [vmem:[#allocation4 + $0x30] sm:$0xff] %vm1492, %v1926
  %2061 = vst.msk [vmem:[#allocation4 + $0x38] sm:$0xff] %vm1492, %v1931
  %2062 = vst.msk [vmem:[#allocation4 + $0x40] sm:$0xff] %vm1492, %v1936
  %2063 = vst.msk [vmem:[#allocation4 + $0x48] sm:$0xff] %vm1492, %v1941
  %2064 = vst.msk [vmem:[#allocation4 + $0x50] sm:$0xff] %vm1492, %v1946
  %2065 = vst.msk [vmem:[#allocation4 + $0x58] sm:$0xff] %vm1492, %v1951
  %2066 = vst.msk [vmem:[#allocation4 + $0x60] sm:$0xff] %vm1492, %v1956
  %2067 = vst.msk [vmem:[#allocation4 + $0x68] sm:$0xff] %vm1492, %v1961
  %2068 = vst.msk [vmem:[#allocation4 + $0x70] sm:$0xff] %vm1492, %v1966
  %2069 = vst.msk [vmem:[#allocation4 + $0x78] sm:$0xff] %vm1492, %v1971
  %2070 = vst.msk [vmem:[#allocation4 + $0x80] sm:$0xff] %vm1492, %v1976
  %2071 = vst.msk [vmem:[#allocation4 + $0x88] sm:$0xff] %vm1492, %v1981
  %2072 = vst.msk [vmem:[#allocation4 + $0x90] sm:$0xff] %vm1492, %v1986
  %2073 = vst.msk [vmem:[#allocation4 + $0x98] sm:$0xff] %vm1492, %v1991
  %2074 = vst.msk [vmem:[#allocation4 + $0xa0] sm:$0xff] %vm1492, %v1996
  %2075 = vst.msk [vmem:[#allocation4 + $0xa8] sm:$0xff] %vm1492, %v2001
  %2076 = vst.msk [vmem:[#allocation4 + $0xb0] sm:$0xff] %vm1492, %v2006
  %2077 = vst.msk [vmem:[#allocation4 + $0xb8] sm:$0xff] %vm1492, %v2011
  %2078 = vst.msk [vmem:[#allocation4 + $0xc0] sm:$0xff] %vm1492, %v2016
  %2079 = vst.msk [vmem:[#allocation4 + $0xc8] sm:$0xff] %vm1492, %v2021
  %2080 = vst.msk [vmem:[#allocation4 + $0xd0] sm:$0xff] %vm1492, %v2026
  %2081 = vst.msk [vmem:[#allocation4 + $0xd8] sm:$0xff] %vm1492, %v2031
  %2082 = vst.msk [vmem:[#allocation4 + $0xe0] sm:$0xff] %vm1492, %v2036
  %2083 = vst.msk [vmem:[#allocation4 + $0xe8] sm:$0xff] %vm1492, %v2041
  %2084 = vst.msk [vmem:[#allocation4 + $0xf0] sm:$0xff] %vm1492, %v2046
  %2085 = vst.msk [vmem:[#allocation4 + $0xf8] sm:$0xff] %vm1492, %v2051
  %v2086 = vsel %vm1492, %v1896, 0.0
  %v2087 = vsel %vm1492, %v1901, 0.0
  %v2088 = vadd.f32 %v2086, %v2087
  %v2089 = vsel %vm1492, %v1906, 0.0
  %v2090 = vadd.f32 %v2088, %v2089
  %v2091 = vsel %vm1492, %v1911, 0.0
  %v2092 = vadd.f32 %v2090, %v2091
  %v2093 = vsel %vm1492, %v1916, 0.0
  %v2094 = vadd.f32 %v2092, %v2093
  %v2095 = vsel %vm1492, %v1921, 0.0
  %v2096 = vadd.f32 %v2094, %v2095
  %v2097 = vsel %vm1492, %v1926, 0.0
  %v2098 = vadd.f32 %v2096, %v2097
  %v2099 = vsel %vm1492, %v1931, 0.0
  %v2100 = vadd.f32 %v2098, %v2099
  %v2101 = vsel %vm1492, %v1936, 0.0
  %v2102 = vadd.f32 %v2100, %v2101
  %v2103 = vsel %vm1492, %v1941, 0.0
  %v2104 = vadd.f32 %v2102, %v2103
  %v2105 = vsel %vm1492, %v1946, 0.0
  %v2106 = vadd.f32 %v2104, %v2105
  %v2107 = vsel %vm1492, %v1951, 0.0
  %v2108 = vadd.f32 %v2106, %v2107
  %v2109 = vsel %vm1492, %v1956, 0.0
  %v2110 = vadd.f32 %v2108, %v2109
  %v2111 = vsel %vm1492, %v1961, 0.0
  %v2112 = vadd.f32 %v2110, %v2111
  %v2113 = vsel %vm1492, %v1966, 0.0
  %v2114 = vadd.f32 %v2112, %v2113
  %v2115 = vsel %vm1492, %v1971, 0.0
  %v2116 = vadd.f32 %v2114, %v2115
  %v2117 = vsel %vm1492, %v1976, 0.0
  %v2118 = vadd.f32 %v2116, %v2117
  %v2119 = vsel %vm1492, %v1981, 0.0
  %v2120 = vadd.f32 %v2118, %v2119
  %v2121 = vsel %vm1492, %v1986, 0.0
  %v2122 = vadd.f32 %v2120, %v2121
  %v2123 = vsel %vm1492, %v1991, 0.0
  %v2124 = vadd.f32 %v2122, %v2123
  %v2125 = vsel %vm1492, %v1996, 0.0
  %v2126 = vadd.f32 %v2124, %v2125
  %v2127 = vsel %vm1492, %v2001, 0.0
  %v2128 = vadd.f32 %v2126, %v2127
  %v2129 = vsel %vm1492, %v2006, 0.0
  %v2130 = vadd.f32 %v2128, %v2129
  %v2131 = vsel %vm1492, %v2011, 0.0
  %v2132 = vadd.f32 %v2130, %v2131
  %v2133 = vsel %vm1492, %v2016, 0.0
  %v2134 = vadd.f32 %v2132, %v2133
  %v2135 = vsel %vm1492, %v2021, 0.0
  %v2136 = vadd.f32 %v2134, %v2135
  %v2137 = vsel %vm1492, %v2026, 0.0
  %v2138 = vadd.f32 %v2136, %v2137
  %v2139 = vsel %vm1492, %v2031, 0.0
  %v2140 = vadd.f32 %v2138, %v2139
  %v2141 = vsel %vm1492, %v2036, 0.0
  %v2142 = vadd.f32 %v2140, %v2141
  %v2143 = vsel %vm1492, %v2041, 0.0
  %v2144 = vadd.f32 %v2142, %v2143
  %v2145 = vsel %vm1492, %v2046, 0.0
  %v2146 = vadd.f32 %v2144, %v2145
  %v2147 = vsel %vm1492, %v2051, 0.0
  %v2148 = vadd.f32 %v2146, %v2147
  %v2149 = vrot.slane %v2148, 4
  %v2150 = vadd.f32 %v2148, %v2149
  %v2151 = vrot.slane %v2150, 2
  %v2152 = vadd.f32 %v2150, %v2151
  %v2153 = vrot.slane %v2152, 1
  %v2154 = vadd.f32 %v2152, %v2153
  %v2155 = vadd.f32 %v2154, 0.0
  %v2156 = vmul.f32 %v1896, %v1896
  %v2157 = vmul.f32 %v1901, %v1901
  %v2158 = vmul.f32 %v1906, %v1906
  %v2159 = vmul.f32 %v1911, %v1911
  %v2160 = vmul.f32 %v1916, %v1916
  %v2161 = vmul.f32 %v1921, %v1921
  %v2162 = vmul.f32 %v1926, %v1926
  %v2163 = vmul.f32 %v1931, %v1931
  %v2164 = vmul.f32 %v1936, %v1936
  %v2165 = vmul.f32 %v1941, %v1941
  %v2166 = vmul.f32 %v1946, %v1946
  %v2167 = vmul.f32 %v1951, %v1951
  %v2168 = vmul.f32 %v1956, %v1956
  %v2169 = vmul.f32 %v1961, %v1961
  %v2170 = vmul.f32 %v1966, %v1966
  %v2171 = vmul.f32 %v1971, %v1971
  %v2172 = vmul.f32 %v1976, %v1976
  %v2173 = vmul.f32 %v1981, %v1981
  %v2174 = vmul.f32 %v1986, %v1986
  %v2175 = vmul.f32 %v1991, %v1991
  %v2176 = vmul.f32 %v1996, %v1996
  %v2177 = vmul.f32 %v2001, %v2001
  %v2178 = vmul.f32 %v2006, %v2006
  %v2179 = vmul.f32 %v2011, %v2011
  %v2180 = vmul.f32 %v2016, %v2016
  %v2181 = vmul.f32 %v2021, %v2021
  %v2182 = vmul.f32 %v2026, %v2026
  %v2183 = vmul.f32 %v2031, %v2031
  %v2184 = vmul.f32 %v2036, %v2036
  %v2185 = vmul.f32 %v2041, %v2041
  %v2186 = vmul.f32 %v2046, %v2046
  %v2187 = vmul.f32 %v2051, %v2051
  %v2188 = vsel %vm1492, %v2156, 0.0
  %v2189 = vsel %vm1492, %v2157, 0.0
  %v2190 = vadd.f32 %v2188, %v2189
  %v2191 = vsel %vm1492, %v2158, 0.0
  %v2192 = vadd.f32 %v2190, %v2191
  %v2193 = vsel %vm1492, %v2159, 0.0
  %v2194 = vadd.f32 %v2192, %v2193
  %v2195 = vsel %vm1492, %v2160, 0.0
  %v2196 = vadd.f32 %v2194, %v2195
  %v2197 = vsel %vm1492, %v2161, 0.0
  %v2198 = vadd.f32 %v2196, %v2197
  %v2199 = vsel %vm1492, %v2162, 0.0
  %v2200 = vadd.f32 %v2198, %v2199
  %v2201 = vsel %vm1492, %v2163, 0.0
  %v2202 = vadd.f32 %v2200, %v2201
  %v2203 = vsel %vm1492, %v2164, 0.0
  %v2204 = vadd.f32 %v2202, %v2203
  %v2205 = vsel %vm1492, %v2165, 0.0
  %v2206 = vadd.f32 %v2204, %v2205
  %v2207 = vsel %vm1492, %v2166, 0.0
  %v2208 = vadd.f32 %v2206, %v2207
  %v2209 = vsel %vm1492, %v2167, 0.0
  %v2210 = vadd.f32 %v2208, %v2209
  %v2211 = vsel %vm1492, %v2168, 0.0
  %v2212 = vadd.f32 %v2210, %v2211
  %v2213 = vsel %vm1492, %v2169, 0.0
  %v2214 = vadd.f32 %v2212, %v2213
  %v2215 = vsel %vm1492, %v2170, 0.0
  %v2216 = vadd.f32 %v2214, %v2215
  %v2217 = vsel %vm1492, %v2171, 0.0
  %v2218 = vadd.f32 %v2216, %v2217
  %v2219 = vsel %vm1492, %v2172, 0.0
  %v2220 = vadd.f32 %v2218, %v2219
  %v2221 = vsel %vm1492, %v2173, 0.0
  %v2222 = vadd.f32 %v2220, %v2221
  %v2223 = vsel %vm1492, %v2174, 0.0
  %v2224 = vadd.f32 %v2222, %v2223
  %v2225 = vsel %vm1492, %v2175, 0.0
  %v2226 = vadd.f32 %v2224, %v2225
  %v2227 = vsel %vm1492, %v2176, 0.0
  %v2228 = vadd.f32 %v2226, %v2227
  %v2229 = vsel %vm1492, %v2177, 0.0
  %v2230 = vadd.f32 %v2228, %v2229
  %v2231 = vsel %vm1492, %v2178, 0.0
  %v2232 = vadd.f32 %v2230, %v2231
  %v2233 = vsel %vm1492, %v2179, 0.0
  %v2234 = vadd.f32 %v2232, %v2233
  %v2235 = vsel %vm1492, %v2180, 0.0
  %v2236 = vadd.f32 %v2234, %v2235
  %v2237 = vsel %vm1492, %v2181, 0.0
  %v2238 = vadd.f32 %v2236, %v2237
  %v2239 = vsel %vm1492, %v2182, 0.0
  %v2240 = vadd.f32 %v2238, %v2239
  %v2241 = vsel %vm1492, %v2183, 0.0
  %v2242 = vadd.f32 %v2240, %v2241
  %v2243 = vsel %vm1492, %v2184, 0.0
  %v2244 = vadd.f32 %v2242, %v2243
  %v2245 = vsel %vm1492, %v2185, 0.0
  %v2246 = vadd.f32 %v2244, %v2245
  %v2247 = vsel %vm1492, %v2186, 0.0
  %v2248 = vadd.f32 %v2246, %v2247
  %v2249 = vsel %vm1492, %v2187, 0.0
  %v2250 = vadd.f32 %v2248, %v2249
  %v2251 = vrot.slane %v2250, 4
  %v2252 = vadd.f32 %v2250, %v2251
  %v2253 = vrot.slane %v2252, 2
  %v2254 = vadd.f32 %v2252, %v2253
  %v2255 = vrot.slane %v2254, 1
  %v2256 = vadd.f32 %v2254, %v2255
  %v2257 = vadd.f32 %v2256, 0.0
  %s2258 = scalar_lea.vmem %s0, 256
  %v2259 = vld [vmem:[%s2258] sm:$0xff]
  %v2260 = vld [vmem:[%s2258 + $0x8] sm:$0xff]
  %v2261 = vld [vmem:[%s2258 + $0x10] sm:$0xff]
  %v2262 = vld [vmem:[%s2258 + $0x18] sm:$0xff]
  %v2263 = vld [vmem:[%s2258 + $0x20] sm:$0xff]
  %v2264 = vld [vmem:[%s2258 + $0x28] sm:$0xff]
  %v2265 = vld [vmem:[%s2258 + $0x30] sm:$0xff]
  %v2266 = vld [vmem:[%s2258 + $0x38] sm:$0xff]
  %v2267 = vld [vmem:[%s2258 + $0x40] sm:$0xff]
  %v2268 = vld [vmem:[%s2258 + $0x48] sm:$0xff]
  %v2269 = vld [vmem:[%s2258 + $0x50] sm:$0xff]
  %v2270 = vld [vmem:[%s2258 + $0x58] sm:$0xff]
  %v2271 = vld [vmem:[%s2258 + $0x60] sm:$0xff]
  %v2272 = vld [vmem:[%s2258 + $0x68] sm:$0xff]
  %v2273 = vld [vmem:[%s2258 + $0x70] sm:$0xff]
  %v2274 = vld [vmem:[%s2258 + $0x78] sm:$0xff]
  %v2275 = vld [vmem:[%s2258 + $0x80] sm:$0xff]
  %v2276 = vld [vmem:[%s2258 + $0x88] sm:$0xff]
  %v2277 = vld [vmem:[%s2258 + $0x90] sm:$0xff]
  %v2278 = vld [vmem:[%s2258 + $0x98] sm:$0xff]
  %v2279 = vld [vmem:[%s2258 + $0xa0] sm:$0xff]
  %v2280 = vld [vmem:[%s2258 + $0xa8] sm:$0xff]
  %v2281 = vld [vmem:[%s2258 + $0xb0] sm:$0xff]
  %v2282 = vld [vmem:[%s2258 + $0xb8] sm:$0xff]
  %v2283 = vld [vmem:[%s2258 + $0xc0] sm:$0xff]
  %v2284 = vld [vmem:[%s2258 + $0xc8] sm:$0xff]
  %v2285 = vld [vmem:[%s2258 + $0xd0] sm:$0xff]
  %v2286 = vld [vmem:[%s2258 + $0xd8] sm:$0xff]
  %v2287 = vld [vmem:[%s2258 + $0xe0] sm:$0xff]
  %v2288 = vld [vmem:[%s2258 + $0xe8] sm:$0xff]
  %v2289 = vld [vmem:[%s2258 + $0xf0] sm:$0xff]
  %v2290 = vld [vmem:[%s2258 + $0xf8] sm:$0xff]
  %2291 = vst.msk [vmem:[%s114 + $0x1] sm:$0xff] %vm26, %v2259
  %2292 = vst.msk [vmem:[%s114 + $0x9] sm:$0xff] %vm26, %v2260
  %2293 = vst.msk [vmem:[%s114 + $0x19] sm:$0xff] %vm26, %v2261
  %2294 = vst.msk [vmem:[%s114 + $0x21] sm:$0xff] %vm26, %v2262
  %2295 = vst.msk [vmem:[%s114 + $0x31] sm:$0xff] %vm26, %v2263
  %2296 = vst.msk [vmem:[%s114 + $0x39] sm:$0xff] %vm26, %v2264
  %2297 = vst.msk [vmem:[%s114 + $0x49] sm:$0xff] %vm26, %v2265
  %2298 = vst.msk [vmem:[%s114 + $0x51] sm:$0xff] %vm26, %v2266
  %2299 = vst.msk [vmem:[%s114 + $0x61] sm:$0xff] %vm26, %v2267
  %2300 = vst.msk [vmem:[%s114 + $0x69] sm:$0xff] %vm26, %v2268
  %2301 = vst.msk [vmem:[%s114 + $0x79] sm:$0xff] %vm26, %v2269
  %2302 = vst.msk [vmem:[%s114 + $0x81] sm:$0xff] %vm26, %v2270
  %2303 = vst.msk [vmem:[%s114 + $0x91] sm:$0xff] %vm26, %v2271
  %2304 = vst.msk [vmem:[%s114 + $0x99] sm:$0xff] %vm26, %v2272
  %2305 = vst.msk [vmem:[%s114 + $0xa9] sm:$0xff] %vm26, %v2273
  %2306 = vst.msk [vmem:[%s114 + $0xb1] sm:$0xff] %vm26, %v2274
  %2307 = vst.msk [vmem:[%s114 + $0xc1] sm:$0xff] %vm26, %v2275
  %2308 = vst.msk [vmem:[%s114 + $0xc9] sm:$0xff] %vm26, %v2276
  %2309 = vst.msk [vmem:[%s114 + $0xd9] sm:$0xff] %vm26, %v2277
  %2310 = vst.msk [vmem:[%s114 + $0xe1] sm:$0xff] %vm26, %v2278
  %2311 = vst.msk [vmem:[%s114 + $0xf1] sm:$0xff] %vm26, %v2279
  %2312 = vst.msk [vmem:[%s114 + $0xf9] sm:$0xff] %vm26, %v2280
  %2313 = vst.msk [vmem:[%s114 + $0x109] sm:$0xff] %vm26, %v2281
  %2314 = vst.msk [vmem:[%s114 + $0x111] sm:$0xff] %vm26, %v2282
  %2315 = vst.msk [vmem:[%s114 + $0x121] sm:$0xff] %vm26, %v2283
  %2316 = vst.msk [vmem:[%s114 + $0x129] sm:$0xff] %vm26, %v2284
  %2317 = vst.msk [vmem:[%s114 + $0x139] sm:$0xff] %vm26, %v2285
  %2318 = vst.msk [vmem:[%s114 + $0x141] sm:$0xff] %vm26, %v2286
  %2319 = vst.msk [vmem:[%s114 + $0x151] sm:$0xff] %vm26, %v2287
  %2320 = vst.msk [vmem:[%s114 + $0x159] sm:$0xff] %vm26, %v2288
  %2321 = vst.msk [vmem:[%s114 + $0x169] sm:$0xff] %vm26, %v2289
  %2322 = vst.msk [vmem:[%s114 + $0x171] sm:$0xff] %vm26, %v2290
  %v2323 = vld [vmem:[#allocation2] sm:$0xff]
  %v2324 = vld [vmem:[#allocation2 + $0x8] sm:$0xff]
  %v2325 = vld [vmem:[#allocation2 + $0x18] sm:$0xff]
  %v2326 = vld [vmem:[#allocation2 + $0x20] sm:$0xff]
  %v2327 = vld [vmem:[#allocation2 + $0x30] sm:$0xff]
  %v2328 = vld [vmem:[#allocation2 + $0x38] sm:$0xff]
  %v2329 = vld [vmem:[#allocation2 + $0x48] sm:$0xff]
  %v2330 = vld [vmem:[#allocation2 + $0x50] sm:$0xff]
  %v2331 = vld [vmem:[#allocation2 + $0x60] sm:$0xff]
  %v2332 = vld [vmem:[#allocation2 + $0x68] sm:$0xff]
  %v2333 = vld [vmem:[#allocation2 + $0x78] sm:$0xff]
  %v2334 = vld [vmem:[#allocation2 + $0x80] sm:$0xff]
  %v2335 = vld [vmem:[#allocation2 + $0x90] sm:$0xff]
  %v2336 = vld [vmem:[#allocation2 + $0x98] sm:$0xff]
  %v2337 = vld [vmem:[#allocation2 + $0xa8] sm:$0xff]
  %v2338 = vld [vmem:[#allocation2 + $0xb0] sm:$0xff]
  %v2339 = vld [vmem:[#allocation2 + $0xc0] sm:$0xff]
  %v2340 = vld [vmem:[#allocation2 + $0xc8] sm:$0xff]
  %v2341 = vld [vmem:[#allocation2 + $0xd8] sm:$0xff]
  %v2342 = vld [vmem:[#allocation2 + $0xe0] sm:$0xff]
  %v2343 = vld [vmem:[#allocation2 + $0xf0] sm:$0xff]
  %v2344 = vld [vmem:[#allocation2 + $0xf8] sm:$0xff]
  %v2345 = vld [vmem:[#allocation2 + $0x108] sm:$0xff]
  %v2346 = vld [vmem:[#allocation2 + $0x110] sm:$0xff]
  %v2347 = vld [vmem:[#allocation2 + $0x120] sm:$0xff]
  %v2348 = vld [vmem:[#allocation2 + $0x128] sm:$0xff]
  %v2349 = vld [vmem:[#allocation2 + $0x138] sm:$0xff]
  %v2350 = vld [vmem:[#allocation2 + $0x140] sm:$0xff]
  %v2351 = vld [vmem:[#allocation2 + $0x150] sm:$0xff]
  %v2352 = vld [vmem:[#allocation2 + $0x158] sm:$0xff]
  %v2353 = vld [vmem:[#allocation2 + $0x168] sm:$0xff]
  %v2354 = vld [vmem:[#allocation2 + $0x170] sm:$0xff]
  %v2355 = vld [vmem:[#allocation2 + $0x1] sm:$0xff]
  %v2356 = vld [vmem:[#allocation2 + $0x9] sm:$0xff]
  %v2357 = vld [vmem:[#allocation2 + $0x19] sm:$0xff]
  %v2358 = vld [vmem:[#allocation2 + $0x21] sm:$0xff]
  %v2359 = vld [vmem:[#allocation2 + $0x31] sm:$0xff]
  %v2360 = vld [vmem:[#allocation2 + $0x39] sm:$0xff]
  %v2361 = vld [vmem:[#allocation2 + $0x49] sm:$0xff]
  %v2362 = vld [vmem:[#allocation2 + $0x51] sm:$0xff]
  %v2363 = vld [vmem:[#allocation2 + $0x61] sm:$0xff]
  %v2364 = vld [vmem:[#allocation2 + $0x69] sm:$0xff]
  %v2365 = vld [vmem:[#allocation2 + $0x79] sm:$0xff]
  %v2366 = vld [vmem:[#allocation2 + $0x81] sm:$0xff]
  %v2367 = vld [vmem:[#allocation2 + $0x91] sm:$0xff]
  %v2368 = vld [vmem:[#allocation2 + $0x99] sm:$0xff]
  %v2369 = vld [vmem:[#allocation2 + $0xa9] sm:$0xff]
  %v2370 = vld [vmem:[#allocation2 + $0xb1] sm:$0xff]
  %v2371 = vld [vmem:[#allocation2 + $0xc1] sm:$0xff]
  %v2372 = vld [vmem:[#allocation2 + $0xc9] sm:$0xff]
  %v2373 = vld [vmem:[#allocation2 + $0xd9] sm:$0xff]
  %v2374 = vld [vmem:[#allocation2 + $0xe1] sm:$0xff]
  %v2375 = vld [vmem:[#allocation2 + $0xf1] sm:$0xff]
  %v2376 = vld [vmem:[#allocation2 + $0xf9] sm:$0xff]
  %v2377 = vld [vmem:[#allocation2 + $0x109] sm:$0xff]
  %v2378 = vld [vmem:[#allocation2 + $0x111] sm:$0xff]
  %v2379 = vld [vmem:[#allocation2 + $0x121] sm:$0xff]
  %v2380 = vld [vmem:[#allocation2 + $0x129] sm:$0xff]
  %v2381 = vld [vmem:[#allocation2 + $0x139] sm:$0xff]
  %v2382 = vld [vmem:[#allocation2 + $0x141] sm:$0xff]
  %v2383 = vld [vmem:[#allocation2 + $0x151] sm:$0xff]
  %v2384 = vld [vmem:[#allocation2 + $0x159] sm:$0xff]
  %v2385 = vld [vmem:[#allocation2 + $0x169] sm:$0xff]
  %v2386 = vld [vmem:[#allocation2 + $0x171] sm:$0xff]
  %v2387 = vld [vmem:[#allocation2 + $0x2] sm:$0xff]
  %v2388 = vld [vmem:[#allocation2 + $0xa] sm:$0xff]
  %v2389 = vld [vmem:[#allocation2 + $0x1a] sm:$0xff]
  %v2390 = vld [vmem:[#allocation2 + $0x22] sm:$0xff]
  %v2391 = vld [vmem:[#allocation2 + $0x32] sm:$0xff]
  %v2392 = vld [vmem:[#allocation2 + $0x3a] sm:$0xff]
  %v2393 = vld [vmem:[#allocation2 + $0x4a] sm:$0xff]
  %v2394 = vld [vmem:[#allocation2 + $0x52] sm:$0xff]
  %v2395 = vld [vmem:[#allocation2 + $0x62] sm:$0xff]
  %v2396 = vld [vmem:[#allocation2 + $0x6a] sm:$0xff]
  %v2397 = vld [vmem:[#allocation2 + $0x7a] sm:$0xff]
  %v2398 = vld [vmem:[#allocation2 + $0x82] sm:$0xff]
  %v2399 = vld [vmem:[#allocation2 + $0x92] sm:$0xff]
  %v2400 = vld [vmem:[#allocation2 + $0x9a] sm:$0xff]
  %v2401 = vld [vmem:[#allocation2 + $0xaa] sm:$0xff]
  %v2402 = vld [vmem:[#allocation2 + $0xb2] sm:$0xff]
  %v2403 = vld [vmem:[#allocation2 + $0xc2] sm:$0xff]
  %v2404 = vld [vmem:[#allocation2 + $0xca] sm:$0xff]
  %v2405 = vld [vmem:[#allocation2 + $0xda] sm:$0xff]
  %v2406 = vld [vmem:[#allocation2 + $0xe2] sm:$0xff]
  %v2407 = vld [vmem:[#allocation2 + $0xf2] sm:$0xff]
  %v2408 = vld [vmem:[#allocation2 + $0xfa] sm:$0xff]
  %v2409 = vld [vmem:[#allocation2 + $0x10a] sm:$0xff]
  %v2410 = vld [vmem:[#allocation2 + $0x112] sm:$0xff]
  %v2411 = vld [vmem:[#allocation2 + $0x122] sm:$0xff]
  %v2412 = vld [vmem:[#allocation2 + $0x12a] sm:$0xff]
  %v2413 = vld [vmem:[#allocation2 + $0x13a] sm:$0xff]
  %v2414 = vld [vmem:[#allocation2 + $0x142] sm:$0xff]
  %v2415 = vld [vmem:[#allocation2 + $0x152] sm:$0xff]
  %v2416 = vld [vmem:[#allocation2 + $0x15a] sm:$0xff]
  %v2417 = vld [vmem:[#allocation2 + $0x16a] sm:$0xff]
  %v2418 = vld [vmem:[#allocation2 + $0x172] sm:$0xff]
  %v2419 = vld [vmem:[%s114] sm:$0xff]
  %v2420 = vld [vmem:[%s114 + $0x8] sm:$0xff]
  %v2421 = vld [vmem:[%s114 + $0x18] sm:$0xff]
  %v2422 = vld [vmem:[%s114 + $0x20] sm:$0xff]
  %v2423 = vld [vmem:[%s114 + $0x30] sm:$0xff]
  %v2424 = vld [vmem:[%s114 + $0x38] sm:$0xff]
  %v2425 = vld [vmem:[%s114 + $0x48] sm:$0xff]
  %v2426 = vld [vmem:[%s114 + $0x50] sm:$0xff]
  %v2427 = vld [vmem:[%s114 + $0x60] sm:$0xff]
  %v2428 = vld [vmem:[%s114 + $0x68] sm:$0xff]
  %v2429 = vld [vmem:[%s114 + $0x78] sm:$0xff]
  %v2430 = vld [vmem:[%s114 + $0x80] sm:$0xff]
  %v2431 = vld [vmem:[%s114 + $0x90] sm:$0xff]
  %v2432 = vld [vmem:[%s114 + $0x98] sm:$0xff]
  %v2433 = vld [vmem:[%s114 + $0xa8] sm:$0xff]
  %v2434 = vld [vmem:[%s114 + $0xb0] sm:$0xff]
  %v2435 = vld [vmem:[%s114 + $0xc0] sm:$0xff]
  %v2436 = vld [vmem:[%s114 + $0xc8] sm:$0xff]
  %v2437 = vld [vmem:[%s114 + $0xd8] sm:$0xff]
  %v2438 = vld [vmem:[%s114 + $0xe0] sm:$0xff]
  %v2439 = vld [vmem:[%s114 + $0xf0] sm:$0xff]
  %v2440 = vld [vmem:[%s114 + $0xf8] sm:$0xff]
  %v2441 = vld [vmem:[%s114 + $0x108] sm:$0xff]
  %v2442 = vld [vmem:[%s114 + $0x110] sm:$0xff]
  %v2443 = vld [vmem:[%s114 + $0x120] sm:$0xff]
  %v2444 = vld [vmem:[%s114 + $0x128] sm:$0xff]
  %v2445 = vld [vmem:[%s114 + $0x138] sm:$0xff]
  %v2446 = vld [vmem:[%s114 + $0x140] sm:$0xff]
  %v2447 = vld [vmem:[%s114 + $0x150] sm:$0xff]
  %v2448 = vld [vmem:[%s114 + $0x158] sm:$0xff]
  %v2449 = vld [vmem:[%s114 + $0x168] sm:$0xff]
  %v2450 = vld [vmem:[%s114 + $0x170] sm:$0xff]
  %v2451 = vld [vmem:[%s114 + $0x1] sm:$0xff]
  %v2452 = vld [vmem:[%s114 + $0x9] sm:$0xff]
  %v2453 = vld [vmem:[%s114 + $0x19] sm:$0xff]
  %v2454 = vld [vmem:[%s114 + $0x21] sm:$0xff]
  %v2455 = vld [vmem:[%s114 + $0x31] sm:$0xff]
  %v2456 = vld [vmem:[%s114 + $0x39] sm:$0xff]
  %v2457 = vld [vmem:[%s114 + $0x49] sm:$0xff]
  %v2458 = vld [vmem:[%s114 + $0x51] sm:$0xff]
  %v2459 = vld [vmem:[%s114 + $0x61] sm:$0xff]
  %v2460 = vld [vmem:[%s114 + $0x69] sm:$0xff]
  %v2461 = vld [vmem:[%s114 + $0x79] sm:$0xff]
  %v2462 = vld [vmem:[%s114 + $0x81] sm:$0xff]
  %v2463 = vld [vmem:[%s114 + $0x91] sm:$0xff]
  %v2464 = vld [vmem:[%s114 + $0x99] sm:$0xff]
  %v2465 = vld [vmem:[%s114 + $0xa9] sm:$0xff]
  %v2466 = vld [vmem:[%s114 + $0xb1] sm:$0xff]
  %v2467 = vld [vmem:[%s114 + $0xc1] sm:$0xff]
  %v2468 = vld [vmem:[%s114 + $0xc9] sm:$0xff]
  %v2469 = vld [vmem:[%s114 + $0xd9] sm:$0xff]
  %v2470 = vld [vmem:[%s114 + $0xe1] sm:$0xff]
  %v2471 = vld [vmem:[%s114 + $0xf1] sm:$0xff]
  %v2472 = vld [vmem:[%s114 + $0xf9] sm:$0xff]
  %v2473 = vld [vmem:[%s114 + $0x109] sm:$0xff]
  %v2474 = vld [vmem:[%s114 + $0x111] sm:$0xff]
  %v2475 = vld [vmem:[%s114 + $0x121] sm:$0xff]
  %v2476 = vld [vmem:[%s114 + $0x129] sm:$0xff]
  %v2477 = vld [vmem:[%s114 + $0x139] sm:$0xff]
  %v2478 = vld [vmem:[%s114 + $0x141] sm:$0xff]
  %v2479 = vld [vmem:[%s114 + $0x151] sm:$0xff]
  %v2480 = vld [vmem:[%s114 + $0x159] sm:$0xff]
  %v2481 = vld [vmem:[%s114 + $0x169] sm:$0xff]
  %v2482 = vld [vmem:[%s114 + $0x171] sm:$0xff]
  %v2483 = vld [vmem:[%s114 + $0x2] sm:$0xff]
  %v2484 = vld [vmem:[%s114 + $0xa] sm:$0xff]
  %v2485 = vld [vmem:[%s114 + $0x1a] sm:$0xff]
  %v2486 = vld [vmem:[%s114 + $0x22] sm:$0xff]
  %v2487 = vld [vmem:[%s114 + $0x32] sm:$0xff]
  %v2488 = vld [vmem:[%s114 + $0x3a] sm:$0xff]
  %v2489 = vld [vmem:[%s114 + $0x4a] sm:$0xff]
  %v2490 = vld [vmem:[%s114 + $0x52] sm:$0xff]
  %v2491 = vld [vmem:[%s114 + $0x62] sm:$0xff]
  %v2492 = vld [vmem:[%s114 + $0x6a] sm:$0xff]
  %v2493 = vld [vmem:[%s114 + $0x7a] sm:$0xff]
  %v2494 = vld [vmem:[%s114 + $0x82] sm:$0xff]
  %v2495 = vld [vmem:[%s114 + $0x92] sm:$0xff]
  %v2496 = vld [vmem:[%s114 + $0x9a] sm:$0xff]
  %v2497 = vld [vmem:[%s114 + $0xaa] sm:$0xff]
  %v2498 = vld [vmem:[%s114 + $0xb2] sm:$0xff]
  %v2499 = vld [vmem:[%s114 + $0xc2] sm:$0xff]
  %v2500 = vld [vmem:[%s114 + $0xca] sm:$0xff]
  %v2501 = vld [vmem:[%s114 + $0xda] sm:$0xff]
  %v2502 = vld [vmem:[%s114 + $0xe2] sm:$0xff]
  %v2503 = vld [vmem:[%s114 + $0xf2] sm:$0xff]
  %v2504 = vld [vmem:[%s114 + $0xfa] sm:$0xff]
  %v2505 = vld [vmem:[%s114 + $0x10a] sm:$0xff]
  %v2506 = vld [vmem:[%s114 + $0x112] sm:$0xff]
  %v2507 = vld [vmem:[%s114 + $0x122] sm:$0xff]
  %v2508 = vld [vmem:[%s114 + $0x12a] sm:$0xff]
  %v2509 = vld [vmem:[%s114 + $0x13a] sm:$0xff]
  %v2510 = vld [vmem:[%s114 + $0x142] sm:$0xff]
  %v2511 = vld [vmem:[%s114 + $0x152] sm:$0xff]
  %v2512 = vld [vmem:[%s114 + $0x15a] sm:$0xff]
  %v2513 = vld [vmem:[%s114 + $0x16a] sm:$0xff]
  %v2514 = vld [vmem:[%s114 + $0x172] sm:$0xff]
  %v2515 = vld [vmem:[%s339] sm:$0xff]
  %v2516 = vld [vmem:[%s339 + $0x8] sm:$0xff]
  %v2517 = vld [vmem:[%s339 + $0x18] sm:$0xff]
  %v2518 = vld [vmem:[%s339 + $0x20] sm:$0xff]
  %v2519 = vld [vmem:[%s339 + $0x30] sm:$0xff]
  %v2520 = vld [vmem:[%s339 + $0x38] sm:$0xff]
  %v2521 = vld [vmem:[%s339 + $0x48] sm:$0xff]
  %v2522 = vld [vmem:[%s339 + $0x50] sm:$0xff]
  %v2523 = vld [vmem:[%s339 + $0x60] sm:$0xff]
  %v2524 = vld [vmem:[%s339 + $0x68] sm:$0xff]
  %v2525 = vld [vmem:[%s339 + $0x78] sm:$0xff]
  %v2526 = vld [vmem:[%s339 + $0x80] sm:$0xff]
  %v2527 = vld [vmem:[%s339 + $0x90] sm:$0xff]
  %v2528 = vld [vmem:[%s339 + $0x98] sm:$0xff]
  %v2529 = vld [vmem:[%s339 + $0xa8] sm:$0xff]
  %v2530 = vld [vmem:[%s339 + $0xb0] sm:$0xff]
  %v2531 = vld [vmem:[%s339 + $0xc0] sm:$0xff]
  %v2532 = vld [vmem:[%s339 + $0xc8] sm:$0xff]
  %v2533 = vld [vmem:[%s339 + $0xd8] sm:$0xff]
  %v2534 = vld [vmem:[%s339 + $0xe0] sm:$0xff]
  %v2535 = vld [vmem:[%s339 + $0xf0] sm:$0xff]
  %v2536 = vld [vmem:[%s339 + $0xf8] sm:$0xff]
  %v2537 = vld [vmem:[%s339 + $0x108] sm:$0xff]
  %v2538 = vld [vmem:[%s339 + $0x110] sm:$0xff]
  %v2539 = vld [vmem:[%s339 + $0x120] sm:$0xff]
  %v2540 = vld [vmem:[%s339 + $0x128] sm:$0xff]
  %v2541 = vld [vmem:[%s339 + $0x138] sm:$0xff]
  %v2542 = vld [vmem:[%s339 + $0x140] sm:$0xff]
  %v2543 = vld [vmem:[%s339 + $0x150] sm:$0xff]
  %v2544 = vld [vmem:[%s339 + $0x158] sm:$0xff]
  %v2545 = vld [vmem:[%s339 + $0x168] sm:$0xff]
  %v2546 = vld [vmem:[%s339 + $0x170] sm:$0xff]
  %v2547 = vld [vmem:[%s339 + $0x1] sm:$0xff]
  %v2548 = vld [vmem:[%s339 + $0x9] sm:$0xff]
  %v2549 = vld [vmem:[%s339 + $0x19] sm:$0xff]
  %v2550 = vld [vmem:[%s339 + $0x21] sm:$0xff]
  %v2551 = vld [vmem:[%s339 + $0x31] sm:$0xff]
  %v2552 = vld [vmem:[%s339 + $0x39] sm:$0xff]
  %v2553 = vld [vmem:[%s339 + $0x49] sm:$0xff]
  %v2554 = vld [vmem:[%s339 + $0x51] sm:$0xff]
  %v2555 = vld [vmem:[%s339 + $0x61] sm:$0xff]
  %v2556 = vld [vmem:[%s339 + $0x69] sm:$0xff]
  %v2557 = vld [vmem:[%s339 + $0x79] sm:$0xff]
  %v2558 = vld [vmem:[%s339 + $0x81] sm:$0xff]
  %v2559 = vld [vmem:[%s339 + $0x91] sm:$0xff]
  %v2560 = vld [vmem:[%s339 + $0x99] sm:$0xff]
  %v2561 = vld [vmem:[%s339 + $0xa9] sm:$0xff]
  %v2562 = vld [vmem:[%s339 + $0xb1] sm:$0xff]
  %v2563 = vld [vmem:[%s339 + $0xc1] sm:$0xff]
  %v2564 = vld [vmem:[%s339 + $0xc9] sm:$0xff]
  %v2565 = vld [vmem:[%s339 + $0xd9] sm:$0xff]
  %v2566 = vld [vmem:[%s339 + $0xe1] sm:$0xff]
  %v2567 = vld [vmem:[%s339 + $0xf1] sm:$0xff]
  %v2568 = vld [vmem:[%s339 + $0xf9] sm:$0xff]
  %v2569 = vld [vmem:[%s339 + $0x109] sm:$0xff]
  %v2570 = vld [vmem:[%s339 + $0x111] sm:$0xff]
  %v2571 = vld [vmem:[%s339 + $0x121] sm:$0xff]
  %v2572 = vld [vmem:[%s339 + $0x129] sm:$0xff]
  %v2573 = vld [vmem:[%s339 + $0x139] sm:$0xff]
  %v2574 = vld [vmem:[%s339 + $0x141] sm:$0xff]
  %v2575 = vld [vmem:[%s339 + $0x151] sm:$0xff]
  %v2576 = vld [vmem:[%s339 + $0x159] sm:$0xff]
  %v2577 = vld [vmem:[%s339 + $0x169] sm:$0xff]
  %v2578 = vld [vmem:[%s339 + $0x171] sm:$0xff]
  %v2579 = vld [vmem:[%s339 + $0x2] sm:$0xff]
  %v2580 = vld [vmem:[%s339 + $0xa] sm:$0xff]
  %v2581 = vld [vmem:[%s339 + $0x1a] sm:$0xff]
  %v2582 = vld [vmem:[%s339 + $0x22] sm:$0xff]
  %v2583 = vld [vmem:[%s339 + $0x32] sm:$0xff]
  %v2584 = vld [vmem:[%s339 + $0x3a] sm:$0xff]
  %v2585 = vld [vmem:[%s339 + $0x4a] sm:$0xff]
  %v2586 = vld [vmem:[%s339 + $0x52] sm:$0xff]
  %v2587 = vld [vmem:[%s339 + $0x62] sm:$0xff]
  %v2588 = vld [vmem:[%s339 + $0x6a] sm:$0xff]
  %v2589 = vld [vmem:[%s339 + $0x7a] sm:$0xff]
  %v2590 = vld [vmem:[%s339 + $0x82] sm:$0xff]
  %v2591 = vld [vmem:[%s339 + $0x92] sm:$0xff]
  %v2592 = vld [vmem:[%s339 + $0x9a] sm:$0xff]
  %v2593 = vld [vmem:[%s339 + $0xaa] sm:$0xff]
  %v2594 = vld [vmem:[%s339 + $0xb2] sm:$0xff]
  %v2595 = vld [vmem:[%s339 + $0xc2] sm:$0xff]
  %v2596 = vld [vmem:[%s339 + $0xca] sm:$0xff]
  %v2597 = vld [vmem:[%s339 + $0xda] sm:$0xff]
  %v2598 = vld [vmem:[%s339 + $0xe2] sm:$0xff]
  %v2599 = vld [vmem:[%s339 + $0xf2] sm:$0xff]
  %v2600 = vld [vmem:[%s339 + $0xfa] sm:$0xff]
  %v2601 = vld [vmem:[%s339 + $0x10a] sm:$0xff]
  %v2602 = vld [vmem:[%s339 + $0x112] sm:$0xff]
  %v2603 = vld [vmem:[%s339 + $0x122] sm:$0xff]
  %v2604 = vld [vmem:[%s339 + $0x12a] sm:$0xff]
  %v2605 = vld [vmem:[%s339 + $0x13a] sm:$0xff]
  %v2606 = vld [vmem:[%s339 + $0x142] sm:$0xff]
  %v2607 = vld [vmem:[%s339 + $0x152] sm:$0xff]
  %v2608 = vld [vmem:[%s339 + $0x15a] sm:$0xff]
  %v2609 = vld [vmem:[%s339 + $0x16a] sm:$0xff]
  %v2610 = vld [vmem:[%s339 + $0x172] sm:$0xff]
  %2643 = vrot.lane.b32.xlu0 %v2355, 4
  %v2644 = vpop.permute.xlu0 %2643
  %2645 = vrot.lane.b32.xlu0 %v2356, 4
  %v2646 = vpop.permute.xlu0 %2645
  %2647 = vrot.lane.b32.xlu0 %v2357, 4
  %v2648 = vpop.permute.xlu0 %2647
  %2649 = vrot.lane.b32.xlu0 %v2358, 4
  %v2650 = vpop.permute.xlu0 %2649
  %2651 = vrot.lane.b32.xlu0 %v2359, 4
  %v2652 = vpop.permute.xlu0 %2651
  %2653 = vrot.lane.b32.xlu0 %v2360, 4
  %v2654 = vpop.permute.xlu0 %2653
  %2655 = vrot.lane.b32.xlu0 %v2361, 4
  %v2656 = vpop.permute.xlu0 %2655
  %2657 = vrot.lane.b32.xlu0 %v2362, 4
  %v2658 = vpop.permute.xlu0 %2657
  %2659 = vrot.lane.b32.xlu0 %v2363, 4
  %v2660 = vpop.permute.xlu0 %2659
  %2661 = vrot.lane.b32.xlu0 %v2364, 4
  %v2662 = vpop.permute.xlu0 %2661
  %2663 = vrot.lane.b32.xlu0 %v2365, 4
  %v2664 = vpop.permute.xlu0 %2663
  %2665 = vrot.lane.b32.xlu0 %v2366, 4
  %v2666 = vpop.permute.xlu0 %2665
  %2667 = vrot.lane.b32.xlu0 %v2367, 4
  %v2668 = vpop.permute.xlu0 %2667
  %2669 = vrot.lane.b32.xlu0 %v2368, 4
  %v2670 = vpop.permute.xlu0 %2669
  %2671 = vrot.lane.b32.xlu0 %v2369, 4
  %v2672 = vpop.permute.xlu0 %2671
  %2673 = vrot.lane.b32.xlu0 %v2370, 4
  %v2674 = vpop.permute.xlu0 %2673
  %2675 = vrot.lane.b32.xlu0 %v2371, 4
  %v2676 = vpop.permute.xlu0 %2675
  %2677 = vrot.lane.b32.xlu0 %v2372, 4
  %v2678 = vpop.permute.xlu0 %2677
  %2679 = vrot.lane.b32.xlu0 %v2373, 4
  %v2680 = vpop.permute.xlu0 %2679
  %2681 = vrot.lane.b32.xlu0 %v2374, 4
  %v2682 = vpop.permute.xlu0 %2681
  %2683 = vrot.lane.b32.xlu0 %v2375, 4
  %v2684 = vpop.permute.xlu0 %2683
  %2685 = vrot.lane.b32.xlu0 %v2376, 4
  %v2686 = vpop.permute.xlu0 %2685
  %2687 = vrot.lane.b32.xlu0 %v2377, 4
  %v2688 = vpop.permute.xlu0 %2687
  %2689 = vrot.lane.b32.xlu0 %v2378, 4
  %v2690 = vpop.permute.xlu0 %2689
  %2691 = vrot.lane.b32.xlu0 %v2379, 4
  %v2692 = vpop.permute.xlu0 %2691
  %2693 = vrot.lane.b32.xlu0 %v2380, 4
  %v2694 = vpop.permute.xlu0 %2693
  %2695 = vrot.lane.b32.xlu0 %v2381, 4
  %v2696 = vpop.permute.xlu0 %2695
  %2697 = vrot.lane.b32.xlu0 %v2382, 4
  %v2698 = vpop.permute.xlu0 %2697
  %2699 = vrot.lane.b32.xlu0 %v2383, 4
  %v2700 = vpop.permute.xlu0 %2699
  %2701 = vrot.lane.b32.xlu0 %v2384, 4
  %v2702 = vpop.permute.xlu0 %2701
  %2703 = vrot.lane.b32.xlu0 %v2385, 4
  %v2704 = vpop.permute.xlu0 %2703
  %2705 = vrot.lane.b32.xlu0 %v2386, 4
  %v2706 = vpop.permute.xlu0 %2705
  %2771 = vrot.lane.b32.xlu0 %v2387, 8
  %v2772 = vpop.permute.xlu0 %2771
  %2773 = vrot.lane.b32.xlu0 %v2388, 8
  %v2774 = vpop.permute.xlu0 %2773
  %2775 = vrot.lane.b32.xlu0 %v2389, 8
  %v2776 = vpop.permute.xlu0 %2775
  %2777 = vrot.lane.b32.xlu0 %v2390, 8
  %v2778 = vpop.permute.xlu0 %2777
  %2779 = vrot.lane.b32.xlu0 %v2391, 8
  %v2780 = vpop.permute.xlu0 %2779
  %2781 = vrot.lane.b32.xlu0 %v2392, 8
  %v2782 = vpop.permute.xlu0 %2781
  %2783 = vrot.lane.b32.xlu0 %v2393, 8
  %v2784 = vpop.permute.xlu0 %2783
  %2785 = vrot.lane.b32.xlu0 %v2394, 8
  %v2786 = vpop.permute.xlu0 %2785
  %2787 = vrot.lane.b32.xlu0 %v2395, 8
  %v2788 = vpop.permute.xlu0 %2787
  %2789 = vrot.lane.b32.xlu0 %v2396, 8
  %v2790 = vpop.permute.xlu0 %2789
  %2791 = vrot.lane.b32.xlu0 %v2397, 8
  %v2792 = vpop.permute.xlu0 %2791
  %2793 = vrot.lane.b32.xlu0 %v2398, 8
  %v2794 = vpop.permute.xlu0 %2793
  %2795 = vrot.lane.b32.xlu0 %v2399, 8
  %v2796 = vpop.permute.xlu0 %2795
  %2797 = vrot.lane.b32.xlu0 %v2400, 8
  %v2798 = vpop.permute.xlu0 %2797
  %2799 = vrot.lane.b32.xlu0 %v2401, 8
  %v2800 = vpop.permute.xlu0 %2799
  %2801 = vrot.lane.b32.xlu0 %v2402, 8
  %v2802 = vpop.permute.xlu0 %2801
  %2803 = vrot.lane.b32.xlu0 %v2403, 8
  %v2804 = vpop.permute.xlu0 %2803
  %2805 = vrot.lane.b32.xlu0 %v2404, 8
  %v2806 = vpop.permute.xlu0 %2805
  %2807 = vrot.lane.b32.xlu0 %v2405, 8
  %v2808 = vpop.permute.xlu0 %2807
  %2809 = vrot.lane.b32.xlu0 %v2406, 8
  %v2810 = vpop.permute.xlu0 %2809
  %2811 = vrot.lane.b32.xlu0 %v2407, 8
  %v2812 = vpop.permute.xlu0 %2811
  %2813 = vrot.lane.b32.xlu0 %v2408, 8
  %v2814 = vpop.permute.xlu0 %2813
  %2815 = vrot.lane.b32.xlu0 %v2409, 8
  %v2816 = vpop.permute.xlu0 %2815
  %2817 = vrot.lane.b32.xlu0 %v2410, 8
  %v2818 = vpop.permute.xlu0 %2817
  %2819 = vrot.lane.b32.xlu0 %v2411, 8
  %v2820 = vpop.permute.xlu0 %2819
  %2821 = vrot.lane.b32.xlu0 %v2412, 8
  %v2822 = vpop.permute.xlu0 %2821
  %2823 = vrot.lane.b32.xlu0 %v2413, 8
  %v2824 = vpop.permute.xlu0 %2823
  %2825 = vrot.lane.b32.xlu0 %v2414, 8
  %v2826 = vpop.permute.xlu0 %2825
  %2827 = vrot.lane.b32.xlu0 %v2415, 8
  %v2828 = vpop.permute.xlu0 %2827
  %2829 = vrot.lane.b32.xlu0 %v2416, 8
  %v2830 = vpop.permute.xlu0 %2829
  %2831 = vrot.lane.b32.xlu0 %v2417, 8
  %v2832 = vpop.permute.xlu0 %2831
  %2833 = vrot.lane.b32.xlu0 %v2418, 8
  %v2834 = vpop.permute.xlu0 %2833
  %2899 = vrot.lane.b32.xlu0 %v2419, 12
  %v2900 = vpop.permute.xlu0 %2899
  %2901 = vrot.lane.b32.xlu0 %v2420, 12
  %v2902 = vpop.permute.xlu0 %2901
  %2903 = vrot.lane.b32.xlu0 %v2421, 12
  %v2904 = vpop.permute.xlu0 %2903
  %2905 = vrot.lane.b32.xlu0 %v2422, 12
  %v2906 = vpop.permute.xlu0 %2905
  %2907 = vrot.lane.b32.xlu0 %v2423, 12
  %v2908 = vpop.permute.xlu0 %2907
  %2909 = vrot.lane.b32.xlu0 %v2424, 12
  %v2910 = vpop.permute.xlu0 %2909
  %2911 = vrot.lane.b32.xlu0 %v2425, 12
  %v2912 = vpop.permute.xlu0 %2911
  %2913 = vrot.lane.b32.xlu0 %v2426, 12
  %v2914 = vpop.permute.xlu0 %2913
  %2915 = vrot.lane.b32.xlu0 %v2427, 12
  %v2916 = vpop.permute.xlu0 %2915
  %2917 = vrot.lane.b32.xlu0 %v2428, 12
  %v2918 = vpop.permute.xlu0 %2917
  %2919 = vrot.lane.b32.xlu0 %v2429, 12
  %v2920 = vpop.permute.xlu0 %2919
  %2921 = vrot.lane.b32.xlu0 %v2430, 12
  %v2922 = vpop.permute.xlu0 %2921
  %2923 = vrot.lane.b32.xlu0 %v2431, 12
  %v2924 = vpop.permute.xlu0 %2923
  %2925 = vrot.lane.b32.xlu0 %v2432, 12
  %v2926 = vpop.permute.xlu0 %2925
  %2927 = vrot.lane.b32.xlu0 %v2433, 12
  %v2928 = vpop.permute.xlu0 %2927
  %2929 = vrot.lane.b32.xlu0 %v2434, 12
  %v2930 = vpop.permute.xlu0 %2929
  %2931 = vrot.lane.b32.xlu0 %v2435, 12
  %v2932 = vpop.permute.xlu0 %2931
  %2933 = vrot.lane.b32.xlu0 %v2436, 12
  %v2934 = vpop.permute.xlu0 %2933
  %2935 = vrot.lane.b32.xlu0 %v2437, 12
  %v2936 = vpop.permute.xlu0 %2935
  %2937 = vrot.lane.b32.xlu0 %v2438, 12
  %v2938 = vpop.permute.xlu0 %2937
  %2939 = vrot.lane.b32.xlu0 %v2439, 12
  %v2940 = vpop.permute.xlu0 %2939
  %2941 = vrot.lane.b32.xlu0 %v2440, 12
  %v2942 = vpop.permute.xlu0 %2941
  %2943 = vrot.lane.b32.xlu0 %v2441, 12
  %v2944 = vpop.permute.xlu0 %2943
  %2945 = vrot.lane.b32.xlu0 %v2442, 12
  %v2946 = vpop.permute.xlu0 %2945
  %2947 = vrot.lane.b32.xlu0 %v2443, 12
  %v2948 = vpop.permute.xlu0 %2947
  %2949 = vrot.lane.b32.xlu0 %v2444, 12
  %v2950 = vpop.permute.xlu0 %2949
  %2951 = vrot.lane.b32.xlu0 %v2445, 12
  %v2952 = vpop.permute.xlu0 %2951
  %2953 = vrot.lane.b32.xlu0 %v2446, 12
  %v2954 = vpop.permute.xlu0 %2953
  %2955 = vrot.lane.b32.xlu0 %v2447, 12
  %v2956 = vpop.permute.xlu0 %2955
  %2957 = vrot.lane.b32.xlu0 %v2448, 12
  %v2958 = vpop.permute.xlu0 %2957
  %2959 = vrot.lane.b32.xlu0 %v2449, 12
  %v2960 = vpop.permute.xlu0 %2959
  %2961 = vrot.lane.b32.xlu0 %v2450, 12
  %v2962 = vpop.permute.xlu0 %2961
  %3027 = vrot.lane.b32.xlu0 %v2451, 16
  %v3028 = vpop.permute.xlu0 %3027
  %3029 = vrot.lane.b32.xlu0 %v2452, 16
  %v3030 = vpop.permute.xlu0 %3029
  %3031 = vrot.lane.b32.xlu0 %v2453, 16
  %v3032 = vpop.permute.xlu0 %3031
  %3033 = vrot.lane.b32.xlu0 %v2454, 16
  %v3034 = vpop.permute.xlu0 %3033
  %3035 = vrot.lane.b32.xlu0 %v2455, 16
  %v3036 = vpop.permute.xlu0 %3035
  %3037 = vrot.lane.b32.xlu0 %v2456, 16
  %v3038 = vpop.permute.xlu0 %3037
  %3039 = vrot.lane.b32.xlu0 %v2457, 16
  %v3040 = vpop.permute.xlu0 %3039
  %3041 = vrot.lane.b32.xlu0 %v2458, 16
  %v3042 = vpop.permute.xlu0 %3041
  %3043 = vrot.lane.b32.xlu0 %v2459, 16
  %v3044 = vpop.permute.xlu0 %3043
  %3045 = vrot.lane.b32.xlu0 %v2460, 16
  %v3046 = vpop.permute.xlu0 %3045
  %3047 = vrot.lane.b32.xlu0 %v2461, 16
  %v3048 = vpop.permute.xlu0 %3047
  %3049 = vrot.lane.b32.xlu0 %v2462, 16
  %v3050 = vpop.permute.xlu0 %3049
  %3051 = vrot.lane.b32.xlu0 %v2463, 16
  %v3052 = vpop.permute.xlu0 %3051
  %3053 = vrot.lane.b32.xlu0 %v2464, 16
  %v3054 = vpop.permute.xlu0 %3053
  %3055 = vrot.lane.b32.xlu0 %v2465, 16
  %v3056 = vpop.permute.xlu0 %3055
  %3057 = vrot.lane.b32.xlu0 %v2466, 16
  %v3058 = vpop.permute.xlu0 %3057
  %3059 = vrot.lane.b32.xlu0 %v2467, 16
  %v3060 = vpop.permute.xlu0 %3059
  %3061 = vrot.lane.b32.xlu0 %v2468, 16
  %v3062 = vpop.permute.xlu0 %3061
  %3063 = vrot.lane.b32.xlu0 %v2469, 16
  %v3064 = vpop.permute.xlu0 %3063
  %3065 = vrot.lane.b32.xlu0 %v2470, 16
  %v3066 = vpop.permute.xlu0 %3065
  %3067 = vrot.lane.b32.xlu0 %v2471, 16
  %v3068 = vpop.permute.xlu0 %3067
  %3069 = vrot.lane.b32.xlu0 %v2472, 16
  %v3070 = vpop.permute.xlu0 %3069
  %3071 = vrot.lane.b32.xlu0 %v2473, 16
  %v3072 = vpop.permute.xlu0 %3071
  %3073 = vrot.lane.b32.xlu0 %v2474, 16
  %v3074 = vpop.permute.xlu0 %3073
  %3075 = vrot.lane.b32.xlu0 %v2475, 16
  %v3076 = vpop.permute.xlu0 %3075
  %3077 = vrot.lane.b32.xlu0 %v2476, 16
  %v3078 = vpop.permute.xlu0 %3077
  %3079 = vrot.lane.b32.xlu0 %v2477, 16
  %v3080 = vpop.permute.xlu0 %3079
  %3081 = vrot.lane.b32.xlu0 %v2478, 16
  %v3082 = vpop.permute.xlu0 %3081
  %3083 = vrot.lane.b32.xlu0 %v2479, 16
  %v3084 = vpop.permute.xlu0 %3083
  %3085 = vrot.lane.b32.xlu0 %v2480, 16
  %v3086 = vpop.permute.xlu0 %3085
  %3087 = vrot.lane.b32.xlu0 %v2481, 16
  %v3088 = vpop.permute.xlu0 %3087
  %3089 = vrot.lane.b32.xlu0 %v2482, 16
  %v3090 = vpop.permute.xlu0 %3089
  %3155 = vrot.lane.b32.xlu0 %v2483, 20
  %v3156 = vpop.permute.xlu0 %3155
  %3157 = vrot.lane.b32.xlu0 %v2484, 20
  %v3158 = vpop.permute.xlu0 %3157
  %3159 = vrot.lane.b32.xlu0 %v2485, 20
  %v3160 = vpop.permute.xlu0 %3159
  %3161 = vrot.lane.b32.xlu0 %v2486, 20
  %v3162 = vpop.permute.xlu0 %3161
  %3163 = vrot.lane.b32.xlu0 %v2487, 20
  %v3164 = vpop.permute.xlu0 %3163
  %3165 = vrot.lane.b32.xlu0 %v2488, 20
  %v3166 = vpop.permute.xlu0 %3165
  %3167 = vrot.lane.b32.xlu0 %v2489, 20
  %v3168 = vpop.permute.xlu0 %3167
  %3169 = vrot.lane.b32.xlu0 %v2490, 20
  %v3170 = vpop.permute.xlu0 %3169
  %3171 = vrot.lane.b32.xlu0 %v2491, 20
  %v3172 = vpop.permute.xlu0 %3171
  %3173 = vrot.lane.b32.xlu0 %v2492, 20
  %v3174 = vpop.permute.xlu0 %3173
  %3175 = vrot.lane.b32.xlu0 %v2493, 20
  %v3176 = vpop.permute.xlu0 %3175
  %3177 = vrot.lane.b32.xlu0 %v2494, 20
  %v3178 = vpop.permute.xlu0 %3177
  %3179 = vrot.lane.b32.xlu0 %v2495, 20
  %v3180 = vpop.permute.xlu0 %3179
  %3181 = vrot.lane.b32.xlu0 %v2496, 20
  %v3182 = vpop.permute.xlu0 %3181
  %3183 = vrot.lane.b32.xlu0 %v2497, 20
  %v3184 = vpop.permute.xlu0 %3183
  %3185 = vrot.lane.b32.xlu0 %v2498, 20
  %v3186 = vpop.permute.xlu0 %3185
  %3187 = vrot.lane.b32.xlu0 %v2499, 20
  %v3188 = vpop.permute.xlu0 %3187
  %3189 = vrot.lane.b32.xlu0 %v2500, 20
  %v3190 = vpop.permute.xlu0 %3189
  %3191 = vrot.lane.b32.xlu0 %v2501, 20
  %v3192 = vpop.permute.xlu0 %3191
  %3193 = vrot.lane.b32.xlu0 %v2502, 20
  %v3194 = vpop.permute.xlu0 %3193
  %3195 = vrot.lane.b32.xlu0 %v2503, 20
  %v3196 = vpop.permute.xlu0 %3195
  %3197 = vrot.lane.b32.xlu0 %v2504, 20
  %v3198 = vpop.permute.xlu0 %3197
  %3199 = vrot.lane.b32.xlu0 %v2505, 20
  %v3200 = vpop.permute.xlu0 %3199
  %3201 = vrot.lane.b32.xlu0 %v2506, 20
  %v3202 = vpop.permute.xlu0 %3201
  %3203 = vrot.lane.b32.xlu0 %v2507, 20
  %v3204 = vpop.permute.xlu0 %3203
  %3205 = vrot.lane.b32.xlu0 %v2508, 20
  %v3206 = vpop.permute.xlu0 %3205
  %3207 = vrot.lane.b32.xlu0 %v2509, 20
  %v3208 = vpop.permute.xlu0 %3207
  %3209 = vrot.lane.b32.xlu0 %v2510, 20
  %v3210 = vpop.permute.xlu0 %3209
  %3211 = vrot.lane.b32.xlu0 %v2511, 20
  %v3212 = vpop.permute.xlu0 %3211
  %3213 = vrot.lane.b32.xlu0 %v2512, 20
  %v3214 = vpop.permute.xlu0 %3213
  %3215 = vrot.lane.b32.xlu0 %v2513, 20
  %v3216 = vpop.permute.xlu0 %3215
  %3217 = vrot.lane.b32.xlu0 %v2514, 20
  %v3218 = vpop.permute.xlu0 %3217
  %3283 = vrot.lane.b32.xlu0 %v2515, 24
  %v3284 = vpop.permute.xlu0 %3283
  %3285 = vrot.lane.b32.xlu0 %v2516, 24
  %v3286 = vpop.permute.xlu0 %3285
  %3287 = vrot.lane.b32.xlu0 %v2517, 24
  %v3288 = vpop.permute.xlu0 %3287
  %3289 = vrot.lane.b32.xlu0 %v2518, 24
  %v3290 = vpop.permute.xlu0 %3289
  %3291 = vrot.lane.b32.xlu0 %v2519, 24
  %v3292 = vpop.permute.xlu0 %3291
  %3293 = vrot.lane.b32.xlu0 %v2520, 24
  %v3294 = vpop.permute.xlu0 %3293
  %3295 = vrot.lane.b32.xlu0 %v2521, 24
  %v3296 = vpop.permute.xlu0 %3295
  %3297 = vrot.lane.b32.xlu0 %v2522, 24
  %v3298 = vpop.permute.xlu0 %3297
  %3299 = vrot.lane.b32.xlu0 %v2523, 24
  %v3300 = vpop.permute.xlu0 %3299
  %3301 = vrot.lane.b32.xlu0 %v2524, 24
  %v3302 = vpop.permute.xlu0 %3301
  %3303 = vrot.lane.b32.xlu0 %v2525, 24
  %v3304 = vpop.permute.xlu0 %3303
  %3305 = vrot.lane.b32.xlu0 %v2526, 24
  %v3306 = vpop.permute.xlu0 %3305
  %3307 = vrot.lane.b32.xlu0 %v2527, 24
  %v3308 = vpop.permute.xlu0 %3307
  %3309 = vrot.lane.b32.xlu0 %v2528, 24
  %v3310 = vpop.permute.xlu0 %3309
  %3311 = vrot.lane.b32.xlu0 %v2529, 24
  %v3312 = vpop.permute.xlu0 %3311
  %3313 = vrot.lane.b32.xlu0 %v2530, 24
  %v3314 = vpop.permute.xlu0 %3313
  %3315 = vrot.lane.b32.xlu0 %v2531, 24
  %v3316 = vpop.permute.xlu0 %3315
  %3317 = vrot.lane.b32.xlu0 %v2532, 24
  %v3318 = vpop.permute.xlu0 %3317
  %3319 = vrot.lane.b32.xlu0 %v2533, 24
  %v3320 = vpop.permute.xlu0 %3319
  %3321 = vrot.lane.b32.xlu0 %v2534, 24
  %v3322 = vpop.permute.xlu0 %3321
  %3323 = vrot.lane.b32.xlu0 %v2535, 24
  %v3324 = vpop.permute.xlu0 %3323
  %3325 = vrot.lane.b32.xlu0 %v2536, 24
  %v3326 = vpop.permute.xlu0 %3325
  %3327 = vrot.lane.b32.xlu0 %v2537, 24
  %v3328 = vpop.permute.xlu0 %3327
  %3329 = vrot.lane.b32.xlu0 %v2538, 24
  %v3330 = vpop.permute.xlu0 %3329
  %3331 = vrot.lane.b32.xlu0 %v2539, 24
  %v3332 = vpop.permute.xlu0 %3331
  %3333 = vrot.lane.b32.xlu0 %v2540, 24
  %v3334 = vpop.permute.xlu0 %3333
  %3335 = vrot.lane.b32.xlu0 %v2541, 24
  %v3336 = vpop.permute.xlu0 %3335
  %3337 = vrot.lane.b32.xlu0 %v2542, 24
  %v3338 = vpop.permute.xlu0 %3337
  %3339 = vrot.lane.b32.xlu0 %v2543, 24
  %v3340 = vpop.permute.xlu0 %3339
  %3341 = vrot.lane.b32.xlu0 %v2544, 24
  %v3342 = vpop.permute.xlu0 %3341
  %3343 = vrot.lane.b32.xlu0 %v2545, 24
  %v3344 = vpop.permute.xlu0 %3343
  %3345 = vrot.lane.b32.xlu0 %v2546, 24
  %v3346 = vpop.permute.xlu0 %3345
  %3411 = vrot.lane.b32.xlu0 %v2547, 28
  %v3412 = vpop.permute.xlu0 %3411
  %3413 = vrot.lane.b32.xlu0 %v2548, 28
  %v3414 = vpop.permute.xlu0 %3413
  %3415 = vrot.lane.b32.xlu0 %v2549, 28
  %v3416 = vpop.permute.xlu0 %3415
  %3417 = vrot.lane.b32.xlu0 %v2550, 28
  %v3418 = vpop.permute.xlu0 %3417
  %3419 = vrot.lane.b32.xlu0 %v2551, 28
  %v3420 = vpop.permute.xlu0 %3419
  %3421 = vrot.lane.b32.xlu0 %v2552, 28
  %v3422 = vpop.permute.xlu0 %3421
  %3423 = vrot.lane.b32.xlu0 %v2553, 28
  %v3424 = vpop.permute.xlu0 %3423
  %3425 = vrot.lane.b32.xlu0 %v2554, 28
  %v3426 = vpop.permute.xlu0 %3425
  %3427 = vrot.lane.b32.xlu0 %v2555, 28
  %v3428 = vpop.permute.xlu0 %3427
  %3429 = vrot.lane.b32.xlu0 %v2556, 28
  %v3430 = vpop.permute.xlu0 %3429
  %3431 = vrot.lane.b32.xlu0 %v2557, 28
  %v3432 = vpop.permute.xlu0 %3431
  %3433 = vrot.lane.b32.xlu0 %v2558, 28
  %v3434 = vpop.permute.xlu0 %3433
  %3435 = vrot.lane.b32.xlu0 %v2559, 28
  %v3436 = vpop.permute.xlu0 %3435
  %3437 = vrot.lane.b32.xlu0 %v2560, 28
  %v3438 = vpop.permute.xlu0 %3437
  %3439 = vrot.lane.b32.xlu0 %v2561, 28
  %v3440 = vpop.permute.xlu0 %3439
  %3441 = vrot.lane.b32.xlu0 %v2562, 28
  %v3442 = vpop.permute.xlu0 %3441
  %3443 = vrot.lane.b32.xlu0 %v2563, 28
  %v3444 = vpop.permute.xlu0 %3443
  %3445 = vrot.lane.b32.xlu0 %v2564, 28
  %v3446 = vpop.permute.xlu0 %3445
  %3447 = vrot.lane.b32.xlu0 %v2565, 28
  %v3448 = vpop.permute.xlu0 %3447
  %3449 = vrot.lane.b32.xlu0 %v2566, 28
  %v3450 = vpop.permute.xlu0 %3449
  %3451 = vrot.lane.b32.xlu0 %v2567, 28
  %v3452 = vpop.permute.xlu0 %3451
  %3453 = vrot.lane.b32.xlu0 %v2568, 28
  %v3454 = vpop.permute.xlu0 %3453
  %3455 = vrot.lane.b32.xlu0 %v2569, 28
  %v3456 = vpop.permute.xlu0 %3455
  %3457 = vrot.lane.b32.xlu0 %v2570, 28
  %v3458 = vpop.permute.xlu0 %3457
  %3459 = vrot.lane.b32.xlu0 %v2571, 28
  %v3460 = vpop.permute.xlu0 %3459
  %3461 = vrot.lane.b32.xlu0 %v2572, 28
  %v3462 = vpop.permute.xlu0 %3461
  %3463 = vrot.lane.b32.xlu0 %v2573, 28
  %v3464 = vpop.permute.xlu0 %3463
  %3465 = vrot.lane.b32.xlu0 %v2574, 28
  %v3466 = vpop.permute.xlu0 %3465
  %3467 = vrot.lane.b32.xlu0 %v2575, 28
  %v3468 = vpop.permute.xlu0 %3467
  %3469 = vrot.lane.b32.xlu0 %v2576, 28
  %v3470 = vpop.permute.xlu0 %3469
  %3471 = vrot.lane.b32.xlu0 %v2577, 28
  %v3472 = vpop.permute.xlu0 %3471
  %3473 = vrot.lane.b32.xlu0 %v2578, 28
  %v3474 = vpop.permute.xlu0 %3473
  %3539 = vrot.lane.b32.xlu0 %v2579, 32
  %v3540 = vpop.permute.xlu0 %3539
  %3541 = vrot.lane.b32.xlu0 %v2580, 32
  %v3542 = vpop.permute.xlu0 %3541
  %3543 = vrot.lane.b32.xlu0 %v2581, 32
  %v3544 = vpop.permute.xlu0 %3543
  %3545 = vrot.lane.b32.xlu0 %v2582, 32
  %v3546 = vpop.permute.xlu0 %3545
  %3547 = vrot.lane.b32.xlu0 %v2583, 32
  %v3548 = vpop.permute.xlu0 %3547
  %3549 = vrot.lane.b32.xlu0 %v2584, 32
  %v3550 = vpop.permute.xlu0 %3549
  %3551 = vrot.lane.b32.xlu0 %v2585, 32
  %v3552 = vpop.permute.xlu0 %3551
  %3553 = vrot.lane.b32.xlu0 %v2586, 32
  %v3554 = vpop.permute.xlu0 %3553
  %3555 = vrot.lane.b32.xlu0 %v2587, 32
  %v3556 = vpop.permute.xlu0 %3555
  %3557 = vrot.lane.b32.xlu0 %v2588, 32
  %v3558 = vpop.permute.xlu0 %3557
  %3559 = vrot.lane.b32.xlu0 %v2589, 32
  %v3560 = vpop.permute.xlu0 %3559
  %3561 = vrot.lane.b32.xlu0 %v2590, 32
  %v3562 = vpop.permute.xlu0 %3561
  %3563 = vrot.lane.b32.xlu0 %v2591, 32
  %v3564 = vpop.permute.xlu0 %3563
  %3565 = vrot.lane.b32.xlu0 %v2592, 32
  %v3566 = vpop.permute.xlu0 %3565
  %3567 = vrot.lane.b32.xlu0 %v2593, 32
  %v3568 = vpop.permute.xlu0 %3567
  %3569 = vrot.lane.b32.xlu0 %v2594, 32
  %v3570 = vpop.permute.xlu0 %3569
  %3571 = vrot.lane.b32.xlu0 %v2595, 32
  %v3572 = vpop.permute.xlu0 %3571
  %3573 = vrot.lane.b32.xlu0 %v2596, 32
  %v3574 = vpop.permute.xlu0 %3573
  %3575 = vrot.lane.b32.xlu0 %v2597, 32
  %v3576 = vpop.permute.xlu0 %3575
  %3577 = vrot.lane.b32.xlu0 %v2598, 32
  %v3578 = vpop.permute.xlu0 %3577
  %3579 = vrot.lane.b32.xlu0 %v2599, 32
  %v3580 = vpop.permute.xlu0 %3579
  %3581 = vrot.lane.b32.xlu0 %v2600, 32
  %v3582 = vpop.permute.xlu0 %3581
  %3583 = vrot.lane.b32.xlu0 %v2601, 32
  %v3584 = vpop.permute.xlu0 %3583
  %3585 = vrot.lane.b32.xlu0 %v2602, 32
  %v3586 = vpop.permute.xlu0 %3585
  %3587 = vrot.lane.b32.xlu0 %v2603, 32
  %v3588 = vpop.permute.xlu0 %3587
  %3589 = vrot.lane.b32.xlu0 %v2604, 32
  %v3590 = vpop.permute.xlu0 %3589
  %3591 = vrot.lane.b32.xlu0 %v2605, 32
  %v3592 = vpop.permute.xlu0 %3591
  %3593 = vrot.lane.b32.xlu0 %v2606, 32
  %v3594 = vpop.permute.xlu0 %3593
  %3595 = vrot.lane.b32.xlu0 %v2607, 32
  %v3596 = vpop.permute.xlu0 %3595
  %3597 = vrot.lane.b32.xlu0 %v2608, 32
  %v3598 = vpop.permute.xlu0 %3597
  %3599 = vrot.lane.b32.xlu0 %v2609, 32
  %v3600 = vpop.permute.xlu0 %3599
  %3601 = vrot.lane.b32.xlu0 %v2610, 32
  %v3602 = vpop.permute.xlu0 %3601
  %v3635 = vsel %vm26, %v2323, %v2644
  %v3636 = vsel %vm26, %v2324, %v2646
  %v3637 = vsel %vm26, %v2325, %v2648
  %v3638 = vsel %vm26, %v2326, %v2650
  %v3639 = vsel %vm26, %v2327, %v2652
  %v3640 = vsel %vm26, %v2328, %v2654
  %v3641 = vsel %vm26, %v2329, %v2656
  %v3642 = vsel %vm26, %v2330, %v2658
  %v3643 = vsel %vm26, %v2331, %v2660
  %v3644 = vsel %vm26, %v2332, %v2662
  %v3645 = vsel %vm26, %v2333, %v2664
  %v3646 = vsel %vm26, %v2334, %v2666
  %v3647 = vsel %vm26, %v2335, %v2668
  %v3648 = vsel %vm26, %v2336, %v2670
  %v3649 = vsel %vm26, %v2337, %v2672
  %v3650 = vsel %vm26, %v2338, %v2674
  %v3651 = vsel %vm26, %v2339, %v2676
  %v3652 = vsel %vm26, %v2340, %v2678
  %v3653 = vsel %vm26, %v2341, %v2680
  %v3654 = vsel %vm26, %v2342, %v2682
  %v3655 = vsel %vm26, %v2343, %v2684
  %v3656 = vsel %vm26, %v2344, %v2686
  %v3657 = vsel %vm26, %v2345, %v2688
  %v3658 = vsel %vm26, %v2346, %v2690
  %v3659 = vsel %vm26, %v2347, %v2692
  %v3660 = vsel %vm26, %v2348, %v2694
  %v3661 = vsel %vm26, %v2349, %v2696
  %v3662 = vsel %vm26, %v2350, %v2698
  %v3663 = vsel %vm26, %v2351, %v2700
  %v3664 = vsel %vm26, %v2352, %v2702
  %v3665 = vsel %vm26, %v2353, %v2704
  %v3666 = vsel %vm26, %v2354, %v2706
  %v3667 = vsel %vm1492, %v3635, %v2772
  %v3668 = vsel %vm1492, %v3636, %v2774
  %v3669 = vsel %vm1492, %v3637, %v2776
  %v3670 = vsel %vm1492, %v3638, %v2778
  %v3671 = vsel %vm1492, %v3639, %v2780
  %v3672 = vsel %vm1492, %v3640, %v2782
  %v3673 = vsel %vm1492, %v3641, %v2784
  %v3674 = vsel %vm1492, %v3642, %v2786
  %v3675 = vsel %vm1492, %v3643, %v2788
  %v3676 = vsel %vm1492, %v3644, %v2790
  %v3677 = vsel %vm1492, %v3645, %v2792
  %v3678 = vsel %vm1492, %v3646, %v2794
  %v3679 = vsel %vm1492, %v3647, %v2796
  %v3680 = vsel %vm1492, %v3648, %v2798
  %v3681 = vsel %vm1492, %v3649, %v2800
  %v3682 = vsel %vm1492, %v3650, %v2802
  %v3683 = vsel %vm1492, %v3651, %v2804
  %v3684 = vsel %vm1492, %v3652, %v2806
  %v3685 = vsel %vm1492, %v3653, %v2808
  %v3686 = vsel %vm1492, %v3654, %v2810
  %v3687 = vsel %vm1492, %v3655, %v2812
  %v3688 = vsel %vm1492, %v3656, %v2814
  %v3689 = vsel %vm1492, %v3657, %v2816
  %v3690 = vsel %vm1492, %v3658, %v2818
  %v3691 = vsel %vm1492, %v3659, %v2820
  %v3692 = vsel %vm1492, %v3660, %v2822
  %v3693 = vsel %vm1492, %v3661, %v2824
  %v3694 = vsel %vm1492, %v3662, %v2826
  %v3695 = vsel %vm1492, %v3663, %v2828
  %v3696 = vsel %vm1492, %v3664, %v2830
  %v3697 = vsel %vm1492, %v3665, %v2832
  %v3698 = vsel %vm1492, %v3666, %v2834
  %v3699 = vsel %vm1525, %v3667, %v2900
  %v3700 = vsel %vm1525, %v3668, %v2902
  %v3701 = vsel %vm1525, %v3669, %v2904
  %v3702 = vsel %vm1525, %v3670, %v2906
  %v3703 = vsel %vm1525, %v3671, %v2908
  %v3704 = vsel %vm1525, %v3672, %v2910
  %v3705 = vsel %vm1525, %v3673, %v2912
  %v3706 = vsel %vm1525, %v3674, %v2914
  %v3707 = vsel %vm1525, %v3675, %v2916
  %v3708 = vsel %vm1525, %v3676, %v2918
  %v3709 = vsel %vm1525, %v3677, %v2920
  %v3710 = vsel %vm1525, %v3678, %v2922
  %v3711 = vsel %vm1525, %v3679, %v2924
  %v3712 = vsel %vm1525, %v3680, %v2926
  %v3713 = vsel %vm1525, %v3681, %v2928
  %v3714 = vsel %vm1525, %v3682, %v2930
  %v3715 = vsel %vm1525, %v3683, %v2932
  %v3716 = vsel %vm1525, %v3684, %v2934
  %v3717 = vsel %vm1525, %v3685, %v2936
  %v3718 = vsel %vm1525, %v3686, %v2938
  %v3719 = vsel %vm1525, %v3687, %v2940
  %v3720 = vsel %vm1525, %v3688, %v2942
  %v3721 = vsel %vm1525, %v3689, %v2944
  %v3722 = vsel %vm1525, %v3690, %v2946
  %v3723 = vsel %vm1525, %v3691, %v2948
  %v3724 = vsel %vm1525, %v3692, %v2950
  %v3725 = vsel %vm1525, %v3693, %v2952
  %v3726 = vsel %vm1525, %v3694, %v2954
  %v3727 = vsel %vm1525, %v3695, %v2956
  %v3728 = vsel %vm1525, %v3696, %v2958
  %v3729 = vsel %vm1525, %v3697, %v2960
  %v3730 = vsel %vm1525, %v3698, %v2962
  %v3731 = vsel %vm1558, %v3699, %v3028
  %v3732 = vsel %vm1558, %v3700, %v3030
  %v3733 = vsel %vm1558, %v3701, %v3032
  %v3734 = vsel %vm1558, %v3702, %v3034
  %v3735 = vsel %vm1558, %v3703, %v3036
  %v3736 = vsel %vm1558, %v3704, %v3038
  %v3737 = vsel %vm1558, %v3705, %v3040
  %v3738 = vsel %vm1558, %v3706, %v3042
  %v3739 = vsel %vm1558, %v3707, %v3044
  %v3740 = vsel %vm1558, %v3708, %v3046
  %v3741 = vsel %vm1558, %v3709, %v3048
  %v3742 = vsel %vm1558, %v3710, %v3050
  %v3743 = vsel %vm1558, %v3711, %v3052
  %v3744 = vsel %vm1558, %v3712, %v3054
  %v3745 = vsel %vm1558, %v3713, %v3056
  %v3746 = vsel %vm1558, %v3714, %v3058
  %v3747 = vsel %vm1558, %v3715, %v3060
  %v3748 = vsel %vm1558, %v3716, %v3062
  %v3749 = vsel %vm1558, %v3717, %v3064
  %v3750 = vsel %vm1558, %v3718, %v3066
  %v3751 = vsel %vm1558, %v3719, %v3068
  %v3752 = vsel %vm1558, %v3720, %v3070
  %v3753 = vsel %vm1558, %v3721, %v3072
  %v3754 = vsel %vm1558, %v3722, %v3074
  %v3755 = vsel %vm1558, %v3723, %v3076
  %v3756 = vsel %vm1558, %v3724, %v3078
  %v3757 = vsel %vm1558, %v3725, %v3080
  %v3758 = vsel %vm1558, %v3726, %v3082
  %v3759 = vsel %vm1558, %v3727, %v3084
  %v3760 = vsel %vm1558, %v3728, %v3086
  %v3761 = vsel %vm1558, %v3729, %v3088
  %v3762 = vsel %vm1558, %v3730, %v3090
  %v3763 = vsel %vm1591, %v3731, %v3156
  %v3764 = vsel %vm1591, %v3732, %v3158
  %v3765 = vsel %vm1591, %v3733, %v3160
  %v3766 = vsel %vm1591, %v3734, %v3162
  %v3767 = vsel %vm1591, %v3735, %v3164
  %v3768 = vsel %vm1591, %v3736, %v3166
  %v3769 = vsel %vm1591, %v3737, %v3168
  %v3770 = vsel %vm1591, %v3738, %v3170
  %v3771 = vsel %vm1591, %v3739, %v3172
  %v3772 = vsel %vm1591, %v3740, %v3174
  %v3773 = vsel %vm1591, %v3741, %v3176
  %v3774 = vsel %vm1591, %v3742, %v3178
  %v3775 = vsel %vm1591, %v3743, %v3180
  %v3776 = vsel %vm1591, %v3744, %v3182
  %v3777 = vsel %vm1591, %v3745, %v3184
  %v3778 = vsel %vm1591, %v3746, %v3186
  %v3779 = vsel %vm1591, %v3747, %v3188
  %v3780 = vsel %vm1591, %v3748, %v3190
  %v3781 = vsel %vm1591, %v3749, %v3192
  %v3782 = vsel %vm1591, %v3750, %v3194
  %v3783 = vsel %vm1591, %v3751, %v3196
  %v3784 = vsel %vm1591, %v3752, %v3198
  %v3785 = vsel %vm1591, %v3753, %v3200
  %v3786 = vsel %vm1591, %v3754, %v3202
  %v3787 = vsel %vm1591, %v3755, %v3204
  %v3788 = vsel %vm1591, %v3756, %v3206
  %v3789 = vsel %vm1591, %v3757, %v3208
  %v3790 = vsel %vm1591, %v3758, %v3210
  %v3791 = vsel %vm1591, %v3759, %v3212
  %v3792 = vsel %vm1591, %v3760, %v3214
  %v3793 = vsel %vm1591, %v3761, %v3216
  %v3794 = vsel %vm1591, %v3762, %v3218
  %v3795 = vsel %vm1624, %v3763, %v3284
  %v3796 = vsel %vm1624, %v3764, %v3286
  %v3797 = vsel %vm1624, %v3765, %v3288
  %v3798 = vsel %vm1624, %v3766, %v3290
  %v3799 = vsel %vm1624, %v3767, %v3292
  %v3800 = vsel %vm1624, %v3768, %v3294
  %v3801 = vsel %vm1624, %v3769, %v3296
  %v3802 = vsel %vm1624, %v3770, %v3298
  %v3803 = vsel %vm1624, %v3771, %v3300
  %v3804 = vsel %vm1624, %v3772, %v3302
  %v3805 = vsel %vm1624, %v3773, %v3304
  %v3806 = vsel %vm1624, %v3774, %v3306
  %v3807 = vsel %vm1624, %v3775, %v3308
  %v3808 = vsel %vm1624, %v3776, %v3310
  %v3809 = vsel %vm1624, %v3777, %v3312
  %v3810 = vsel %vm1624, %v3778, %v3314
  %v3811 = vsel %vm1624, %v3779, %v3316
  %v3812 = vsel %vm1624, %v3780, %v3318
  %v3813 = vsel %vm1624, %v3781, %v3320
  %v3814 = vsel %vm1624, %v3782, %v3322
  %v3815 = vsel %vm1624, %v3783, %v3324
  %v3816 = vsel %vm1624, %v3784, %v3326
  %v3817 = vsel %vm1624, %v3785, %v3328
  %v3818 = vsel %vm1624, %v3786, %v3330
  %v3819 = vsel %vm1624, %v3787, %v3332
  %v3820 = vsel %vm1624, %v3788, %v3334
  %v3821 = vsel %vm1624, %v3789, %v3336
  %v3822 = vsel %vm1624, %v3790, %v3338
  %v3823 = vsel %vm1624, %v3791, %v3340
  %v3824 = vsel %vm1624, %v3792, %v3342
  %v3825 = vsel %vm1624, %v3793, %v3344
  %v3826 = vsel %vm1624, %v3794, %v3346
  %v3827 = vsel %vm1657, %v3795, %v3412
  %v3828 = vsel %vm1657, %v3796, %v3414
  %v3829 = vsel %vm1657, %v3797, %v3416
  %v3830 = vsel %vm1657, %v3798, %v3418
  %v3831 = vsel %vm1657, %v3799, %v3420
  %v3832 = vsel %vm1657, %v3800, %v3422
  %v3833 = vsel %vm1657, %v3801, %v3424
  %v3834 = vsel %vm1657, %v3802, %v3426
  %v3835 = vsel %vm1657, %v3803, %v3428
  %v3836 = vsel %vm1657, %v3804, %v3430
  %v3837 = vsel %vm1657, %v3805, %v3432
  %v3838 = vsel %vm1657, %v3806, %v3434
  %v3839 = vsel %vm1657, %v3807, %v3436
  %v3840 = vsel %vm1657, %v3808, %v3438
  %v3841 = vsel %vm1657, %v3809, %v3440
  %v3842 = vsel %vm1657, %v3810, %v3442
  %v3843 = vsel %vm1657, %v3811, %v3444
  %v3844 = vsel %vm1657, %v3812, %v3446
  %v3845 = vsel %vm1657, %v3813, %v3448
  %v3846 = vsel %vm1657, %v3814, %v3450
  %v3847 = vsel %vm1657, %v3815, %v3452
  %v3848 = vsel %vm1657, %v3816, %v3454
  %v3849 = vsel %vm1657, %v3817, %v3456
  %v3850 = vsel %vm1657, %v3818, %v3458
  %v3851 = vsel %vm1657, %v3819, %v3460
  %v3852 = vsel %vm1657, %v3820, %v3462
  %v3853 = vsel %vm1657, %v3821, %v3464
  %v3854 = vsel %vm1657, %v3822, %v3466
  %v3855 = vsel %vm1657, %v3823, %v3468
  %v3856 = vsel %vm1657, %v3824, %v3470
  %v3857 = vsel %vm1657, %v3825, %v3472
  %v3858 = vsel %vm1657, %v3826, %v3474
  %v3859 = vsel %vm1690, %v3827, %v3540
  %v3860 = vsel %vm1690, %v3828, %v3542
  %v3861 = vsel %vm1690, %v3829, %v3544
  %v3862 = vsel %vm1690, %v3830, %v3546
  %v3863 = vsel %vm1690, %v3831, %v3548
  %v3864 = vsel %vm1690, %v3832, %v3550
  %v3865 = vsel %vm1690, %v3833, %v3552
  %v3866 = vsel %vm1690, %v3834, %v3554
  %v3867 = vsel %vm1690, %v3835, %v3556
  %v3868 = vsel %vm1690, %v3836, %v3558
  %v3869 = vsel %vm1690, %v3837, %v3560
  %v3870 = vsel %vm1690, %v3838, %v3562
  %v3871 = vsel %vm1690, %v3839, %v3564
  %v3872 = vsel %vm1690, %v3840, %v3566
  %v3873 = vsel %vm1690, %v3841, %v3568
  %v3874 = vsel %vm1690, %v3842, %v3570
  %v3875 = vsel %vm1690, %v3843, %v3572
  %v3876 = vsel %vm1690, %v3844, %v3574
  %v3877 = vsel %vm1690, %v3845, %v3576
  %v3878 = vsel %vm1690, %v3846, %v3578
  %v3879 = vsel %vm1690, %v3847, %v3580
  %v3880 = vsel %vm1690, %v3848, %v3582
  %v3881 = vsel %vm1690, %v3849, %v3584
  %v3882 = vsel %vm1690, %v3850, %v3586
  %v3883 = vsel %vm1690, %v3851, %v3588
  %v3884 = vsel %vm1690, %v3852, %v3590
  %v3885 = vsel %vm1690, %v3853, %v3592
  %v3886 = vsel %vm1690, %v3854, %v3594
  %v3887 = vsel %vm1690, %v3855, %v3596
  %v3888 = vsel %vm1690, %v3856, %v3598
  %v3889 = vsel %vm1690, %v3857, %v3600
  %v3890 = vsel %vm1690, %v3858, %v3602
  %v3891 = vld [vmem:[%s1] sm:$0xff]
  %v3892 = vld [vmem:[%s1 + $0x8] sm:$0xff]
  %v3893 = vld [vmem:[%s1 + $0x10] sm:$0xff]
  %v3894 = vld [vmem:[%s1 + $0x18] sm:$0xff]
  %v3895 = vld [vmem:[%s1 + $0x20] sm:$0xf]
  %v3897 = vsel %vm1728, %v3859, 0
  %v3900 = vsel %vm1728, %v3860, 0
  %v3903 = vsel %vm1728, %v3861, 0
  %v3906 = vsel %vm1728, %v3862, 0
  %v3909 = vsel %vm1728, %v3863, 0
  %v3912 = vsel %vm1728, %v3864, 0
  %v3915 = vsel %vm1728, %v3865, 0
  %v3918 = vsel %vm1728, %v3866, 0
  %v3921 = vsel %vm1728, %v3867, 0
  %v3924 = vsel %vm1728, %v3868, 0
  %v3927 = vsel %vm1728, %v3869, 0
  %v3930 = vsel %vm1728, %v3870, 0
  %v3933 = vsel %vm1728, %v3871, 0
  %v3936 = vsel %vm1728, %v3872, 0
  %v3939 = vsel %vm1728, %v3873, 0
  %v3942 = vsel %vm1728, %v3874, 0
  %v3945 = vsel %vm1728, %v3875, 0
  %v3948 = vsel %vm1728, %v3876, 0
  %v3951 = vsel %vm1728, %v3877, 0
  %v3954 = vsel %vm1728, %v3878, 0
  %v3957 = vsel %vm1728, %v3879, 0
  %v3960 = vsel %vm1728, %v3880, 0
  %v3963 = vsel %vm1728, %v3881, 0
  %v3966 = vsel %vm1728, %v3882, 0
  %v3969 = vsel %vm1728, %v3883, 0
  %v3972 = vsel %vm1728, %v3884, 0
  %v3975 = vsel %vm1728, %v3885, 0
  %v3978 = vsel %vm1728, %v3886, 0
  %v3981 = vsel %vm1728, %v3887, 0
  %v3984 = vsel %vm1728, %v3888, 0
  %v3987 = vsel %vm1728, %v3889, 0
  %v3990 = vsel %vm1728, %v3890, 0
  %v3993 = vsel %vm1825, %v3895, 0
  %3995 = vmatprep.subr.mxu0 0.0
  %3996 = vmatpush1.msra.mxu0 %v3891
  %3997 = vmatprep.subr.mxu0 0.0
  %3998 = vmatpush1.msra.mxu0 %v3892
  %3999 = vmatprep.subr.mxu0 0.0
  %4000 = vmatpush1.msra.mxu0 %v3893
  %4001 = vmatprep.subr.mxu0 0.0
  %4002 = vmatpush1.msra.mxu0 %v3894
  %4003 = vmatprep.subr.mxu0 0.0
  %4004 = vmatpush1.msra.mxu0 %v3993
  %4005 = vmatprep.subr.mxu0 0.0
  %4006 = vmatpush1.msra.mxu0 0.0
  %4007 = vmatprep.subr.mxu0 0.0
  %4008 = vmatpush1.msra.mxu0 0.0
  %4009 = vmatprep.subr.mxu0 0.0
  %4010 = vmatpush1.msra.mxu0 0.0
  %4011 = vmatprep.subr.mxu0 0.0
  %4012 = vmatpush1.msra.mxu0 0.0
  %4013 = vmatprep.subr.mxu0 0.0
  %4014 = vmatpush1.msra.mxu0 0.0
  %4015 = vmatprep.subr.mxu0 0.0
  %4016 = vmatpush1.msra.mxu0 0.0
  %4017 = vmatprep.subr.mxu0 0.0
  %4018 = vmatpush1.msra.mxu0 0.0
  %4019 = vmatprep.subr.mxu0 0.0
  %4020 = vmatpush1.msra.mxu0 0.0
  %4021 = vmatprep.subr.mxu0 0.0
  %4022 = vmatpush1.msra.mxu0 0.0
  %4023 = vmatprep.subr.mxu0 0.0
  %4024 = vmatpush1.msra.mxu0 0.0
  %4025 = vmatprep.subr.mxu0 0.0
  %4026 = vmatpush1.msra.mxu0 0.0
  %4027 = vmatprep.subr.mxu0 0.0
  %4028 = vmatpush1.msra.mxu0 0.0
  %4029 = vmatprep.subr.mxu0 0.0
  %4030 = vmatpush1.msra.mxu0 0.0
  %4031 = vmatprep.subr.mxu0 0.0
  %4032 = vmatpush1.msra.mxu0 0.0
  %4033 = vmatprep.subr.mxu0 0.0
  %4034 = vmatpush1.msra.mxu0 0.0
  %4035 = vmatprep.subr.mxu0 0.0
  %4036 = vmatpush1.msra.mxu0 0.0
  %4037 = vmatprep.subr.mxu0 0.0
  %4038 = vmatpush1.msra.mxu0 0.0
  %4039 = vmatprep.subr.mxu0 0.0
  %4040 = vmatpush1.msra.mxu0 0.0
  %4041 = vmatprep.subr.mxu0 0.0
  %4042 = vmatpush1.msra.mxu0 0.0
  %4043 = vmatprep.subr.mxu0 0.0
  %4044 = vmatpush1.msra.mxu0 0.0
  %4045 = vmatprep.subr.mxu0 0.0
  %4046 = vmatpush1.msra.mxu0 0.0
  %4047 = vmatprep.subr.mxu0 0.0
  %4048 = vmatpush1.msra.mxu0 0.0
  %4049 = vmatprep.subr.mxu0 0.0
  %4050 = vmatpush1.msra.mxu0 0.0
  %4051 = vmatprep.subr.mxu0 0.0
  %4052 = vmatpush1.msra.mxu0 0.0
  %4053 = vmatprep.subr.mxu0 0.0
  %4054 = vmatpush1.msra.mxu0 0.0
  %4055 = vmatprep.subr.mxu0 0.0
  %4056 = vmatpush1.msra.mxu0 0.0
  %4057 = vmatprep.subr.mxu0 0.0
  %4058 = vmatpush1.msra.mxu0 0.0
  %4059 = vmatprep.mubr.f32.mxu0 0.0
  %4060 = vmatmul.mubr.f32.gmra.mrb[0].mxu0 %v3897
  %v4061 = vpop.f32.mrb[0].mxu0
  %v4062 = vadd.f32 0.0, %v4061
  %v4063 = vpop.f32.mrb[0].mxu0
  %4064 = vmatprep.mubr.f32.mxu0 0.0
  %4065 = vmatmul.mubr.f32.gmra.mrb[0].mxu0 %v3900
  %v4066 = vpop.f32.mrb[0].mxu0
  %v4067 = vadd.f32 0.0, %v4066
  %v4068 = vpop.f32.mrb[0].mxu0
  %4069 = vmatprep.mubr.f32.mxu0 0.0
  %4070 = vmatmul.mubr.f32.gmra.mrb[0].mxu0 %v3903
  %v4071 = vpop.f32.mrb[0].mxu0
  %v4072 = vadd.f32 0.0, %v4071
  %v4073 = vpop.f32.mrb[0].mxu0
  %4074 = vmatprep.mubr.f32.mxu0 0.0
  %4075 = vmatmul.mubr.f32.gmra.mrb[0].mxu0 %v3906
  %v4076 = vpop.f32.mrb[0].mxu0
  %v4077 = vadd.f32 0.0, %v4076
  %v4078 = vpop.f32.mrb[0].mxu0
  %4079 = vmatprep.mubr.f32.mxu0 0.0
  %4080 = vmatmul.mubr.f32.gmra.mrb[0].mxu0 %v3909
  %v4081 = vpop.f32.mrb[0].mxu0
  %v4082 = vadd.f32 0.0, %v4081
  %v4083 = vpop.f32.mrb[0].mxu0
  %4084 = vmatprep.mubr.f32.mxu0 0.0
  %4085 = vmatmul.mubr.f32.gmra.mrb[0].mxu0 %v3912
  %v4086 = vpop.f32.mrb[0].mxu0
  %v4087 = vadd.f32 0.0, %v4086
  %v4088 = vpop.f32.mrb[0].mxu0
  %4089 = vmatprep.mubr.f32.mxu0 0.0
  %4090 = vmatmul.mubr.f32.gmra.mrb[0].mxu0 %v3915
  %v4091 = vpop.f32.mrb[0].mxu0
  %v4092 = vadd.f32 0.0, %v4091
  %v4093 = vpop.f32.mrb[0].mxu0
  %4094 = vmatprep.mubr.f32.mxu0 0.0
  %4095 = vmatmul.mubr.f32.gmra.mrb[0].mxu0 %v3918
  %v4096 = vpop.f32.mrb[0].mxu0
  %v4097 = vadd.f32 0.0, %v4096
  %v4098 = vpop.f32.mrb[0].mxu0
  %4099 = vmatprep.mubr.f32.mxu0 0.0
  %4100 = vmatmul.mubr.f32.gmra.mrb[0].mxu0 %v3921
  %v4101 = vpop.f32.mrb[0].mxu0
  %v4102 = vadd.f32 0.0, %v4101
  %v4103 = vpop.f32.mrb[0].mxu0
  %4104 = vmatprep.mubr.f32.mxu0 0.0
  %4105 = vmatmul.mubr.f32.gmra.mrb[0].mxu0 %v3924
  %v4106 = vpop.f32.mrb[0].mxu0
  %v4107 = vadd.f32 0.0, %v4106
  %v4108 = vpop.f32.mrb[0].mxu0
  %4109 = vmatprep.mubr.f32.mxu0 0.0
  %4110 = vmatmul.mubr.f32.gmra.mrb[0].mxu0 %v3927
  %v4111 = vpop.f32.mrb[0].mxu0
  %v4112 = vadd.f32 0.0, %v4111
  %v4113 = vpop.f32.mrb[0].mxu0
  %4114 = vmatprep.mubr.f32.mxu0 0.0
  %4115 = vmatmul.mubr.f32.gmra.mrb[0].mxu0 %v3930
  %v4116 = vpop.f32.mrb[0].mxu0
  %v4117 = vadd.f32 0.0, %v4116
  %v4118 = vpop.f32.mrb[0].mxu0
  %4119 = vmatprep.mubr.f32.mxu0 0.0
  %4120 = vmatmul.mubr.f32.gmra.mrb[0].mxu0 %v3933
  %v4121 = vpop.f32.mrb[0].mxu0
  %v4122 = vadd.f32 0.0, %v4121
  %v4123 = vpop.f32.mrb[0].mxu0
  %4124 = vmatprep.mubr.f32.mxu0 0.0
  %4125 = vmatmul.mubr.f32.gmra.mrb[0].mxu0 %v3936
  %v4126 = vpop.f32.mrb[0].mxu0
  %v4127 = vadd.f32 0.0, %v4126
  %v4128 = vpop.f32.mrb[0].mxu0
  %4129 = vmatprep.mubr.f32.mxu0 0.0
  %4130 = vmatmul.mubr.f32.gmra.mrb[0].mxu0 %v3939
  %v4131 = vpop.f32.mrb[0].mxu0
  %v4132 = vadd.f32 0.0, %v4131
  %v4133 = vpop.f32.mrb[0].mxu0
  %4134 = vmatprep.mubr.f32.mxu0 0.0
  %4135 = vmatmul.mubr.f32.gmra.mrb[0].mxu0 %v3942
  %v4136 = vpop.f32.mrb[0].mxu0
  %v4137 = vadd.f32 0.0, %v4136
  %v4138 = vpop.f32.mrb[0].mxu0
  %4139 = vmatprep.mubr.f32.mxu0 0.0
  %4140 = vmatmul.mubr.f32.gmra.mrb[0].mxu0 %v3945
  %v4141 = vpop.f32.mrb[0].mxu0
  %v4142 = vadd.f32 0.0, %v4141
  %v4143 = vpop.f32.mrb[0].mxu0
  %4144 = vmatprep.mubr.f32.mxu0 0.0
  %4145 = vmatmul.mubr.f32.gmra.mrb[0].mxu0 %v3948
  %v4146 = vpop.f32.mrb[0].mxu0
  %v4147 = vadd.f32 0.0, %v4146
  %v4148 = vpop.f32.mrb[0].mxu0
  %4149 = vmatprep.mubr.f32.mxu0 0.0
  %4150 = vmatmul.mubr.f32.gmra.mrb[0].mxu0 %v3951
  %v4151 = vpop.f32.mrb[0].mxu0
  %v4152 = vadd.f32 0.0, %v4151
  %v4153 = vpop.f32.mrb[0].mxu0
  %4154 = vmatprep.mubr.f32.mxu0 0.0
  %4155 = vmatmul.mubr.f32.gmra.mrb[0].mxu0 %v3954
  %v4156 = vpop.f32.mrb[0].mxu0
  %v4157 = vadd.f32 0.0, %v4156
  %v4158 = vpop.f32.mrb[0].mxu0
  %4159 = vmatprep.mubr.f32.mxu0 0.0
  %4160 = vmatmul.mubr.f32.gmra.mrb[0].mxu0 %v3957
  %v4161 = vpop.f32.mrb[0].mxu0
  %v4162 = vadd.f32 0.0, %v4161
  %v4163 = vpop.f32.mrb[0].mxu0
  %4164 = vmatprep.mubr.f32.mxu0 0.0
  %4165 = vmatmul.mubr.f32.gmra.mrb[0].mxu0 %v3960
  %v4166 = vpop.f32.mrb[0].mxu0
  %v4167 = vadd.f32 0.0, %v4166
  %v4168 = vpop.f32.mrb[0].mxu0
  %4169 = vmatprep.mubr.f32.mxu0 0.0
  %4170 = vmatmul.mubr.f32.gmra.mrb[0].mxu0 %v3963
  %v4171 = vpop.f32.mrb[0].mxu0
  %v4172 = vadd.f32 0.0, %v4171
  %v4173 = vpop.f32.mrb[0].mxu0
  %4174 = vmatprep.mubr.f32.mxu0 0.0
  %4175 = vmatmul.mubr.f32.gmra.mrb[0].mxu0 %v3966
  %v4176 = vpop.f32.mrb[0].mxu0
  %v4177 = vadd.f32 0.0, %v4176
  %v4178 = vpop.f32.mrb[0].mxu0
  %4179 = vmatprep.mubr.f32.mxu0 0.0
  %4180 = vmatmul.mubr.f32.gmra.mrb[0].mxu0 %v3969
  %v4181 = vpop.f32.mrb[0].mxu0
  %v4182 = vadd.f32 0.0, %v4181
  %v4183 = vpop.f32.mrb[0].mxu0
  %4184 = vmatprep.mubr.f32.mxu0 0.0
  %4185 = vmatmul.mubr.f32.gmra.mrb[0].mxu0 %v3972
  %v4186 = vpop.f32.mrb[0].mxu0
  %v4187 = vadd.f32 0.0, %v4186
  %v4188 = vpop.f32.mrb[0].mxu0
  %4189 = vmatprep.mubr.f32.mxu0 0.0
  %4190 = vmatmul.mubr.f32.gmra.mrb[0].mxu0 %v3975
  %v4191 = vpop.f32.mrb[0].mxu0
  %v4192 = vadd.f32 0.0, %v4191
  %v4193 = vpop.f32.mrb[0].mxu0
  %4194 = vmatprep.mubr.f32.mxu0 0.0
  %4195 = vmatmul.mubr.f32.gmra.mrb[0].mxu0 %v3978
  %v4196 = vpop.f32.mrb[0].mxu0
  %v4197 = vadd.f32 0.0, %v4196
  %v4198 = vpop.f32.mrb[0].mxu0
  %4199 = vmatprep.mubr.f32.mxu0 0.0
  %4200 = vmatmul.mubr.f32.gmra.mrb[0].mxu0 %v3981
  %v4201 = vpop.f32.mrb[0].mxu0
  %v4202 = vadd.f32 0.0, %v4201
  %v4203 = vpop.f32.mrb[0].mxu0
  %4204 = vmatprep.mubr.f32.mxu0 0.0
  %4205 = vmatmul.mubr.f32.gmra.mrb[0].mxu0 %v3984
  %v4206 = vpop.f32.mrb[0].mxu0
  %v4207 = vadd.f32 0.0, %v4206
  %v4208 = vpop.f32.mrb[0].mxu0
  %4209 = vmatprep.mubr.f32.mxu0 0.0
  %4210 = vmatmul.mubr.f32.gmra.mrb[0].mxu0 %v3987
  %v4211 = vpop.f32.mrb[0].mxu0
  %v4212 = vadd.f32 0.0, %v4211
  %v4213 = vpop.f32.mrb[0].mxu0
  %4214 = vmatprep.mubr.f32.mxu0 0.0
  %4215 = vmatmul.mubr.f32.gmra.mrb[0].mxu0 %v3990
  %v4216 = vpop.f32.mrb[0].mxu0
  %v4217 = vadd.f32 0.0, %v4216
  %v4218 = vpop.f32.mrb[0].mxu0
  %4219 = vdwg.mxu0
  %s4220 = scalar_lea.vmem [#allocation4], 256
  %4221 = vst.msk [vmem:[%s4220] sm:$0xff] %vm1492, %v4062
  %4222 = vst.msk [vmem:[%s4220 + $0x8] sm:$0xff] %vm1492, %v4067
  %4223 = vst.msk [vmem:[%s4220 + $0x10] sm:$0xff] %vm1492, %v4072
  %4224 = vst.msk [vmem:[%s4220 + $0x18] sm:$0xff] %vm1492, %v4077
  %4225 = vst.msk [vmem:[%s4220 + $0x20] sm:$0xff] %vm1492, %v4082
  %4226 = vst.msk [vmem:[%s4220 + $0x28] sm:$0xff] %vm1492, %v4087
  %4227 = vst.msk [vmem:[%s4220 + $0x30] sm:$0xff] %vm1492, %v4092
  %4228 = vst.msk [vmem:[%s4220 + $0x38] sm:$0xff] %vm1492, %v4097
  %4229 = vst.msk [vmem:[%s4220 + $0x40] sm:$0xff] %vm1492, %v4102
  %4230 = vst.msk [vmem:[%s4220 + $0x48] sm:$0xff] %vm1492, %v4107
  %4231 = vst.msk [vmem:[%s4220 + $0x50] sm:$0xff] %vm1492, %v4112
  %4232 = vst.msk [vmem:[%s4220 + $0x58] sm:$0xff] %vm1492, %v4117
  %4233 = vst.msk [vmem:[%s4220 + $0x60] sm:$0xff] %vm1492, %v4122
  %4234 = vst.msk [vmem:[%s4220 + $0x68] sm:$0xff] %vm1492, %v4127
  %4235 = vst.msk [vmem:[%s4220 + $0x70] sm:$0xff] %vm1492, %v4132
  %4236 = vst.msk [vmem:[%s4220 + $0x78] sm:$0xff] %vm1492, %v4137
  %4237 = vst.msk [vmem:[%s4220 + $0x80] sm:$0xff] %vm1492, %v4142
  %4238 = vst.msk [vmem:[%s4220 + $0x88] sm:$0xff] %vm1492, %v4147
  %4239 = vst.msk [vmem:[%s4220 + $0x90] sm:$0xff] %vm1492, %v4152
  %4240 = vst.msk [vmem:[%s4220 + $0x98] sm:$0xff] %vm1492, %v4157
  %4241 = vst.msk [vmem:[%s4220 + $0xa0] sm:$0xff] %vm1492, %v4162
  %4242 = vst.msk [vmem:[%s4220 + $0xa8] sm:$0xff] %vm1492, %v4167
  %4243 = vst.msk [vmem:[%s4220 + $0xb0] sm:$0xff] %vm1492, %v4172
  %4244 = vst.msk [vmem:[%s4220 + $0xb8] sm:$0xff] %vm1492, %v4177
  %4245 = vst.msk [vmem:[%s4220 + $0xc0] sm:$0xff] %vm1492, %v4182
  %4246 = vst.msk [vmem:[%s4220 + $0xc8] sm:$0xff] %vm1492, %v4187
  %4247 = vst.msk [vmem:[%s4220 + $0xd0] sm:$0xff] %vm1492, %v4192
  %4248 = vst.msk [vmem:[%s4220 + $0xd8] sm:$0xff] %vm1492, %v4197
  %4249 = vst.msk [vmem:[%s4220 + $0xe0] sm:$0xff] %vm1492, %v4202
  %4250 = vst.msk [vmem:[%s4220 + $0xe8] sm:$0xff] %vm1492, %v4207
  %4251 = vst.msk [vmem:[%s4220 + $0xf0] sm:$0xff] %vm1492, %v4212
  %4252 = vst.msk [vmem:[%s4220 + $0xf8] sm:$0xff] %vm1492, %v4217
  %v4253 = vsel %vm1492, %v4062, 0.0
  %v4254 = vsel %vm1492, %v4067, 0.0
  %v4255 = vadd.f32 %v4253, %v4254
  %v4256 = vsel %vm1492, %v4072, 0.0
  %v4257 = vadd.f32 %v4255, %v4256
  %v4258 = vsel %vm1492, %v4077, 0.0
  %v4259 = vadd.f32 %v4257, %v4258
  %v4260 = vsel %vm1492, %v4082, 0.0
  %v4261 = vadd.f32 %v4259, %v4260
  %v4262 = vsel %vm1492, %v4087, 0.0
  %v4263 = vadd.f32 %v4261, %v4262
  %v4264 = vsel %vm1492, %v4092, 0.0
  %v4265 = vadd.f32 %v4263, %v4264
  %v4266 = vsel %vm1492, %v4097, 0.0
  %v4267 = vadd.f32 %v4265, %v4266
  %v4268 = vsel %vm1492, %v4102, 0.0
  %v4269 = vadd.f32 %v4267, %v4268
  %v4270 = vsel %vm1492, %v4107, 0.0
  %v4271 = vadd.f32 %v4269, %v4270
  %v4272 = vsel %vm1492, %v4112, 0.0
  %v4273 = vadd.f32 %v4271, %v4272
  %v4274 = vsel %vm1492, %v4117, 0.0
  %v4275 = vadd.f32 %v4273, %v4274
  %v4276 = vsel %vm1492, %v4122, 0.0
  %v4277 = vadd.f32 %v4275, %v4276
  %v4278 = vsel %vm1492, %v4127, 0.0
  %v4279 = vadd.f32 %v4277, %v4278
  %v4280 = vsel %vm1492, %v4132, 0.0
  %v4281 = vadd.f32 %v4279, %v4280
  %v4282 = vsel %vm1492, %v4137, 0.0
  %v4283 = vadd.f32 %v4281, %v4282
  %v4284 = vsel %vm1492, %v4142, 0.0
  %v4285 = vadd.f32 %v4283, %v4284
  %v4286 = vsel %vm1492, %v4147, 0.0
  %v4287 = vadd.f32 %v4285, %v4286
  %v4288 = vsel %vm1492, %v4152, 0.0
  %v4289 = vadd.f32 %v4287, %v4288
  %v4290 = vsel %vm1492, %v4157, 0.0
  %v4291 = vadd.f32 %v4289, %v4290
  %v4292 = vsel %vm1492, %v4162, 0.0
  %v4293 = vadd.f32 %v4291, %v4292
  %v4294 = vsel %vm1492, %v4167, 0.0
  %v4295 = vadd.f32 %v4293, %v4294
  %v4296 = vsel %vm1492, %v4172, 0.0
  %v4297 = vadd.f32 %v4295, %v4296
  %v4298 = vsel %vm1492, %v4177, 0.0
  %v4299 = vadd.f32 %v4297, %v4298
  %v4300 = vsel %vm1492, %v4182, 0.0
  %v4301 = vadd.f32 %v4299, %v4300
  %v4302 = vsel %vm1492, %v4187, 0.0
  %v4303 = vadd.f32 %v4301, %v4302
  %v4304 = vsel %vm1492, %v4192, 0.0
  %v4305 = vadd.f32 %v4303, %v4304
  %v4306 = vsel %vm1492, %v4197, 0.0
  %v4307 = vadd.f32 %v4305, %v4306
  %v4308 = vsel %vm1492, %v4202, 0.0
  %v4309 = vadd.f32 %v4307, %v4308
  %v4310 = vsel %vm1492, %v4207, 0.0
  %v4311 = vadd.f32 %v4309, %v4310
  %v4312 = vsel %vm1492, %v4212, 0.0
  %v4313 = vadd.f32 %v4311, %v4312
  %v4314 = vsel %vm1492, %v4217, 0.0
  %v4315 = vadd.f32 %v4313, %v4314
  %v4316 = vrot.slane %v4315, 4
  %v4317 = vadd.f32 %v4315, %v4316
  %v4318 = vrot.slane %v4317, 2
  %v4319 = vadd.f32 %v4317, %v4318
  %v4320 = vrot.slane %v4319, 1
  %v4321 = vadd.f32 %v4319, %v4320
  %v4322 = vadd.f32 %v2155, %v4321
  %v4323 = vmul.f32 %v4062, %v4062
  %v4324 = vmul.f32 %v4067, %v4067
  %v4325 = vmul.f32 %v4072, %v4072
  %v4326 = vmul.f32 %v4077, %v4077
  %v4327 = vmul.f32 %v4082, %v4082
  %v4328 = vmul.f32 %v4087, %v4087
  %v4329 = vmul.f32 %v4092, %v4092
  %v4330 = vmul.f32 %v4097, %v4097
  %v4331 = vmul.f32 %v4102, %v4102
  %v4332 = vmul.f32 %v4107, %v4107
  %v4333 = vmul.f32 %v4112, %v4112
  %v4334 = vmul.f32 %v4117, %v4117
  %v4335 = vmul.f32 %v4122, %v4122
  %v4336 = vmul.f32 %v4127, %v4127
  %v4337 = vmul.f32 %v4132, %v4132
  %v4338 = vmul.f32 %v4137, %v4137
  %v4339 = vmul.f32 %v4142, %v4142
  %v4340 = vmul.f32 %v4147, %v4147
  %v4341 = vmul.f32 %v4152, %v4152
  %v4342 = vmul.f32 %v4157, %v4157
  %v4343 = vmul.f32 %v4162, %v4162
  %v4344 = vmul.f32 %v4167, %v4167
  %v4345 = vmul.f32 %v4172, %v4172
  %v4346 = vmul.f32 %v4177, %v4177
  %v4347 = vmul.f32 %v4182, %v4182
  %v4348 = vmul.f32 %v4187, %v4187
  %v4349 = vmul.f32 %v4192, %v4192
  %v4350 = vmul.f32 %v4197, %v4197
  %v4351 = vmul.f32 %v4202, %v4202
  %v4352 = vmul.f32 %v4207, %v4207
  %v4353 = vmul.f32 %v4212, %v4212
  %v4354 = vmul.f32 %v4217, %v4217
  %v4355 = vsel %vm1492, %v4323, 0.0
  %v4356 = vsel %vm1492, %v4324, 0.0
  %v4357 = vadd.f32 %v4355, %v4356
  %v4358 = vsel %vm1492, %v4325, 0.0
  %v4359 = vadd.f32 %v4357, %v4358
  %v4360 = vsel %vm1492, %v4326, 0.0
  %v4361 = vadd.f32 %v4359, %v4360
  %v4362 = vsel %vm1492, %v4327, 0.0
  %v4363 = vadd.f32 %v4361, %v4362
  %v4364 = vsel %vm1492, %v4328, 0.0
  %v4365 = vadd.f32 %v4363, %v4364
  %v4366 = vsel %vm1492, %v4329, 0.0
  %v4367 = vadd.f32 %v4365, %v4366
  %v4368 = vsel %vm1492, %v4330, 0.0
  %v4369 = vadd.f32 %v4367, %v4368
  %v4370 = vsel %vm1492, %v4331, 0.0
  %v4371 = vadd.f32 %v4369, %v4370
  %v4372 = vsel %vm1492, %v4332, 0.0
  %v4373 = vadd.f32 %v4371, %v4372
  %v4374 = vsel %vm1492, %v4333, 0.0
  %v4375 = vadd.f32 %v4373, %v4374
  %v4376 = vsel %vm1492, %v4334, 0.0
  %v4377 = vadd.f32 %v4375, %v4376
  %v4378 = vsel %vm1492, %v4335, 0.0
  %v4379 = vadd.f32 %v4377, %v4378
  %v4380 = vsel %vm1492, %v4336, 0.0
  %v4381 = vadd.f32 %v4379, %v4380
  %v4382 = vsel %vm1492, %v4337, 0.0
  %v4383 = vadd.f32 %v4381, %v4382
  %v4384 = vsel %vm1492, %v4338, 0.0
  %v4385 = vadd.f32 %v4383, %v4384
  %v4386 = vsel %vm1492, %v4339, 0.0
  %v4387 = vadd.f32 %v4385, %v4386
  %v4388 = vsel %vm1492, %v4340, 0.0
  %v4389 = vadd.f32 %v4387, %v4388
  %v4390 = vsel %vm1492, %v4341, 0.0
  %v4391 = vadd.f32 %v4389, %v4390
  %v4392 = vsel %vm1492, %v4342, 0.0
  %v4393 = vadd.f32 %v4391, %v4392
  %v4394 = vsel %vm1492, %v4343, 0.0
  %v4395 = vadd.f32 %v4393, %v4394
  %v4396 = vsel %vm1492, %v4344, 0.0
  %v4397 = vadd.f32 %v4395, %v4396
  %v4398 = vsel %vm1492, %v4345, 0.0
  %v4399 = vadd.f32 %v4397, %v4398
  %v4400 = vsel %vm1492, %v4346, 0.0
  %v4401 = vadd.f32 %v4399, %v4400
  %v4402 = vsel %vm1492, %v4347, 0.0
  %v4403 = vadd.f32 %v4401, %v4402
  %v4404 = vsel %vm1492, %v4348, 0.0
  %v4405 = vadd.f32 %v4403, %v4404
  %v4406 = vsel %vm1492, %v4349, 0.0
  %v4407 = vadd.f32 %v4405, %v4406
  %v4408 = vsel %vm1492, %v4350, 0.0
  %v4409 = vadd.f32 %v4407, %v4408
  %v4410 = vsel %vm1492, %v4351, 0.0
  %v4411 = vadd.f32 %v4409, %v4410
  %v4412 = vsel %vm1492, %v4352, 0.0
  %v4413 = vadd.f32 %v4411, %v4412
  %v4414 = vsel %vm1492, %v4353, 0.0
  %v4415 = vadd.f32 %v4413, %v4414
  %v4416 = vsel %vm1492, %v4354, 0.0
  %v4417 = vadd.f32 %v4415, %v4416
  %v4418 = vrot.slane %v4417, 4
  %v4419 = vadd.f32 %v4417, %v4418
  %v4420 = vrot.slane %v4419, 2
  %v4421 = vadd.f32 %v4419, %v4420
  %v4422 = vrot.slane %v4421, 1
  %v4423 = vadd.f32 %v4421, %v4422
  %v4424 = vadd.f32 %v2257, %v4423
  %v4425 = vld [vmem:[%s3] sm:$0x1]
  %v4426 = vld [vmem:[%s4] sm:$0x1]
  %v4427 = vmul.f32 %v4322, 0.001953125
  %v4428 = vmul.f32 %v4424, 0.001953125
  %v4429 = vmul.f32 %v4427, %v4427
  %v4430 = vsub.f32 %v4428, %v4429
  %v4431 = vmax.f32 %v4430, 0.0
  %v4432 = vadd.f32 %v4431, 1e-05
  %v4433 = vrsqrt.pop %v4432
  %v4434 = vmul.f32 %v4425, %v4433
  %v4435 = vmul.f32 %v4427, %v4434
  %v4436 = vsub.f32 %v4426, %v4435
  %4437 = vst.msk [vmem:[#allocation3] sm:$0xff] %vm1492, 0.0
  %4438 = vst.msk [vmem:[#allocation3 + $0x8] sm:$0xff] %vm1492, 0.0
  %vm4439 = vcmask 58368
  %4440 = vst.msk [vmem:[#allocation3 + $0x10] sm:$0x3] %vm4439, 0.0
  %4441 = vst.msk [vmem:[#allocation3 + $0x18] sm:$0xff] %vm1492, 0.0
  %4442 = vst.msk [vmem:[#allocation3 + $0x20] sm:$0xff] %vm1492, 0.0
  %4443 = vst.msk [vmem:[#allocation3 + $0x28] sm:$0x3] %vm4439, 0.0
  %4444 = vst.msk [vmem:[#allocation3 + $0x30] sm:$0xff] %vm1492, 0.0
  %4445 = vst.msk [vmem:[#allocation3 + $0x38] sm:$0xff] %vm1492, 0.0
  %4446 = vst.msk [vmem:[#allocation3 + $0x40] sm:$0x3] %vm4439, 0.0
  %4447 = vst.msk [vmem:[#allocation3 + $0x48] sm:$0xff] %vm1492, 0.0
  %4448 = vst.msk [vmem:[#allocation3 + $0x50] sm:$0xff] %vm1492, 0.0
  %4449 = vst.msk [vmem:[#allocation3 + $0x58] sm:$0x3] %vm4439, 0.0
  %4450 = vst.msk [vmem:[#allocation3 + $0x60] sm:$0xff] %vm1492, 0.0
  %4451 = vst.msk [vmem:[#allocation3 + $0x68] sm:$0xff] %vm1492, 0.0
  %4452 = vst.msk [vmem:[#allocation3 + $0x70] sm:$0x3] %vm4439, 0.0
  %4453 = vst.msk [vmem:[#allocation3 + $0x78] sm:$0xff] %vm1492, 0.0
  %4454 = vst.msk [vmem:[#allocation3 + $0x80] sm:$0xff] %vm1492, 0.0
  %4455 = vst.msk [vmem:[#allocation3 + $0x88] sm:$0x3] %vm4439, 0.0
  %4456 = vst.msk [vmem:[#allocation3 + $0x90] sm:$0xff] %vm1492, 0.0
  %4457 = vst.msk [vmem:[#allocation3 + $0x98] sm:$0xff] %vm1492, 0.0
  %4458 = vst.msk [vmem:[#allocation3 + $0xa0] sm:$0x3] %vm4439, 0.0
  %4459 = vst.msk [vmem:[#allocation3 + $0xa8] sm:$0xff] %vm1492, 0.0
  %4460 = vst.msk [vmem:[#allocation3 + $0xb0] sm:$0xff] %vm1492, 0.0
  %4461 = vst.msk [vmem:[#allocation3 + $0xb8] sm:$0x3] %vm4439, 0.0
  %4462 = vst.msk [vmem:[#allocation3 + $0xc0] sm:$0xff] %vm1492, 0.0
  %4463 = vst.msk [vmem:[#allocation3 + $0xc8] sm:$0xff] %vm1492, 0.0
  %4464 = vst.msk [vmem:[#allocation3 + $0xd0] sm:$0x3] %vm4439, 0.0
  %4465 = vst.msk [vmem:[#allocation3 + $0xd8] sm:$0xff] %vm1492, 0.0
  %4466 = vst.msk [vmem:[#allocation3 + $0xe0] sm:$0xff] %vm1492, 0.0
  %4467 = vst.msk [vmem:[#allocation3 + $0xe8] sm:$0x3] %vm4439, 0.0
  %4468 = vst.msk [vmem:[#allocation3 + $0xf0] sm:$0xff] %vm1492, 0.0
  %4469 = vst.msk [vmem:[#allocation3 + $0xf8] sm:$0xff] %vm1492, 0.0
  %4470 = vst.msk [vmem:[#allocation3 + $0x100] sm:$0x3] %vm4439, 0.0
  %4471 = vst.msk [vmem:[#allocation3 + $0x108] sm:$0xff] %vm1492, 0.0
  %4472 = vst.msk [vmem:[#allocation3 + $0x110] sm:$0xff] %vm1492, 0.0
  %4473 = vst.msk [vmem:[#allocation3 + $0x118] sm:$0x3] %vm4439, 0.0
  %4474 = vst.msk [vmem:[#allocation3 + $0x120] sm:$0xff] %vm1492, 0.0
  %4475 = vst.msk [vmem:[#allocation3 + $0x128] sm:$0xff] %vm1492, 0.0
  %4476 = vst.msk [vmem:[#allocation3 + $0x130] sm:$0x3] %vm4439, 0.0
  %4477 = vst.msk [vmem:[#allocation3 + $0x138] sm:$0xff] %vm1492, 0.0
  %4478 = vst.msk [vmem:[#allocation3 + $0x140] sm:$0xff] %vm1492, 0.0
  %4479 = vst.msk [vmem:[#allocation3 + $0x148] sm:$0x3] %vm4439, 0.0
  %4480 = vst.msk [vmem:[#allocation3 + $0x150] sm:$0xff] %vm1492, 0.0
  %4481 = vst.msk [vmem:[#allocation3 + $0x158] sm:$0xff] %vm1492, 0.0
  %4482 = vst.msk [vmem:[#allocation3 + $0x160] sm:$0x3] %vm4439, 0.0
  %4483 = vst.msk [vmem:[#allocation3 + $0x168] sm:$0xff] %vm1492, 0.0
  %4484 = vst.msk [vmem:[#allocation3 + $0x170] sm:$0xff] %vm1492, 0.0
  %4485 = vst.msk [vmem:[#allocation3 + $0x178] sm:$0x3] %vm4439, 0.0
  %4486 = vst.msk [vmem:[#allocation3 + $0x180] sm:$0xff] %vm1492, 0.0
  %4487 = vst.msk [vmem:[#allocation3 + $0x188] sm:$0xff] %vm1492, 0.0
  %4488 = vst.msk [vmem:[#allocation3 + $0x190] sm:$0x3] %vm4439, 0.0
  %4489 = vst.msk [vmem:[#allocation3 + $0x198] sm:$0xff] %vm1492, 0.0
  %4490 = vst.msk [vmem:[#allocation3 + $0x1a0] sm:$0xff] %vm1492, 0.0
  %4491 = vst.msk [vmem:[#allocation3 + $0x1a8] sm:$0x3] %vm4439, 0.0
  %v4492 = vld [vmem:[#allocation4] sm:$0xff]
  %v4493 = vld [vmem:[#allocation4 + $0x8] sm:$0xff]
  %v4494 = vld [vmem:[#allocation4 + $0x10] sm:$0xff]
  %v4495 = vld [vmem:[#allocation4 + $0x18] sm:$0xff]
  %v4496 = vld [vmem:[#allocation4 + $0x20] sm:$0xff]
  %v4497 = vld [vmem:[#allocation4 + $0x28] sm:$0xff]
  %v4498 = vld [vmem:[#allocation4 + $0x30] sm:$0xff]
  %v4499 = vld [vmem:[#allocation4 + $0x38] sm:$0xff]
  %v4500 = vld [vmem:[#allocation4 + $0x40] sm:$0xff]
  %v4501 = vld [vmem:[#allocation4 + $0x48] sm:$0xff]
  %v4502 = vld [vmem:[#allocation4 + $0x50] sm:$0xff]
  %v4503 = vld [vmem:[#allocation4 + $0x58] sm:$0xff]
  %v4504 = vld [vmem:[#allocation4 + $0x60] sm:$0xff]
  %v4505 = vld [vmem:[#allocation4 + $0x68] sm:$0xff]
  %v4506 = vld [vmem:[#allocation4 + $0x70] sm:$0xff]
  %v4507 = vld [vmem:[#allocation4 + $0x78] sm:$0xff]
  %v4508 = vld [vmem:[#allocation4 + $0x80] sm:$0xff]
  %v4509 = vld [vmem:[#allocation4 + $0x88] sm:$0xff]
  %v4510 = vld [vmem:[#allocation4 + $0x90] sm:$0xff]
  %v4511 = vld [vmem:[#allocation4 + $0x98] sm:$0xff]
  %v4512 = vld [vmem:[#allocation4 + $0xa0] sm:$0xff]
  %v4513 = vld [vmem:[#allocation4 + $0xa8] sm:$0xff]
  %v4514 = vld [vmem:[#allocation4 + $0xb0] sm:$0xff]
  %v4515 = vld [vmem:[#allocation4 + $0xb8] sm:$0xff]
  %v4516 = vld [vmem:[#allocation4 + $0xc0] sm:$0xff]
  %v4517 = vld [vmem:[#allocation4 + $0xc8] sm:$0xff]
  %v4518 = vld [vmem:[#allocation4 + $0xd0] sm:$0xff]
  %v4519 = vld [vmem:[#allocation4 + $0xd8] sm:$0xff]
  %v4520 = vld [vmem:[#allocation4 + $0xe0] sm:$0xff]
  %v4521 = vld [vmem:[#allocation4 + $0xe8] sm:$0xff]
  %v4522 = vld [vmem:[#allocation4 + $0xf0] sm:$0xff]
  %v4523 = vld [vmem:[#allocation4 + $0xf8] sm:$0xff]
  %v4525 = vlaneseq
  %v4526 = vshrl.u32 %v4525, 7
  %v4527 = vsub.s32 0, %v4526
  %v4528 = vrot.slane %v4434, %v4527
  %v4530 = vmul.f32 %v4492, %v4528
  %v4531 = vmul.f32 %v4493, %v4528
  %v4532 = vmul.f32 %v4494, %v4528
  %v4533 = vmul.f32 %v4495, %v4528
  %v4534 = vmul.f32 %v4496, %v4528
  %v4535 = vmul.f32 %v4497, %v4528
  %v4536 = vmul.f32 %v4498, %v4528
  %v4537 = vmul.f32 %v4499, %v4528
  %v4538 = vmul.f32 %v4500, %v4528
  %v4539 = vmul.f32 %v4501, %v4528
  %v4540 = vmul.f32 %v4502, %v4528
  %v4541 = vmul.f32 %v4503, %v4528
  %v4542 = vmul.f32 %v4504, %v4528
  %v4543 = vmul.f32 %v4505, %v4528
  %v4544 = vmul.f32 %v4506, %v4528
  %v4545 = vmul.f32 %v4507, %v4528
  %v4546 = vmul.f32 %v4508, %v4528
  %v4547 = vmul.f32 %v4509, %v4528
  %v4548 = vmul.f32 %v4510, %v4528
  %v4549 = vmul.f32 %v4511, %v4528
  %v4550 = vmul.f32 %v4512, %v4528
  %v4551 = vmul.f32 %v4513, %v4528
  %v4552 = vmul.f32 %v4514, %v4528
  %v4553 = vmul.f32 %v4515, %v4528
  %v4554 = vmul.f32 %v4516, %v4528
  %v4555 = vmul.f32 %v4517, %v4528
  %v4556 = vmul.f32 %v4518, %v4528
  %v4557 = vmul.f32 %v4519, %v4528
  %v4558 = vmul.f32 %v4520, %v4528
  %v4559 = vmul.f32 %v4521, %v4528
  %v4560 = vmul.f32 %v4522, %v4528
  %v4561 = vmul.f32 %v4523, %v4528
  %v4563 = vlaneseq
  %v4564 = vshrl.u32 %v4563, 7
  %v4565 = vsub.s32 0, %v4564
  %v4566 = vrot.slane %v4436, %v4565
  %v4568 = vadd.f32 %v4530, %v4566
  %v4569 = vadd.f32 %v4531, %v4566
  %v4570 = vadd.f32 %v4532, %v4566
  %v4571 = vadd.f32 %v4533, %v4566
  %v4572 = vadd.f32 %v4534, %v4566
  %v4573 = vadd.f32 %v4535, %v4566
  %v4574 = vadd.f32 %v4536, %v4566
  %v4575 = vadd.f32 %v4537, %v4566
  %v4576 = vadd.f32 %v4538, %v4566
  %v4577 = vadd.f32 %v4539, %v4566
  %v4578 = vadd.f32 %v4540, %v4566
  %v4579 = vadd.f32 %v4541, %v4566
  %v4580 = vadd.f32 %v4542, %v4566
  %v4581 = vadd.f32 %v4543, %v4566
  %v4582 = vadd.f32 %v4544, %v4566
  %v4583 = vadd.f32 %v4545, %v4566
  %v4584 = vadd.f32 %v4546, %v4566
  %v4585 = vadd.f32 %v4547, %v4566
  %v4586 = vadd.f32 %v4548, %v4566
  %v4587 = vadd.f32 %v4549, %v4566
  %v4588 = vadd.f32 %v4550, %v4566
  %v4589 = vadd.f32 %v4551, %v4566
  %v4590 = vadd.f32 %v4552, %v4566
  %v4591 = vadd.f32 %v4553, %v4566
  %v4592 = vadd.f32 %v4554, %v4566
  %v4593 = vadd.f32 %v4555, %v4566
  %v4594 = vadd.f32 %v4556, %v4566
  %v4595 = vadd.f32 %v4557, %v4566
  %v4596 = vadd.f32 %v4558, %v4566
  %v4597 = vadd.f32 %v4559, %v4566
  %v4598 = vadd.f32 %v4560, %v4566
  %v4599 = vadd.f32 %v4561, %v4566
  %v4600 = vmax.f32 %v4568, 0.0
  %v4601 = vmax.f32 %v4569, 0.0
  %v4602 = vmax.f32 %v4570, 0.0
  %v4603 = vmax.f32 %v4571, 0.0
  %v4604 = vmax.f32 %v4572, 0.0
  %v4605 = vmax.f32 %v4573, 0.0
  %v4606 = vmax.f32 %v4574, 0.0
  %v4607 = vmax.f32 %v4575, 0.0
  %v4608 = vmax.f32 %v4576, 0.0
  %v4609 = vmax.f32 %v4577, 0.0
  %v4610 = vmax.f32 %v4578, 0.0
  %v4611 = vmax.f32 %v4579, 0.0
  %v4612 = vmax.f32 %v4580, 0.0
  %v4613 = vmax.f32 %v4581, 0.0
  %v4614 = vmax.f32 %v4582, 0.0
  %v4615 = vmax.f32 %v4583, 0.0
  %v4616 = vmax.f32 %v4584, 0.0
  %v4617 = vmax.f32 %v4585, 0.0
  %v4618 = vmax.f32 %v4586, 0.0
  %v4619 = vmax.f32 %v4587, 0.0
  %v4620 = vmax.f32 %v4588, 0.0
  %v4621 = vmax.f32 %v4589, 0.0
  %v4622 = vmax.f32 %v4590, 0.0
  %v4623 = vmax.f32 %v4591, 0.0
  %v4624 = vmax.f32 %v4592, 0.0
  %v4625 = vmax.f32 %v4593, 0.0
  %v4626 = vmax.f32 %v4594, 0.0
  %v4627 = vmax.f32 %v4595, 0.0
  %v4628 = vmax.f32 %v4596, 0.0
  %v4629 = vmax.f32 %v4597, 0.0
  %v4630 = vmax.f32 %v4598, 0.0
  %v4631 = vmax.f32 %v4599, 0.0
  %s4632 = scalar_lea.vmem [#allocation3], 24
  %4633 = vst.msk [vmem:[%s4632 + $0x1] sm:$0xff] %vm1492, %v4600
  %4634 = vst.msk [vmem:[%s4632 + $0x9] sm:$0xff] %vm1492, %v4601
  %4635 = vst.msk [vmem:[%s4632 + $0x19] sm:$0xff] %vm1492, %v4602
  %4636 = vst.msk [vmem:[%s4632 + $0x21] sm:$0xff] %vm1492, %v4603
  %4637 = vst.msk [vmem:[%s4632 + $0x31] sm:$0xff] %vm1492, %v4604
  %4638 = vst.msk [vmem:[%s4632 + $0x39] sm:$0xff] %vm1492, %v4605
  %4639 = vst.msk [vmem:[%s4632 + $0x49] sm:$0xff] %vm1492, %v4606
  %4640 = vst.msk [vmem:[%s4632 + $0x51] sm:$0xff] %vm1492, %v4607
  %4641 = vst.msk [vmem:[%s4632 + $0x61] sm:$0xff] %vm1492, %v4608
  %4642 = vst.msk [vmem:[%s4632 + $0x69] sm:$0xff] %vm1492, %v4609
  %4643 = vst.msk [vmem:[%s4632 + $0x79] sm:$0xff] %vm1492, %v4610
  %4644 = vst.msk [vmem:[%s4632 + $0x81] sm:$0xff] %vm1492, %v4611
  %4645 = vst.msk [vmem:[%s4632 + $0x91] sm:$0xff] %vm1492, %v4612
  %4646 = vst.msk [vmem:[%s4632 + $0x99] sm:$0xff] %vm1492, %v4613
  %4647 = vst.msk [vmem:[%s4632 + $0xa9] sm:$0xff] %vm1492, %v4614
  %4648 = vst.msk [vmem:[%s4632 + $0xb1] sm:$0xff] %vm1492, %v4615
  %4649 = vst.msk [vmem:[%s4632 + $0xc1] sm:$0xff] %vm1492, %v4616
  %4650 = vst.msk [vmem:[%s4632 + $0xc9] sm:$0xff] %vm1492, %v4617
  %4651 = vst.msk [vmem:[%s4632 + $0xd9] sm:$0xff] %vm1492, %v4618
  %4652 = vst.msk [vmem:[%s4632 + $0xe1] sm:$0xff] %vm1492, %v4619
  %4653 = vst.msk [vmem:[%s4632 + $0xf1] sm:$0xff] %vm1492, %v4620
  %4654 = vst.msk [vmem:[%s4632 + $0xf9] sm:$0xff] %vm1492, %v4621
  %4655 = vst.msk [vmem:[%s4632 + $0x109] sm:$0xff] %vm1492, %v4622
  %4656 = vst.msk [vmem:[%s4632 + $0x111] sm:$0xff] %vm1492, %v4623
  %4657 = vst.msk [vmem:[%s4632 + $0x121] sm:$0xff] %vm1492, %v4624
  %4658 = vst.msk [vmem:[%s4632 + $0x129] sm:$0xff] %vm1492, %v4625
  %4659 = vst.msk [vmem:[%s4632 + $0x139] sm:$0xff] %vm1492, %v4626
  %4660 = vst.msk [vmem:[%s4632 + $0x141] sm:$0xff] %vm1492, %v4627
  %4661 = vst.msk [vmem:[%s4632 + $0x151] sm:$0xff] %vm1492, %v4628
  %4662 = vst.msk [vmem:[%s4632 + $0x159] sm:$0xff] %vm1492, %v4629
  %4663 = vst.msk [vmem:[%s4632 + $0x169] sm:$0xff] %vm1492, %v4630
  %4664 = vst.msk [vmem:[%s4632 + $0x171] sm:$0xff] %vm1492, %v4631
  %v4665 = vld [vmem:[#allocation3] sm:$0xff]
  %v4666 = vld [vmem:[#allocation3 + $0x8] sm:$0xff]
  %v4667 = vld [vmem:[#allocation3 + $0x18] sm:$0xff]
  %v4668 = vld [vmem:[#allocation3 + $0x20] sm:$0xff]
  %v4669 = vld [vmem:[#allocation3 + $0x30] sm:$0xff]
  %v4670 = vld [vmem:[#allocation3 + $0x38] sm:$0xff]
  %v4671 = vld [vmem:[#allocation3 + $0x48] sm:$0xff]
  %v4672 = vld [vmem:[#allocation3 + $0x50] sm:$0xff]
  %v4673 = vld [vmem:[#allocation3 + $0x60] sm:$0xff]
  %v4674 = vld [vmem:[#allocation3 + $0x68] sm:$0xff]
  %v4675 = vld [vmem:[#allocation3 + $0x78] sm:$0xff]
  %v4676 = vld [vmem:[#allocation3 + $0x80] sm:$0xff]
  %v4677 = vld [vmem:[#allocation3 + $0x90] sm:$0xff]
  %v4678 = vld [vmem:[#allocation3 + $0x98] sm:$0xff]
  %v4679 = vld [vmem:[#allocation3 + $0xa8] sm:$0xff]
  %v4680 = vld [vmem:[#allocation3 + $0xb0] sm:$0xff]
  %v4681 = vld [vmem:[#allocation3 + $0xc0] sm:$0xff]
  %v4682 = vld [vmem:[#allocation3 + $0xc8] sm:$0xff]
  %v4683 = vld [vmem:[#allocation3 + $0xd8] sm:$0xff]
  %v4684 = vld [vmem:[#allocation3 + $0xe0] sm:$0xff]
  %v4685 = vld [vmem:[#allocation3 + $0xf0] sm:$0xff]
  %v4686 = vld [vmem:[#allocation3 + $0xf8] sm:$0xff]
  %v4687 = vld [vmem:[#allocation3 + $0x108] sm:$0xff]
  %v4688 = vld [vmem:[#allocation3 + $0x110] sm:$0xff]
  %v4689 = vld [vmem:[#allocation3 + $0x120] sm:$0xff]
  %v4690 = vld [vmem:[#allocation3 + $0x128] sm:$0xff]
  %v4691 = vld [vmem:[#allocation3 + $0x138] sm:$0xff]
  %v4692 = vld [vmem:[#allocation3 + $0x140] sm:$0xff]
  %v4693 = vld [vmem:[#allocation3 + $0x150] sm:$0xff]
  %v4694 = vld [vmem:[#allocation3 + $0x158] sm:$0xff]
  %v4695 = vld [vmem:[#allocation3 + $0x168] sm:$0xff]
  %v4696 = vld [vmem:[#allocation3 + $0x170] sm:$0xff]
  %v4697 = vld [vmem:[#allocation3 + $0x1] sm:$0xff]
  %v4698 = vld [vmem:[#allocation3 + $0x9] sm:$0xff]
  %v4699 = vld [vmem:[#allocation3 + $0x19] sm:$0xff]
  %v4700 = vld [vmem:[#allocation3 + $0x21] sm:$0xff]
  %v4701 = vld [vmem:[#allocation3 + $0x31] sm:$0xff]
  %v4702 = vld [vmem:[#allocation3 + $0x39] sm:$0xff]
  %v4703 = vld [vmem:[#allocation3 + $0x49] sm:$0xff]
  %v4704 = vld [vmem:[#allocation3 + $0x51] sm:$0xff]
  %v4705 = vld [vmem:[#allocation3 + $0x61] sm:$0xff]
  %v4706 = vld [vmem:[#allocation3 + $0x69] sm:$0xff]
  %v4707 = vld [vmem:[#allocation3 + $0x79] sm:$0xff]
  %v4708 = vld [vmem:[#allocation3 + $0x81] sm:$0xff]
  %v4709 = vld [vmem:[#allocation3 + $0x91] sm:$0xff]
  %v4710 = vld [vmem:[#allocation3 + $0x99] sm:$0xff]
  %v4711 = vld [vmem:[#allocation3 + $0xa9] sm:$0xff]
  %v4712 = vld [vmem:[#allocation3 + $0xb1] sm:$0xff]
  %v4713 = vld [vmem:[#allocation3 + $0xc1] sm:$0xff]
  %v4714 = vld [vmem:[#allocation3 + $0xc9] sm:$0xff]
  %v4715 = vld [vmem:[#allocation3 + $0xd9] sm:$0xff]
  %v4716 = vld [vmem:[#allocation3 + $0xe1] sm:$0xff]
  %v4717 = vld [vmem:[#allocation3 + $0xf1] sm:$0xff]
  %v4718 = vld [vmem:[#allocation3 + $0xf9] sm:$0xff]
  %v4719 = vld [vmem:[#allocation3 + $0x109] sm:$0xff]
  %v4720 = vld [vmem:[#allocation3 + $0x111] sm:$0xff]
  %v4721 = vld [vmem:[#allocation3 + $0x121] sm:$0xff]
  %v4722 = vld [vmem:[#allocation3 + $0x129] sm:$0xff]
  %v4723 = vld [vmem:[#allocation3 + $0x139] sm:$0xff]
  %v4724 = vld [vmem:[#allocation3 + $0x141] sm:$0xff]
  %v4725 = vld [vmem:[#allocation3 + $0x151] sm:$0xff]
  %v4726 = vld [vmem:[#allocation3 + $0x159] sm:$0xff]
  %v4727 = vld [vmem:[#allocation3 + $0x169] sm:$0xff]
  %v4728 = vld [vmem:[#allocation3 + $0x171] sm:$0xff]
  %v4729 = vld [vmem:[#allocation3 + $0x2] sm:$0xff]
  %v4730 = vld [vmem:[#allocation3 + $0xa] sm:$0xff]
  %v4731 = vld [vmem:[#allocation3 + $0x1a] sm:$0xff]
  %v4732 = vld [vmem:[#allocation3 + $0x22] sm:$0xff]
  %v4733 = vld [vmem:[#allocation3 + $0x32] sm:$0xff]
  %v4734 = vld [vmem:[#allocation3 + $0x3a] sm:$0xff]
  %v4735 = vld [vmem:[#allocation3 + $0x4a] sm:$0xff]
  %v4736 = vld [vmem:[#allocation3 + $0x52] sm:$0xff]
  %v4737 = vld [vmem:[#allocation3 + $0x62] sm:$0xff]
  %v4738 = vld [vmem:[#allocation3 + $0x6a] sm:$0xff]
  %v4739 = vld [vmem:[#allocation3 + $0x7a] sm:$0xff]
  %v4740 = vld [vmem:[#allocation3 + $0x82] sm:$0xff]
  %v4741 = vld [vmem:[#allocation3 + $0x92] sm:$0xff]
  %v4742 = vld [vmem:[#allocation3 + $0x9a] sm:$0xff]
  %v4743 = vld [vmem:[#allocation3 + $0xaa] sm:$0xff]
  %v4744 = vld [vmem:[#allocation3 + $0xb2] sm:$0xff]
  %v4745 = vld [vmem:[#allocation3 + $0xc2] sm:$0xff]
  %v4746 = vld [vmem:[#allocation3 + $0xca] sm:$0xff]
  %v4747 = vld [vmem:[#allocation3 + $0xda] sm:$0xff]
  %v4748 = vld [vmem:[#allocation3 + $0xe2] sm:$0xff]
  %v4749 = vld [vmem:[#allocation3 + $0xf2] sm:$0xff]
  %v4750 = vld [vmem:[#allocation3 + $0xfa] sm:$0xff]
  %v4751 = vld [vmem:[#allocation3 + $0x10a] sm:$0xff]
  %v4752 = vld [vmem:[#allocation3 + $0x112] sm:$0xff]
  %v4753 = vld [vmem:[#allocation3 + $0x122] sm:$0xff]
  %v4754 = vld [vmem:[#allocation3 + $0x12a] sm:$0xff]
  %v4755 = vld [vmem:[#allocation3 + $0x13a] sm:$0xff]
  %v4756 = vld [vmem:[#allocation3 + $0x142] sm:$0xff]
  %v4757 = vld [vmem:[#allocation3 + $0x152] sm:$0xff]
  %v4758 = vld [vmem:[#allocation3 + $0x15a] sm:$0xff]
  %v4759 = vld [vmem:[#allocation3 + $0x16a] sm:$0xff]
  %v4760 = vld [vmem:[#allocation3 + $0x172] sm:$0xff]
  %v4761 = vld [vmem:[%s4632] sm:$0xff]
  %v4762 = vld [vmem:[%s4632 + $0x8] sm:$0xff]
  %v4763 = vld [vmem:[%s4632 + $0x18] sm:$0xff]
  %v4764 = vld [vmem:[%s4632 + $0x20] sm:$0xff]
  %v4765 = vld [vmem:[%s4632 + $0x30] sm:$0xff]
  %v4766 = vld [vmem:[%s4632 + $0x38] sm:$0xff]
  %v4767 = vld [vmem:[%s4632 + $0x48] sm:$0xff]
  %v4768 = vld [vmem:[%s4632 + $0x50] sm:$0xff]
  %v4769 = vld [vmem:[%s4632 + $0x60] sm:$0xff]
  %v4770 = vld [vmem:[%s4632 + $0x68] sm:$0xff]
  %v4771 = vld [vmem:[%s4632 + $0x78] sm:$0xff]
  %v4772 = vld [vmem:[%s4632 + $0x80] sm:$0xff]
  %v4773 = vld [vmem:[%s4632 + $0x90] sm:$0xff]
  %v4774 = vld [vmem:[%s4632 + $0x98] sm:$0xff]
  %v4775 = vld [vmem:[%s4632 + $0xa8] sm:$0xff]
  %v4776 = vld [vmem:[%s4632 + $0xb0] sm:$0xff]
  %v4777 = vld [vmem:[%s4632 + $0xc0] sm:$0xff]
  %v4778 = vld [vmem:[%s4632 + $0xc8] sm:$0xff]
  %v4779 = vld [vmem:[%s4632 + $0xd8] sm:$0xff]
  %v4780 = vld [vmem:[%s4632 + $0xe0] sm:$0xff]
  %v4781 = vld [vmem:[%s4632 + $0xf0] sm:$0xff]
  %v4782 = vld [vmem:[%s4632 + $0xf8] sm:$0xff]
  %v4783 = vld [vmem:[%s4632 + $0x108] sm:$0xff]
  %v4784 = vld [vmem:[%s4632 + $0x110] sm:$0xff]
  %v4785 = vld [vmem:[%s4632 + $0x120] sm:$0xff]
  %v4786 = vld [vmem:[%s4632 + $0x128] sm:$0xff]
  %v4787 = vld [vmem:[%s4632 + $0x138] sm:$0xff]
  %v4788 = vld [vmem:[%s4632 + $0x140] sm:$0xff]
  %v4789 = vld [vmem:[%s4632 + $0x150] sm:$0xff]
  %v4790 = vld [vmem:[%s4632 + $0x158] sm:$0xff]
  %v4791 = vld [vmem:[%s4632 + $0x168] sm:$0xff]
  %v4792 = vld [vmem:[%s4632 + $0x170] sm:$0xff]
  %v4793 = vld [vmem:[%s4632 + $0x1] sm:$0xff]
  %v4794 = vld [vmem:[%s4632 + $0x9] sm:$0xff]
  %v4795 = vld [vmem:[%s4632 + $0x19] sm:$0xff]
  %v4796 = vld [vmem:[%s4632 + $0x21] sm:$0xff]
  %v4797 = vld [vmem:[%s4632 + $0x31] sm:$0xff]
  %v4798 = vld [vmem:[%s4632 + $0x39] sm:$0xff]
  %v4799 = vld [vmem:[%s4632 + $0x49] sm:$0xff]
  %v4800 = vld [vmem:[%s4632 + $0x51] sm:$0xff]
  %v4801 = vld [vmem:[%s4632 + $0x61] sm:$0xff]
  %v4802 = vld [vmem:[%s4632 + $0x69] sm:$0xff]
  %v4803 = vld [vmem:[%s4632 + $0x79] sm:$0xff]
  %v4804 = vld [vmem:[%s4632 + $0x81] sm:$0xff]
  %v4805 = vld [vmem:[%s4632 + $0x91] sm:$0xff]
  %v4806 = vld [vmem:[%s4632 + $0x99] sm:$0xff]
  %v4807 = vld [vmem:[%s4632 + $0xa9] sm:$0xff]
  %v4808 = vld [vmem:[%s4632 + $0xb1] sm:$0xff]
  %v4809 = vld [vmem:[%s4632 + $0xc1] sm:$0xff]
  %v4810 = vld [vmem:[%s4632 + $0xc9] sm:$0xff]
  %v4811 = vld [vmem:[%s4632 + $0xd9] sm:$0xff]
  %v4812 = vld [vmem:[%s4632 + $0xe1] sm:$0xff]
  %v4813 = vld [vmem:[%s4632 + $0xf1] sm:$0xff]
  %v4814 = vld [vmem:[%s4632 + $0xf9] sm:$0xff]
  %v4815 = vld [vmem:[%s4632 + $0x109] sm:$0xff]
  %v4816 = vld [vmem:[%s4632 + $0x111] sm:$0xff]
  %v4817 = vld [vmem:[%s4632 + $0x121] sm:$0xff]
  %v4818 = vld [vmem:[%s4632 + $0x129] sm:$0xff]
  %v4819 = vld [vmem:[%s4632 + $0x139] sm:$0xff]
  %v4820 = vld [vmem:[%s4632 + $0x141] sm:$0xff]
  %v4821 = vld [vmem:[%s4632 + $0x151] sm:$0xff]
  %v4822 = vld [vmem:[%s4632 + $0x159] sm:$0xff]
  %v4823 = vld [vmem:[%s4632 + $0x169] sm:$0xff]
  %v4824 = vld [vmem:[%s4632 + $0x171] sm:$0xff]
  %v4825 = vld [vmem:[%s4632 + $0x2] sm:$0xff]
  %v4826 = vld [vmem:[%s4632 + $0xa] sm:$0xff]
  %v4827 = vld [vmem:[%s4632 + $0x1a] sm:$0xff]
  %v4828 = vld [vmem:[%s4632 + $0x22] sm:$0xff]
  %v4829 = vld [vmem:[%s4632 + $0x32] sm:$0xff]
  %v4830 = vld [vmem:[%s4632 + $0x3a] sm:$0xff]
  %v4831 = vld [vmem:[%s4632 + $0x4a] sm:$0xff]
  %v4832 = vld [vmem:[%s4632 + $0x52] sm:$0xff]
  %v4833 = vld [vmem:[%s4632 + $0x62] sm:$0xff]
  %v4834 = vld [vmem:[%s4632 + $0x6a] sm:$0xff]
  %v4835 = vld [vmem:[%s4632 + $0x7a] sm:$0xff]
  %v4836 = vld [vmem:[%s4632 + $0x82] sm:$0xff]
  %v4837 = vld [vmem:[%s4632 + $0x92] sm:$0xff]
  %v4838 = vld [vmem:[%s4632 + $0x9a] sm:$0xff]
  %v4839 = vld [vmem:[%s4632 + $0xaa] sm:$0xff]
  %v4840 = vld [vmem:[%s4632 + $0xb2] sm:$0xff]
  %v4841 = vld [vmem:[%s4632 + $0xc2] sm:$0xff]
  %v4842 = vld [vmem:[%s4632 + $0xca] sm:$0xff]
  %v4843 = vld [vmem:[%s4632 + $0xda] sm:$0xff]
  %v4844 = vld [vmem:[%s4632 + $0xe2] sm:$0xff]
  %v4845 = vld [vmem:[%s4632 + $0xf2] sm:$0xff]
  %v4846 = vld [vmem:[%s4632 + $0xfa] sm:$0xff]
  %v4847 = vld [vmem:[%s4632 + $0x10a] sm:$0xff]
  %v4848 = vld [vmem:[%s4632 + $0x112] sm:$0xff]
  %v4849 = vld [vmem:[%s4632 + $0x122] sm:$0xff]
  %v4850 = vld [vmem:[%s4632 + $0x12a] sm:$0xff]
  %v4851 = vld [vmem:[%s4632 + $0x13a] sm:$0xff]
  %v4852 = vld [vmem:[%s4632 + $0x142] sm:$0xff]
  %v4853 = vld [vmem:[%s4632 + $0x152] sm:$0xff]
  %v4854 = vld [vmem:[%s4632 + $0x15a] sm:$0xff]
  %v4855 = vld [vmem:[%s4632 + $0x16a] sm:$0xff]
  %v4856 = vld [vmem:[%s4632 + $0x172] sm:$0xff]
  %s4857 = scalar_lea.vmem [#allocation3], 48
  %v4858 = vld [vmem:[%s4857] sm:$0xff]
  %v4859 = vld [vmem:[%s4857 + $0x8] sm:$0xff]
  %v4860 = vld [vmem:[%s4857 + $0x18] sm:$0xff]
  %v4861 = vld [vmem:[%s4857 + $0x20] sm:$0xff]
  %v4862 = vld [vmem:[%s4857 + $0x30] sm:$0xff]
  %v4863 = vld [vmem:[%s4857 + $0x38] sm:$0xff]
  %v4864 = vld [vmem:[%s4857 + $0x48] sm:$0xff]
  %v4865 = vld [vmem:[%s4857 + $0x50] sm:$0xff]
  %v4866 = vld [vmem:[%s4857 + $0x60] sm:$0xff]
  %v4867 = vld [vmem:[%s4857 + $0x68] sm:$0xff]
  %v4868 = vld [vmem:[%s4857 + $0x78] sm:$0xff]
  %v4869 = vld [vmem:[%s4857 + $0x80] sm:$0xff]
  %v4870 = vld [vmem:[%s4857 + $0x90] sm:$0xff]
  %v4871 = vld [vmem:[%s4857 + $0x98] sm:$0xff]
  %v4872 = vld [vmem:[%s4857 + $0xa8] sm:$0xff]
  %v4873 = vld [vmem:[%s4857 + $0xb0] sm:$0xff]
  %v4874 = vld [vmem:[%s4857 + $0xc0] sm:$0xff]
  %v4875 = vld [vmem:[%s4857 + $0xc8] sm:$0xff]
  %v4876 = vld [vmem:[%s4857 + $0xd8] sm:$0xff]
  %v4877 = vld [vmem:[%s4857 + $0xe0] sm:$0xff]
  %v4878 = vld [vmem:[%s4857 + $0xf0] sm:$0xff]
  %v4879 = vld [vmem:[%s4857 + $0xf8] sm:$0xff]
  %v4880 = vld [vmem:[%s4857 + $0x108] sm:$0xff]
  %v4881 = vld [vmem:[%s4857 + $0x110] sm:$0xff]
  %v4882 = vld [vmem:[%s4857 + $0x120] sm:$0xff]
  %v4883 = vld [vmem:[%s4857 + $0x128] sm:$0xff]
  %v4884 = vld [vmem:[%s4857 + $0x138] sm:$0xff]
  %v4885 = vld [vmem:[%s4857 + $0x140] sm:$0xff]
  %v4886 = vld [vmem:[%s4857 + $0x150] sm:$0xff]
  %v4887 = vld [vmem:[%s4857 + $0x158] sm:$0xff]
  %v4888 = vld [vmem:[%s4857 + $0x168] sm:$0xff]
  %v4889 = vld [vmem:[%s4857 + $0x170] sm:$0xff]
  %v4890 = vld [vmem:[%s4857 + $0x1] sm:$0xff]
  %v4891 = vld [vmem:[%s4857 + $0x9] sm:$0xff]
  %v4892 = vld [vmem:[%s4857 + $0x19] sm:$0xff]
  %v4893 = vld [vmem:[%s4857 + $0x21] sm:$0xff]
  %v4894 = vld [vmem:[%s4857 + $0x31] sm:$0xff]
  %v4895 = vld [vmem:[%s4857 + $0x39] sm:$0xff]
  %v4896 = vld [vmem:[%s4857 + $0x49] sm:$0xff]
  %v4897 = vld [vmem:[%s4857 + $0x51] sm:$0xff]
  %v4898 = vld [vmem:[%s4857 + $0x61] sm:$0xff]
  %v4899 = vld [vmem:[%s4857 + $0x69] sm:$0xff]
  %v4900 = vld [vmem:[%s4857 + $0x79] sm:$0xff]
  %v4901 = vld [vmem:[%s4857 + $0x81] sm:$0xff]
  %v4902 = vld [vmem:[%s4857 + $0x91] sm:$0xff]
  %v4903 = vld [vmem:[%s4857 + $0x99] sm:$0xff]
  %v4904 = vld [vmem:[%s4857 + $0xa9] sm:$0xff]
  %v4905 = vld [vmem:[%s4857 + $0xb1] sm:$0xff]
  %v4906 = vld [vmem:[%s4857 + $0xc1] sm:$0xff]
  %v4907 = vld [vmem:[%s4857 + $0xc9] sm:$0xff]
  %v4908 = vld [vmem:[%s4857 + $0xd9] sm:$0xff]
  %v4909 = vld [vmem:[%s4857 + $0xe1] sm:$0xff]
  %v4910 = vld [vmem:[%s4857 + $0xf1] sm:$0xff]
  %v4911 = vld [vmem:[%s4857 + $0xf9] sm:$0xff]
  %v4912 = vld [vmem:[%s4857 + $0x109] sm:$0xff]
  %v4913 = vld [vmem:[%s4857 + $0x111] sm:$0xff]
  %v4914 = vld [vmem:[%s4857 + $0x121] sm:$0xff]
  %v4915 = vld [vmem:[%s4857 + $0x129] sm:$0xff]
  %v4916 = vld [vmem:[%s4857 + $0x139] sm:$0xff]
  %v4917 = vld [vmem:[%s4857 + $0x141] sm:$0xff]
  %v4918 = vld [vmem:[%s4857 + $0x151] sm:$0xff]
  %v4919 = vld [vmem:[%s4857 + $0x159] sm:$0xff]
  %v4920 = vld [vmem:[%s4857 + $0x169] sm:$0xff]
  %v4921 = vld [vmem:[%s4857 + $0x171] sm:$0xff]
  %v4922 = vld [vmem:[%s4857 + $0x2] sm:$0xff]
  %v4923 = vld [vmem:[%s4857 + $0xa] sm:$0xff]
  %v4924 = vld [vmem:[%s4857 + $0x1a] sm:$0xff]
  %v4925 = vld [vmem:[%s4857 + $0x22] sm:$0xff]
  %v4926 = vld [vmem:[%s4857 + $0x32] sm:$0xff]
  %v4927 = vld [vmem:[%s4857 + $0x3a] sm:$0xff]
  %v4928 = vld [vmem:[%s4857 + $0x4a] sm:$0xff]
  %v4929 = vld [vmem:[%s4857 + $0x52] sm:$0xff]
  %v4930 = vld [vmem:[%s4857 + $0x62] sm:$0xff]
  %v4931 = vld [vmem:[%s4857 + $0x6a] sm:$0xff]
  %v4932 = vld [vmem:[%s4857 + $0x7a] sm:$0xff]
  %v4933 = vld [vmem:[%s4857 + $0x82] sm:$0xff]
  %v4934 = vld [vmem:[%s4857 + $0x92] sm:$0xff]
  %v4935 = vld [vmem:[%s4857 + $0x9a] sm:$0xff]
  %v4936 = vld [vmem:[%s4857 + $0xaa] sm:$0xff]
  %v4937 = vld [vmem:[%s4857 + $0xb2] sm:$0xff]
  %v4938 = vld [vmem:[%s4857 + $0xc2] sm:$0xff]
  %v4939 = vld [vmem:[%s4857 + $0xca] sm:$0xff]
  %v4940 = vld [vmem:[%s4857 + $0xda] sm:$0xff]
  %v4941 = vld [vmem:[%s4857 + $0xe2] sm:$0xff]
  %v4942 = vld [vmem:[%s4857 + $0xf2] sm:$0xff]
  %v4943 = vld [vmem:[%s4857 + $0xfa] sm:$0xff]
  %v4944 = vld [vmem:[%s4857 + $0x10a] sm:$0xff]
  %v4945 = vld [vmem:[%s4857 + $0x112] sm:$0xff]
  %v4946 = vld [vmem:[%s4857 + $0x122] sm:$0xff]
  %v4947 = vld [vmem:[%s4857 + $0x12a] sm:$0xff]
  %v4948 = vld [vmem:[%s4857 + $0x13a] sm:$0xff]
  %v4949 = vld [vmem:[%s4857 + $0x142] sm:$0xff]
  %v4950 = vld [vmem:[%s4857 + $0x152] sm:$0xff]
  %v4951 = vld [vmem:[%s4857 + $0x15a] sm:$0xff]
  %v4952 = vld [vmem:[%s4857 + $0x16a] sm:$0xff]
  %v4953 = vld [vmem:[%s4857 + $0x172] sm:$0xff]
  %4986 = vrot.lane.b32.xlu0 %v4697, 8
  %v4987 = vpop.permute.xlu0 %4986
  %4988 = vrot.lane.b32.xlu0 %v4698, 8
  %v4989 = vpop.permute.xlu0 %4988
  %4990 = vrot.lane.b32.xlu0 %v4699, 8
  %v4991 = vpop.permute.xlu0 %4990
  %4992 = vrot.lane.b32.xlu0 %v4700, 8
  %v4993 = vpop.permute.xlu0 %4992
  %4994 = vrot.lane.b32.xlu0 %v4701, 8
  %v4995 = vpop.permute.xlu0 %4994
  %4996 = vrot.lane.b32.xlu0 %v4702, 8
  %v4997 = vpop.permute.xlu0 %4996
  %4998 = vrot.lane.b32.xlu0 %v4703, 8
  %v4999 = vpop.permute.xlu0 %4998
  %5000 = vrot.lane.b32.xlu0 %v4704, 8
  %v5001 = vpop.permute.xlu0 %5000
  %5002 = vrot.lane.b32.xlu0 %v4705, 8
  %v5003 = vpop.permute.xlu0 %5002
  %5004 = vrot.lane.b32.xlu0 %v4706, 8
  %v5005 = vpop.permute.xlu0 %5004
  %5006 = vrot.lane.b32.xlu0 %v4707, 8
  %v5007 = vpop.permute.xlu0 %5006
  %5008 = vrot.lane.b32.xlu0 %v4708, 8
  %v5009 = vpop.permute.xlu0 %5008
  %5010 = vrot.lane.b32.xlu0 %v4709, 8
  %v5011 = vpop.permute.xlu0 %5010
  %5012 = vrot.lane.b32.xlu0 %v4710, 8
  %v5013 = vpop.permute.xlu0 %5012
  %5014 = vrot.lane.b32.xlu0 %v4711, 8
  %v5015 = vpop.permute.xlu0 %5014
  %5016 = vrot.lane.b32.xlu0 %v4712, 8
  %v5017 = vpop.permute.xlu0 %5016
  %5018 = vrot.lane.b32.xlu0 %v4713, 8
  %v5019 = vpop.permute.xlu0 %5018
  %5020 = vrot.lane.b32.xlu0 %v4714, 8
  %v5021 = vpop.permute.xlu0 %5020
  %5022 = vrot.lane.b32.xlu0 %v4715, 8
  %v5023 = vpop.permute.xlu0 %5022
  %5024 = vrot.lane.b32.xlu0 %v4716, 8
  %v5025 = vpop.permute.xlu0 %5024
  %5026 = vrot.lane.b32.xlu0 %v4717, 8
  %v5027 = vpop.permute.xlu0 %5026
  %5028 = vrot.lane.b32.xlu0 %v4718, 8
  %v5029 = vpop.permute.xlu0 %5028
  %5030 = vrot.lane.b32.xlu0 %v4719, 8
  %v5031 = vpop.permute.xlu0 %5030
  %5032 = vrot.lane.b32.xlu0 %v4720, 8
  %v5033 = vpop.permute.xlu0 %5032
  %5034 = vrot.lane.b32.xlu0 %v4721, 8
  %v5035 = vpop.permute.xlu0 %5034
  %5036 = vrot.lane.b32.xlu0 %v4722, 8
  %v5037 = vpop.permute.xlu0 %5036
  %5038 = vrot.lane.b32.xlu0 %v4723, 8
  %v5039 = vpop.permute.xlu0 %5038
  %5040 = vrot.lane.b32.xlu0 %v4724, 8
  %v5041 = vpop.permute.xlu0 %5040
  %5042 = vrot.lane.b32.xlu0 %v4725, 8
  %v5043 = vpop.permute.xlu0 %5042
  %5044 = vrot.lane.b32.xlu0 %v4726, 8
  %v5045 = vpop.permute.xlu0 %5044
  %5046 = vrot.lane.b32.xlu0 %v4727, 8
  %v5047 = vpop.permute.xlu0 %5046
  %5048 = vrot.lane.b32.xlu0 %v4728, 8
  %v5049 = vpop.permute.xlu0 %5048
  %5114 = vrot.lane.b32.xlu0 %v4729, 16
  %v5115 = vpop.permute.xlu0 %5114
  %5116 = vrot.lane.b32.xlu0 %v4730, 16
  %v5117 = vpop.permute.xlu0 %5116
  %5118 = vrot.lane.b32.xlu0 %v4731, 16
  %v5119 = vpop.permute.xlu0 %5118
  %5120 = vrot.lane.b32.xlu0 %v4732, 16
  %v5121 = vpop.permute.xlu0 %5120
  %5122 = vrot.lane.b32.xlu0 %v4733, 16
  %v5123 = vpop.permute.xlu0 %5122
  %5124 = vrot.lane.b32.xlu0 %v4734, 16
  %v5125 = vpop.permute.xlu0 %5124
  %5126 = vrot.lane.b32.xlu0 %v4735, 16
  %v5127 = vpop.permute.xlu0 %5126
  %5128 = vrot.lane.b32.xlu0 %v4736, 16
  %v5129 = vpop.permute.xlu0 %5128
  %5130 = vrot.lane.b32.xlu0 %v4737, 16
  %v5131 = vpop.permute.xlu0 %5130
  %5132 = vrot.lane.b32.xlu0 %v4738, 16
  %v5133 = vpop.permute.xlu0 %5132
  %5134 = vrot.lane.b32.xlu0 %v4739, 16
  %v5135 = vpop.permute.xlu0 %5134
  %5136 = vrot.lane.b32.xlu0 %v4740, 16
  %v5137 = vpop.permute.xlu0 %5136
  %5138 = vrot.lane.b32.xlu0 %v4741, 16
  %v5139 = vpop.permute.xlu0 %5138
  %5140 = vrot.lane.b32.xlu0 %v4742, 16
  %v5141 = vpop.permute.xlu0 %5140
  %5142 = vrot.lane.b32.xlu0 %v4743, 16
  %v5143 = vpop.permute.xlu0 %5142
  %5144 = vrot.lane.b32.xlu0 %v4744, 16
  %v5145 = vpop.permute.xlu0 %5144
  %5146 = vrot.lane.b32.xlu0 %v4745, 16
  %v5147 = vpop.permute.xlu0 %5146
  %5148 = vrot.lane.b32.xlu0 %v4746, 16
  %v5149 = vpop.permute.xlu0 %5148
  %5150 = vrot.lane.b32.xlu0 %v4747, 16
  %v5151 = vpop.permute.xlu0 %5150
  %5152 = vrot.lane.b32.xlu0 %v4748, 16
  %v5153 = vpop.permute.xlu0 %5152
  %5154 = vrot.lane.b32.xlu0 %v4749, 16
  %v5155 = vpop.permute.xlu0 %5154
  %5156 = vrot.lane.b32.xlu0 %v4750, 16
  %v5157 = vpop.permute.xlu0 %5156
  %5158 = vrot.lane.b32.xlu0 %v4751, 16
  %v5159 = vpop.permute.xlu0 %5158
  %5160 = vrot.lane.b32.xlu0 %v4752, 16
  %v5161 = vpop.permute.xlu0 %5160
  %5162 = vrot.lane.b32.xlu0 %v4753, 16
  %v5163 = vpop.permute.xlu0 %5162
  %5164 = vrot.lane.b32.xlu0 %v4754, 16
  %v5165 = vpop.permute.xlu0 %5164
  %5166 = vrot.lane.b32.xlu0 %v4755, 16
  %v5167 = vpop.permute.xlu0 %5166
  %5168 = vrot.lane.b32.xlu0 %v4756, 16
  %v5169 = vpop.permute.xlu0 %5168
  %5170 = vrot.lane.b32.xlu0 %v4757, 16
  %v5171 = vpop.permute.xlu0 %5170
  %5172 = vrot.lane.b32.xlu0 %v4758, 16
  %v5173 = vpop.permute.xlu0 %5172
  %5174 = vrot.lane.b32.xlu0 %v4759, 16
  %v5175 = vpop.permute.xlu0 %5174
  %5176 = vrot.lane.b32.xlu0 %v4760, 16
  %v5177 = vpop.permute.xlu0 %5176
  %5242 = vrot.lane.b32.xlu0 %v4761, 24
  %v5243 = vpop.permute.xlu0 %5242
  %5244 = vrot.lane.b32.xlu0 %v4762, 24
  %v5245 = vpop.permute.xlu0 %5244
  %5246 = vrot.lane.b32.xlu0 %v4763, 24
  %v5247 = vpop.permute.xlu0 %5246
  %5248 = vrot.lane.b32.xlu0 %v4764, 24
  %v5249 = vpop.permute.xlu0 %5248
  %5250 = vrot.lane.b32.xlu0 %v4765, 24
  %v5251 = vpop.permute.xlu0 %5250
  %5252 = vrot.lane.b32.xlu0 %v4766, 24
  %v5253 = vpop.permute.xlu0 %5252
  %5254 = vrot.lane.b32.xlu0 %v4767, 24
  %v5255 = vpop.permute.xlu0 %5254
  %5256 = vrot.lane.b32.xlu0 %v4768, 24
  %v5257 = vpop.permute.xlu0 %5256
  %5258 = vrot.lane.b32.xlu0 %v4769, 24
  %v5259 = vpop.permute.xlu0 %5258
  %5260 = vrot.lane.b32.xlu0 %v4770, 24
  %v5261 = vpop.permute.xlu0 %5260
  %5262 = vrot.lane.b32.xlu0 %v4771, 24
  %v5263 = vpop.permute.xlu0 %5262
  %5264 = vrot.lane.b32.xlu0 %v4772, 24
  %v5265 = vpop.permute.xlu0 %5264
  %5266 = vrot.lane.b32.xlu0 %v4773, 24
  %v5267 = vpop.permute.xlu0 %5266
  %5268 = vrot.lane.b32.xlu0 %v4774, 24
  %v5269 = vpop.permute.xlu0 %5268
  %5270 = vrot.lane.b32.xlu0 %v4775, 24
  %v5271 = vpop.permute.xlu0 %5270
  %5272 = vrot.lane.b32.xlu0 %v4776, 24
  %v5273 = vpop.permute.xlu0 %5272
  %5274 = vrot.lane.b32.xlu0 %v4777, 24
  %v5275 = vpop.permute.xlu0 %5274
  %5276 = vrot.lane.b32.xlu0 %v4778, 24
  %v5277 = vpop.permute.xlu0 %5276
  %5278 = vrot.lane.b32.xlu0 %v4779, 24
  %v5279 = vpop.permute.xlu0 %5278
  %5280 = vrot.lane.b32.xlu0 %v4780, 24
  %v5281 = vpop.permute.xlu0 %5280
  %5282 = vrot.lane.b32.xlu0 %v4781, 24
  %v5283 = vpop.permute.xlu0 %5282
  %5284 = vrot.lane.b32.xlu0 %v4782, 24
  %v5285 = vpop.permute.xlu0 %5284
  %5286 = vrot.lane.b32.xlu0 %v4783, 24
  %v5287 = vpop.permute.xlu0 %5286
  %5288 = vrot.lane.b32.xlu0 %v4784, 24
  %v5289 = vpop.permute.xlu0 %5288
  %5290 = vrot.lane.b32.xlu0 %v4785, 24
  %v5291 = vpop.permute.xlu0 %5290
  %5292 = vrot.lane.b32.xlu0 %v4786, 24
  %v5293 = vpop.permute.xlu0 %5292
  %5294 = vrot.lane.b32.xlu0 %v4787, 24
  %v5295 = vpop.permute.xlu0 %5294
  %5296 = vrot.lane.b32.xlu0 %v4788, 24
  %v5297 = vpop.permute.xlu0 %5296
  %5298 = vrot.lane.b32.xlu0 %v4789, 24
  %v5299 = vpop.permute.xlu0 %5298
  %5300 = vrot.lane.b32.xlu0 %v4790, 24
  %v5301 = vpop.permute.xlu0 %5300
  %5302 = vrot.lane.b32.xlu0 %v4791, 24
  %v5303 = vpop.permute.xlu0 %5302
  %5304 = vrot.lane.b32.xlu0 %v4792, 24
  %v5305 = vpop.permute.xlu0 %5304
  %5370 = vrot.lane.b32.xlu0 %v4793, 32
  %v5371 = vpop.permute.xlu0 %5370
  %5372 = vrot.lane.b32.xlu0 %v4794, 32
  %v5373 = vpop.permute.xlu0 %5372
  %5374 = vrot.lane.b32.xlu0 %v4795, 32
  %v5375 = vpop.permute.xlu0 %5374
  %5376 = vrot.lane.b32.xlu0 %v4796, 32
  %v5377 = vpop.permute.xlu0 %5376
  %5378 = vrot.lane.b32.xlu0 %v4797, 32
  %v5379 = vpop.permute.xlu0 %5378
  %5380 = vrot.lane.b32.xlu0 %v4798, 32
  %v5381 = vpop.permute.xlu0 %5380
  %5382 = vrot.lane.b32.xlu0 %v4799, 32
  %v5383 = vpop.permute.xlu0 %5382
  %5384 = vrot.lane.b32.xlu0 %v4800, 32
  %v5385 = vpop.permute.xlu0 %5384
  %5386 = vrot.lane.b32.xlu0 %v4801, 32
  %v5387 = vpop.permute.xlu0 %5386
  %5388 = vrot.lane.b32.xlu0 %v4802, 32
  %v5389 = vpop.permute.xlu0 %5388
  %5390 = vrot.lane.b32.xlu0 %v4803, 32
  %v5391 = vpop.permute.xlu0 %5390
  %5392 = vrot.lane.b32.xlu0 %v4804, 32
  %v5393 = vpop.permute.xlu0 %5392
  %5394 = vrot.lane.b32.xlu0 %v4805, 32
  %v5395 = vpop.permute.xlu0 %5394
  %5396 = vrot.lane.b32.xlu0 %v4806, 32
  %v5397 = vpop.permute.xlu0 %5396
  %5398 = vrot.lane.b32.xlu0 %v4807, 32
  %v5399 = vpop.permute.xlu0 %5398
  %5400 = vrot.lane.b32.xlu0 %v4808, 32
  %v5401 = vpop.permute.xlu0 %5400
  %5402 = vrot.lane.b32.xlu0 %v4809, 32
  %v5403 = vpop.permute.xlu0 %5402
  %5404 = vrot.lane.b32.xlu0 %v4810, 32
  %v5405 = vpop.permute.xlu0 %5404
  %5406 = vrot.lane.b32.xlu0 %v4811, 32
  %v5407 = vpop.permute.xlu0 %5406
  %5408 = vrot.lane.b32.xlu0 %v4812, 32
  %v5409 = vpop.permute.xlu0 %5408
  %5410 = vrot.lane.b32.xlu0 %v4813, 32
  %v5411 = vpop.permute.xlu0 %5410
  %5412 = vrot.lane.b32.xlu0 %v4814, 32
  %v5413 = vpop.permute.xlu0 %5412
  %5414 = vrot.lane.b32.xlu0 %v4815, 32
  %v5415 = vpop.permute.xlu0 %5414
  %5416 = vrot.lane.b32.xlu0 %v4816, 32
  %v5417 = vpop.permute.xlu0 %5416
  %5418 = vrot.lane.b32.xlu0 %v4817, 32
  %v5419 = vpop.permute.xlu0 %5418
  %5420 = vrot.lane.b32.xlu0 %v4818, 32
  %v5421 = vpop.permute.xlu0 %5420
  %5422 = vrot.lane.b32.xlu0 %v4819, 32
  %v5423 = vpop.permute.xlu0 %5422
  %5424 = vrot.lane.b32.xlu0 %v4820, 32
  %v5425 = vpop.permute.xlu0 %5424
  %5426 = vrot.lane.b32.xlu0 %v4821, 32
  %v5427 = vpop.permute.xlu0 %5426
  %5428 = vrot.lane.b32.xlu0 %v4822, 32
  %v5429 = vpop.permute.xlu0 %5428
  %5430 = vrot.lane.b32.xlu0 %v4823, 32
  %v5431 = vpop.permute.xlu0 %5430
  %5432 = vrot.lane.b32.xlu0 %v4824, 32
  %v5433 = vpop.permute.xlu0 %5432
  %5498 = vrot.lane.b32.xlu0 %v4825, 40
  %v5499 = vpop.permute.xlu0 %5498
  %5500 = vrot.lane.b32.xlu0 %v4826, 40
  %v5501 = vpop.permute.xlu0 %5500
  %5502 = vrot.lane.b32.xlu0 %v4827, 40
  %v5503 = vpop.permute.xlu0 %5502
  %5504 = vrot.lane.b32.xlu0 %v4828, 40
  %v5505 = vpop.permute.xlu0 %5504
  %5506 = vrot.lane.b32.xlu0 %v4829, 40
  %v5507 = vpop.permute.xlu0 %5506
  %5508 = vrot.lane.b32.xlu0 %v4830, 40
  %v5509 = vpop.permute.xlu0 %5508
  %5510 = vrot.lane.b32.xlu0 %v4831, 40
  %v5511 = vpop.permute.xlu0 %5510
  %5512 = vrot.lane.b32.xlu0 %v4832, 40
  %v5513 = vpop.permute.xlu0 %5512
  %5514 = vrot.lane.b32.xlu0 %v4833, 40
  %v5515 = vpop.permute.xlu0 %5514
  %5516 = vrot.lane.b32.xlu0 %v4834, 40
  %v5517 = vpop.permute.xlu0 %5516
  %5518 = vrot.lane.b32.xlu0 %v4835, 40
  %v5519 = vpop.permute.xlu0 %5518
  %5520 = vrot.lane.b32.xlu0 %v4836, 40
  %v5521 = vpop.permute.xlu0 %5520
  %5522 = vrot.lane.b32.xlu0 %v4837, 40
  %v5523 = vpop.permute.xlu0 %5522
  %5524 = vrot.lane.b32.xlu0 %v4838, 40
  %v5525 = vpop.permute.xlu0 %5524
  %5526 = vrot.lane.b32.xlu0 %v4839, 40
  %v5527 = vpop.permute.xlu0 %5526
  %5528 = vrot.lane.b32.xlu0 %v4840, 40
  %v5529 = vpop.permute.xlu0 %5528
  %5530 = vrot.lane.b32.xlu0 %v4841, 40
  %v5531 = vpop.permute.xlu0 %5530
  %5532 = vrot.lane.b32.xlu0 %v4842, 40
  %v5533 = vpop.permute.xlu0 %5532
  %5534 = vrot.lane.b32.xlu0 %v4843, 40
  %v5535 = vpop.permute.xlu0 %5534
  %5536 = vrot.lane.b32.xlu0 %v4844, 40
  %v5537 = vpop.permute.xlu0 %5536
  %5538 = vrot.lane.b32.xlu0 %v4845, 40
  %v5539 = vpop.permute.xlu0 %5538
  %5540 = vrot.lane.b32.xlu0 %v4846, 40
  %v5541 = vpop.permute.xlu0 %5540
  %5542 = vrot.lane.b32.xlu0 %v4847, 40
  %v5543 = vpop.permute.xlu0 %5542
  %5544 = vrot.lane.b32.xlu0 %v4848, 40
  %v5545 = vpop.permute.xlu0 %5544
  %5546 = vrot.lane.b32.xlu0 %v4849, 40
  %v5547 = vpop.permute.xlu0 %5546
  %5548 = vrot.lane.b32.xlu0 %v4850, 40
  %v5549 = vpop.permute.xlu0 %5548
  %5550 = vrot.lane.b32.xlu0 %v4851, 40
  %v5551 = vpop.permute.xlu0 %5550
  %5552 = vrot.lane.b32.xlu0 %v4852, 40
  %v5553 = vpop.permute.xlu0 %5552
  %5554 = vrot.lane.b32.xlu0 %v4853, 40
  %v5555 = vpop.permute.xlu0 %5554
  %5556 = vrot.lane.b32.xlu0 %v4854, 40
  %v5557 = vpop.permute.xlu0 %5556
  %5558 = vrot.lane.b32.xlu0 %v4855, 40
  %v5559 = vpop.permute.xlu0 %5558
  %5560 = vrot.lane.b32.xlu0 %v4856, 40
  %v5561 = vpop.permute.xlu0 %5560
  %5626 = vrot.lane.b32.xlu0 %v4858, 48
  %v5627 = vpop.permute.xlu0 %5626
  %5628 = vrot.lane.b32.xlu0 %v4859, 48
  %v5629 = vpop.permute.xlu0 %5628
  %5630 = vrot.lane.b32.xlu0 %v4860, 48
  %v5631 = vpop.permute.xlu0 %5630
  %5632 = vrot.lane.b32.xlu0 %v4861, 48
  %v5633 = vpop.permute.xlu0 %5632
  %5634 = vrot.lane.b32.xlu0 %v4862, 48
  %v5635 = vpop.permute.xlu0 %5634
  %5636 = vrot.lane.b32.xlu0 %v4863, 48
  %v5637 = vpop.permute.xlu0 %5636
  %5638 = vrot.lane.b32.xlu0 %v4864, 48
  %v5639 = vpop.permute.xlu0 %5638
  %5640 = vrot.lane.b32.xlu0 %v4865, 48
  %v5641 = vpop.permute.xlu0 %5640
  %5642 = vrot.lane.b32.xlu0 %v4866, 48
  %v5643 = vpop.permute.xlu0 %5642
  %5644 = vrot.lane.b32.xlu0 %v4867, 48
  %v5645 = vpop.permute.xlu0 %5644
  %5646 = vrot.lane.b32.xlu0 %v4868, 48
  %v5647 = vpop.permute.xlu0 %5646
  %5648 = vrot.lane.b32.xlu0 %v4869, 48
  %v5649 = vpop.permute.xlu0 %5648
  %5650 = vrot.lane.b32.xlu0 %v4870, 48
  %v5651 = vpop.permute.xlu0 %5650
  %5652 = vrot.lane.b32.xlu0 %v4871, 48
  %v5653 = vpop.permute.xlu0 %5652
  %5654 = vrot.lane.b32.xlu0 %v4872, 48
  %v5655 = vpop.permute.xlu0 %5654
  %5656 = vrot.lane.b32.xlu0 %v4873, 48
  %v5657 = vpop.permute.xlu0 %5656
  %5658 = vrot.lane.b32.xlu0 %v4874, 48
  %v5659 = vpop.permute.xlu0 %5658
  %5660 = vrot.lane.b32.xlu0 %v4875, 48
  %v5661 = vpop.permute.xlu0 %5660
  %5662 = vrot.lane.b32.xlu0 %v4876, 48
  %v5663 = vpop.permute.xlu0 %5662
  %5664 = vrot.lane.b32.xlu0 %v4877, 48
  %v5665 = vpop.permute.xlu0 %5664
  %5666 = vrot.lane.b32.xlu0 %v4878, 48
  %v5667 = vpop.permute.xlu0 %5666
  %5668 = vrot.lane.b32.xlu0 %v4879, 48
  %v5669 = vpop.permute.xlu0 %5668
  %5670 = vrot.lane.b32.xlu0 %v4880, 48
  %v5671 = vpop.permute.xlu0 %5670
  %5672 = vrot.lane.b32.xlu0 %v4881, 48
  %v5673 = vpop.permute.xlu0 %5672
  %5674 = vrot.lane.b32.xlu0 %v4882, 48
  %v5675 = vpop.permute.xlu0 %5674
  %5676 = vrot.lane.b32.xlu0 %v4883, 48
  %v5677 = vpop.permute.xlu0 %5676
  %5678 = vrot.lane.b32.xlu0 %v4884, 48
  %v5679 = vpop.permute.xlu0 %5678
  %5680 = vrot.lane.b32.xlu0 %v4885, 48
  %v5681 = vpop.permute.xlu0 %5680
  %5682 = vrot.lane.b32.xlu0 %v4886, 48
  %v5683 = vpop.permute.xlu0 %5682
  %5684 = vrot.lane.b32.xlu0 %v4887, 48
  %v5685 = vpop.permute.xlu0 %5684
  %5686 = vrot.lane.b32.xlu0 %v4888, 48
  %v5687 = vpop.permute.xlu0 %5686
  %5688 = vrot.lane.b32.xlu0 %v4889, 48
  %v5689 = vpop.permute.xlu0 %5688
  %5754 = vrot.lane.b32.xlu0 %v4890, 56
  %v5755 = vpop.permute.xlu0 %5754
  %5756 = vrot.lane.b32.xlu0 %v4891, 56
  %v5757 = vpop.permute.xlu0 %5756
  %5758 = vrot.lane.b32.xlu0 %v4892, 56
  %v5759 = vpop.permute.xlu0 %5758
  %5760 = vrot.lane.b32.xlu0 %v4893, 56
  %v5761 = vpop.permute.xlu0 %5760
  %5762 = vrot.lane.b32.xlu0 %v4894, 56
  %v5763 = vpop.permute.xlu0 %5762
  %5764 = vrot.lane.b32.xlu0 %v4895, 56
  %v5765 = vpop.permute.xlu0 %5764
  %5766 = vrot.lane.b32.xlu0 %v4896, 56
  %v5767 = vpop.permute.xlu0 %5766
  %5768 = vrot.lane.b32.xlu0 %v4897, 56
  %v5769 = vpop.permute.xlu0 %5768
  %5770 = vrot.lane.b32.xlu0 %v4898, 56
  %v5771 = vpop.permute.xlu0 %5770
  %5772 = vrot.lane.b32.xlu0 %v4899, 56
  %v5773 = vpop.permute.xlu0 %5772
  %5774 = vrot.lane.b32.xlu0 %v4900, 56
  %v5775 = vpop.permute.xlu0 %5774
  %5776 = vrot.lane.b32.xlu0 %v4901, 56
  %v5777 = vpop.permute.xlu0 %5776
  %5778 = vrot.lane.b32.xlu0 %v4902, 56
  %v5779 = vpop.permute.xlu0 %5778
  %5780 = vrot.lane.b32.xlu0 %v4903, 56
  %v5781 = vpop.permute.xlu0 %5780
  %5782 = vrot.lane.b32.xlu0 %v4904, 56
  %v5783 = vpop.permute.xlu0 %5782
  %5784 = vrot.lane.b32.xlu0 %v4905, 56
  %v5785 = vpop.permute.xlu0 %5784
  %5786 = vrot.lane.b32.xlu0 %v4906, 56
  %v5787 = vpop.permute.xlu0 %5786
  %5788 = vrot.lane.b32.xlu0 %v4907, 56
  %v5789 = vpop.permute.xlu0 %5788
  %5790 = vrot.lane.b32.xlu0 %v4908, 56
  %v5791 = vpop.permute.xlu0 %5790
  %5792 = vrot.lane.b32.xlu0 %v4909, 56
  %v5793 = vpop.permute.xlu0 %5792
  %5794 = vrot.lane.b32.xlu0 %v4910, 56
  %v5795 = vpop.permute.xlu0 %5794
  %5796 = vrot.lane.b32.xlu0 %v4911, 56
  %v5797 = vpop.permute.xlu0 %5796
  %5798 = vrot.lane.b32.xlu0 %v4912, 56
  %v5799 = vpop.permute.xlu0 %5798
  %5800 = vrot.lane.b32.xlu0 %v4913, 56
  %v5801 = vpop.permute.xlu0 %5800
  %5802 = vrot.lane.b32.xlu0 %v4914, 56
  %v5803 = vpop.permute.xlu0 %5802
  %5804 = vrot.lane.b32.xlu0 %v4915, 56
  %v5805 = vpop.permute.xlu0 %5804
  %5806 = vrot.lane.b32.xlu0 %v4916, 56
  %v5807 = vpop.permute.xlu0 %5806
  %5808 = vrot.lane.b32.xlu0 %v4917, 56
  %v5809 = vpop.permute.xlu0 %5808
  %5810 = vrot.lane.b32.xlu0 %v4918, 56
  %v5811 = vpop.permute.xlu0 %5810
  %5812 = vrot.lane.b32.xlu0 %v4919, 56
  %v5813 = vpop.permute.xlu0 %5812
  %5814 = vrot.lane.b32.xlu0 %v4920, 56
  %v5815 = vpop.permute.xlu0 %5814
  %5816 = vrot.lane.b32.xlu0 %v4921, 56
  %v5817 = vpop.permute.xlu0 %5816
  %5882 = vrot.lane.b32.xlu0 %v4922, 64
  %v5883 = vpop.permute.xlu0 %5882
  %5884 = vrot.lane.b32.xlu0 %v4923, 64
  %v5885 = vpop.permute.xlu0 %5884
  %5886 = vrot.lane.b32.xlu0 %v4924, 64
  %v5887 = vpop.permute.xlu0 %5886
  %5888 = vrot.lane.b32.xlu0 %v4925, 64
  %v5889 = vpop.permute.xlu0 %5888
  %5890 = vrot.lane.b32.xlu0 %v4926, 64
  %v5891 = vpop.permute.xlu0 %5890
  %5892 = vrot.lane.b32.xlu0 %v4927, 64
  %v5893 = vpop.permute.xlu0 %5892
  %5894 = vrot.lane.b32.xlu0 %v4928, 64
  %v5895 = vpop.permute.xlu0 %5894
  %5896 = vrot.lane.b32.xlu0 %v4929, 64
  %v5897 = vpop.permute.xlu0 %5896
  %5898 = vrot.lane.b32.xlu0 %v4930, 64
  %v5899 = vpop.permute.xlu0 %5898
  %5900 = vrot.lane.b32.xlu0 %v4931, 64
  %v5901 = vpop.permute.xlu0 %5900
  %5902 = vrot.lane.b32.xlu0 %v4932, 64
  %v5903 = vpop.permute.xlu0 %5902
  %5904 = vrot.lane.b32.xlu0 %v4933, 64
  %v5905 = vpop.permute.xlu0 %5904
  %5906 = vrot.lane.b32.xlu0 %v4934, 64
  %v5907 = vpop.permute.xlu0 %5906
  %5908 = vrot.lane.b32.xlu0 %v4935, 64
  %v5909 = vpop.permute.xlu0 %5908
  %5910 = vrot.lane.b32.xlu0 %v4936, 64
  %v5911 = vpop.permute.xlu0 %5910
  %5912 = vrot.lane.b32.xlu0 %v4937, 64
  %v5913 = vpop.permute.xlu0 %5912
  %5914 = vrot.lane.b32.xlu0 %v4938, 64
  %v5915 = vpop.permute.xlu0 %5914
  %5916 = vrot.lane.b32.xlu0 %v4939, 64
  %v5917 = vpop.permute.xlu0 %5916
  %5918 = vrot.lane.b32.xlu0 %v4940, 64
  %v5919 = vpop.permute.xlu0 %5918
  %5920 = vrot.lane.b32.xlu0 %v4941, 64
  %v5921 = vpop.permute.xlu0 %5920
  %5922 = vrot.lane.b32.xlu0 %v4942, 64
  %v5923 = vpop.permute.xlu0 %5922
  %5924 = vrot.lane.b32.xlu0 %v4943, 64
  %v5925 = vpop.permute.xlu0 %5924
  %5926 = vrot.lane.b32.xlu0 %v4944, 64
  %v5927 = vpop.permute.xlu0 %5926
  %5928 = vrot.lane.b32.xlu0 %v4945, 64
  %v5929 = vpop.permute.xlu0 %5928
  %5930 = vrot.lane.b32.xlu0 %v4946, 64
  %v5931 = vpop.permute.xlu0 %5930
  %5932 = vrot.lane.b32.xlu0 %v4947, 64
  %v5933 = vpop.permute.xlu0 %5932
  %5934 = vrot.lane.b32.xlu0 %v4948, 64
  %v5935 = vpop.permute.xlu0 %5934
  %5936 = vrot.lane.b32.xlu0 %v4949, 64
  %v5937 = vpop.permute.xlu0 %5936
  %5938 = vrot.lane.b32.xlu0 %v4950, 64
  %v5939 = vpop.permute.xlu0 %5938
  %5940 = vrot.lane.b32.xlu0 %v4951, 64
  %v5941 = vpop.permute.xlu0 %5940
  %5942 = vrot.lane.b32.xlu0 %v4952, 64
  %v5943 = vpop.permute.xlu0 %5942
  %5944 = vrot.lane.b32.xlu0 %v4953, 64
  %v5945 = vpop.permute.xlu0 %5944
  %v5978 = vsel %vm1492, %v4665, %v4987
  %v5979 = vsel %vm1492, %v4666, %v4989
  %v5980 = vsel %vm1492, %v4667, %v4991
  %v5981 = vsel %vm1492, %v4668, %v4993
  %v5982 = vsel %vm1492, %v4669, %v4995
  %v5983 = vsel %vm1492, %v4670, %v4997
  %v5984 = vsel %vm1492, %v4671, %v4999
  %v5985 = vsel %vm1492, %v4672, %v5001
  %v5986 = vsel %vm1492, %v4673, %v5003
  %v5987 = vsel %vm1492, %v4674, %v5005
  %v5988 = vsel %vm1492, %v4675, %v5007
  %v5989 = vsel %vm1492, %v4676, %v5009
  %v5990 = vsel %vm1492, %v4677, %v5011
  %v5991 = vsel %vm1492, %v4678, %v5013
  %v5992 = vsel %vm1492, %v4679, %v5015
  %v5993 = vsel %vm1492, %v4680, %v5017
  %v5994 = vsel %vm1492, %v4681, %v5019
  %v5995 = vsel %vm1492, %v4682, %v5021
  %v5996 = vsel %vm1492, %v4683, %v5023
  %v5997 = vsel %vm1492, %v4684, %v5025
  %v5998 = vsel %vm1492, %v4685, %v5027
  %v5999 = vsel %vm1492, %v4686, %v5029
  %v6000 = vsel %vm1492, %v4687, %v5031
  %v6001 = vsel %vm1492, %v4688, %v5033
  %v6002 = vsel %vm1492, %v4689, %v5035
  %v6003 = vsel %vm1492, %v4690, %v5037
  %v6004 = vsel %vm1492, %v4691, %v5039
  %v6005 = vsel %vm1492, %v4692, %v5041
  %v6006 = vsel %vm1492, %v4693, %v5043
  %v6007 = vsel %vm1492, %v4694, %v5045
  %v6008 = vsel %vm1492, %v4695, %v5047
  %v6009 = vsel %vm1492, %v4696, %v5049
  %v6010 = vsel %vm1558, %v5978, %v5115
  %v6011 = vsel %vm1558, %v5979, %v5117
  %v6012 = vsel %vm1558, %v5980, %v5119
  %v6013 = vsel %vm1558, %v5981, %v5121
  %v6014 = vsel %vm1558, %v5982, %v5123
  %v6015 = vsel %vm1558, %v5983, %v5125
  %v6016 = vsel %vm1558, %v5984, %v5127
  %v6017 = vsel %vm1558, %v5985, %v5129
  %v6018 = vsel %vm1558, %v5986, %v5131
  %v6019 = vsel %vm1558, %v5987, %v5133
  %v6020 = vsel %vm1558, %v5988, %v5135
  %v6021 = vsel %vm1558, %v5989, %v5137
  %v6022 = vsel %vm1558, %v5990, %v5139
  %v6023 = vsel %vm1558, %v5991, %v5141
  %v6024 = vsel %vm1558, %v5992, %v5143
  %v6025 = vsel %vm1558, %v5993, %v5145
  %v6026 = vsel %vm1558, %v5994, %v5147
  %v6027 = vsel %vm1558, %v5995, %v5149
  %v6028 = vsel %vm1558, %v5996, %v5151
  %v6029 = vsel %vm1558, %v5997, %v5153
  %v6030 = vsel %vm1558, %v5998, %v5155
  %v6031 = vsel %vm1558, %v5999, %v5157
  %v6032 = vsel %vm1558, %v6000, %v5159
  %v6033 = vsel %vm1558, %v6001, %v5161
  %v6034 = vsel %vm1558, %v6002, %v5163
  %v6035 = vsel %vm1558, %v6003, %v5165
  %v6036 = vsel %vm1558, %v6004, %v5167
  %v6037 = vsel %vm1558, %v6005, %v5169
  %v6038 = vsel %vm1558, %v6006, %v5171
  %v6039 = vsel %vm1558, %v6007, %v5173
  %v6040 = vsel %vm1558, %v6008, %v5175
  %v6041 = vsel %vm1558, %v6009, %v5177
  %v6042 = vsel %vm1624, %v6010, %v5243
  %v6043 = vsel %vm1624, %v6011, %v5245
  %v6044 = vsel %vm1624, %v6012, %v5247
  %v6045 = vsel %vm1624, %v6013, %v5249
  %v6046 = vsel %vm1624, %v6014, %v5251
  %v6047 = vsel %vm1624, %v6015, %v5253
  %v6048 = vsel %vm1624, %v6016, %v5255
  %v6049 = vsel %vm1624, %v6017, %v5257
  %v6050 = vsel %vm1624, %v6018, %v5259
  %v6051 = vsel %vm1624, %v6019, %v5261
  %v6052 = vsel %vm1624, %v6020, %v5263
  %v6053 = vsel %vm1624, %v6021, %v5265
  %v6054 = vsel %vm1624, %v6022, %v5267
  %v6055 = vsel %vm1624, %v6023, %v5269
  %v6056 = vsel %vm1624, %v6024, %v5271
  %v6057 = vsel %vm1624, %v6025, %v5273
  %v6058 = vsel %vm1624, %v6026, %v5275
  %v6059 = vsel %vm1624, %v6027, %v5277
  %v6060 = vsel %vm1624, %v6028, %v5279
  %v6061 = vsel %vm1624, %v6029, %v5281
  %v6062 = vsel %vm1624, %v6030, %v5283
  %v6063 = vsel %vm1624, %v6031, %v5285
  %v6064 = vsel %vm1624, %v6032, %v5287
  %v6065 = vsel %vm1624, %v6033, %v5289
  %v6066 = vsel %vm1624, %v6034, %v5291
  %v6067 = vsel %vm1624, %v6035, %v5293
  %v6068 = vsel %vm1624, %v6036, %v5295
  %v6069 = vsel %vm1624, %v6037, %v5297
  %v6070 = vsel %vm1624, %v6038, %v5299
  %v6071 = vsel %vm1624, %v6039, %v5301
  %v6072 = vsel %vm1624, %v6040, %v5303
  %v6073 = vsel %vm1624, %v6041, %v5305
  %v6074 = vsel %vm1690, %v6042, %v5371
  %v6075 = vsel %vm1690, %v6043, %v5373
  %v6076 = vsel %vm1690, %v6044, %v5375
  %v6077 = vsel %vm1690, %v6045, %v5377
  %v6078 = vsel %vm1690, %v6046, %v5379
  %v6079 = vsel %vm1690, %v6047, %v5381
  %v6080 = vsel %vm1690, %v6048, %v5383
  %v6081 = vsel %vm1690, %v6049, %v5385
  %v6082 = vsel %vm1690, %v6050, %v5387
  %v6083 = vsel %vm1690, %v6051, %v5389
  %v6084 = vsel %vm1690, %v6052, %v5391
  %v6085 = vsel %vm1690, %v6053, %v5393
  %v6086 = vsel %vm1690, %v6054, %v5395
  %v6087 = vsel %vm1690, %v6055, %v5397
  %v6088 = vsel %vm1690, %v6056, %v5399
  %v6089 = vsel %vm1690, %v6057, %v5401
  %v6090 = vsel %vm1690, %v6058, %v5403
  %v6091 = vsel %vm1690, %v6059, %v5405
  %v6092 = vsel %vm1690, %v6060, %v5407
  %v6093 = vsel %vm1690, %v6061, %v5409
  %v6094 = vsel %vm1690, %v6062, %v5411
  %v6095 = vsel %vm1690, %v6063, %v5413
  %v6096 = vsel %vm1690, %v6064, %v5415
  %v6097 = vsel %vm1690, %v6065, %v5417
  %v6098 = vsel %vm1690, %v6066, %v5419
  %v6099 = vsel %vm1690, %v6067, %v5421
  %v6100 = vsel %vm1690, %v6068, %v5423
  %v6101 = vsel %vm1690, %v6069, %v5425
  %v6102 = vsel %vm1690, %v6070, %v5427
  %v6103 = vsel %vm1690, %v6071, %v5429
  %v6104 = vsel %vm1690, %v6072, %v5431
  %v6105 = vsel %vm1690, %v6073, %v5433
  %vm6106 = vcmask 326656
  %v6107 = vsel %vm6106, %v6074, %v5499
  %v6108 = vsel %vm6106, %v6075, %v5501
  %v6109 = vsel %vm6106, %v6076, %v5503
  %v6110 = vsel %vm6106, %v6077, %v5505
  %v6111 = vsel %vm6106, %v6078, %v5507
  %v6112 = vsel %vm6106, %v6079, %v5509
  %v6113 = vsel %vm6106, %v6080, %v5511
  %v6114 = vsel %vm6106, %v6081, %v5513
  %v6115 = vsel %vm6106, %v6082, %v5515
  %v6116 = vsel %vm6106, %v6083, %v5517
  %v6117 = vsel %vm6106, %v6084, %v5519
  %v6118 = vsel %vm6106, %v6085, %v5521
  %v6119 = vsel %vm6106, %v6086, %v5523
  %v6120 = vsel %vm6106, %v6087, %v5525
  %v6121 = vsel %vm6106, %v6088, %v5527
  %v6122 = vsel %vm6106, %v6089, %v5529
  %v6123 = vsel %vm6106, %v6090, %v5531
  %v6124 = vsel %vm6106, %v6091, %v5533
  %v6125 = vsel %vm6106, %v6092, %v5535
  %v6126 = vsel %vm6106, %v6093, %v5537
  %v6127 = vsel %vm6106, %v6094, %v5539
  %v6128 = vsel %vm6106, %v6095, %v5541
  %v6129 = vsel %vm6106, %v6096, %v5543
  %v6130 = vsel %vm6106, %v6097, %v5545
  %v6131 = vsel %vm6106, %v6098, %v5547
  %v6132 = vsel %vm6106, %v6099, %v5549
  %v6133 = vsel %vm6106, %v6100, %v5551
  %v6134 = vsel %vm6106, %v6101, %v5553
  %v6135 = vsel %vm6106, %v6102, %v5555
  %v6136 = vsel %vm6106, %v6103, %v5557
  %v6137 = vsel %vm6106, %v6104, %v5559
  %v6138 = vsel %vm6106, %v6105, %v5561
  %vm6139 = vcmask 392192
  %v6140 = vsel %vm6139, %v6107, %v5627
  %v6141 = vsel %vm6139, %v6108, %v5629
  %v6142 = vsel %vm6139, %v6109, %v5631
  %v6143 = vsel %vm6139, %v6110, %v5633
  %v6144 = vsel %vm6139, %v6111, %v5635
  %v6145 = vsel %vm6139, %v6112, %v5637
  %v6146 = vsel %vm6139, %v6113, %v5639
  %v6147 = vsel %vm6139, %v6114, %v5641
  %v6148 = vsel %vm6139, %v6115, %v5643
  %v6149 = vsel %vm6139, %v6116, %v5645
  %v6150 = vsel %vm6139, %v6117, %v5647
  %v6151 = vsel %vm6139, %v6118, %v5649
  %v6152 = vsel %vm6139, %v6119, %v5651
  %v6153 = vsel %vm6139, %v6120, %v5653
  %v6154 = vsel %vm6139, %v6121, %v5655
  %v6155 = vsel %vm6139, %v6122, %v5657
  %v6156 = vsel %vm6139, %v6123, %v5659
  %v6157 = vsel %vm6139, %v6124, %v5661
  %v6158 = vsel %vm6139, %v6125, %v5663
  %v6159 = vsel %vm6139, %v6126, %v5665
  %v6160 = vsel %vm6139, %v6127, %v5667
  %v6161 = vsel %vm6139, %v6128, %v5669
  %v6162 = vsel %vm6139, %v6129, %v5671
  %v6163 = vsel %vm6139, %v6130, %v5673
  %v6164 = vsel %vm6139, %v6131, %v5675
  %v6165 = vsel %vm6139, %v6132, %v5677
  %v6166 = vsel %vm6139, %v6133, %v5679
  %v6167 = vsel %vm6139, %v6134, %v5681
  %v6168 = vsel %vm6139, %v6135, %v5683
  %v6169 = vsel %vm6139, %v6136, %v5685
  %v6170 = vsel %vm6139, %v6137, %v5687
  %v6171 = vsel %vm6139, %v6138, %v5689
  %vm6172 = vcmask 457728
  %v6173 = vsel %vm6172, %v6140, %v5755
  %v6174 = vsel %vm6172, %v6141, %v5757
  %v6175 = vsel %vm6172, %v6142, %v5759
  %v6176 = vsel %vm6172, %v6143, %v5761
  %v6177 = vsel %vm6172, %v6144, %v5763
  %v6178 = vsel %vm6172, %v6145, %v5765
  %v6179 = vsel %vm6172, %v6146, %v5767
  %v6180 = vsel %vm6172, %v6147, %v5769
  %v6181 = vsel %vm6172, %v6148, %v5771
  %v6182 = vsel %vm6172, %v6149, %v5773
  %v6183 = vsel %vm6172, %v6150, %v5775
  %v6184 = vsel %vm6172, %v6151, %v5777
  %v6185 = vsel %vm6172, %v6152, %v5779
  %v6186 = vsel %vm6172, %v6153, %v5781
  %v6187 = vsel %vm6172, %v6154, %v5783
  %v6188 = vsel %vm6172, %v6155, %v5785
  %v6189 = vsel %vm6172, %v6156, %v5787
  %v6190 = vsel %vm6172, %v6157, %v5789
  %v6191 = vsel %vm6172, %v6158, %v5791
  %v6192 = vsel %vm6172, %v6159, %v5793
  %v6193 = vsel %vm6172, %v6160, %v5795
  %v6194 = vsel %vm6172, %v6161, %v5797
  %v6195 = vsel %vm6172, %v6162, %v5799
  %v6196 = vsel %vm6172, %v6163, %v5801
  %v6197 = vsel %vm6172, %v6164, %v5803
  %v6198 = vsel %vm6172, %v6165, %v5805
  %v6199 = vsel %vm6172, %v6166, %v5807
  %v6200 = vsel %vm6172, %v6167, %v5809
  %v6201 = vsel %vm6172, %v6168, %v5811
  %v6202 = vsel %vm6172, %v6169, %v5813
  %v6203 = vsel %vm6172, %v6170, %v5815
  %v6204 = vsel %vm6172, %v6171, %v5817
  %vm6205 = vcmask 523264
  %v6206 = vsel %vm6205, %v6173, %v5883
  %v6207 = vsel %vm6205, %v6174, %v5885
  %v6208 = vsel %vm6205, %v6175, %v5887
  %v6209 = vsel %vm6205, %v6176, %v5889
  %v6210 = vsel %vm6205, %v6177, %v5891
  %v6211 = vsel %vm6205, %v6178, %v5893
  %v6212 = vsel %vm6205, %v6179, %v5895
  %v6213 = vsel %vm6205, %v6180, %v5897
  %v6214 = vsel %vm6205, %v6181, %v5899
  %v6215 = vsel %vm6205, %v6182, %v5901
  %v6216 = vsel %vm6205, %v6183, %v5903
  %v6217 = vsel %vm6205, %v6184, %v5905
  %v6218 = vsel %vm6205, %v6185, %v5907
  %v6219 = vsel %vm6205, %v6186, %v5909
  %v6220 = vsel %vm6205, %v6187, %v5911
  %v6221 = vsel %vm6205, %v6188, %v5913
  %v6222 = vsel %vm6205, %v6189, %v5915
  %v6223 = vsel %vm6205, %v6190, %v5917
  %v6224 = vsel %vm6205, %v6191, %v5919
  %v6225 = vsel %vm6205, %v6192, %v5921
  %v6226 = vsel %vm6205, %v6193, %v5923
  %v6227 = vsel %vm6205, %v6194, %v5925
  %v6228 = vsel %vm6205, %v6195, %v5927
  %v6229 = vsel %vm6205, %v6196, %v5929
  %v6230 = vsel %vm6205, %v6197, %v5931
  %v6231 = vsel %vm6205, %v6198, %v5933
  %v6232 = vsel %vm6205, %v6199, %v5935
  %v6233 = vsel %vm6205, %v6200, %v5937
  %v6234 = vsel %vm6205, %v6201, %v5939
  %v6235 = vsel %vm6205, %v6202, %v5941
  %v6236 = vsel %vm6205, %v6203, %v5943
  %v6237 = vsel %vm6205, %v6204, %v5945
  %v6238 = vld [vmem:[%s2] sm:$0xff]
  %v6239 = vld [vmem:[%s2 + $0x8] sm:$0xff]
  %v6240 = vld [vmem:[%s2 + $0x10] sm:$0xff]
  %v6241 = vld [vmem:[%s2 + $0x18] sm:$0xff]
  %v6242 = vld [vmem:[%s2 + $0x20] sm:$0xff]
  %v6243 = vld [vmem:[%s2 + $0x28] sm:$0xff]
  %v6244 = vld [vmem:[%s2 + $0x30] sm:$0xff]
  %v6245 = vld [vmem:[%s2 + $0x38] sm:$0xff]
  %v6246 = vld [vmem:[%s2 + $0x40] sm:$0xff]
  %vm6247 = vcmask 588800
  %v6249 = vsel %vm6247, %v6206, 0
  %v6252 = vsel %vm6247, %v6207, 0
  %v6255 = vsel %vm6247, %v6208, 0
  %v6258 = vsel %vm6247, %v6209, 0
  %v6261 = vsel %vm6247, %v6210, 0
  %v6264 = vsel %vm6247, %v6211, 0
  %v6267 = vsel %vm6247, %v6212, 0
  %v6270 = vsel %vm6247, %v6213, 0
  %v6273 = vsel %vm6247, %v6214, 0
  %v6276 = vsel %vm6247, %v6215, 0
  %v6279 = vsel %vm6247, %v6216, 0
  %v6282 = vsel %vm6247, %v6217, 0
  %v6285 = vsel %vm6247, %v6218, 0
  %v6288 = vsel %vm6247, %v6219, 0
  %v6291 = vsel %vm6247, %v6220, 0
  %v6294 = vsel %vm6247, %v6221, 0
  %v6297 = vsel %vm6247, %v6222, 0
  %v6300 = vsel %vm6247, %v6223, 0
  %v6303 = vsel %vm6247, %v6224, 0
  %v6306 = vsel %vm6247, %v6225, 0
  %v6309 = vsel %vm6247, %v6226, 0
  %v6312 = vsel %vm6247, %v6227, 0
  %v6315 = vsel %vm6247, %v6228, 0
  %v6318 = vsel %vm6247, %v6229, 0
  %v6321 = vsel %vm6247, %v6230, 0
  %v6324 = vsel %vm6247, %v6231, 0
  %v6327 = vsel %vm6247, %v6232, 0
  %v6330 = vsel %vm6247, %v6233, 0
  %v6333 = vsel %vm6247, %v6234, 0
  %v6336 = vsel %vm6247, %v6235, 0
  %v6339 = vsel %vm6247, %v6236, 0
  %v6342 = vsel %vm6247, %v6237, 0
  %6344 = vmatprep.subr.mxu0 0.0
  %6345 = vmatpush1.msra.mxu0 %v6238
  %6346 = vmatprep.subr.mxu0 0.0
  %6347 = vmatpush1.msra.mxu0 %v6239
  %6348 = vmatprep.subr.mxu0 0.0
  %6349 = vmatpush1.msra.mxu0 %v6240
  %6350 = vmatprep.subr.mxu0 0.0
  %6351 = vmatpush1.msra.mxu0 %v6241
  %6352 = vmatprep.subr.mxu0 0.0
  %6353 = vmatpush1.msra.mxu0 %v6242
  %6354 = vmatprep.subr.mxu0 0.0
  %6355 = vmatpush1.msra.mxu0 %v6243
  %6356 = vmatprep.subr.mxu0 0.0
  %6357 = vmatpush1.msra.mxu0 %v6244
  %6358 = vmatprep.subr.mxu0 0.0
  %6359 = vmatpush1.msra.mxu0 %v6245
  %6360 = vmatprep.subr.mxu0 0.0
  %6361 = vmatpush1.msra.mxu0 %v6246
  %6362 = vmatprep.subr.mxu0 0.0
  %6363 = vmatpush1.msra.mxu0 0.0
  %6364 = vmatprep.subr.mxu0 0.0
  %6365 = vmatpush1.msra.mxu0 0.0
  %6366 = vmatprep.subr.mxu0 0.0
  %6367 = vmatpush1.msra.mxu0 0.0
  %6368 = vmatprep.subr.mxu0 0.0
  %6369 = vmatpush1.msra.mxu0 0.0
  %6370 = vmatprep.subr.mxu0 0.0
  %6371 = vmatpush1.msra.mxu0 0.0
  %6372 = vmatprep.subr.mxu0 0.0
  %6373 = vmatpush1.msra.mxu0 0.0
  %6374 = vmatprep.subr.mxu0 0.0
  %6375 = vmatpush1.msra.mxu0 0.0
  %6376 = vmatprep.subr.mxu0 0.0
  %6377 = vmatpush1.msra.mxu0 0.0
  %6378 = vmatprep.subr.mxu0 0.0
  %6379 = vmatpush1.msra.mxu0 0.0
  %6380 = vmatprep.subr.mxu0 0.0
  %6381 = vmatpush1.msra.mxu0 0.0
  %6382 = vmatprep.subr.mxu0 0.0
  %6383 = vmatpush1.msra.mxu0 0.0
  %6384 = vmatprep.subr.mxu0 0.0
  %6385 = vmatpush1.msra.mxu0 0.0
  %6386 = vmatprep.subr.mxu0 0.0
  %6387 = vmatpush1.msra.mxu0 0.0
  %6388 = vmatprep.subr.mxu0 0.0
  %6389 = vmatpush1.msra.mxu0 0.0
  %6390 = vmatprep.subr.mxu0 0.0
  %6391 = vmatpush1.msra.mxu0 0.0
  %6392 = vmatprep.subr.mxu0 0.0
  %6393 = vmatpush1.msra.mxu0 0.0
  %6394 = vmatprep.subr.mxu0 0.0
  %6395 = vmatpush1.msra.mxu0 0.0
  %6396 = vmatprep.subr.mxu0 0.0
  %6397 = vmatpush1.msra.mxu0 0.0
  %6398 = vmatprep.subr.mxu0 0.0
  %6399 = vmatpush1.msra.mxu0 0.0
  %6400 = vmatprep.subr.mxu0 0.0
  %6401 = vmatpush1.msra.mxu0 0.0
  %6402 = vmatprep.subr.mxu0 0.0
  %6403 = vmatpush1.msra.mxu0 0.0
  %6404 = vmatprep.subr.mxu0 0.0
  %6405 = vmatpush1.msra.mxu0 0.0
  %6406 = vmatprep.subr.mxu0 0.0
  %6407 = vmatpush1.msra.mxu0 0.0
  %6408 = vmatprep.mubr.f32.mxu0 0.0
  %6409 = vmatmul.mubr.f32.gmra.mrb[0].mxu0 %v6249
  %v6410 = vpop.f32.mrb[0].mxu0
  %v6411 = vadd.f32 0.0, %v6410
  %v6412 = vpop.f32.mrb[0].mxu0
  %6413 = vmatprep.mubr.f32.mxu0 0.0
  %6414 = vmatmul.mubr.f32.gmra.mrb[0].mxu0 %v6252
  %v6415 = vpop.f32.mrb[0].mxu0
  %v6416 = vadd.f32 0.0, %v6415
  %v6417 = vpop.f32.mrb[0].mxu0
  %6418 = vmatprep.mubr.f32.mxu0 0.0
  %6419 = vmatmul.mubr.f32.gmra.mrb[0].mxu0 %v6255
  %v6420 = vpop.f32.mrb[0].mxu0
  %v6421 = vadd.f32 0.0, %v6420
  %v6422 = vpop.f32.mrb[0].mxu0
  %6423 = vmatprep.mubr.f32.mxu0 0.0
  %6424 = vmatmul.mubr.f32.gmra.mrb[0].mxu0 %v6258
  %v6425 = vpop.f32.mrb[0].mxu0
  %v6426 = vadd.f32 0.0, %v6425
  %v6427 = vpop.f32.mrb[0].mxu0
  %6428 = vmatprep.mubr.f32.mxu0 0.0
  %6429 = vmatmul.mubr.f32.gmra.mrb[0].mxu0 %v6261
  %v6430 = vpop.f32.mrb[0].mxu0
  %v6431 = vadd.f32 0.0, %v6430
  %v6432 = vpop.f32.mrb[0].mxu0
  %6433 = vmatprep.mubr.f32.mxu0 0.0
  %6434 = vmatmul.mubr.f32.gmra.mrb[0].mxu0 %v6264
  %v6435 = vpop.f32.mrb[0].mxu0
  %v6436 = vadd.f32 0.0, %v6435
  %v6437 = vpop.f32.mrb[0].mxu0
  %6438 = vmatprep.mubr.f32.mxu0 0.0
  %6439 = vmatmul.mubr.f32.gmra.mrb[0].mxu0 %v6267
  %v6440 = vpop.f32.mrb[0].mxu0
  %v6441 = vadd.f32 0.0, %v6440
  %v6442 = vpop.f32.mrb[0].mxu0
  %6443 = vmatprep.mubr.f32.mxu0 0.0
  %6444 = vmatmul.mubr.f32.gmra.mrb[0].mxu0 %v6270
  %v6445 = vpop.f32.mrb[0].mxu0
  %v6446 = vadd.f32 0.0, %v6445
  %v6447 = vpop.f32.mrb[0].mxu0
  %6448 = vmatprep.mubr.f32.mxu0 0.0
  %6449 = vmatmul.mubr.f32.gmra.mrb[0].mxu0 %v6273
  %v6450 = vpop.f32.mrb[0].mxu0
  %v6451 = vadd.f32 0.0, %v6450
  %v6452 = vpop.f32.mrb[0].mxu0
  %6453 = vmatprep.mubr.f32.mxu0 0.0
  %6454 = vmatmul.mubr.f32.gmra.mrb[0].mxu0 %v6276
  %v6455 = vpop.f32.mrb[0].mxu0
  %v6456 = vadd.f32 0.0, %v6455
  %v6457 = vpop.f32.mrb[0].mxu0
  %6458 = vmatprep.mubr.f32.mxu0 0.0
  %6459 = vmatmul.mubr.f32.gmra.mrb[0].mxu0 %v6279
  %v6460 = vpop.f32.mrb[0].mxu0
  %v6461 = vadd.f32 0.0, %v6460
  %v6462 = vpop.f32.mrb[0].mxu0
  %6463 = vmatprep.mubr.f32.mxu0 0.0
  %6464 = vmatmul.mubr.f32.gmra.mrb[0].mxu0 %v6282
  %v6465 = vpop.f32.mrb[0].mxu0
  %v6466 = vadd.f32 0.0, %v6465
  %v6467 = vpop.f32.mrb[0].mxu0
  %6468 = vmatprep.mubr.f32.mxu0 0.0
  %6469 = vmatmul.mubr.f32.gmra.mrb[0].mxu0 %v6285
  %v6470 = vpop.f32.mrb[0].mxu0
  %v6471 = vadd.f32 0.0, %v6470
  %v6472 = vpop.f32.mrb[0].mxu0
  %6473 = vmatprep.mubr.f32.mxu0 0.0
  %6474 = vmatmul.mubr.f32.gmra.mrb[0].mxu0 %v6288
  %v6475 = vpop.f32.mrb[0].mxu0
  %v6476 = vadd.f32 0.0, %v6475
  %v6477 = vpop.f32.mrb[0].mxu0
  %6478 = vmatprep.mubr.f32.mxu0 0.0
  %6479 = vmatmul.mubr.f32.gmra.mrb[0].mxu0 %v6291
  %v6480 = vpop.f32.mrb[0].mxu0
  %v6481 = vadd.f32 0.0, %v6480
  %v6482 = vpop.f32.mrb[0].mxu0
  %6483 = vmatprep.mubr.f32.mxu0 0.0
  %6484 = vmatmul.mubr.f32.gmra.mrb[0].mxu0 %v6294
  %v6485 = vpop.f32.mrb[0].mxu0
  %v6486 = vadd.f32 0.0, %v6485
  %v6487 = vpop.f32.mrb[0].mxu0
  %6488 = vmatprep.mubr.f32.mxu0 0.0
  %6489 = vmatmul.mubr.f32.gmra.mrb[0].mxu0 %v6297
  %v6490 = vpop.f32.mrb[0].mxu0
  %v6491 = vadd.f32 0.0, %v6490
  %v6492 = vpop.f32.mrb[0].mxu0
  %6493 = vmatprep.mubr.f32.mxu0 0.0
  %6494 = vmatmul.mubr.f32.gmra.mrb[0].mxu0 %v6300
  %v6495 = vpop.f32.mrb[0].mxu0
  %v6496 = vadd.f32 0.0, %v6495
  %v6497 = vpop.f32.mrb[0].mxu0
  %6498 = vmatprep.mubr.f32.mxu0 0.0
  %6499 = vmatmul.mubr.f32.gmra.mrb[0].mxu0 %v6303
  %v6500 = vpop.f32.mrb[0].mxu0
  %v6501 = vadd.f32 0.0, %v6500
  %v6502 = vpop.f32.mrb[0].mxu0
  %6503 = vmatprep.mubr.f32.mxu0 0.0
  %6504 = vmatmul.mubr.f32.gmra.mrb[0].mxu0 %v6306
  %v6505 = vpop.f32.mrb[0].mxu0
  %v6506 = vadd.f32 0.0, %v6505
  %v6507 = vpop.f32.mrb[0].mxu0
  %6508 = vmatprep.mubr.f32.mxu0 0.0
  %6509 = vmatmul.mubr.f32.gmra.mrb[0].mxu0 %v6309
  %v6510 = vpop.f32.mrb[0].mxu0
  %v6511 = vadd.f32 0.0, %v6510
  %v6512 = vpop.f32.mrb[0].mxu0
  %6513 = vmatprep.mubr.f32.mxu0 0.0
  %6514 = vmatmul.mubr.f32.gmra.mrb[0].mxu0 %v6312
  %v6515 = vpop.f32.mrb[0].mxu0
  %v6516 = vadd.f32 0.0, %v6515
  %v6517 = vpop.f32.mrb[0].mxu0
  %6518 = vmatprep.mubr.f32.mxu0 0.0
  %6519 = vmatmul.mubr.f32.gmra.mrb[0].mxu0 %v6315
  %v6520 = vpop.f32.mrb[0].mxu0
  %v6521 = vadd.f32 0.0, %v6520
  %v6522 = vpop.f32.mrb[0].mxu0
  %6523 = vmatprep.mubr.f32.mxu0 0.0
  %6524 = vmatmul.mubr.f32.gmra.mrb[0].mxu0 %v6318
  %v6525 = vpop.f32.mrb[0].mxu0
  %v6526 = vadd.f32 0.0, %v6525
  %v6527 = vpop.f32.mrb[0].mxu0
  %6528 = vmatprep.mubr.f32.mxu0 0.0
  %6529 = vmatmul.mubr.f32.gmra.mrb[0].mxu0 %v6321
  %v6530 = vpop.f32.mrb[0].mxu0
  %v6531 = vadd.f32 0.0, %v6530
  %v6532 = vpop.f32.mrb[0].mxu0
  %6533 = vmatprep.mubr.f32.mxu0 0.0
  %6534 = vmatmul.mubr.f32.gmra.mrb[0].mxu0 %v6324
  %v6535 = vpop.f32.mrb[0].mxu0
  %v6536 = vadd.f32 0.0, %v6535
  %v6537 = vpop.f32.mrb[0].mxu0
  %6538 = vmatprep.mubr.f32.mxu0 0.0
  %6539 = vmatmul.mubr.f32.gmra.mrb[0].mxu0 %v6327
  %v6540 = vpop.f32.mrb[0].mxu0
  %v6541 = vadd.f32 0.0, %v6540
  %v6542 = vpop.f32.mrb[0].mxu0
  %6543 = vmatprep.mubr.f32.mxu0 0.0
  %6544 = vmatmul.mubr.f32.gmra.mrb[0].mxu0 %v6330
  %v6545 = vpop.f32.mrb[0].mxu0
  %v6546 = vadd.f32 0.0, %v6545
  %v6547 = vpop.f32.mrb[0].mxu0
  %6548 = vmatprep.mubr.f32.mxu0 0.0
  %6549 = vmatmul.mubr.f32.gmra.mrb[0].mxu0 %v6333
  %v6550 = vpop.f32.mrb[0].mxu0
  %v6551 = vadd.f32 0.0, %v6550
  %v6552 = vpop.f32.mrb[0].mxu0
  %6553 = vmatprep.mubr.f32.mxu0 0.0
  %6554 = vmatmul.mubr.f32.gmra.mrb[0].mxu0 %v6336
  %v6555 = vpop.f32.mrb[0].mxu0
  %v6556 = vadd.f32 0.0, %v6555
  %v6557 = vpop.f32.mrb[0].mxu0
  %6558 = vmatprep.mubr.f32.mxu0 0.0
  %6559 = vmatmul.mubr.f32.gmra.mrb[0].mxu0 %v6339
  %v6560 = vpop.f32.mrb[0].mxu0
  %v6561 = vadd.f32 0.0, %v6560
  %v6562 = vpop.f32.mrb[0].mxu0
  %6563 = vmatprep.mubr.f32.mxu0 0.0
  %6564 = vmatmul.mubr.f32.gmra.mrb[0].mxu0 %v6342
  %v6565 = vpop.f32.mrb[0].mxu0
  %v6566 = vadd.f32 0.0, %v6565
  %v6567 = vpop.f32.mrb[0].mxu0
  %6568 = vdwg.mxu0
  %6569 = vst.msk [vmem:[#allocation4] sm:$0xff] %vm1492, %v6411
  %6570 = vst.msk [vmem:[#allocation4 + $0x8] sm:$0xff] %vm1492, %v6416
  %6571 = vst.msk [vmem:[#allocation4 + $0x10] sm:$0xff] %vm1492, %v6421
  %6572 = vst.msk [vmem:[#allocation4 + $0x18] sm:$0xff] %vm1492, %v6426
  %6573 = vst.msk [vmem:[#allocation4 + $0x20] sm:$0xff] %vm1492, %v6431
  %6574 = vst.msk [vmem:[#allocation4 + $0x28] sm:$0xff] %vm1492, %v6436
  %6575 = vst.msk [vmem:[#allocation4 + $0x30] sm:$0xff] %vm1492, %v6441
  %6576 = vst.msk [vmem:[#allocation4 + $0x38] sm:$0xff] %vm1492, %v6446
  %6577 = vst.msk [vmem:[#allocation4 + $0x40] sm:$0xff] %vm1492, %v6451
  %6578 = vst.msk [vmem:[#allocation4 + $0x48] sm:$0xff] %vm1492, %v6456
  %6579 = vst.msk [vmem:[#allocation4 + $0x50] sm:$0xff] %vm1492, %v6461
  %6580 = vst.msk [vmem:[#allocation4 + $0x58] sm:$0xff] %vm1492, %v6466
  %6581 = vst.msk [vmem:[#allocation4 + $0x60] sm:$0xff] %vm1492, %v6471
  %6582 = vst.msk [vmem:[#allocation4 + $0x68] sm:$0xff] %vm1492, %v6476
  %6583 = vst.msk [vmem:[#allocation4 + $0x70] sm:$0xff] %vm1492, %v6481
  %6584 = vst.msk [vmem:[#allocation4 + $0x78] sm:$0xff] %vm1492, %v6486
  %6585 = vst.msk [vmem:[#allocation4 + $0x80] sm:$0xff] %vm1492, %v6491
  %6586 = vst.msk [vmem:[#allocation4 + $0x88] sm:$0xff] %vm1492, %v6496
  %6587 = vst.msk [vmem:[#allocation4 + $0x90] sm:$0xff] %vm1492, %v6501
  %6588 = vst.msk [vmem:[#allocation4 + $0x98] sm:$0xff] %vm1492, %v6506
  %6589 = vst.msk [vmem:[#allocation4 + $0xa0] sm:$0xff] %vm1492, %v6511
  %6590 = vst.msk [vmem:[#allocation4 + $0xa8] sm:$0xff] %vm1492, %v6516
  %6591 = vst.msk [vmem:[#allocation4 + $0xb0] sm:$0xff] %vm1492, %v6521
  %6592 = vst.msk [vmem:[#allocation4 + $0xb8] sm:$0xff] %vm1492, %v6526
  %6593 = vst.msk [vmem:[#allocation4 + $0xc0] sm:$0xff] %vm1492, %v6531
  %6594 = vst.msk [vmem:[#allocation4 + $0xc8] sm:$0xff] %vm1492, %v6536
  %6595 = vst.msk [vmem:[#allocation4 + $0xd0] sm:$0xff] %vm1492, %v6541
  %6596 = vst.msk [vmem:[#allocation4 + $0xd8] sm:$0xff] %vm1492, %v6546
  %6597 = vst.msk [vmem:[#allocation4 + $0xe0] sm:$0xff] %vm1492, %v6551
  %6598 = vst.msk [vmem:[#allocation4 + $0xe8] sm:$0xff] %vm1492, %v6556
  %6599 = vst.msk [vmem:[#allocation4 + $0xf0] sm:$0xff] %vm1492, %v6561
  %6600 = vst.msk [vmem:[#allocation4 + $0xf8] sm:$0xff] %vm1492, %v6566
  %v6601 = vsel %vm1492, %v6411, 0.0
  %v6602 = vsel %vm1492, %v6416, 0.0
  %v6603 = vadd.f32 %v6601, %v6602
  %v6604 = vsel %vm1492, %v6421, 0.0
  %v6605 = vadd.f32 %v6603, %v6604
  %v6606 = vsel %vm1492, %v6426, 0.0
  %v6607 = vadd.f32 %v6605, %v6606
  %v6608 = vsel %vm1492, %v6431, 0.0
  %v6609 = vadd.f32 %v6607, %v6608
  %v6610 = vsel %vm1492, %v6436, 0.0
  %v6611 = vadd.f32 %v6609, %v6610
  %v6612 = vsel %vm1492, %v6441, 0.0
  %v6613 = vadd.f32 %v6611, %v6612
  %v6614 = vsel %vm1492, %v6446, 0.0
  %v6615 = vadd.f32 %v6613, %v6614
  %v6616 = vsel %vm1492, %v6451, 0.0
  %v6617 = vadd.f32 %v6615, %v6616
  %v6618 = vsel %vm1492, %v6456, 0.0
  %v6619 = vadd.f32 %v6617, %v6618
  %v6620 = vsel %vm1492, %v6461, 0.0
  %v6621 = vadd.f32 %v6619, %v6620
  %v6622 = vsel %vm1492, %v6466, 0.0
  %v6623 = vadd.f32 %v6621, %v6622
  %v6624 = vsel %vm1492, %v6471, 0.0
  %v6625 = vadd.f32 %v6623, %v6624
  %v6626 = vsel %vm1492, %v6476, 0.0
  %v6627 = vadd.f32 %v6625, %v6626
  %v6628 = vsel %vm1492, %v6481, 0.0
  %v6629 = vadd.f32 %v6627, %v6628
  %v6630 = vsel %vm1492, %v6486, 0.0
  %v6631 = vadd.f32 %v6629, %v6630
  %v6632 = vsel %vm1492, %v6491, 0.0
  %v6633 = vadd.f32 %v6631, %v6632
  %v6634 = vsel %vm1492, %v6496, 0.0
  %v6635 = vadd.f32 %v6633, %v6634
  %v6636 = vsel %vm1492, %v6501, 0.0
  %v6637 = vadd.f32 %v6635, %v6636
  %v6638 = vsel %vm1492, %v6506, 0.0
  %v6639 = vadd.f32 %v6637, %v6638
  %v6640 = vsel %vm1492, %v6511, 0.0
  %v6641 = vadd.f32 %v6639, %v6640
  %v6642 = vsel %vm1492, %v6516, 0.0
  %v6643 = vadd.f32 %v6641, %v6642
  %v6644 = vsel %vm1492, %v6521, 0.0
  %v6645 = vadd.f32 %v6643, %v6644
  %v6646 = vsel %vm1492, %v6526, 0.0
  %v6647 = vadd.f32 %v6645, %v6646
  %v6648 = vsel %vm1492, %v6531, 0.0
  %v6649 = vadd.f32 %v6647, %v6648
  %v6650 = vsel %vm1492, %v6536, 0.0
  %v6651 = vadd.f32 %v6649, %v6650
  %v6652 = vsel %vm1492, %v6541, 0.0
  %v6653 = vadd.f32 %v6651, %v6652
  %v6654 = vsel %vm1492, %v6546, 0.0
  %v6655 = vadd.f32 %v6653, %v6654
  %v6656 = vsel %vm1492, %v6551, 0.0
  %v6657 = vadd.f32 %v6655, %v6656
  %v6658 = vsel %vm1492, %v6556, 0.0
  %v6659 = vadd.f32 %v6657, %v6658
  %v6660 = vsel %vm1492, %v6561, 0.0
  %v6661 = vadd.f32 %v6659, %v6660
  %v6662 = vsel %vm1492, %v6566, 0.0
  %v6663 = vadd.f32 %v6661, %v6662
  %v6664 = vrot.slane %v6663, 4
  %v6665 = vadd.f32 %v6663, %v6664
  %v6666 = vrot.slane %v6665, 2
  %v6667 = vadd.f32 %v6665, %v6666
  %v6668 = vrot.slane %v6667, 1
  %v6669 = vadd.f32 %v6667, %v6668
  %v6670 = vadd.f32 %v6669, 0.0
  %v6671 = vmul.f32 %v6411, %v6411
  %v6672 = vmul.f32 %v6416, %v6416
  %v6673 = vmul.f32 %v6421, %v6421
  %v6674 = vmul.f32 %v6426, %v6426
  %v6675 = vmul.f32 %v6431, %v6431
  %v6676 = vmul.f32 %v6436, %v6436
  %v6677 = vmul.f32 %v6441, %v6441
  %v6678 = vmul.f32 %v6446, %v6446
  %v6679 = vmul.f32 %v6451, %v6451
  %v6680 = vmul.f32 %v6456, %v6456
  %v6681 = vmul.f32 %v6461, %v6461
  %v6682 = vmul.f32 %v6466, %v6466
  %v6683 = vmul.f32 %v6471, %v6471
  %v6684 = vmul.f32 %v6476, %v6476
  %v6685 = vmul.f32 %v6481, %v6481
  %v6686 = vmul.f32 %v6486, %v6486
  %v6687 = vmul.f32 %v6491, %v6491
  %v6688 = vmul.f32 %v6496, %v6496
  %v6689 = vmul.f32 %v6501, %v6501
  %v6690 = vmul.f32 %v6506, %v6506
  %v6691 = vmul.f32 %v6511, %v6511
  %v6692 = vmul.f32 %v6516, %v6516
  %v6693 = vmul.f32 %v6521, %v6521
  %v6694 = vmul.f32 %v6526, %v6526
  %v6695 = vmul.f32 %v6531, %v6531
  %v6696 = vmul.f32 %v6536, %v6536
  %v6697 = vmul.f32 %v6541, %v6541
  %v6698 = vmul.f32 %v6546, %v6546
  %v6699 = vmul.f32 %v6551, %v6551
  %v6700 = vmul.f32 %v6556, %v6556
  %v6701 = vmul.f32 %v6561, %v6561
  %v6702 = vmul.f32 %v6566, %v6566
  %v6703 = vsel %vm1492, %v6671, 0.0
  %v6704 = vsel %vm1492, %v6672, 0.0
  %v6705 = vadd.f32 %v6703, %v6704
  %v6706 = vsel %vm1492, %v6673, 0.0
  %v6707 = vadd.f32 %v6705, %v6706
  %v6708 = vsel %vm1492, %v6674, 0.0
  %v6709 = vadd.f32 %v6707, %v6708
  %v6710 = vsel %vm1492, %v6675, 0.0
  %v6711 = vadd.f32 %v6709, %v6710
  %v6712 = vsel %vm1492, %v6676, 0.0
  %v6713 = vadd.f32 %v6711, %v6712
  %v6714 = vsel %vm1492, %v6677, 0.0
  %v6715 = vadd.f32 %v6713, %v6714
  %v6716 = vsel %vm1492, %v6678, 0.0
  %v6717 = vadd.f32 %v6715, %v6716
  %v6718 = vsel %vm1492, %v6679, 0.0
  %v6719 = vadd.f32 %v6717, %v6718
  %v6720 = vsel %vm1492, %v6680, 0.0
  %v6721 = vadd.f32 %v6719, %v6720
  %v6722 = vsel %vm1492, %v6681, 0.0
  %v6723 = vadd.f32 %v6721, %v6722
  %v6724 = vsel %vm1492, %v6682, 0.0
  %v6725 = vadd.f32 %v6723, %v6724
  %v6726 = vsel %vm1492, %v6683, 0.0
  %v6727 = vadd.f32 %v6725, %v6726
  %v6728 = vsel %vm1492, %v6684, 0.0
  %v6729 = vadd.f32 %v6727, %v6728
  %v6730 = vsel %vm1492, %v6685, 0.0
  %v6731 = vadd.f32 %v6729, %v6730
  %v6732 = vsel %vm1492, %v6686, 0.0
  %v6733 = vadd.f32 %v6731, %v6732
  %v6734 = vsel %vm1492, %v6687, 0.0
  %v6735 = vadd.f32 %v6733, %v6734
  %v6736 = vsel %vm1492, %v6688, 0.0
  %v6737 = vadd.f32 %v6735, %v6736
  %v6738 = vsel %vm1492, %v6689, 0.0
  %v6739 = vadd.f32 %v6737, %v6738
  %v6740 = vsel %vm1492, %v6690, 0.0
  %v6741 = vadd.f32 %v6739, %v6740
  %v6742 = vsel %vm1492, %v6691, 0.0
  %v6743 = vadd.f32 %v6741, %v6742
  %v6744 = vsel %vm1492, %v6692, 0.0
  %v6745 = vadd.f32 %v6743, %v6744
  %v6746 = vsel %vm1492, %v6693, 0.0
  %v6747 = vadd.f32 %v6745, %v6746
  %v6748 = vsel %vm1492, %v6694, 0.0
  %v6749 = vadd.f32 %v6747, %v6748
  %v6750 = vsel %vm1492, %v6695, 0.0
  %v6751 = vadd.f32 %v6749, %v6750
  %v6752 = vsel %vm1492, %v6696, 0.0
  %v6753 = vadd.f32 %v6751, %v6752
  %v6754 = vsel %vm1492, %v6697, 0.0
  %v6755 = vadd.f32 %v6753, %v6754
  %v6756 = vsel %vm1492, %v6698, 0.0
  %v6757 = vadd.f32 %v6755, %v6756
  %v6758 = vsel %vm1492, %v6699, 0.0
  %v6759 = vadd.f32 %v6757, %v6758
  %v6760 = vsel %vm1492, %v6700, 0.0
  %v6761 = vadd.f32 %v6759, %v6760
  %v6762 = vsel %vm1492, %v6701, 0.0
  %v6763 = vadd.f32 %v6761, %v6762
  %v6764 = vsel %vm1492, %v6702, 0.0
  %v6765 = vadd.f32 %v6763, %v6764
  %v6766 = vrot.slane %v6765, 4
  %v6767 = vadd.f32 %v6765, %v6766
  %v6768 = vrot.slane %v6767, 2
  %v6769 = vadd.f32 %v6767, %v6768
  %v6770 = vrot.slane %v6769, 1
  %v6771 = vadd.f32 %v6769, %v6770
  %v6772 = vadd.f32 %v6771, 0.0
  %v6773 = vld [vmem:[%s4220] sm:$0xff]
  %v6774 = vld [vmem:[%s4220 + $0x8] sm:$0xff]
  %v6775 = vld [vmem:[%s4220 + $0x10] sm:$0xff]
  %v6776 = vld [vmem:[%s4220 + $0x18] sm:$0xff]
  %v6777 = vld [vmem:[%s4220 + $0x20] sm:$0xff]
  %v6778 = vld [vmem:[%s4220 + $0x28] sm:$0xff]
  %v6779 = vld [vmem:[%s4220 + $0x30] sm:$0xff]
  %v6780 = vld [vmem:[%s4220 + $0x38] sm:$0xff]
  %v6781 = vld [vmem:[%s4220 + $0x40] sm:$0xff]
  %v6782 = vld [vmem:[%s4220 + $0x48] sm:$0xff]
  %v6783 = vld [vmem:[%s4220 + $0x50] sm:$0xff]
  %v6784 = vld [vmem:[%s4220 + $0x58] sm:$0xff]
  %v6785 = vld [vmem:[%s4220 + $0x60] sm:$0xff]
  %v6786 = vld [vmem:[%s4220 + $0x68] sm:$0xff]
  %v6787 = vld [vmem:[%s4220 + $0x70] sm:$0xff]
  %v6788 = vld [vmem:[%s4220 + $0x78] sm:$0xff]
  %v6789 = vld [vmem:[%s4220 + $0x80] sm:$0xff]
  %v6790 = vld [vmem:[%s4220 + $0x88] sm:$0xff]
  %v6791 = vld [vmem:[%s4220 + $0x90] sm:$0xff]
  %v6792 = vld [vmem:[%s4220 + $0x98] sm:$0xff]
  %v6793 = vld [vmem:[%s4220 + $0xa0] sm:$0xff]
  %v6794 = vld [vmem:[%s4220 + $0xa8] sm:$0xff]
  %v6795 = vld [vmem:[%s4220 + $0xb0] sm:$0xff]
  %v6796 = vld [vmem:[%s4220 + $0xb8] sm:$0xff]
  %v6797 = vld [vmem:[%s4220 + $0xc0] sm:$0xff]
  %v6798 = vld [vmem:[%s4220 + $0xc8] sm:$0xff]
  %v6799 = vld [vmem:[%s4220 + $0xd0] sm:$0xff]
  %v6800 = vld [vmem:[%s4220 + $0xd8] sm:$0xff]
  %v6801 = vld [vmem:[%s4220 + $0xe0] sm:$0xff]
  %v6802 = vld [vmem:[%s4220 + $0xe8] sm:$0xff]
  %v6803 = vld [vmem:[%s4220 + $0xf0] sm:$0xff]
  %v6804 = vld [vmem:[%s4220 + $0xf8] sm:$0xff]
  %v6805 = vmul.f32 %v6773, %v4528
  %v6806 = vmul.f32 %v6774, %v4528
  %v6807 = vmul.f32 %v6775, %v4528
  %v6808 = vmul.f32 %v6776, %v4528
  %v6809 = vmul.f32 %v6777, %v4528
  %v6810 = vmul.f32 %v6778, %v4528
  %v6811 = vmul.f32 %v6779, %v4528
  %v6812 = vmul.f32 %v6780, %v4528
  %v6813 = vmul.f32 %v6781, %v4528
  %v6814 = vmul.f32 %v6782, %v4528
  %v6815 = vmul.f32 %v6783, %v4528
  %v6816 = vmul.f32 %v6784, %v4528
  %v6817 = vmul.f32 %v6785, %v4528
  %v6818 = vmul.f32 %v6786, %v4528
  %v6819 = vmul.f32 %v6787, %v4528
  %v6820 = vmul.f32 %v6788, %v4528
  %v6821 = vmul.f32 %v6789, %v4528
  %v6822 = vmul.f32 %v6790, %v4528
  %v6823 = vmul.f32 %v6791, %v4528
  %v6824 = vmul.f32 %v6792, %v4528
  %v6825 = vmul.f32 %v6793, %v4528
  %v6826 = vmul.f32 %v6794, %v4528
  %v6827 = vmul.f32 %v6795, %v4528
  %v6828 = vmul.f32 %v6796, %v4528
  %v6829 = vmul.f32 %v6797, %v4528
  %v6830 = vmul.f32 %v6798, %v4528
  %v6831 = vmul.f32 %v6799, %v4528
  %v6832 = vmul.f32 %v6800, %v4528
  %v6833 = vmul.f32 %v6801, %v4528
  %v6834 = vmul.f32 %v6802, %v4528
  %v6835 = vmul.f32 %v6803, %v4528
  %v6836 = vmul.f32 %v6804, %v4528
  %v6837 = vadd.f32 %v6805, %v4566
  %v6838 = vadd.f32 %v6806, %v4566
  %v6839 = vadd.f32 %v6807, %v4566
  %v6840 = vadd.f32 %v6808, %v4566
  %v6841 = vadd.f32 %v6809, %v4566
  %v6842 = vadd.f32 %v6810, %v4566
  %v6843 = vadd.f32 %v6811, %v4566
  %v6844 = vadd.f32 %v6812, %v4566
  %v6845 = vadd.f32 %v6813, %v4566
  %v6846 = vadd.f32 %v6814, %v4566
  %v6847 = vadd.f32 %v6815, %v4566
  %v6848 = vadd.f32 %v6816, %v4566
  %v6849 = vadd.f32 %v6817, %v4566
  %v6850 = vadd.f32 %v6818, %v4566
  %v6851 = vadd.f32 %v6819, %v4566
  %v6852 = vadd.f32 %v6820, %v4566
  %v6853 = vadd.f32 %v6821, %v4566
  %v6854 = vadd.f32 %v6822, %v4566
  %v6855 = vadd.f32 %v6823, %v4566
  %v6856 = vadd.f32 %v6824, %v4566
  %v6857 = vadd.f32 %v6825, %v4566
  %v6858 = vadd.f32 %v6826, %v4566
  %v6859 = vadd.f32 %v6827, %v4566
  %v6860 = vadd.f32 %v6828, %v4566
  %v6861 = vadd.f32 %v6829, %v4566
  %v6862 = vadd.f32 %v6830, %v4566
  %v6863 = vadd.f32 %v6831, %v4566
  %v6864 = vadd.f32 %v6832, %v4566
  %v6865 = vadd.f32 %v6833, %v4566
  %v6866 = vadd.f32 %v6834, %v4566
  %v6867 = vadd.f32 %v6835, %v4566
  %v6868 = vadd.f32 %v6836, %v4566
  %v6869 = vmax.f32 %v6837, 0.0
  %v6870 = vmax.f32 %v6838, 0.0
  %v6871 = vmax.f32 %v6839, 0.0
  %v6872 = vmax.f32 %v6840, 0.0
  %v6873 = vmax.f32 %v6841, 0.0
  %v6874 = vmax.f32 %v6842, 0.0
  %v6875 = vmax.f32 %v6843, 0.0
  %v6876 = vmax.f32 %v6844, 0.0
  %v6877 = vmax.f32 %v6845, 0.0
  %v6878 = vmax.f32 %v6846, 0.0
  %v6879 = vmax.f32 %v6847, 0.0
  %v6880 = vmax.f32 %v6848, 0.0
  %v6881 = vmax.f32 %v6849, 0.0
  %v6882 = vmax.f32 %v6850, 0.0
  %v6883 = vmax.f32 %v6851, 0.0
  %v6884 = vmax.f32 %v6852, 0.0
  %v6885 = vmax.f32 %v6853, 0.0
  %v6886 = vmax.f32 %v6854, 0.0
  %v6887 = vmax.f32 %v6855, 0.0
  %v6888 = vmax.f32 %v6856, 0.0
  %v6889 = vmax.f32 %v6857, 0.0
  %v6890 = vmax.f32 %v6858, 0.0
  %v6891 = vmax.f32 %v6859, 0.0
  %v6892 = vmax.f32 %v6860, 0.0
  %v6893 = vmax.f32 %v6861, 0.0
  %v6894 = vmax.f32 %v6862, 0.0
  %v6895 = vmax.f32 %v6863, 0.0
  %v6896 = vmax.f32 %v6864, 0.0
  %v6897 = vmax.f32 %v6865, 0.0
  %v6898 = vmax.f32 %v6866, 0.0
  %v6899 = vmax.f32 %v6867, 0.0
  %v6900 = vmax.f32 %v6868, 0.0
  %6901 = vst.msk [vmem:[%s4632 + $0x1] sm:$0xff] %vm1492, %v6869
  %6902 = vst.msk [vmem:[%s4632 + $0x9] sm:$0xff] %vm1492, %v6870
  %6903 = vst.msk [vmem:[%s4632 + $0x19] sm:$0xff] %vm1492, %v6871
  %6904 = vst.msk [vmem:[%s4632 + $0x21] sm:$0xff] %vm1492, %v6872
  %6905 = vst.msk [vmem:[%s4632 + $0x31] sm:$0xff] %vm1492, %v6873
  %6906 = vst.msk [vmem:[%s4632 + $0x39] sm:$0xff] %vm1492, %v6874
  %6907 = vst.msk [vmem:[%s4632 + $0x49] sm:$0xff] %vm1492, %v6875
  %6908 = vst.msk [vmem:[%s4632 + $0x51] sm:$0xff] %vm1492, %v6876
  %6909 = vst.msk [vmem:[%s4632 + $0x61] sm:$0xff] %vm1492, %v6877
  %6910 = vst.msk [vmem:[%s4632 + $0x69] sm:$0xff] %vm1492, %v6878
  %6911 = vst.msk [vmem:[%s4632 + $0x79] sm:$0xff] %vm1492, %v6879
  %6912 = vst.msk [vmem:[%s4632 + $0x81] sm:$0xff] %vm1492, %v6880
  %6913 = vst.msk [vmem:[%s4632 + $0x91] sm:$0xff] %vm1492, %v6881
  %6914 = vst.msk [vmem:[%s4632 + $0x99] sm:$0xff] %vm1492, %v6882
  %6915 = vst.msk [vmem:[%s4632 + $0xa9] sm:$0xff] %vm1492, %v6883
  %6916 = vst.msk [vmem:[%s4632 + $0xb1] sm:$0xff] %vm1492, %v6884
  %6917 = vst.msk [vmem:[%s4632 + $0xc1] sm:$0xff] %vm1492, %v6885
  %6918 = vst.msk [vmem:[%s4632 + $0xc9] sm:$0xff] %vm1492, %v6886
  %6919 = vst.msk [vmem:[%s4632 + $0xd9] sm:$0xff] %vm1492, %v6887
  %6920 = vst.msk [vmem:[%s4632 + $0xe1] sm:$0xff] %vm1492, %v6888
  %6921 = vst.msk [vmem:[%s4632 + $0xf1] sm:$0xff] %vm1492, %v6889
  %6922 = vst.msk [vmem:[%s4632 + $0xf9] sm:$0xff] %vm1492, %v6890
  %6923 = vst.msk [vmem:[%s4632 + $0x109] sm:$0xff] %vm1492, %v6891
  %6924 = vst.msk [vmem:[%s4632 + $0x111] sm:$0xff] %vm1492, %v6892
  %6925 = vst.msk [vmem:[%s4632 + $0x121] sm:$0xff] %vm1492, %v6893
  %6926 = vst.msk [vmem:[%s4632 + $0x129] sm:$0xff] %vm1492, %v6894
  %6927 = vst.msk [vmem:[%s4632 + $0x139] sm:$0xff] %vm1492, %v6895
  %6928 = vst.msk [vmem:[%s4632 + $0x141] sm:$0xff] %vm1492, %v6896
  %6929 = vst.msk [vmem:[%s4632 + $0x151] sm:$0xff] %vm1492, %v6897
  %6930 = vst.msk [vmem:[%s4632 + $0x159] sm:$0xff] %vm1492, %v6898
  %6931 = vst.msk [vmem:[%s4632 + $0x169] sm:$0xff] %vm1492, %v6899
  %6932 = vst.msk [vmem:[%s4632 + $0x171] sm:$0xff] %vm1492, %v6900
  %v6933 = vld [vmem:[#allocation3] sm:$0xff]
  %v6934 = vld [vmem:[#allocation3 + $0x8] sm:$0xff]
  %v6935 = vld [vmem:[#allocation3 + $0x18] sm:$0xff]
  %v6936 = vld [vmem:[#allocation3 + $0x20] sm:$0xff]
  %v6937 = vld [vmem:[#allocation3 + $0x30] sm:$0xff]
  %v6938 = vld [vmem:[#allocation3 + $0x38] sm:$0xff]
  %v6939 = vld [vmem:[#allocation3 + $0x48] sm:$0xff]
  %v6940 = vld [vmem:[#allocation3 + $0x50] sm:$0xff]
  %v6941 = vld [vmem:[#allocation3 + $0x60] sm:$0xff]
  %v6942 = vld [vmem:[#allocation3 + $0x68] sm:$0xff]
  %v6943 = vld [vmem:[#allocation3 + $0x78] sm:$0xff]
  %v6944 = vld [vmem:[#allocation3 + $0x80] sm:$0xff]
  %v6945 = vld [vmem:[#allocation3 + $0x90] sm:$0xff]
  %v6946 = vld [vmem:[#allocation3 + $0x98] sm:$0xff]
  %v6947 = vld [vmem:[#allocation3 + $0xa8] sm:$0xff]
  %v6948 = vld [vmem:[#allocation3 + $0xb0] sm:$0xff]
  %v6949 = vld [vmem:[#allocation3 + $0xc0] sm:$0xff]
  %v6950 = vld [vmem:[#allocation3 + $0xc8] sm:$0xff]
  %v6951 = vld [vmem:[#allocation3 + $0xd8] sm:$0xff]
  %v6952 = vld [vmem:[#allocation3 + $0xe0] sm:$0xff]
  %v6953 = vld [vmem:[#allocation3 + $0xf0] sm:$0xff]
  %v6954 = vld [vmem:[#allocation3 + $0xf8] sm:$0xff]
  %v6955 = vld [vmem:[#allocation3 + $0x108] sm:$0xff]
  %v6956 = vld [vmem:[#allocation3 + $0x110] sm:$0xff]
  %v6957 = vld [vmem:[#allocation3 + $0x120] sm:$0xff]
  %v6958 = vld [vmem:[#allocation3 + $0x128] sm:$0xff]
  %v6959 = vld [vmem:[#allocation3 + $0x138] sm:$0xff]
  %v6960 = vld [vmem:[#allocation3 + $0x140] sm:$0xff]
  %v6961 = vld [vmem:[#allocation3 + $0x150] sm:$0xff]
  %v6962 = vld [vmem:[#allocation3 + $0x158] sm:$0xff]
  %v6963 = vld [vmem:[#allocation3 + $0x168] sm:$0xff]
  %v6964 = vld [vmem:[#allocation3 + $0x170] sm:$0xff]
  %v6965 = vld [vmem:[#allocation3 + $0x1] sm:$0xff]
  %v6966 = vld [vmem:[#allocation3 + $0x9] sm:$0xff]
  %v6967 = vld [vmem:[#allocation3 + $0x19] sm:$0xff]
  %v6968 = vld [vmem:[#allocation3 + $0x21] sm:$0xff]
  %v6969 = vld [vmem:[#allocation3 + $0x31] sm:$0xff]
  %v6970 = vld [vmem:[#allocation3 + $0x39] sm:$0xff]
  %v6971 = vld [vmem:[#allocation3 + $0x49] sm:$0xff]
  %v6972 = vld [vmem:[#allocation3 + $0x51] sm:$0xff]
  %v6973 = vld [vmem:[#allocation3 + $0x61] sm:$0xff]
  %v6974 = vld [vmem:[#allocation3 + $0x69] sm:$0xff]
  %v6975 = vld [vmem:[#allocation3 + $0x79] sm:$0xff]
  %v6976 = vld [vmem:[#allocation3 + $0x81] sm:$0xff]
  %v6977 = vld [vmem:[#allocation3 + $0x91] sm:$0xff]
  %v6978 = vld [vmem:[#allocation3 + $0x99] sm:$0xff]
  %v6979 = vld [vmem:[#allocation3 + $0xa9] sm:$0xff]
  %v6980 = vld [vmem:[#allocation3 + $0xb1] sm:$0xff]
  %v6981 = vld [vmem:[#allocation3 + $0xc1] sm:$0xff]
  %v6982 = vld [vmem:[#allocation3 + $0xc9] sm:$0xff]
  %v6983 = vld [vmem:[#allocation3 + $0xd9] sm:$0xff]
  %v6984 = vld [vmem:[#allocation3 + $0xe1] sm:$0xff]
  %v6985 = vld [vmem:[#allocation3 + $0xf1] sm:$0xff]
  %v6986 = vld [vmem:[#allocation3 + $0xf9] sm:$0xff]
  %v6987 = vld [vmem:[#allocation3 + $0x109] sm:$0xff]
  %v6988 = vld [vmem:[#allocation3 + $0x111] sm:$0xff]
  %v6989 = vld [vmem:[#allocation3 + $0x121] sm:$0xff]
  %v6990 = vld [vmem:[#allocation3 + $0x129] sm:$0xff]
  %v6991 = vld [vmem:[#allocation3 + $0x139] sm:$0xff]
  %v6992 = vld [vmem:[#allocation3 + $0x141] sm:$0xff]
  %v6993 = vld [vmem:[#allocation3 + $0x151] sm:$0xff]
  %v6994 = vld [vmem:[#allocation3 + $0x159] sm:$0xff]
  %v6995 = vld [vmem:[#allocation3 + $0x169] sm:$0xff]
  %v6996 = vld [vmem:[#allocation3 + $0x171] sm:$0xff]
  %v6997 = vld [vmem:[#allocation3 + $0x2] sm:$0xff]
  %v6998 = vld [vmem:[#allocation3 + $0xa] sm:$0xff]
  %v6999 = vld [vmem:[#allocation3 + $0x1a] sm:$0xff]
  %v7000 = vld [vmem:[#allocation3 + $0x22] sm:$0xff]
  %v7001 = vld [vmem:[#allocation3 + $0x32] sm:$0xff]
  %v7002 = vld [vmem:[#allocation3 + $0x3a] sm:$0xff]
  %v7003 = vld [vmem:[#allocation3 + $0x4a] sm:$0xff]
  %v7004 = vld [vmem:[#allocation3 + $0x52] sm:$0xff]
  %v7005 = vld [vmem:[#allocation3 + $0x62] sm:$0xff]
  %v7006 = vld [vmem:[#allocation3 + $0x6a] sm:$0xff]
  %v7007 = vld [vmem:[#allocation3 + $0x7a] sm:$0xff]
  %v7008 = vld [vmem:[#allocation3 + $0x82] sm:$0xff]
  %v7009 = vld [vmem:[#allocation3 + $0x92] sm:$0xff]
  %v7010 = vld [vmem:[#allocation3 + $0x9a] sm:$0xff]
  %v7011 = vld [vmem:[#allocation3 + $0xaa] sm:$0xff]
  %v7012 = vld [vmem:[#allocation3 + $0xb2] sm:$0xff]
  %v7013 = vld [vmem:[#allocation3 + $0xc2] sm:$0xff]
  %v7014 = vld [vmem:[#allocation3 + $0xca] sm:$0xff]
  %v7015 = vld [vmem:[#allocation3 + $0xda] sm:$0xff]
  %v7016 = vld [vmem:[#allocation3 + $0xe2] sm:$0xff]
  %v7017 = vld [vmem:[#allocation3 + $0xf2] sm:$0xff]
  %v7018 = vld [vmem:[#allocation3 + $0xfa] sm:$0xff]
  %v7019 = vld [vmem:[#allocation3 + $0x10a] sm:$0xff]
  %v7020 = vld [vmem:[#allocation3 + $0x112] sm:$0xff]
  %v7021 = vld [vmem:[#allocation3 + $0x122] sm:$0xff]
  %v7022 = vld [vmem:[#allocation3 + $0x12a] sm:$0xff]
  %v7023 = vld [vmem:[#allocation3 + $0x13a] sm:$0xff]
  %v7024 = vld [vmem:[#allocation3 + $0x142] sm:$0xff]
  %v7025 = vld [vmem:[#allocation3 + $0x152] sm:$0xff]
  %v7026 = vld [vmem:[#allocation3 + $0x15a] sm:$0xff]
  %v7027 = vld [vmem:[#allocation3 + $0x16a] sm:$0xff]
  %v7028 = vld [vmem:[#allocation3 + $0x172] sm:$0xff]
  %v7029 = vld [vmem:[%s4632] sm:$0xff]
  %v7030 = vld [vmem:[%s4632 + $0x8] sm:$0xff]
  %v7031 = vld [vmem:[%s4632 + $0x18] sm:$0xff]
  %v7032 = vld [vmem:[%s4632 + $0x20] sm:$0xff]
  %v7033 = vld [vmem:[%s4632 + $0x30] sm:$0xff]
  %v7034 = vld [vmem:[%s4632 + $0x38] sm:$0xff]
  %v7035 = vld [vmem:[%s4632 + $0x48] sm:$0xff]
  %v7036 = vld [vmem:[%s4632 + $0x50] sm:$0xff]
  %v7037 = vld [vmem:[%s4632 + $0x60] sm:$0xff]
  %v7038 = vld [vmem:[%s4632 + $0x68] sm:$0xff]
  %v7039 = vld [vmem:[%s4632 + $0x78] sm:$0xff]
  %v7040 = vld [vmem:[%s4632 + $0x80] sm:$0xff]
  %v7041 = vld [vmem:[%s4632 + $0x90] sm:$0xff]
  %v7042 = vld [vmem:[%s4632 + $0x98] sm:$0xff]
  %v7043 = vld [vmem:[%s4632 + $0xa8] sm:$0xff]
  %v7044 = vld [vmem:[%s4632 + $0xb0] sm:$0xff]
  %v7045 = vld [vmem:[%s4632 + $0xc0] sm:$0xff]
  %v7046 = vld [vmem:[%s4632 + $0xc8] sm:$0xff]
  %v7047 = vld [vmem:[%s4632 + $0xd8] sm:$0xff]
  %v7048 = vld [vmem:[%s4632 + $0xe0] sm:$0xff]
  %v7049 = vld [vmem:[%s4632 + $0xf0] sm:$0xff]
  %v7050 = vld [vmem:[%s4632 + $0xf8] sm:$0xff]
  %v7051 = vld [vmem:[%s4632 + $0x108] sm:$0xff]
  %v7052 = vld [vmem:[%s4632 + $0x110] sm:$0xff]
  %v7053 = vld [vmem:[%s4632 + $0x120] sm:$0xff]
  %v7054 = vld [vmem:[%s4632 + $0x128] sm:$0xff]
  %v7055 = vld [vmem:[%s4632 + $0x138] sm:$0xff]
  %v7056 = vld [vmem:[%s4632 + $0x140] sm:$0xff]
  %v7057 = vld [vmem:[%s4632 + $0x150] sm:$0xff]
  %v7058 = vld [vmem:[%s4632 + $0x158] sm:$0xff]
  %v7059 = vld [vmem:[%s4632 + $0x168] sm:$0xff]
  %v7060 = vld [vmem:[%s4632 + $0x170] sm:$0xff]
  %v7061 = vld [vmem:[%s4632 + $0x1] sm:$0xff]
  %v7062 = vld [vmem:[%s4632 + $0x9] sm:$0xff]
  %v7063 = vld [vmem:[%s4632 + $0x19] sm:$0xff]
  %v7064 = vld [vmem:[%s4632 + $0x21] sm:$0xff]
  %v7065 = vld [vmem:[%s4632 + $0x31] sm:$0xff]
  %v7066 = vld [vmem:[%s4632 + $0x39] sm:$0xff]
  %v7067 = vld [vmem:[%s4632 + $0x49] sm:$0xff]
  %v7068 = vld [vmem:[%s4632 + $0x51] sm:$0xff]
  %v7069 = vld [vmem:[%s4632 + $0x61] sm:$0xff]
  %v7070 = vld [vmem:[%s4632 + $0x69] sm:$0xff]
  %v7071 = vld [vmem:[%s4632 + $0x79] sm:$0xff]
  %v7072 = vld [vmem:[%s4632 + $0x81] sm:$0xff]
  %v7073 = vld [vmem:[%s4632 + $0x91] sm:$0xff]
  %v7074 = vld [vmem:[%s4632 + $0x99] sm:$0xff]
  %v7075 = vld [vmem:[%s4632 + $0xa9] sm:$0xff]
  %v7076 = vld [vmem:[%s4632 + $0xb1] sm:$0xff]
  %v7077 = vld [vmem:[%s4632 + $0xc1] sm:$0xff]
  %v7078 = vld [vmem:[%s4632 + $0xc9] sm:$0xff]
  %v7079 = vld [vmem:[%s4632 + $0xd9] sm:$0xff]
  %v7080 = vld [vmem:[%s4632 + $0xe1] sm:$0xff]
  %v7081 = vld [vmem:[%s4632 + $0xf1] sm:$0xff]
  %v7082 = vld [vmem:[%s4632 + $0xf9] sm:$0xff]
  %v7083 = vld [vmem:[%s4632 + $0x109] sm:$0xff]
  %v7084 = vld [vmem:[%s4632 + $0x111] sm:$0xff]
  %v7085 = vld [vmem:[%s4632 + $0x121] sm:$0xff]
  %v7086 = vld [vmem:[%s4632 + $0x129] sm:$0xff]
  %v7087 = vld [vmem:[%s4632 + $0x139] sm:$0xff]
  %v7088 = vld [vmem:[%s4632 + $0x141] sm:$0xff]
  %v7089 = vld [vmem:[%s4632 + $0x151] sm:$0xff]
  %v7090 = vld [vmem:[%s4632 + $0x159] sm:$0xff]
  %v7091 = vld [vmem:[%s4632 + $0x169] sm:$0xff]
  %v7092 = vld [vmem:[%s4632 + $0x171] sm:$0xff]
  %v7093 = vld [vmem:[%s4632 + $0x2] sm:$0xff]
  %v7094 = vld [vmem:[%s4632 + $0xa] sm:$0xff]
  %v7095 = vld [vmem:[%s4632 + $0x1a] sm:$0xff]
  %v7096 = vld [vmem:[%s4632 + $0x22] sm:$0xff]
  %v7097 = vld [vmem:[%s4632 + $0x32] sm:$0xff]
  %v7098 = vld [vmem:[%s4632 + $0x3a] sm:$0xff]
  %v7099 = vld [vmem:[%s4632 + $0x4a] sm:$0xff]
  %v7100 = vld [vmem:[%s4632 + $0x52] sm:$0xff]
  %v7101 = vld [vmem:[%s4632 + $0x62] sm:$0xff]
  %v7102 = vld [vmem:[%s4632 + $0x6a] sm:$0xff]
  %v7103 = vld [vmem:[%s4632 + $0x7a] sm:$0xff]
  %v7104 = vld [vmem:[%s4632 + $0x82] sm:$0xff]
  %v7105 = vld [vmem:[%s4632 + $0x92] sm:$0xff]
  %v7106 = vld [vmem:[%s4632 + $0x9a] sm:$0xff]
  %v7107 = vld [vmem:[%s4632 + $0xaa] sm:$0xff]
  %v7108 = vld [vmem:[%s4632 + $0xb2] sm:$0xff]
  %v7109 = vld [vmem:[%s4632 + $0xc2] sm:$0xff]
  %v7110 = vld [vmem:[%s4632 + $0xca] sm:$0xff]
  %v7111 = vld [vmem:[%s4632 + $0xda] sm:$0xff]
  %v7112 = vld [vmem:[%s4632 + $0xe2] sm:$0xff]
  %v7113 = vld [vmem:[%s4632 + $0xf2] sm:$0xff]
  %v7114 = vld [vmem:[%s4632 + $0xfa] sm:$0xff]
  %v7115 = vld [vmem:[%s4632 + $0x10a] sm:$0xff]
  %v7116 = vld [vmem:[%s4632 + $0x112] sm:$0xff]
  %v7117 = vld [vmem:[%s4632 + $0x122] sm:$0xff]
  %v7118 = vld [vmem:[%s4632 + $0x12a] sm:$0xff]
  %v7119 = vld [vmem:[%s4632 + $0x13a] sm:$0xff]
  %v7120 = vld [vmem:[%s4632 + $0x142] sm:$0xff]
  %v7121 = vld [vmem:[%s4632 + $0x152] sm:$0xff]
  %v7122 = vld [vmem:[%s4632 + $0x15a] sm:$0xff]
  %v7123 = vld [vmem:[%s4632 + $0x16a] sm:$0xff]
  %v7124 = vld [vmem:[%s4632 + $0x172] sm:$0xff]
  %v7125 = vld [vmem:[%s4857] sm:$0xff]
  %v7126 = vld [vmem:[%s4857 + $0x8] sm:$0xff]
  %v7127 = vld [vmem:[%s4857 + $0x18] sm:$0xff]
  %v7128 = vld [vmem:[%s4857 + $0x20] sm:$0xff]
  %v7129 = vld [vmem:[%s4857 + $0x30] sm:$0xff]
  %v7130 = vld [vmem:[%s4857 + $0x38] sm:$0xff]
  %v7131 = vld [vmem:[%s4857 + $0x48] sm:$0xff]
  %v7132 = vld [vmem:[%s4857 + $0x50] sm:$0xff]
  %v7133 = vld [vmem:[%s4857 + $0x60] sm:$0xff]
  %v7134 = vld [vmem:[%s4857 + $0x68] sm:$0xff]
  %v7135 = vld [vmem:[%s4857 + $0x78] sm:$0xff]
  %v7136 = vld [vmem:[%s4857 + $0x80] sm:$0xff]
  %v7137 = vld [vmem:[%s4857 + $0x90] sm:$0xff]
  %v7138 = vld [vmem:[%s4857 + $0x98] sm:$0xff]
  %v7139 = vld [vmem:[%s4857 + $0xa8] sm:$0xff]
  %v7140 = vld [vmem:[%s4857 + $0xb0] sm:$0xff]
  %v7141 = vld [vmem:[%s4857 + $0xc0] sm:$0xff]
  %v7142 = vld [vmem:[%s4857 + $0xc8] sm:$0xff]
  %v7143 = vld [vmem:[%s4857 + $0xd8] sm:$0xff]
  %v7144 = vld [vmem:[%s4857 + $0xe0] sm:$0xff]
  %v7145 = vld [vmem:[%s4857 + $0xf0] sm:$0xff]
  %v7146 = vld [vmem:[%s4857 + $0xf8] sm:$0xff]
  %v7147 = vld [vmem:[%s4857 + $0x108] sm:$0xff]
  %v7148 = vld [vmem:[%s4857 + $0x110] sm:$0xff]
  %v7149 = vld [vmem:[%s4857 + $0x120] sm:$0xff]
  %v7150 = vld [vmem:[%s4857 + $0x128] sm:$0xff]
  %v7151 = vld [vmem:[%s4857 + $0x138] sm:$0xff]
  %v7152 = vld [vmem:[%s4857 + $0x140] sm:$0xff]
  %v7153 = vld [vmem:[%s4857 + $0x150] sm:$0xff]
  %v7154 = vld [vmem:[%s4857 + $0x158] sm:$0xff]
  %v7155 = vld [vmem:[%s4857 + $0x168] sm:$0xff]
  %v7156 = vld [vmem:[%s4857 + $0x170] sm:$0xff]
  %v7157 = vld [vmem:[%s4857 + $0x1] sm:$0xff]
  %v7158 = vld [vmem:[%s4857 + $0x9] sm:$0xff]
  %v7159 = vld [vmem:[%s4857 + $0x19] sm:$0xff]
  %v7160 = vld [vmem:[%s4857 + $0x21] sm:$0xff]
  %v7161 = vld [vmem:[%s4857 + $0x31] sm:$0xff]
  %v7162 = vld [vmem:[%s4857 + $0x39] sm:$0xff]
  %v7163 = vld [vmem:[%s4857 + $0x49] sm:$0xff]
  %v7164 = vld [vmem:[%s4857 + $0x51] sm:$0xff]
  %v7165 = vld [vmem:[%s4857 + $0x61] sm:$0xff]
  %v7166 = vld [vmem:[%s4857 + $0x69] sm:$0xff]
  %v7167 = vld [vmem:[%s4857 + $0x79] sm:$0xff]
  %v7168 = vld [vmem:[%s4857 + $0x81] sm:$0xff]
  %v7169 = vld [vmem:[%s4857 + $0x91] sm:$0xff]
  %v7170 = vld [vmem:[%s4857 + $0x99] sm:$0xff]
  %v7171 = vld [vmem:[%s4857 + $0xa9] sm:$0xff]
  %v7172 = vld [vmem:[%s4857 + $0xb1] sm:$0xff]
  %v7173 = vld [vmem:[%s4857 + $0xc1] sm:$0xff]
  %v7174 = vld [vmem:[%s4857 + $0xc9] sm:$0xff]
  %v7175 = vld [vmem:[%s4857 + $0xd9] sm:$0xff]
  %v7176 = vld [vmem:[%s4857 + $0xe1] sm:$0xff]
  %v7177 = vld [vmem:[%s4857 + $0xf1] sm:$0xff]
  %v7178 = vld [vmem:[%s4857 + $0xf9] sm:$0xff]
  %v7179 = vld [vmem:[%s4857 + $0x109] sm:$0xff]
  %v7180 = vld [vmem:[%s4857 + $0x111] sm:$0xff]
  %v7181 = vld [vmem:[%s4857 + $0x121] sm:$0xff]
  %v7182 = vld [vmem:[%s4857 + $0x129] sm:$0xff]
  %v7183 = vld [vmem:[%s4857 + $0x139] sm:$0xff]
  %v7184 = vld [vmem:[%s4857 + $0x141] sm:$0xff]
  %v7185 = vld [vmem:[%s4857 + $0x151] sm:$0xff]
  %v7186 = vld [vmem:[%s4857 + $0x159] sm:$0xff]
  %v7187 = vld [vmem:[%s4857 + $0x169] sm:$0xff]
  %v7188 = vld [vmem:[%s4857 + $0x171] sm:$0xff]
  %v7189 = vld [vmem:[%s4857 + $0x2] sm:$0xff]
  %v7190 = vld [vmem:[%s4857 + $0xa] sm:$0xff]
  %v7191 = vld [vmem:[%s4857 + $0x1a] sm:$0xff]
  %v7192 = vld [vmem:[%s4857 + $0x22] sm:$0xff]
  %v7193 = vld [vmem:[%s4857 + $0x32] sm:$0xff]
  %v7194 = vld [vmem:[%s4857 + $0x3a] sm:$0xff]
  %v7195 = vld [vmem:[%s4857 + $0x4a] sm:$0xff]
  %v7196 = vld [vmem:[%s4857 + $0x52] sm:$0xff]
  %v7197 = vld [vmem:[%s4857 + $0x62] sm:$0xff]
  %v7198 = vld [vmem:[%s4857 + $0x6a] sm:$0xff]
  %v7199 = vld [vmem:[%s4857 + $0x7a] sm:$0xff]
  %v7200 = vld [vmem:[%s4857 + $0x82] sm:$0xff]
  %v7201 = vld [vmem:[%s4857 + $0x92] sm:$0xff]
  %v7202 = vld [vmem:[%s4857 + $0x9a] sm:$0xff]
  %v7203 = vld [vmem:[%s4857 + $0xaa] sm:$0xff]
  %v7204 = vld [vmem:[%s4857 + $0xb2] sm:$0xff]
  %v7205 = vld [vmem:[%s4857 + $0xc2] sm:$0xff]
  %v7206 = vld [vmem:[%s4857 + $0xca] sm:$0xff]
  %v7207 = vld [vmem:[%s4857 + $0xda] sm:$0xff]
  %v7208 = vld [vmem:[%s4857 + $0xe2] sm:$0xff]
  %v7209 = vld [vmem:[%s4857 + $0xf2] sm:$0xff]
  %v7210 = vld [vmem:[%s4857 + $0xfa] sm:$0xff]
  %v7211 = vld [vmem:[%s4857 + $0x10a] sm:$0xff]
  %v7212 = vld [vmem:[%s4857 + $0x112] sm:$0xff]
  %v7213 = vld [vmem:[%s4857 + $0x122] sm:$0xff]
  %v7214 = vld [vmem:[%s4857 + $0x12a] sm:$0xff]
  %v7215 = vld [vmem:[%s4857 + $0x13a] sm:$0xff]
  %v7216 = vld [vmem:[%s4857 + $0x142] sm:$0xff]
  %v7217 = vld [vmem:[%s4857 + $0x152] sm:$0xff]
  %v7218 = vld [vmem:[%s4857 + $0x15a] sm:$0xff]
  %v7219 = vld [vmem:[%s4857 + $0x16a] sm:$0xff]
  %v7220 = vld [vmem:[%s4857 + $0x172] sm:$0xff]
  %7253 = vrot.lane.b32.xlu0 %v6965, 8
  %v7254 = vpop.permute.xlu0 %7253
  %7255 = vrot.lane.b32.xlu0 %v6966, 8
  %v7256 = vpop.permute.xlu0 %7255
  %7257 = vrot.lane.b32.xlu0 %v6967, 8
  %v7258 = vpop.permute.xlu0 %7257
  %7259 = vrot.lane.b32.xlu0 %v6968, 8
  %v7260 = vpop.permute.xlu0 %7259
  %7261 = vrot.lane.b32.xlu0 %v6969, 8
  %v7262 = vpop.permute.xlu0 %7261
  %7263 = vrot.lane.b32.xlu0 %v6970, 8
  %v7264 = vpop.permute.xlu0 %7263
  %7265 = vrot.lane.b32.xlu0 %v6971, 8
  %v7266 = vpop.permute.xlu0 %7265
  %7267 = vrot.lane.b32.xlu0 %v6972, 8
  %v7268 = vpop.permute.xlu0 %7267
  %7269 = vrot.lane.b32.xlu0 %v6973, 8
  %v7270 = vpop.permute.xlu0 %7269
  %7271 = vrot.lane.b32.xlu0 %v6974, 8
  %v7272 = vpop.permute.xlu0 %7271
  %7273 = vrot.lane.b32.xlu0 %v6975, 8
  %v7274 = vpop.permute.xlu0 %7273
  %7275 = vrot.lane.b32.xlu0 %v6976, 8
  %v7276 = vpop.permute.xlu0 %7275
  %7277 = vrot.lane.b32.xlu0 %v6977, 8
  %v7278 = vpop.permute.xlu0 %7277
  %7279 = vrot.lane.b32.xlu0 %v6978, 8
  %v7280 = vpop.permute.xlu0 %7279
  %7281 = vrot.lane.b32.xlu0 %v6979, 8
  %v7282 = vpop.permute.xlu0 %7281
  %7283 = vrot.lane.b32.xlu0 %v6980, 8
  %v7284 = vpop.permute.xlu0 %7283
  %7285 = vrot.lane.b32.xlu0 %v6981, 8
  %v7286 = vpop.permute.xlu0 %7285
  %7287 = vrot.lane.b32.xlu0 %v6982, 8
  %v7288 = vpop.permute.xlu0 %7287
  %7289 = vrot.lane.b32.xlu0 %v6983, 8
  %v7290 = vpop.permute.xlu0 %7289
  %7291 = vrot.lane.b32.xlu0 %v6984, 8
  %v7292 = vpop.permute.xlu0 %7291
  %7293 = vrot.lane.b32.xlu0 %v6985, 8
  %v7294 = vpop.permute.xlu0 %7293
  %7295 = vrot.lane.b32.xlu0 %v6986, 8
  %v7296 = vpop.permute.xlu0 %7295
  %7297 = vrot.lane.b32.xlu0 %v6987, 8
  %v7298 = vpop.permute.xlu0 %7297
  %7299 = vrot.lane.b32.xlu0 %v6988, 8
  %v7300 = vpop.permute.xlu0 %7299
  %7301 = vrot.lane.b32.xlu0 %v6989, 8
  %v7302 = vpop.permute.xlu0 %7301
  %7303 = vrot.lane.b32.xlu0 %v6990, 8
  %v7304 = vpop.permute.xlu0 %7303
  %7305 = vrot.lane.b32.xlu0 %v6991, 8
  %v7306 = vpop.permute.xlu0 %7305
  %7307 = vrot.lane.b32.xlu0 %v6992, 8
  %v7308 = vpop.permute.xlu0 %7307
  %7309 = vrot.lane.b32.xlu0 %v6993, 8
  %v7310 = vpop.permute.xlu0 %7309
  %7311 = vrot.lane.b32.xlu0 %v6994, 8
  %v7312 = vpop.permute.xlu0 %7311
  %7313 = vrot.lane.b32.xlu0 %v6995, 8
  %v7314 = vpop.permute.xlu0 %7313
  %7315 = vrot.lane.b32.xlu0 %v6996, 8
  %v7316 = vpop.permute.xlu0 %7315
  %7381 = vrot.lane.b32.xlu0 %v6997, 16
  %v7382 = vpop.permute.xlu0 %7381
  %7383 = vrot.lane.b32.xlu0 %v6998, 16
  %v7384 = vpop.permute.xlu0 %7383
  %7385 = vrot.lane.b32.xlu0 %v6999, 16
  %v7386 = vpop.permute.xlu0 %7385
  %7387 = vrot.lane.b32.xlu0 %v7000, 16
  %v7388 = vpop.permute.xlu0 %7387
  %7389 = vrot.lane.b32.xlu0 %v7001, 16
  %v7390 = vpop.permute.xlu0 %7389
  %7391 = vrot.lane.b32.xlu0 %v7002, 16
  %v7392 = vpop.permute.xlu0 %7391
  %7393 = vrot.lane.b32.xlu0 %v7003, 16
  %v7394 = vpop.permute.xlu0 %7393
  %7395 = vrot.lane.b32.xlu0 %v7004, 16
  %v7396 = vpop.permute.xlu0 %7395
  %7397 = vrot.lane.b32.xlu0 %v7005, 16
  %v7398 = vpop.permute.xlu0 %7397
  %7399 = vrot.lane.b32.xlu0 %v7006, 16
  %v7400 = vpop.permute.xlu0 %7399
  %7401 = vrot.lane.b32.xlu0 %v7007, 16
  %v7402 = vpop.permute.xlu0 %7401
  %7403 = vrot.lane.b32.xlu0 %v7008, 16
  %v7404 = vpop.permute.xlu0 %7403
  %7405 = vrot.lane.b32.xlu0 %v7009, 16
  %v7406 = vpop.permute.xlu0 %7405
  %7407 = vrot.lane.b32.xlu0 %v7010, 16
  %v7408 = vpop.permute.xlu0 %7407
  %7409 = vrot.lane.b32.xlu0 %v7011, 16
  %v7410 = vpop.permute.xlu0 %7409
  %7411 = vrot.lane.b32.xlu0 %v7012, 16
  %v7412 = vpop.permute.xlu0 %7411
  %7413 = vrot.lane.b32.xlu0 %v7013, 16
  %v7414 = vpop.permute.xlu0 %7413
  %7415 = vrot.lane.b32.xlu0 %v7014, 16
  %v7416 = vpop.permute.xlu0 %7415
  %7417 = vrot.lane.b32.xlu0 %v7015, 16
  %v7418 = vpop.permute.xlu0 %7417
  %7419 = vrot.lane.b32.xlu0 %v7016, 16
  %v7420 = vpop.permute.xlu0 %7419
  %7421 = vrot.lane.b32.xlu0 %v7017, 16
  %v7422 = vpop.permute.xlu0 %7421
  %7423 = vrot.lane.b32.xlu0 %v7018, 16
  %v7424 = vpop.permute.xlu0 %7423
  %7425 = vrot.lane.b32.xlu0 %v7019, 16
  %v7426 = vpop.permute.xlu0 %7425
  %7427 = vrot.lane.b32.xlu0 %v7020, 16
  %v7428 = vpop.permute.xlu0 %7427
  %7429 = vrot.lane.b32.xlu0 %v7021, 16
  %v7430 = vpop.permute.xlu0 %7429
  %7431 = vrot.lane.b32.xlu0 %v7022, 16
  %v7432 = vpop.permute.xlu0 %7431
  %7433 = vrot.lane.b32.xlu0 %v7023, 16
  %v7434 = vpop.permute.xlu0 %7433
  %7435 = vrot.lane.b32.xlu0 %v7024, 16
  %v7436 = vpop.permute.xlu0 %7435
  %7437 = vrot.lane.b32.xlu0 %v7025, 16
  %v7438 = vpop.permute.xlu0 %7437
  %7439 = vrot.lane.b32.xlu0 %v7026, 16
  %v7440 = vpop.permute.xlu0 %7439
  %7441 = vrot.lane.b32.xlu0 %v7027, 16
  %v7442 = vpop.permute.xlu0 %7441
  %7443 = vrot.lane.b32.xlu0 %v7028, 16
  %v7444 = vpop.permute.xlu0 %7443
  %7509 = vrot.lane.b32.xlu0 %v7029, 24
  %v7510 = vpop.permute.xlu0 %7509
  %7511 = vrot.lane.b32.xlu0 %v7030, 24
  %v7512 = vpop.permute.xlu0 %7511
  %7513 = vrot.lane.b32.xlu0 %v7031, 24
  %v7514 = vpop.permute.xlu0 %7513
  %7515 = vrot.lane.b32.xlu0 %v7032, 24
  %v7516 = vpop.permute.xlu0 %7515
  %7517 = vrot.lane.b32.xlu0 %v7033, 24
  %v7518 = vpop.permute.xlu0 %7517
  %7519 = vrot.lane.b32.xlu0 %v7034, 24
  %v7520 = vpop.permute.xlu0 %7519
  %7521 = vrot.lane.b32.xlu0 %v7035, 24
  %v7522 = vpop.permute.xlu0 %7521
  %7523 = vrot.lane.b32.xlu0 %v7036, 24
  %v7524 = vpop.permute.xlu0 %7523
  %7525 = vrot.lane.b32.xlu0 %v7037, 24
  %v7526 = vpop.permute.xlu0 %7525
  %7527 = vrot.lane.b32.xlu0 %v7038, 24
  %v7528 = vpop.permute.xlu0 %7527
  %7529 = vrot.lane.b32.xlu0 %v7039, 24
  %v7530 = vpop.permute.xlu0 %7529
  %7531 = vrot.lane.b32.xlu0 %v7040, 24
  %v7532 = vpop.permute.xlu0 %7531
  %7533 = vrot.lane.b32.xlu0 %v7041, 24
  %v7534 = vpop.permute.xlu0 %7533
  %7535 = vrot.lane.b32.xlu0 %v7042, 24
  %v7536 = vpop.permute.xlu0 %7535
  %7537 = vrot.lane.b32.xlu0 %v7043, 24
  %v7538 = vpop.permute.xlu0 %7537
  %7539 = vrot.lane.b32.xlu0 %v7044, 24
  %v7540 = vpop.permute.xlu0 %7539
  %7541 = vrot.lane.b32.xlu0 %v7045, 24
  %v7542 = vpop.permute.xlu0 %7541
  %7543 = vrot.lane.b32.xlu0 %v7046, 24
  %v7544 = vpop.permute.xlu0 %7543
  %7545 = vrot.lane.b32.xlu0 %v7047, 24
  %v7546 = vpop.permute.xlu0 %7545
  %7547 = vrot.lane.b32.xlu0 %v7048, 24
  %v7548 = vpop.permute.xlu0 %7547
  %7549 = vrot.lane.b32.xlu0 %v7049, 24
  %v7550 = vpop.permute.xlu0 %7549
  %7551 = vrot.lane.b32.xlu0 %v7050, 24
  %v7552 = vpop.permute.xlu0 %7551
  %7553 = vrot.lane.b32.xlu0 %v7051, 24
  %v7554 = vpop.permute.xlu0 %7553
  %7555 = vrot.lane.b32.xlu0 %v7052, 24
  %v7556 = vpop.permute.xlu0 %7555
  %7557 = vrot.lane.b32.xlu0 %v7053, 24
  %v7558 = vpop.permute.xlu0 %7557
  %7559 = vrot.lane.b32.xlu0 %v7054, 24
  %v7560 = vpop.permute.xlu0 %7559
  %7561 = vrot.lane.b32.xlu0 %v7055, 24
  %v7562 = vpop.permute.xlu0 %7561
  %7563 = vrot.lane.b32.xlu0 %v7056, 24
  %v7564 = vpop.permute.xlu0 %7563
  %7565 = vrot.lane.b32.xlu0 %v7057, 24
  %v7566 = vpop.permute.xlu0 %7565
  %7567 = vrot.lane.b32.xlu0 %v7058, 24
  %v7568 = vpop.permute.xlu0 %7567
  %7569 = vrot.lane.b32.xlu0 %v7059, 24
  %v7570 = vpop.permute.xlu0 %7569
  %7571 = vrot.lane.b32.xlu0 %v7060, 24
  %v7572 = vpop.permute.xlu0 %7571
  %7637 = vrot.lane.b32.xlu0 %v7061, 32
  %v7638 = vpop.permute.xlu0 %7637
  %7639 = vrot.lane.b32.xlu0 %v7062, 32
  %v7640 = vpop.permute.xlu0 %7639
  %7641 = vrot.lane.b32.xlu0 %v7063, 32
  %v7642 = vpop.permute.xlu0 %7641
  %7643 = vrot.lane.b32.xlu0 %v7064, 32
  %v7644 = vpop.permute.xlu0 %7643
  %7645 = vrot.lane.b32.xlu0 %v7065, 32
  %v7646 = vpop.permute.xlu0 %7645
  %7647 = vrot.lane.b32.xlu0 %v7066, 32
  %v7648 = vpop.permute.xlu0 %7647
  %7649 = vrot.lane.b32.xlu0 %v7067, 32
  %v7650 = vpop.permute.xlu0 %7649
  %7651 = vrot.lane.b32.xlu0 %v7068, 32
  %v7652 = vpop.permute.xlu0 %7651
  %7653 = vrot.lane.b32.xlu0 %v7069, 32
  %v7654 = vpop.permute.xlu0 %7653
  %7655 = vrot.lane.b32.xlu0 %v7070, 32
  %v7656 = vpop.permute.xlu0 %7655
  %7657 = vrot.lane.b32.xlu0 %v7071, 32
  %v7658 = vpop.permute.xlu0 %7657
  %7659 = vrot.lane.b32.xlu0 %v7072, 32
  %v7660 = vpop.permute.xlu0 %7659
  %7661 = vrot.lane.b32.xlu0 %v7073, 32
  %v7662 = vpop.permute.xlu0 %7661
  %7663 = vrot.lane.b32.xlu0 %v7074, 32
  %v7664 = vpop.permute.xlu0 %7663
  %7665 = vrot.lane.b32.xlu0 %v7075, 32
  %v7666 = vpop.permute.xlu0 %7665
  %7667 = vrot.lane.b32.xlu0 %v7076, 32
  %v7668 = vpop.permute.xlu0 %7667
  %7669 = vrot.lane.b32.xlu0 %v7077, 32
  %v7670 = vpop.permute.xlu0 %7669
  %7671 = vrot.lane.b32.xlu0 %v7078, 32
  %v7672 = vpop.permute.xlu0 %7671
  %7673 = vrot.lane.b32.xlu0 %v7079, 32
  %v7674 = vpop.permute.xlu0 %7673
  %7675 = vrot.lane.b32.xlu0 %v7080, 32
  %v7676 = vpop.permute.xlu0 %7675
  %7677 = vrot.lane.b32.xlu0 %v7081, 32
  %v7678 = vpop.permute.xlu0 %7677
  %7679 = vrot.lane.b32.xlu0 %v7082, 32
  %v7680 = vpop.permute.xlu0 %7679
  %7681 = vrot.lane.b32.xlu0 %v7083, 32
  %v7682 = vpop.permute.xlu0 %7681
  %7683 = vrot.lane.b32.xlu0 %v7084, 32
  %v7684 = vpop.permute.xlu0 %7683
  %7685 = vrot.lane.b32.xlu0 %v7085, 32
  %v7686 = vpop.permute.xlu0 %7685
  %7687 = vrot.lane.b32.xlu0 %v7086, 32
  %v7688 = vpop.permute.xlu0 %7687
  %7689 = vrot.lane.b32.xlu0 %v7087, 32
  %v7690 = vpop.permute.xlu0 %7689
  %7691 = vrot.lane.b32.xlu0 %v7088, 32
  %v7692 = vpop.permute.xlu0 %7691
  %7693 = vrot.lane.b32.xlu0 %v7089, 32
  %v7694 = vpop.permute.xlu0 %7693
  %7695 = vrot.lane.b32.xlu0 %v7090, 32
  %v7696 = vpop.permute.xlu0 %7695
  %7697 = vrot.lane.b32.xlu0 %v7091, 32
  %v7698 = vpop.permute.xlu0 %7697
  %7699 = vrot.lane.b32.xlu0 %v7092, 32
  %v7700 = vpop.permute.xlu0 %7699
  %7765 = vrot.lane.b32.xlu0 %v7093, 40
  %v7766 = vpop.permute.xlu0 %7765
  %7767 = vrot.lane.b32.xlu0 %v7094, 40
  %v7768 = vpop.permute.xlu0 %7767
  %7769 = vrot.lane.b32.xlu0 %v7095, 40
  %v7770 = vpop.permute.xlu0 %7769
  %7771 = vrot.lane.b32.xlu0 %v7096, 40
  %v7772 = vpop.permute.xlu0 %7771
  %7773 = vrot.lane.b32.xlu0 %v7097, 40
  %v7774 = vpop.permute.xlu0 %7773
  %7775 = vrot.lane.b32.xlu0 %v7098, 40
  %v7776 = vpop.permute.xlu0 %7775
  %7777 = vrot.lane.b32.xlu0 %v7099, 40
  %v7778 = vpop.permute.xlu0 %7777
  %7779 = vrot.lane.b32.xlu0 %v7100, 40
  %v7780 = vpop.permute.xlu0 %7779
  %7781 = vrot.lane.b32.xlu0 %v7101, 40
  %v7782 = vpop.permute.xlu0 %7781
  %7783 = vrot.lane.b32.xlu0 %v7102, 40
  %v7784 = vpop.permute.xlu0 %7783
  %7785 = vrot.lane.b32.xlu0 %v7103, 40
  %v7786 = vpop.permute.xlu0 %7785
  %7787 = vrot.lane.b32.xlu0 %v7104, 40
  %v7788 = vpop.permute.xlu0 %7787
  %7789 = vrot.lane.b32.xlu0 %v7105, 40
  %v7790 = vpop.permute.xlu0 %7789
  %7791 = vrot.lane.b32.xlu0 %v7106, 40
  %v7792 = vpop.permute.xlu0 %7791
  %7793 = vrot.lane.b32.xlu0 %v7107, 40
  %v7794 = vpop.permute.xlu0 %7793
  %7795 = vrot.lane.b32.xlu0 %v7108, 40
  %v7796 = vpop.permute.xlu0 %7795
  %7797 = vrot.lane.b32.xlu0 %v7109, 40
  %v7798 = vpop.permute.xlu0 %7797
  %7799 = vrot.lane.b32.xlu0 %v7110, 40
  %v7800 = vpop.permute.xlu0 %7799
  %7801 = vrot.lane.b32.xlu0 %v7111, 40
  %v7802 = vpop.permute.xlu0 %7801
  %7803 = vrot.lane.b32.xlu0 %v7112, 40
  %v7804 = vpop.permute.xlu0 %7803
  %7805 = vrot.lane.b32.xlu0 %v7113, 40
  %v7806 = vpop.permute.xlu0 %7805
  %7807 = vrot.lane.b32.xlu0 %v7114, 40
  %v7808 = vpop.permute.xlu0 %7807
  %7809 = vrot.lane.b32.xlu0 %v7115, 40
  %v7810 = vpop.permute.xlu0 %7809
  %7811 = vrot.lane.b32.xlu0 %v7116, 40
  %v7812 = vpop.permute.xlu0 %7811
  %7813 = vrot.lane.b32.xlu0 %v7117, 40
  %v7814 = vpop.permute.xlu0 %7813
  %7815 = vrot.lane.b32.xlu0 %v7118, 40
  %v7816 = vpop.permute.xlu0 %7815
  %7817 = vrot.lane.b32.xlu0 %v7119, 40
  %v7818 = vpop.permute.xlu0 %7817
  %7819 = vrot.lane.b32.xlu0 %v7120, 40
  %v7820 = vpop.permute.xlu0 %7819
  %7821 = vrot.lane.b32.xlu0 %v7121, 40
  %v7822 = vpop.permute.xlu0 %7821
  %7823 = vrot.lane.b32.xlu0 %v7122, 40
  %v7824 = vpop.permute.xlu0 %7823
  %7825 = vrot.lane.b32.xlu0 %v7123, 40
  %v7826 = vpop.permute.xlu0 %7825
  %7827 = vrot.lane.b32.xlu0 %v7124, 40
  %v7828 = vpop.permute.xlu0 %7827
  %7893 = vrot.lane.b32.xlu0 %v7125, 48
  %v7894 = vpop.permute.xlu0 %7893
  %7895 = vrot.lane.b32.xlu0 %v7126, 48
  %v7896 = vpop.permute.xlu0 %7895
  %7897 = vrot.lane.b32.xlu0 %v7127, 48
  %v7898 = vpop.permute.xlu0 %7897
  %7899 = vrot.lane.b32.xlu0 %v7128, 48
  %v7900 = vpop.permute.xlu0 %7899
  %7901 = vrot.lane.b32.xlu0 %v7129, 48
  %v7902 = vpop.permute.xlu0 %7901
  %7903 = vrot.lane.b32.xlu0 %v7130, 48
  %v7904 = vpop.permute.xlu0 %7903
  %7905 = vrot.lane.b32.xlu0 %v7131, 48
  %v7906 = vpop.permute.xlu0 %7905
  %7907 = vrot.lane.b32.xlu0 %v7132, 48
  %v7908 = vpop.permute.xlu0 %7907
  %7909 = vrot.lane.b32.xlu0 %v7133, 48
  %v7910 = vpop.permute.xlu0 %7909
  %7911 = vrot.lane.b32.xlu0 %v7134, 48
  %v7912 = vpop.permute.xlu0 %7911
  %7913 = vrot.lane.b32.xlu0 %v7135, 48
  %v7914 = vpop.permute.xlu0 %7913
  %7915 = vrot.lane.b32.xlu0 %v7136, 48
  %v7916 = vpop.permute.xlu0 %7915
  %7917 = vrot.lane.b32.xlu0 %v7137, 48
  %v7918 = vpop.permute.xlu0 %7917
  %7919 = vrot.lane.b32.xlu0 %v7138, 48
  %v7920 = vpop.permute.xlu0 %7919
  %7921 = vrot.lane.b32.xlu0 %v7139, 48
  %v7922 = vpop.permute.xlu0 %7921
  %7923 = vrot.lane.b32.xlu0 %v7140, 48
  %v7924 = vpop.permute.xlu0 %7923
  %7925 = vrot.lane.b32.xlu0 %v7141, 48
  %v7926 = vpop.permute.xlu0 %7925
  %7927 = vrot.lane.b32.xlu0 %v7142, 48
  %v7928 = vpop.permute.xlu0 %7927
  %7929 = vrot.lane.b32.xlu0 %v7143, 48
  %v7930 = vpop.permute.xlu0 %7929
  %7931 = vrot.lane.b32.xlu0 %v7144, 48
  %v7932 = vpop.permute.xlu0 %7931
  %7933 = vrot.lane.b32.xlu0 %v7145, 48
  %v7934 = vpop.permute.xlu0 %7933
  %7935 = vrot.lane.b32.xlu0 %v7146, 48
  %v7936 = vpop.permute.xlu0 %7935
  %7937 = vrot.lane.b32.xlu0 %v7147, 48
  %v7938 = vpop.permute.xlu0 %7937
  %7939 = vrot.lane.b32.xlu0 %v7148, 48
  %v7940 = vpop.permute.xlu0 %7939
  %7941 = vrot.lane.b32.xlu0 %v7149, 48
  %v7942 = vpop.permute.xlu0 %7941
  %7943 = vrot.lane.b32.xlu0 %v7150, 48
  %v7944 = vpop.permute.xlu0 %7943
  %7945 = vrot.lane.b32.xlu0 %v7151, 48
  %v7946 = vpop.permute.xlu0 %7945
  %7947 = vrot.lane.b32.xlu0 %v7152, 48
  %v7948 = vpop.permute.xlu0 %7947
  %7949 = vrot.lane.b32.xlu0 %v7153, 48
  %v7950 = vpop.permute.xlu0 %7949
  %7951 = vrot.lane.b32.xlu0 %v7154, 48
  %v7952 = vpop.permute.xlu0 %7951
  %7953 = vrot.lane.b32.xlu0 %v7155, 48
  %v7954 = vpop.permute.xlu0 %7953
  %7955 = vrot.lane.b32.xlu0 %v7156, 48
  %v7956 = vpop.permute.xlu0 %7955
  %8021 = vrot.lane.b32.xlu0 %v7157, 56
  %v8022 = vpop.permute.xlu0 %8021
  %8023 = vrot.lane.b32.xlu0 %v7158, 56
  %v8024 = vpop.permute.xlu0 %8023
  %8025 = vrot.lane.b32.xlu0 %v7159, 56
  %v8026 = vpop.permute.xlu0 %8025
  %8027 = vrot.lane.b32.xlu0 %v7160, 56
  %v8028 = vpop.permute.xlu0 %8027
  %8029 = vrot.lane.b32.xlu0 %v7161, 56
  %v8030 = vpop.permute.xlu0 %8029
  %8031 = vrot.lane.b32.xlu0 %v7162, 56
  %v8032 = vpop.permute.xlu0 %8031
  %8033 = vrot.lane.b32.xlu0 %v7163, 56
  %v8034 = vpop.permute.xlu0 %8033
  %8035 = vrot.lane.b32.xlu0 %v7164, 56
  %v8036 = vpop.permute.xlu0 %8035
  %8037 = vrot.lane.b32.xlu0 %v7165, 56
  %v8038 = vpop.permute.xlu0 %8037
  %8039 = vrot.lane.b32.xlu0 %v7166, 56
  %v8040 = vpop.permute.xlu0 %8039
  %8041 = vrot.lane.b32.xlu0 %v7167, 56
  %v8042 = vpop.permute.xlu0 %8041
  %8043 = vrot.lane.b32.xlu0 %v7168, 56
  %v8044 = vpop.permute.xlu0 %8043
  %8045 = vrot.lane.b32.xlu0 %v7169, 56
  %v8046 = vpop.permute.xlu0 %8045
  %8047 = vrot.lane.b32.xlu0 %v7170, 56
  %v8048 = vpop.permute.xlu0 %8047
  %8049 = vrot.lane.b32.xlu0 %v7171, 56
  %v8050 = vpop.permute.xlu0 %8049
  %8051 = vrot.lane.b32.xlu0 %v7172, 56
  %v8052 = vpop.permute.xlu0 %8051
  %8053 = vrot.lane.b32.xlu0 %v7173, 56
  %v8054 = vpop.permute.xlu0 %8053
  %8055 = vrot.lane.b32.xlu0 %v7174, 56
  %v8056 = vpop.permute.xlu0 %8055
  %8057 = vrot.lane.b32.xlu0 %v7175, 56
  %v8058 = vpop.permute.xlu0 %8057
  %8059 = vrot.lane.b32.xlu0 %v7176, 56
  %v8060 = vpop.permute.xlu0 %8059
  %8061 = vrot.lane.b32.xlu0 %v7177, 56
  %v8062 = vpop.permute.xlu0 %8061
  %8063 = vrot.lane.b32.xlu0 %v7178, 56
  %v8064 = vpop.permute.xlu0 %8063
  %8065 = vrot.lane.b32.xlu0 %v7179, 56
  %v8066 = vpop.permute.xlu0 %8065
  %8067 = vrot.lane.b32.xlu0 %v7180, 56
  %v8068 = vpop.permute.xlu0 %8067
  %8069 = vrot.lane.b32.xlu0 %v7181, 56
  %v8070 = vpop.permute.xlu0 %8069
  %8071 = vrot.lane.b32.xlu0 %v7182, 56
  %v8072 = vpop.permute.xlu0 %8071
  %8073 = vrot.lane.b32.xlu0 %v7183, 56
  %v8074 = vpop.permute.xlu0 %8073
  %8075 = vrot.lane.b32.xlu0 %v7184, 56
  %v8076 = vpop.permute.xlu0 %8075
  %8077 = vrot.lane.b32.xlu0 %v7185, 56
  %v8078 = vpop.permute.xlu0 %8077
  %8079 = vrot.lane.b32.xlu0 %v7186, 56
  %v8080 = vpop.permute.xlu0 %8079
  %8081 = vrot.lane.b32.xlu0 %v7187, 56
  %v8082 = vpop.permute.xlu0 %8081
  %8083 = vrot.lane.b32.xlu0 %v7188, 56
  %v8084 = vpop.permute.xlu0 %8083
  %8149 = vrot.lane.b32.xlu0 %v7189, 64
  %v8150 = vpop.permute.xlu0 %8149
  %8151 = vrot.lane.b32.xlu0 %v7190, 64
  %v8152 = vpop.permute.xlu0 %8151
  %8153 = vrot.lane.b32.xlu0 %v7191, 64
  %v8154 = vpop.permute.xlu0 %8153
  %8155 = vrot.lane.b32.xlu0 %v7192, 64
  %v8156 = vpop.permute.xlu0 %8155
  %8157 = vrot.lane.b32.xlu0 %v7193, 64
  %v8158 = vpop.permute.xlu0 %8157
  %8159 = vrot.lane.b32.xlu0 %v7194, 64
  %v8160 = vpop.permute.xlu0 %8159
  %8161 = vrot.lane.b32.xlu0 %v7195, 64
  %v8162 = vpop.permute.xlu0 %8161
  %8163 = vrot.lane.b32.xlu0 %v7196, 64
  %v8164 = vpop.permute.xlu0 %8163
  %8165 = vrot.lane.b32.xlu0 %v7197, 64
  %v8166 = vpop.permute.xlu0 %8165
  %8167 = vrot.lane.b32.xlu0 %v7198, 64
  %v8168 = vpop.permute.xlu0 %8167
  %8169 = vrot.lane.b32.xlu0 %v7199, 64
  %v8170 = vpop.permute.xlu0 %8169
  %8171 = vrot.lane.b32.xlu0 %v7200, 64
  %v8172 = vpop.permute.xlu0 %8171
  %8173 = vrot.lane.b32.xlu0 %v7201, 64
  %v8174 = vpop.permute.xlu0 %8173
  %8175 = vrot.lane.b32.xlu0 %v7202, 64
  %v8176 = vpop.permute.xlu0 %8175
  %8177 = vrot.lane.b32.xlu0 %v7203, 64
  %v8178 = vpop.permute.xlu0 %8177
  %8179 = vrot.lane.b32.xlu0 %v7204, 64
  %v8180 = vpop.permute.xlu0 %8179
  %8181 = vrot.lane.b32.xlu0 %v7205, 64
  %v8182 = vpop.permute.xlu0 %8181
  %8183 = vrot.lane.b32.xlu0 %v7206, 64
  %v8184 = vpop.permute.xlu0 %8183
  %8185 = vrot.lane.b32.xlu0 %v7207, 64
  %v8186 = vpop.permute.xlu0 %8185
  %8187 = vrot.lane.b32.xlu0 %v7208, 64
  %v8188 = vpop.permute.xlu0 %8187
  %8189 = vrot.lane.b32.xlu0 %v7209, 64
  %v8190 = vpop.permute.xlu0 %8189
  %8191 = vrot.lane.b32.xlu0 %v7210, 64
  %v8192 = vpop.permute.xlu0 %8191
  %8193 = vrot.lane.b32.xlu0 %v7211, 64
  %v8194 = vpop.permute.xlu0 %8193
  %8195 = vrot.lane.b32.xlu0 %v7212, 64
  %v8196 = vpop.permute.xlu0 %8195
  %8197 = vrot.lane.b32.xlu0 %v7213, 64
  %v8198 = vpop.permute.xlu0 %8197
  %8199 = vrot.lane.b32.xlu0 %v7214, 64
  %v8200 = vpop.permute.xlu0 %8199
  %8201 = vrot.lane.b32.xlu0 %v7215, 64
  %v8202 = vpop.permute.xlu0 %8201
  %8203 = vrot.lane.b32.xlu0 %v7216, 64
  %v8204 = vpop.permute.xlu0 %8203
  %8205 = vrot.lane.b32.xlu0 %v7217, 64
  %v8206 = vpop.permute.xlu0 %8205
  %8207 = vrot.lane.b32.xlu0 %v7218, 64
  %v8208 = vpop.permute.xlu0 %8207
  %8209 = vrot.lane.b32.xlu0 %v7219, 64
  %v8210 = vpop.permute.xlu0 %8209
  %8211 = vrot.lane.b32.xlu0 %v7220, 64
  %v8212 = vpop.permute.xlu0 %8211
  %v8245 = vsel %vm1492, %v6933, %v7254
  %v8246 = vsel %vm1492, %v6934, %v7256
  %v8247 = vsel %vm1492, %v6935, %v7258
  %v8248 = vsel %vm1492, %v6936, %v7260
  %v8249 = vsel %vm1492, %v6937, %v7262
  %v8250 = vsel %vm1492, %v6938, %v7264
  %v8251 = vsel %vm1492, %v6939, %v7266
  %v8252 = vsel %vm1492, %v6940, %v7268
  %v8253 = vsel %vm1492, %v6941, %v7270
  %v8254 = vsel %vm1492, %v6942, %v7272
  %v8255 = vsel %vm1492, %v6943, %v7274
  %v8256 = vsel %vm1492, %v6944, %v7276
  %v8257 = vsel %vm1492, %v6945, %v7278
  %v8258 = vsel %vm1492, %v6946, %v7280
  %v8259 = vsel %vm1492, %v6947, %v7282
  %v8260 = vsel %vm1492, %v6948, %v7284
  %v8261 = vsel %vm1492, %v6949, %v7286
  %v8262 = vsel %vm1492, %v6950, %v7288
  %v8263 = vsel %vm1492, %v6951, %v7290
  %v8264 = vsel %vm1492, %v6952, %v7292
  %v8265 = vsel %vm1492, %v6953, %v7294
  %v8266 = vsel %vm1492, %v6954, %v7296
  %v8267 = vsel %vm1492, %v6955, %v7298
  %v8268 = vsel %vm1492, %v6956, %v7300
  %v8269 = vsel %vm1492, %v6957, %v7302
  %v8270 = vsel %vm1492, %v6958, %v7304
  %v8271 = vsel %vm1492, %v6959, %v7306
  %v8272 = vsel %vm1492, %v6960, %v7308
  %v8273 = vsel %vm1492, %v6961, %v7310
  %v8274 = vsel %vm1492, %v6962, %v7312
  %v8275 = vsel %vm1492, %v6963, %v7314
  %v8276 = vsel %vm1492, %v6964, %v7316
  %v8277 = vsel %vm1558, %v8245, %v7382
  %v8278 = vsel %vm1558, %v8246, %v7384
  %v8279 = vsel %vm1558, %v8247, %v7386
  %v8280 = vsel %vm1558, %v8248, %v7388
  %v8281 = vsel %vm1558, %v8249, %v7390
  %v8282 = vsel %vm1558, %v8250, %v7392
  %v8283 = vsel %vm1558, %v8251, %v7394
  %v8284 = vsel %vm1558, %v8252, %v7396
  %v8285 = vsel %vm1558, %v8253, %v7398
  %v8286 = vsel %vm1558, %v8254, %v7400
  %v8287 = vsel %vm1558, %v8255, %v7402
  %v8288 = vsel %vm1558, %v8256, %v7404
  %v8289 = vsel %vm1558, %v8257, %v7406
  %v8290 = vsel %vm1558, %v8258, %v7408
  %v8291 = vsel %vm1558, %v8259, %v7410
  %v8292 = vsel %vm1558, %v8260, %v7412
  %v8293 = vsel %vm1558, %v8261, %v7414
  %v8294 = vsel %vm1558, %v8262, %v7416
  %v8295 = vsel %vm1558, %v8263, %v7418
  %v8296 = vsel %vm1558, %v8264, %v7420
  %v8297 = vsel %vm1558, %v8265, %v7422
  %v8298 = vsel %vm1558, %v8266, %v7424
  %v8299 = vsel %vm1558, %v8267, %v7426
  %v8300 = vsel %vm1558, %v8268, %v7428
  %v8301 = vsel %vm1558, %v8269, %v7430
  %v8302 = vsel %vm1558, %v8270, %v7432
  %v8303 = vsel %vm1558, %v8271, %v7434
  %v8304 = vsel %vm1558, %v8272, %v7436
  %v8305 = vsel %vm1558, %v8273, %v7438
  %v8306 = vsel %vm1558, %v8274, %v7440
  %v8307 = vsel %vm1558, %v8275, %v7442
  %v8308 = vsel %vm1558, %v8276, %v7444
  %v8309 = vsel %vm1624, %v8277, %v7510
  %v8310 = vsel %vm1624, %v8278, %v7512
  %v8311 = vsel %vm1624, %v8279, %v7514
  %v8312 = vsel %vm1624, %v8280, %v7516
  %v8313 = vsel %vm1624, %v8281, %v7518
  %v8314 = vsel %vm1624, %v8282, %v7520
  %v8315 = vsel %vm1624, %v8283, %v7522
  %v8316 = vsel %vm1624, %v8284, %v7524
  %v8317 = vsel %vm1624, %v8285, %v7526
  %v8318 = vsel %vm1624, %v8286, %v7528
  %v8319 = vsel %vm1624, %v8287, %v7530
  %v8320 = vsel %vm1624, %v8288, %v7532
  %v8321 = vsel %vm1624, %v8289, %v7534
  %v8322 = vsel %vm1624, %v8290, %v7536
  %v8323 = vsel %vm1624, %v8291, %v7538
  %v8324 = vsel %vm1624, %v8292, %v7540
  %v8325 = vsel %vm1624, %v8293, %v7542
  %v8326 = vsel %vm1624, %v8294, %v7544
  %v8327 = vsel %vm1624, %v8295, %v7546
  %v8328 = vsel %vm1624, %v8296, %v7548
  %v8329 = vsel %vm1624, %v8297, %v7550
  %v8330 = vsel %vm1624, %v8298, %v7552
  %v8331 = vsel %vm1624, %v8299, %v7554
  %v8332 = vsel %vm1624, %v8300, %v7556
  %v8333 = vsel %vm1624, %v8301, %v7558
  %v8334 = vsel %vm1624, %v8302, %v7560
  %v8335 = vsel %vm1624, %v8303, %v7562
  %v8336 = vsel %vm1624, %v8304, %v7564
  %v8337 = vsel %vm1624, %v8305, %v7566
  %v8338 = vsel %vm1624, %v8306, %v7568
  %v8339 = vsel %vm1624, %v8307, %v7570
  %v8340 = vsel %vm1624, %v8308, %v7572
  %v8341 = vsel %vm1690, %v8309, %v7638
  %v8342 = vsel %vm1690, %v8310, %v7640
  %v8343 = vsel %vm1690, %v8311, %v7642
  %v8344 = vsel %vm1690, %v8312, %v7644
  %v8345 = vsel %vm1690, %v8313, %v7646
  %v8346 = vsel %vm1690, %v8314, %v7648
  %v8347 = vsel %vm1690, %v8315, %v7650
  %v8348 = vsel %vm1690, %v8316, %v7652
  %v8349 = vsel %vm1690, %v8317, %v7654
  %v8350 = vsel %vm1690, %v8318, %v7656
  %v8351 = vsel %vm1690, %v8319, %v7658
  %v8352 = vsel %vm1690, %v8320, %v7660
  %v8353 = vsel %vm1690, %v8321, %v7662
  %v8354 = vsel %vm1690, %v8322, %v7664
  %v8355 = vsel %vm1690, %v8323, %v7666
  %v8356 = vsel %vm1690, %v8324, %v7668
  %v8357 = vsel %vm1690, %v8325, %v7670
  %v8358 = vsel %vm1690, %v8326, %v7672
  %v8359 = vsel %vm1690, %v8327, %v7674
  %v8360 = vsel %vm1690, %v8328, %v7676
  %v8361 = vsel %vm1690, %v8329, %v7678
  %v8362 = vsel %vm1690, %v8330, %v7680
  %v8363 = vsel %vm1690, %v8331, %v7682
  %v8364 = vsel %vm1690, %v8332, %v7684
  %v8365 = vsel %vm1690, %v8333, %v7686
  %v8366 = vsel %vm1690, %v8334, %v7688
  %v8367 = vsel %vm1690, %v8335, %v7690
  %v8368 = vsel %vm1690, %v8336, %v7692
  %v8369 = vsel %vm1690, %v8337, %v7694
  %v8370 = vsel %vm1690, %v8338, %v7696
  %v8371 = vsel %vm1690, %v8339, %v7698
  %v8372 = vsel %vm1690, %v8340, %v7700
  %v8373 = vsel %vm6106, %v8341, %v7766
  %v8374 = vsel %vm6106, %v8342, %v7768
  %v8375 = vsel %vm6106, %v8343, %v7770
  %v8376 = vsel %vm6106, %v8344, %v7772
  %v8377 = vsel %vm6106, %v8345, %v7774
  %v8378 = vsel %vm6106, %v8346, %v7776
  %v8379 = vsel %vm6106, %v8347, %v7778
  %v8380 = vsel %vm6106, %v8348, %v7780
  %v8381 = vsel %vm6106, %v8349, %v7782
  %v8382 = vsel %vm6106, %v8350, %v7784
  %v8383 = vsel %vm6106, %v8351, %v7786
  %v8384 = vsel %vm6106, %v8352, %v7788
  %v8385 = vsel %vm6106, %v8353, %v7790
  %v8386 = vsel %vm6106, %v8354, %v7792
  %v8387 = vsel %vm6106, %v8355, %v7794
  %v8388 = vsel %vm6106, %v8356, %v7796
  %v8389 = vsel %vm6106, %v8357, %v7798
  %v8390 = vsel %vm6106, %v8358, %v7800
  %v8391 = vsel %vm6106, %v8359, %v7802
  %v8392 = vsel %vm6106, %v8360, %v7804
  %v8393 = vsel %vm6106, %v8361, %v7806
  %v8394 = vsel %vm6106, %v8362, %v7808
  %v8395 = vsel %vm6106, %v8363, %v7810
  %v8396 = vsel %vm6106, %v8364, %v7812
  %v8397 = vsel %vm6106, %v8365, %v7814
  %v8398 = vsel %vm6106, %v8366, %v7816
  %v8399 = vsel %vm6106, %v8367, %v7818
  %v8400 = vsel %vm6106, %v8368, %v7820
  %v8401 = vsel %vm6106, %v8369, %v7822
  %v8402 = vsel %vm6106, %v8370, %v7824
  %v8403 = vsel %vm6106, %v8371, %v7826
  %v8404 = vsel %vm6106, %v8372, %v7828
  %v8405 = vsel %vm6139, %v8373, %v7894
  %v8406 = vsel %vm6139, %v8374, %v7896
  %v8407 = vsel %vm6139, %v8375, %v7898
  %v8408 = vsel %vm6139, %v8376, %v7900
  %v8409 = vsel %vm6139, %v8377, %v7902
  %v8410 = vsel %vm6139, %v8378, %v7904
  %v8411 = vsel %vm6139, %v8379, %v7906
  %v8412 = vsel %vm6139, %v8380, %v7908
  %v8413 = vsel %vm6139, %v8381, %v7910
  %v8414 = vsel %vm6139, %v8382, %v7912
  %v8415 = vsel %vm6139, %v8383, %v7914
  %v8416 = vsel %vm6139, %v8384, %v7916
  %v8417 = vsel %vm6139, %v8385, %v7918
  %v8418 = vsel %vm6139, %v8386, %v7920
  %v8419 = vsel %vm6139, %v8387, %v7922
  %v8420 = vsel %vm6139, %v8388, %v7924
  %v8421 = vsel %vm6139, %v8389, %v7926
  %v8422 = vsel %vm6139, %v8390, %v7928
  %v8423 = vsel %vm6139, %v8391, %v7930
  %v8424 = vsel %vm6139, %v8392, %v7932
  %v8425 = vsel %vm6139, %v8393, %v7934
  %v8426 = vsel %vm6139, %v8394, %v7936
  %v8427 = vsel %vm6139, %v8395, %v7938
  %v8428 = vsel %vm6139, %v8396, %v7940
  %v8429 = vsel %vm6139, %v8397, %v7942
  %v8430 = vsel %vm6139, %v8398, %v7944
  %v8431 = vsel %vm6139, %v8399, %v7946
  %v8432 = vsel %vm6139, %v8400, %v7948
  %v8433 = vsel %vm6139, %v8401, %v7950
  %v8434 = vsel %vm6139, %v8402, %v7952
  %v8435 = vsel %vm6139, %v8403, %v7954
  %v8436 = vsel %vm6139, %v8404, %v7956
  %v8437 = vsel %vm6172, %v8405, %v8022
  %v8438 = vsel %vm6172, %v8406, %v8024
  %v8439 = vsel %vm6172, %v8407, %v8026
  %v8440 = vsel %vm6172, %v8408, %v8028
  %v8441 = vsel %vm6172, %v8409, %v8030
  %v8442 = vsel %vm6172, %v8410, %v8032
  %v8443 = vsel %vm6172, %v8411, %v8034
  %v8444 = vsel %vm6172, %v8412, %v8036
  %v8445 = vsel %vm6172, %v8413, %v8038
  %v8446 = vsel %vm6172, %v8414, %v8040
  %v8447 = vsel %vm6172, %v8415, %v8042
  %v8448 = vsel %vm6172, %v8416, %v8044
  %v8449 = vsel %vm6172, %v8417, %v8046
  %v8450 = vsel %vm6172, %v8418, %v8048
  %v8451 = vsel %vm6172, %v8419, %v8050
  %v8452 = vsel %vm6172, %v8420, %v8052
  %v8453 = vsel %vm6172, %v8421, %v8054
  %v8454 = vsel %vm6172, %v8422, %v8056
  %v8455 = vsel %vm6172, %v8423, %v8058
  %v8456 = vsel %vm6172, %v8424, %v8060
  %v8457 = vsel %vm6172, %v8425, %v8062
  %v8458 = vsel %vm6172, %v8426, %v8064
  %v8459 = vsel %vm6172, %v8427, %v8066
  %v8460 = vsel %vm6172, %v8428, %v8068
  %v8461 = vsel %vm6172, %v8429, %v8070
  %v8462 = vsel %vm6172, %v8430, %v8072
  %v8463 = vsel %vm6172, %v8431, %v8074
  %v8464 = vsel %vm6172, %v8432, %v8076
  %v8465 = vsel %vm6172, %v8433, %v8078
  %v8466 = vsel %vm6172, %v8434, %v8080
  %v8467 = vsel %vm6172, %v8435, %v8082
  %v8468 = vsel %vm6172, %v8436, %v8084
  %v8469 = vsel %vm6205, %v8437, %v8150
  %v8470 = vsel %vm6205, %v8438, %v8152
  %v8471 = vsel %vm6205, %v8439, %v8154
  %v8472 = vsel %vm6205, %v8440, %v8156
  %v8473 = vsel %vm6205, %v8441, %v8158
  %v8474 = vsel %vm6205, %v8442, %v8160
  %v8475 = vsel %vm6205, %v8443, %v8162
  %v8476 = vsel %vm6205, %v8444, %v8164
  %v8477 = vsel %vm6205, %v8445, %v8166
  %v8478 = vsel %vm6205, %v8446, %v8168
  %v8479 = vsel %vm6205, %v8447, %v8170
  %v8480 = vsel %vm6205, %v8448, %v8172
  %v8481 = vsel %vm6205, %v8449, %v8174
  %v8482 = vsel %vm6205, %v8450, %v8176
  %v8483 = vsel %vm6205, %v8451, %v8178
  %v8484 = vsel %vm6205, %v8452, %v8180
  %v8485 = vsel %vm6205, %v8453, %v8182
  %v8486 = vsel %vm6205, %v8454, %v8184
  %v8487 = vsel %vm6205, %v8455, %v8186
  %v8488 = vsel %vm6205, %v8456, %v8188
  %v8489 = vsel %vm6205, %v8457, %v8190
  %v8490 = vsel %vm6205, %v8458, %v8192
  %v8491 = vsel %vm6205, %v8459, %v8194
  %v8492 = vsel %vm6205, %v8460, %v8196
  %v8493 = vsel %vm6205, %v8461, %v8198
  %v8494 = vsel %vm6205, %v8462, %v8200
  %v8495 = vsel %vm6205, %v8463, %v8202
  %v8496 = vsel %vm6205, %v8464, %v8204
  %v8497 = vsel %vm6205, %v8465, %v8206
  %v8498 = vsel %vm6205, %v8466, %v8208
  %v8499 = vsel %vm6205, %v8467, %v8210
  %v8500 = vsel %vm6205, %v8468, %v8212
  %v8501 = vld [vmem:[%s2] sm:$0xff]
  %v8502 = vld [vmem:[%s2 + $0x8] sm:$0xff]
  %v8503 = vld [vmem:[%s2 + $0x10] sm:$0xff]
  %v8504 = vld [vmem:[%s2 + $0x18] sm:$0xff]
  %v8505 = vld [vmem:[%s2 + $0x20] sm:$0xff]
  %v8506 = vld [vmem:[%s2 + $0x28] sm:$0xff]
  %v8507 = vld [vmem:[%s2 + $0x30] sm:$0xff]
  %v8508 = vld [vmem:[%s2 + $0x38] sm:$0xff]
  %v8509 = vld [vmem:[%s2 + $0x40] sm:$0xff]
  %v8511 = vsel %vm6247, %v8469, 0
  %v8514 = vsel %vm6247, %v8470, 0
  %v8517 = vsel %vm6247, %v8471, 0
  %v8520 = vsel %vm6247, %v8472, 0
  %v8523 = vsel %vm6247, %v8473, 0
  %v8526 = vsel %vm6247, %v8474, 0
  %v8529 = vsel %vm6247, %v8475, 0
  %v8532 = vsel %vm6247, %v8476, 0
  %v8535 = vsel %vm6247, %v8477, 0
  %v8538 = vsel %vm6247, %v8478, 0
  %v8541 = vsel %vm6247, %v8479, 0
  %v8544 = vsel %vm6247, %v8480, 0
  %v8547 = vsel %vm6247, %v8481, 0
  %v8550 = vsel %vm6247, %v8482, 0
  %v8553 = vsel %vm6247, %v8483, 0
  %v8556 = vsel %vm6247, %v8484, 0
  %v8559 = vsel %vm6247, %v8485, 0
  %v8562 = vsel %vm6247, %v8486, 0
  %v8565 = vsel %vm6247, %v8487, 0
  %v8568 = vsel %vm6247, %v8488, 0
  %v8571 = vsel %vm6247, %v8489, 0
  %v8574 = vsel %vm6247, %v8490, 0
  %v8577 = vsel %vm6247, %v8491, 0
  %v8580 = vsel %vm6247, %v8492, 0
  %v8583 = vsel %vm6247, %v8493, 0
  %v8586 = vsel %vm6247, %v8494, 0
  %v8589 = vsel %vm6247, %v8495, 0
  %v8592 = vsel %vm6247, %v8496, 0
  %v8595 = vsel %vm6247, %v8497, 0
  %v8598 = vsel %vm6247, %v8498, 0
  %v8601 = vsel %vm6247, %v8499, 0
  %v8604 = vsel %vm6247, %v8500, 0
  %8606 = vmatprep.subr.mxu0 0.0
  %8607 = vmatpush1.msra.mxu0 %v8501
  %8608 = vmatprep.subr.mxu0 0.0
  %8609 = vmatpush1.msra.mxu0 %v8502
  %8610 = vmatprep.subr.mxu0 0.0
  %8611 = vmatpush1.msra.mxu0 %v8503
  %8612 = vmatprep.subr.mxu0 0.0
  %8613 = vmatpush1.msra.mxu0 %v8504
  %8614 = vmatprep.subr.mxu0 0.0
  %8615 = vmatpush1.msra.mxu0 %v8505
  %8616 = vmatprep.subr.mxu0 0.0
  %8617 = vmatpush1.msra.mxu0 %v8506
  %8618 = vmatprep.subr.mxu0 0.0
  %8619 = vmatpush1.msra.mxu0 %v8507
  %8620 = vmatprep.subr.mxu0 0.0
  %8621 = vmatpush1.msra.mxu0 %v8508
  %8622 = vmatprep.subr.mxu0 0.0
  %8623 = vmatpush1.msra.mxu0 %v8509
  %8624 = vmatprep.subr.mxu0 0.0
  %8625 = vmatpush1.msra.mxu0 0.0
  %8626 = vmatprep.subr.mxu0 0.0
  %8627 = vmatpush1.msra.mxu0 0.0
  %8628 = vmatprep.subr.mxu0 0.0
  %8629 = vmatpush1.msra.mxu0 0.0
  %8630 = vmatprep.subr.mxu0 0.0
  %8631 = vmatpush1.msra.mxu0 0.0
  %8632 = vmatprep.subr.mxu0 0.0
  %8633 = vmatpush1.msra.mxu0 0.0
  %8634 = vmatprep.subr.mxu0 0.0
  %8635 = vmatpush1.msra.mxu0 0.0
  %8636 = vmatprep.subr.mxu0 0.0
  %8637 = vmatpush1.msra.mxu0 0.0
  %8638 = vmatprep.subr.mxu0 0.0
  %8639 = vmatpush1.msra.mxu0 0.0
  %8640 = vmatprep.subr.mxu0 0.0
  %8641 = vmatpush1.msra.mxu0 0.0
  %8642 = vmatprep.subr.mxu0 0.0
  %8643 = vmatpush1.msra.mxu0 0.0
  %8644 = vmatprep.subr.mxu0 0.0
  %8645 = vmatpush1.msra.mxu0 0.0
  %8646 = vmatprep.subr.mxu0 0.0
  %8647 = vmatpush1.msra.mxu0 0.0
  %8648 = vmatprep.subr.mxu0 0.0
  %8649 = vmatpush1.msra.mxu0 0.0
  %8650 = vmatprep.subr.mxu0 0.0
  %8651 = vmatpush1.msra.mxu0 0.0
  %8652 = vmatprep.subr.mxu0 0.0
  %8653 = vmatpush1.msra.mxu0 0.0
  %8654 = vmatprep.subr.mxu0 0.0
  %8655 = vmatpush1.msra.mxu0 0.0
  %8656 = vmatprep.subr.mxu0 0.0
  %8657 = vmatpush1.msra.mxu0 0.0
  %8658 = vmatprep.subr.mxu0 0.0
  %8659 = vmatpush1.msra.mxu0 0.0
  %8660 = vmatprep.subr.mxu0 0.0
  %8661 = vmatpush1.msra.mxu0 0.0
  %8662 = vmatprep.subr.mxu0 0.0
  %8663 = vmatpush1.msra.mxu0 0.0
  %8664 = vmatprep.subr.mxu0 0.0
  %8665 = vmatpush1.msra.mxu0 0.0
  %8666 = vmatprep.subr.mxu0 0.0
  %8667 = vmatpush1.msra.mxu0 0.0
  %8668 = vmatprep.subr.mxu0 0.0
  %8669 = vmatpush1.msra.mxu0 0.0
  %8670 = vmatprep.mubr.f32.mxu0 0.0
  %8671 = vmatmul.mubr.f32.gmra.mrb[0].mxu0 %v8511
  %v8672 = vpop.f32.mrb[0].mxu0
  %v8673 = vadd.f32 0.0, %v8672
  %v8674 = vpop.f32.mrb[0].mxu0
  %8675 = vmatprep.mubr.f32.mxu0 0.0
  %8676 = vmatmul.mubr.f32.gmra.mrb[0].mxu0 %v8514
  %v8677 = vpop.f32.mrb[0].mxu0
  %v8678 = vadd.f32 0.0, %v8677
  %v8679 = vpop.f32.mrb[0].mxu0
  %8680 = vmatprep.mubr.f32.mxu0 0.0
  %8681 = vmatmul.mubr.f32.gmra.mrb[0].mxu0 %v8517
  %v8682 = vpop.f32.mrb[0].mxu0
  %v8683 = vadd.f32 0.0, %v8682
  %v8684 = vpop.f32.mrb[0].mxu0
  %8685 = vmatprep.mubr.f32.mxu0 0.0
  %8686 = vmatmul.mubr.f32.gmra.mrb[0].mxu0 %v8520
  %v8687 = vpop.f32.mrb[0].mxu0
  %v8688 = vadd.f32 0.0, %v8687
  %v8689 = vpop.f32.mrb[0].mxu0
  %8690 = vmatprep.mubr.f32.mxu0 0.0
  %8691 = vmatmul.mubr.f32.gmra.mrb[0].mxu0 %v8523
  %v8692 = vpop.f32.mrb[0].mxu0
  %v8693 = vadd.f32 0.0, %v8692
  %v8694 = vpop.f32.mrb[0].mxu0
  %8695 = vmatprep.mubr.f32.mxu0 0.0
  %8696 = vmatmul.mubr.f32.gmra.mrb[0].mxu0 %v8526
  %v8697 = vpop.f32.mrb[0].mxu0
  %v8698 = vadd.f32 0.0, %v8697
  %v8699 = vpop.f32.mrb[0].mxu0
  %8700 = vmatprep.mubr.f32.mxu0 0.0
  %8701 = vmatmul.mubr.f32.gmra.mrb[0].mxu0 %v8529
  %v8702 = vpop.f32.mrb[0].mxu0
  %v8703 = vadd.f32 0.0, %v8702
  %v8704 = vpop.f32.mrb[0].mxu0
  %8705 = vmatprep.mubr.f32.mxu0 0.0
  %8706 = vmatmul.mubr.f32.gmra.mrb[0].mxu0 %v8532
  %v8707 = vpop.f32.mrb[0].mxu0
  %v8708 = vadd.f32 0.0, %v8707
  %v8709 = vpop.f32.mrb[0].mxu0
  %8710 = vmatprep.mubr.f32.mxu0 0.0
  %8711 = vmatmul.mubr.f32.gmra.mrb[0].mxu0 %v8535
  %v8712 = vpop.f32.mrb[0].mxu0
  %v8713 = vadd.f32 0.0, %v8712
  %v8714 = vpop.f32.mrb[0].mxu0
  %8715 = vmatprep.mubr.f32.mxu0 0.0
  %8716 = vmatmul.mubr.f32.gmra.mrb[0].mxu0 %v8538
  %v8717 = vpop.f32.mrb[0].mxu0
  %v8718 = vadd.f32 0.0, %v8717
  %v8719 = vpop.f32.mrb[0].mxu0
  %8720 = vmatprep.mubr.f32.mxu0 0.0
  %8721 = vmatmul.mubr.f32.gmra.mrb[0].mxu0 %v8541
  %v8722 = vpop.f32.mrb[0].mxu0
  %v8723 = vadd.f32 0.0, %v8722
  %v8724 = vpop.f32.mrb[0].mxu0
  %8725 = vmatprep.mubr.f32.mxu0 0.0
  %8726 = vmatmul.mubr.f32.gmra.mrb[0].mxu0 %v8544
  %v8727 = vpop.f32.mrb[0].mxu0
  %v8728 = vadd.f32 0.0, %v8727
  %v8729 = vpop.f32.mrb[0].mxu0
  %8730 = vmatprep.mubr.f32.mxu0 0.0
  %8731 = vmatmul.mubr.f32.gmra.mrb[0].mxu0 %v8547
  %v8732 = vpop.f32.mrb[0].mxu0
  %v8733 = vadd.f32 0.0, %v8732
  %v8734 = vpop.f32.mrb[0].mxu0
  %8735 = vmatprep.mubr.f32.mxu0 0.0
  %8736 = vmatmul.mubr.f32.gmra.mrb[0].mxu0 %v8550
  %v8737 = vpop.f32.mrb[0].mxu0
  %v8738 = vadd.f32 0.0, %v8737
  %v8739 = vpop.f32.mrb[0].mxu0
  %8740 = vmatprep.mubr.f32.mxu0 0.0
  %8741 = vmatmul.mubr.f32.gmra.mrb[0].mxu0 %v8553
  %v8742 = vpop.f32.mrb[0].mxu0
  %v8743 = vadd.f32 0.0, %v8742
  %v8744 = vpop.f32.mrb[0].mxu0
  %8745 = vmatprep.mubr.f32.mxu0 0.0
  %8746 = vmatmul.mubr.f32.gmra.mrb[0].mxu0 %v8556
  %v8747 = vpop.f32.mrb[0].mxu0
  %v8748 = vadd.f32 0.0, %v8747
  %v8749 = vpop.f32.mrb[0].mxu0
  %8750 = vmatprep.mubr.f32.mxu0 0.0
  %8751 = vmatmul.mubr.f32.gmra.mrb[0].mxu0 %v8559
  %v8752 = vpop.f32.mrb[0].mxu0
  %v8753 = vadd.f32 0.0, %v8752
  %v8754 = vpop.f32.mrb[0].mxu0
  %8755 = vmatprep.mubr.f32.mxu0 0.0
  %8756 = vmatmul.mubr.f32.gmra.mrb[0].mxu0 %v8562
  %v8757 = vpop.f32.mrb[0].mxu0
  %v8758 = vadd.f32 0.0, %v8757
  %v8759 = vpop.f32.mrb[0].mxu0
  %8760 = vmatprep.mubr.f32.mxu0 0.0
  %8761 = vmatmul.mubr.f32.gmra.mrb[0].mxu0 %v8565
  %v8762 = vpop.f32.mrb[0].mxu0
  %v8763 = vadd.f32 0.0, %v8762
  %v8764 = vpop.f32.mrb[0].mxu0
  %8765 = vmatprep.mubr.f32.mxu0 0.0
  %8766 = vmatmul.mubr.f32.gmra.mrb[0].mxu0 %v8568
  %v8767 = vpop.f32.mrb[0].mxu0
  %v8768 = vadd.f32 0.0, %v8767
  %v8769 = vpop.f32.mrb[0].mxu0
  %8770 = vmatprep.mubr.f32.mxu0 0.0
  %8771 = vmatmul.mubr.f32.gmra.mrb[0].mxu0 %v8571
  %v8772 = vpop.f32.mrb[0].mxu0
  %v8773 = vadd.f32 0.0, %v8772
  %v8774 = vpop.f32.mrb[0].mxu0
  %8775 = vmatprep.mubr.f32.mxu0 0.0
  %8776 = vmatmul.mubr.f32.gmra.mrb[0].mxu0 %v8574
  %v8777 = vpop.f32.mrb[0].mxu0
  %v8778 = vadd.f32 0.0, %v8777
  %v8779 = vpop.f32.mrb[0].mxu0
  %8780 = vmatprep.mubr.f32.mxu0 0.0
  %8781 = vmatmul.mubr.f32.gmra.mrb[0].mxu0 %v8577
  %v8782 = vpop.f32.mrb[0].mxu0
  %v8783 = vadd.f32 0.0, %v8782
  %v8784 = vpop.f32.mrb[0].mxu0
  %8785 = vmatprep.mubr.f32.mxu0 0.0
  %8786 = vmatmul.mubr.f32.gmra.mrb[0].mxu0 %v8580
  %v8787 = vpop.f32.mrb[0].mxu0
  %v8788 = vadd.f32 0.0, %v8787
  %v8789 = vpop.f32.mrb[0].mxu0
  %8790 = vmatprep.mubr.f32.mxu0 0.0
  %8791 = vmatmul.mubr.f32.gmra.mrb[0].mxu0 %v8583
  %v8792 = vpop.f32.mrb[0].mxu0
  %v8793 = vadd.f32 0.0, %v8792
  %v8794 = vpop.f32.mrb[0].mxu0
  %8795 = vmatprep.mubr.f32.mxu0 0.0
  %8796 = vmatmul.mubr.f32.gmra.mrb[0].mxu0 %v8586
  %v8797 = vpop.f32.mrb[0].mxu0
  %v8798 = vadd.f32 0.0, %v8797
  %v8799 = vpop.f32.mrb[0].mxu0
  %8800 = vmatprep.mubr.f32.mxu0 0.0
  %8801 = vmatmul.mubr.f32.gmra.mrb[0].mxu0 %v8589
  %v8802 = vpop.f32.mrb[0].mxu0
  %v8803 = vadd.f32 0.0, %v8802
  %v8804 = vpop.f32.mrb[0].mxu0
  %8805 = vmatprep.mubr.f32.mxu0 0.0
  %8806 = vmatmul.mubr.f32.gmra.mrb[0].mxu0 %v8592
  %v8807 = vpop.f32.mrb[0].mxu0
  %v8808 = vadd.f32 0.0, %v8807
  %v8809 = vpop.f32.mrb[0].mxu0
  %8810 = vmatprep.mubr.f32.mxu0 0.0
  %8811 = vmatmul.mubr.f32.gmra.mrb[0].mxu0 %v8595
  %v8812 = vpop.f32.mrb[0].mxu0
  %v8813 = vadd.f32 0.0, %v8812
  %v8814 = vpop.f32.mrb[0].mxu0
  %8815 = vmatprep.mubr.f32.mxu0 0.0
  %8816 = vmatmul.mubr.f32.gmra.mrb[0].mxu0 %v8598
  %v8817 = vpop.f32.mrb[0].mxu0
  %v8818 = vadd.f32 0.0, %v8817
  %v8819 = vpop.f32.mrb[0].mxu0
  %8820 = vmatprep.mubr.f32.mxu0 0.0
  %8821 = vmatmul.mubr.f32.gmra.mrb[0].mxu0 %v8601
  %v8822 = vpop.f32.mrb[0].mxu0
  %v8823 = vadd.f32 0.0, %v8822
  %v8824 = vpop.f32.mrb[0].mxu0
  %8825 = vmatprep.mubr.f32.mxu0 0.0
  %8826 = vmatmul.mubr.f32.gmra.mrb[0].mxu0 %v8604
  %v8827 = vpop.f32.mrb[0].mxu0
  %v8828 = vadd.f32 0.0, %v8827
  %v8829 = vpop.f32.mrb[0].mxu0
  %8830 = vdwg.mxu0
  %8831 = vst.msk [vmem:[%s4220] sm:$0xff] %vm1492, %v8673
  %8832 = vst.msk [vmem:[%s4220 + $0x8] sm:$0xff] %vm1492, %v8678
  %8833 = vst.msk [vmem:[%s4220 + $0x10] sm:$0xff] %vm1492, %v8683
  %8834 = vst.msk [vmem:[%s4220 + $0x18] sm:$0xff] %vm1492, %v8688
  %8835 = vst.msk [vmem:[%s4220 + $0x20] sm:$0xff] %vm1492, %v8693
  %8836 = vst.msk [vmem:[%s4220 + $0x28] sm:$0xff] %vm1492, %v8698
  %8837 = vst.msk [vmem:[%s4220 + $0x30] sm:$0xff] %vm1492, %v8703
  %8838 = vst.msk [vmem:[%s4220 + $0x38] sm:$0xff] %vm1492, %v8708
  %8839 = vst.msk [vmem:[%s4220 + $0x40] sm:$0xff] %vm1492, %v8713
  %8840 = vst.msk [vmem:[%s4220 + $0x48] sm:$0xff] %vm1492, %v8718
  %8841 = vst.msk [vmem:[%s4220 + $0x50] sm:$0xff] %vm1492, %v8723
  %8842 = vst.msk [vmem:[%s4220 + $0x58] sm:$0xff] %vm1492, %v8728
  %8843 = vst.msk [vmem:[%s4220 + $0x60] sm:$0xff] %vm1492, %v8733
  %8844 = vst.msk [vmem:[%s4220 + $0x68] sm:$0xff] %vm1492, %v8738
  %8845 = vst.msk [vmem:[%s4220 + $0x70] sm:$0xff] %vm1492, %v8743
  %8846 = vst.msk [vmem:[%s4220 + $0x78] sm:$0xff] %vm1492, %v8748
  %8847 = vst.msk [vmem:[%s4220 + $0x80] sm:$0xff] %vm1492, %v8753
  %8848 = vst.msk [vmem:[%s4220 + $0x88] sm:$0xff] %vm1492, %v8758
  %8849 = vst.msk [vmem:[%s4220 + $0x90] sm:$0xff] %vm1492, %v8763
  %8850 = vst.msk [vmem:[%s4220 + $0x98] sm:$0xff] %vm1492, %v8768
  %8851 = vst.msk [vmem:[%s4220 + $0xa0] sm:$0xff] %vm1492, %v8773
  %8852 = vst.msk [vmem:[%s4220 + $0xa8] sm:$0xff] %vm1492, %v8778
  %8853 = vst.msk [vmem:[%s4220 + $0xb0] sm:$0xff] %vm1492, %v8783
  %8854 = vst.msk [vmem:[%s4220 + $0xb8] sm:$0xff] %vm1492, %v8788
  %8855 = vst.msk [vmem:[%s4220 + $0xc0] sm:$0xff] %vm1492, %v8793
  %8856 = vst.msk [vmem:[%s4220 + $0xc8] sm:$0xff] %vm1492, %v8798
  %8857 = vst.msk [vmem:[%s4220 + $0xd0] sm:$0xff] %vm1492, %v8803
  %8858 = vst.msk [vmem:[%s4220 + $0xd8] sm:$0xff] %vm1492, %v8808
  %8859 = vst.msk [vmem:[%s4220 + $0xe0] sm:$0xff] %vm1492, %v8813
  %8860 = vst.msk [vmem:[%s4220 + $0xe8] sm:$0xff] %vm1492, %v8818
  %8861 = vst.msk [vmem:[%s4220 + $0xf0] sm:$0xff] %vm1492, %v8823
  %8862 = vst.msk [vmem:[%s4220 + $0xf8] sm:$0xff] %vm1492, %v8828
  %v8863 = vsel %vm1492, %v8673, 0.0
  %v8864 = vsel %vm1492, %v8678, 0.0
  %v8865 = vadd.f32 %v8863, %v8864
  %v8866 = vsel %vm1492, %v8683, 0.0
  %v8867 = vadd.f32 %v8865, %v8866
  %v8868 = vsel %vm1492, %v8688, 0.0
  %v8869 = vadd.f32 %v8867, %v8868
  %v8870 = vsel %vm1492, %v8693, 0.0
  %v8871 = vadd.f32 %v8869, %v8870
  %v8872 = vsel %vm1492, %v8698, 0.0
  %v8873 = vadd.f32 %v8871, %v8872
  %v8874 = vsel %vm1492, %v8703, 0.0
  %v8875 = vadd.f32 %v8873, %v8874
  %v8876 = vsel %vm1492, %v8708, 0.0
  %v8877 = vadd.f32 %v8875, %v8876
  %v8878 = vsel %vm1492, %v8713, 0.0
  %v8879 = vadd.f32 %v8877, %v8878
  %v8880 = vsel %vm1492, %v8718, 0.0
  %v8881 = vadd.f32 %v8879, %v8880
  %v8882 = vsel %vm1492, %v8723, 0.0
  %v8883 = vadd.f32 %v8881, %v8882
  %v8884 = vsel %vm1492, %v8728, 0.0
  %v8885 = vadd.f32 %v8883, %v8884
  %v8886 = vsel %vm1492, %v8733, 0.0
  %v8887 = vadd.f32 %v8885, %v8886
  %v8888 = vsel %vm1492, %v8738, 0.0
  %v8889 = vadd.f32 %v8887, %v8888
  %v8890 = vsel %vm1492, %v8743, 0.0
  %v8891 = vadd.f32 %v8889, %v8890
  %v8892 = vsel %vm1492, %v8748, 0.0
  %v8893 = vadd.f32 %v8891, %v8892
  %v8894 = vsel %vm1492, %v8753, 0.0
  %v8895 = vadd.f32 %v8893, %v8894
  %v8896 = vsel %vm1492, %v8758, 0.0
  %v8897 = vadd.f32 %v8895, %v8896
  %v8898 = vsel %vm1492, %v8763, 0.0
  %v8899 = vadd.f32 %v8897, %v8898
  %v8900 = vsel %vm1492, %v8768, 0.0
  %v8901 = vadd.f32 %v8899, %v8900
  %v8902 = vsel %vm1492, %v8773, 0.0
  %v8903 = vadd.f32 %v8901, %v8902
  %v8904 = vsel %vm1492, %v8778, 0.0
  %v8905 = vadd.f32 %v8903, %v8904
  %v8906 = vsel %vm1492, %v8783, 0.0
  %v8907 = vadd.f32 %v8905, %v8906
  %v8908 = vsel %vm1492, %v8788, 0.0
  %v8909 = vadd.f32 %v8907, %v8908
  %v8910 = vsel %vm1492, %v8793, 0.0
  %v8911 = vadd.f32 %v8909, %v8910
  %v8912 = vsel %vm1492, %v8798, 0.0
  %v8913 = vadd.f32 %v8911, %v8912
  %v8914 = vsel %vm1492, %v8803, 0.0
  %v8915 = vadd.f32 %v8913, %v8914
  %v8916 = vsel %vm1492, %v8808, 0.0
  %v8917 = vadd.f32 %v8915, %v8916
  %v8918 = vsel %vm1492, %v8813, 0.0
  %v8919 = vadd.f32 %v8917, %v8918
  %v8920 = vsel %vm1492, %v8818, 0.0
  %v8921 = vadd.f32 %v8919, %v8920
  %v8922 = vsel %vm1492, %v8823, 0.0
  %v8923 = vadd.f32 %v8921, %v8922
  %v8924 = vsel %vm1492, %v8828, 0.0
  %v8925 = vadd.f32 %v8923, %v8924
  %v8926 = vrot.slane %v8925, 4
  %v8927 = vadd.f32 %v8925, %v8926
  %v8928 = vrot.slane %v8927, 2
  %v8929 = vadd.f32 %v8927, %v8928
  %v8930 = vrot.slane %v8929, 1
  %v8931 = vadd.f32 %v8929, %v8930
  %v8932 = vadd.f32 %v6670, %v8931
  %v8933 = vmul.f32 %v8673, %v8673
  %v8934 = vmul.f32 %v8678, %v8678
  %v8935 = vmul.f32 %v8683, %v8683
  %v8936 = vmul.f32 %v8688, %v8688
  %v8937 = vmul.f32 %v8693, %v8693
  %v8938 = vmul.f32 %v8698, %v8698
  %v8939 = vmul.f32 %v8703, %v8703
  %v8940 = vmul.f32 %v8708, %v8708
  %v8941 = vmul.f32 %v8713, %v8713
  %v8942 = vmul.f32 %v8718, %v8718
  %v8943 = vmul.f32 %v8723, %v8723
  %v8944 = vmul.f32 %v8728, %v8728
  %v8945 = vmul.f32 %v8733, %v8733
  %v8946 = vmul.f32 %v8738, %v8738
  %v8947 = vmul.f32 %v8743, %v8743
  %v8948 = vmul.f32 %v8748, %v8748
  %v8949 = vmul.f32 %v8753, %v8753
  %v8950 = vmul.f32 %v8758, %v8758
  %v8951 = vmul.f32 %v8763, %v8763
  %v8952 = vmul.f32 %v8768, %v8768
  %v8953 = vmul.f32 %v8773, %v8773
  %v8954 = vmul.f32 %v8778, %v8778
  %v8955 = vmul.f32 %v8783, %v8783
  %v8956 = vmul.f32 %v8788, %v8788
  %v8957 = vmul.f32 %v8793, %v8793
  %v8958 = vmul.f32 %v8798, %v8798
  %v8959 = vmul.f32 %v8803, %v8803
  %v8960 = vmul.f32 %v8808, %v8808
  %v8961 = vmul.f32 %v8813, %v8813
  %v8962 = vmul.f32 %v8818, %v8818
  %v8963 = vmul.f32 %v8823, %v8823
  %v8964 = vmul.f32 %v8828, %v8828
  %v8965 = vsel %vm1492, %v8933, 0.0
  %v8966 = vsel %vm1492, %v8934, 0.0
  %v8967 = vadd.f32 %v8965, %v8966
  %v8968 = vsel %vm1492, %v8935, 0.0
  %v8969 = vadd.f32 %v8967, %v8968
  %v8970 = vsel %vm1492, %v8936, 0.0
  %v8971 = vadd.f32 %v8969, %v8970
  %v8972 = vsel %vm1492, %v8937, 0.0
  %v8973 = vadd.f32 %v8971, %v8972
  %v8974 = vsel %vm1492, %v8938, 0.0
  %v8975 = vadd.f32 %v8973, %v8974
  %v8976 = vsel %vm1492, %v8939, 0.0
  %v8977 = vadd.f32 %v8975, %v8976
  %v8978 = vsel %vm1492, %v8940, 0.0
  %v8979 = vadd.f32 %v8977, %v8978
  %v8980 = vsel %vm1492, %v8941, 0.0
  %v8981 = vadd.f32 %v8979, %v8980
  %v8982 = vsel %vm1492, %v8942, 0.0
  %v8983 = vadd.f32 %v8981, %v8982
  %v8984 = vsel %vm1492, %v8943, 0.0
  %v8985 = vadd.f32 %v8983, %v8984
  %v8986 = vsel %vm1492, %v8944, 0.0
  %v8987 = vadd.f32 %v8985, %v8986
  %v8988 = vsel %vm1492, %v8945, 0.0
  %v8989 = vadd.f32 %v8987, %v8988
  %v8990 = vsel %vm1492, %v8946, 0.0
  %v8991 = vadd.f32 %v8989, %v8990
  %v8992 = vsel %vm1492, %v8947, 0.0
  %v8993 = vadd.f32 %v8991, %v8992
  %v8994 = vsel %vm1492, %v8948, 0.0
  %v8995 = vadd.f32 %v8993, %v8994
  %v8996 = vsel %vm1492, %v8949, 0.0
  %v8997 = vadd.f32 %v8995, %v8996
  %v8998 = vsel %vm1492, %v8950, 0.0
  %v8999 = vadd.f32 %v8997, %v8998
  %v9000 = vsel %vm1492, %v8951, 0.0
  %v9001 = vadd.f32 %v8999, %v9000
  %v9002 = vsel %vm1492, %v8952, 0.0
  %v9003 = vadd.f32 %v9001, %v9002
  %v9004 = vsel %vm1492, %v8953, 0.0
  %v9005 = vadd.f32 %v9003, %v9004
  %v9006 = vsel %vm1492, %v8954, 0.0
  %v9007 = vadd.f32 %v9005, %v9006
  %v9008 = vsel %vm1492, %v8955, 0.0
  %v9009 = vadd.f32 %v9007, %v9008
  %v9010 = vsel %vm1492, %v8956, 0.0
  %v9011 = vadd.f32 %v9009, %v9010
  %v9012 = vsel %vm1492, %v8957, 0.0
  %v9013 = vadd.f32 %v9011, %v9012
  %v9014 = vsel %vm1492, %v8958, 0.0
  %v9015 = vadd.f32 %v9013, %v9014
  %v9016 = vsel %vm1492, %v8959, 0.0
  %v9017 = vadd.f32 %v9015, %v9016
  %v9018 = vsel %vm1492, %v8960, 0.0
  %v9019 = vadd.f32 %v9017, %v9018
  %v9020 = vsel %vm1492, %v8961, 0.0
  %v9021 = vadd.f32 %v9019, %v9020
  %v9022 = vsel %vm1492, %v8962, 0.0
  %v9023 = vadd.f32 %v9021, %v9022
  %v9024 = vsel %vm1492, %v8963, 0.0
  %v9025 = vadd.f32 %v9023, %v9024
  %v9026 = vsel %vm1492, %v8964, 0.0
  %v9027 = vadd.f32 %v9025, %v9026
  %v9028 = vrot.slane %v9027, 4
  %v9029 = vadd.f32 %v9027, %v9028
  %v9030 = vrot.slane %v9029, 2
  %v9031 = vadd.f32 %v9029, %v9030
  %v9032 = vrot.slane %v9031, 1
  %v9033 = vadd.f32 %v9031, %v9032
  %v9034 = vadd.f32 %v6772, %v9033
  %v9035 = vld [vmem:[%s5] sm:$0x1]
  %v9036 = vld [vmem:[%s6] sm:$0x1]
  %v9037 = vmul.f32 %v8932, 0.001953125
  %v9038 = vmul.f32 %v9034, 0.001953125
  %v9039 = vmul.f32 %v9037, %v9037
  %v9040 = vsub.f32 %v9038, %v9039
  %v9041 = vmax.f32 %v9040, 0.0
  %v9042 = vadd.f32 %v9041, 1e-05
  %v9043 = vrsqrt.pop %v9042
  %v9044 = vmul.f32 %v9035, %v9043
  %v9045 = vmul.f32 %v9037, %v9044
  %v9046 = vsub.f32 %v9036, %v9045
  %v9047 = vld [vmem:[#allocation4] sm:$0xff]
  %v9048 = vld [vmem:[#allocation4 + $0x8] sm:$0xff]
  %v9049 = vld [vmem:[#allocation4 + $0x10] sm:$0xff]
  %v9050 = vld [vmem:[#allocation4 + $0x18] sm:$0xff]
  %v9051 = vld [vmem:[#allocation4 + $0x20] sm:$0xff]
  %v9052 = vld [vmem:[#allocation4 + $0x28] sm:$0xff]
  %v9053 = vld [vmem:[#allocation4 + $0x30] sm:$0xff]
  %v9054 = vld [vmem:[#allocation4 + $0x38] sm:$0xff]
  %v9055 = vld [vmem:[#allocation4 + $0x40] sm:$0xff]
  %v9056 = vld [vmem:[#allocation4 + $0x48] sm:$0xff]
  %v9057 = vld [vmem:[#allocation4 + $0x50] sm:$0xff]
  %v9058 = vld [vmem:[#allocation4 + $0x58] sm:$0xff]
  %v9059 = vld [vmem:[#allocation4 + $0x60] sm:$0xff]
  %v9060 = vld [vmem:[#allocation4 + $0x68] sm:$0xff]
  %v9061 = vld [vmem:[#allocation4 + $0x70] sm:$0xff]
  %v9062 = vld [vmem:[#allocation4 + $0x78] sm:$0xff]
  %v9063 = vld [vmem:[#allocation4 + $0x80] sm:$0xff]
  %v9064 = vld [vmem:[#allocation4 + $0x88] sm:$0xff]
  %v9065 = vld [vmem:[#allocation4 + $0x90] sm:$0xff]
  %v9066 = vld [vmem:[#allocation4 + $0x98] sm:$0xff]
  %v9067 = vld [vmem:[#allocation4 + $0xa0] sm:$0xff]
  %v9068 = vld [vmem:[#allocation4 + $0xa8] sm:$0xff]
  %v9069 = vld [vmem:[#allocation4 + $0xb0] sm:$0xff]
  %v9070 = vld [vmem:[#allocation4 + $0xb8] sm:$0xff]
  %v9071 = vld [vmem:[#allocation4 + $0xc0] sm:$0xff]
  %v9072 = vld [vmem:[#allocation4 + $0xc8] sm:$0xff]
  %v9073 = vld [vmem:[#allocation4 + $0xd0] sm:$0xff]
  %v9074 = vld [vmem:[#allocation4 + $0xd8] sm:$0xff]
  %v9075 = vld [vmem:[#allocation4 + $0xe0] sm:$0xff]
  %v9076 = vld [vmem:[#allocation4 + $0xe8] sm:$0xff]
  %v9077 = vld [vmem:[#allocation4 + $0xf0] sm:$0xff]
  %v9078 = vld [vmem:[#allocation4 + $0xf8] sm:$0xff]
  %v9080 = vlaneseq
  %v9081 = vshrl.u32 %v9080, 7
  %v9082 = vsub.s32 0, %v9081
  %v9083 = vrot.slane %v9044, %v9082
  %v9085 = vmul.f32 %v9047, %v9083
  %v9086 = vmul.f32 %v9048, %v9083
  %v9087 = vmul.f32 %v9049, %v9083
  %v9088 = vmul.f32 %v9050, %v9083
  %v9089 = vmul.f32 %v9051, %v9083
  %v9090 = vmul.f32 %v9052, %v9083
  %v9091 = vmul.f32 %v9053, %v9083
  %v9092 = vmul.f32 %v9054, %v9083
  %v9093 = vmul.f32 %v9055, %v9083
  %v9094 = vmul.f32 %v9056, %v9083
  %v9095 = vmul.f32 %v9057, %v9083
  %v9096 = vmul.f32 %v9058, %v9083
  %v9097 = vmul.f32 %v9059, %v9083
  %v9098 = vmul.f32 %v9060, %v9083
  %v9099 = vmul.f32 %v9061, %v9083
  %v9100 = vmul.f32 %v9062, %v9083
  %v9101 = vmul.f32 %v9063, %v9083
  %v9102 = vmul.f32 %v9064, %v9083
  %v9103 = vmul.f32 %v9065, %v9083
  %v9104 = vmul.f32 %v9066, %v9083
  %v9105 = vmul.f32 %v9067, %v9083
  %v9106 = vmul.f32 %v9068, %v9083
  %v9107 = vmul.f32 %v9069, %v9083
  %v9108 = vmul.f32 %v9070, %v9083
  %v9109 = vmul.f32 %v9071, %v9083
  %v9110 = vmul.f32 %v9072, %v9083
  %v9111 = vmul.f32 %v9073, %v9083
  %v9112 = vmul.f32 %v9074, %v9083
  %v9113 = vmul.f32 %v9075, %v9083
  %v9114 = vmul.f32 %v9076, %v9083
  %v9115 = vmul.f32 %v9077, %v9083
  %v9116 = vmul.f32 %v9078, %v9083
  %v9118 = vlaneseq
  %v9119 = vshrl.u32 %v9118, 7
  %v9120 = vsub.s32 0, %v9119
  %v9121 = vrot.slane %v9046, %v9120
  %v9123 = vadd.f32 %v9085, %v9121
  %v9124 = vadd.f32 %v9086, %v9121
  %v9125 = vadd.f32 %v9087, %v9121
  %v9126 = vadd.f32 %v9088, %v9121
  %v9127 = vadd.f32 %v9089, %v9121
  %v9128 = vadd.f32 %v9090, %v9121
  %v9129 = vadd.f32 %v9091, %v9121
  %v9130 = vadd.f32 %v9092, %v9121
  %v9131 = vadd.f32 %v9093, %v9121
  %v9132 = vadd.f32 %v9094, %v9121
  %v9133 = vadd.f32 %v9095, %v9121
  %v9134 = vadd.f32 %v9096, %v9121
  %v9135 = vadd.f32 %v9097, %v9121
  %v9136 = vadd.f32 %v9098, %v9121
  %v9137 = vadd.f32 %v9099, %v9121
  %v9138 = vadd.f32 %v9100, %v9121
  %v9139 = vadd.f32 %v9101, %v9121
  %v9140 = vadd.f32 %v9102, %v9121
  %v9141 = vadd.f32 %v9103, %v9121
  %v9142 = vadd.f32 %v9104, %v9121
  %v9143 = vadd.f32 %v9105, %v9121
  %v9144 = vadd.f32 %v9106, %v9121
  %v9145 = vadd.f32 %v9107, %v9121
  %v9146 = vadd.f32 %v9108, %v9121
  %v9147 = vadd.f32 %v9109, %v9121
  %v9148 = vadd.f32 %v9110, %v9121
  %v9149 = vadd.f32 %v9111, %v9121
  %v9150 = vadd.f32 %v9112, %v9121
  %v9151 = vadd.f32 %v9113, %v9121
  %v9152 = vadd.f32 %v9114, %v9121
  %v9153 = vadd.f32 %v9115, %v9121
  %v9154 = vadd.f32 %v9116, %v9121
  %v9155 = vmax.f32 %v9123, 0.0
  %v9156 = vmax.f32 %v9124, 0.0
  %v9157 = vmax.f32 %v9125, 0.0
  %v9158 = vmax.f32 %v9126, 0.0
  %v9159 = vmax.f32 %v9127, 0.0
  %v9160 = vmax.f32 %v9128, 0.0
  %v9161 = vmax.f32 %v9129, 0.0
  %v9162 = vmax.f32 %v9130, 0.0
  %v9163 = vmax.f32 %v9131, 0.0
  %v9164 = vmax.f32 %v9132, 0.0
  %v9165 = vmax.f32 %v9133, 0.0
  %v9166 = vmax.f32 %v9134, 0.0
  %v9167 = vmax.f32 %v9135, 0.0
  %v9168 = vmax.f32 %v9136, 0.0
  %v9169 = vmax.f32 %v9137, 0.0
  %v9170 = vmax.f32 %v9138, 0.0
  %v9171 = vmax.f32 %v9139, 0.0
  %v9172 = vmax.f32 %v9140, 0.0
  %v9173 = vmax.f32 %v9141, 0.0
  %v9174 = vmax.f32 %v9142, 0.0
  %v9175 = vmax.f32 %v9143, 0.0
  %v9176 = vmax.f32 %v9144, 0.0
  %v9177 = vmax.f32 %v9145, 0.0
  %v9178 = vmax.f32 %v9146, 0.0
  %v9179 = vmax.f32 %v9147, 0.0
  %v9180 = vmax.f32 %v9148, 0.0
  %v9181 = vmax.f32 %v9149, 0.0
  %v9182 = vmax.f32 %v9150, 0.0
  %v9183 = vmax.f32 %v9151, 0.0
  %v9184 = vmax.f32 %v9152, 0.0
  %v9185 = vmax.f32 %v9153, 0.0
  %v9186 = vmax.f32 %v9154, 0.0
  %9187 = vst.msk [vmem:[%s7] sm:$0xff] %vm1492, %v9155
  %9188 = vst.msk [vmem:[%s7 + $0x8] sm:$0xff] %vm1492, %v9156
  %9189 = vst.msk [vmem:[%s7 + $0x10] sm:$0xff] %vm1492, %v9157
  %9190 = vst.msk [vmem:[%s7 + $0x18] sm:$0xff] %vm1492, %v9158
  %9191 = vst.msk [vmem:[%s7 + $0x20] sm:$0xff] %vm1492, %v9159
  %9192 = vst.msk [vmem:[%s7 + $0x28] sm:$0xff] %vm1492, %v9160
  %9193 = vst.msk [vmem:[%s7 + $0x30] sm:$0xff] %vm1492, %v9161
  %9194 = vst.msk [vmem:[%s7 + $0x38] sm:$0xff] %vm1492, %v9162
  %9195 = vst.msk [vmem:[%s7 + $0x40] sm:$0xff] %vm1492, %v9163
  %9196 = vst.msk [vmem:[%s7 + $0x48] sm:$0xff] %vm1492, %v9164
  %9197 = vst.msk [vmem:[%s7 + $0x50] sm:$0xff] %vm1492, %v9165
  %9198 = vst.msk [vmem:[%s7 + $0x58] sm:$0xff] %vm1492, %v9166
  %9199 = vst.msk [vmem:[%s7 + $0x60] sm:$0xff] %vm1492, %v9167
  %9200 = vst.msk [vmem:[%s7 + $0x68] sm:$0xff] %vm1492, %v9168
  %9201 = vst.msk [vmem:[%s7 + $0x70] sm:$0xff] %vm1492, %v9169
  %9202 = vst.msk [vmem:[%s7 + $0x78] sm:$0xff] %vm1492, %v9170
  %9203 = vst.msk [vmem:[%s7 + $0x80] sm:$0xff] %vm1492, %v9171
  %9204 = vst.msk [vmem:[%s7 + $0x88] sm:$0xff] %vm1492, %v9172
  %9205 = vst.msk [vmem:[%s7 + $0x90] sm:$0xff] %vm1492, %v9173
  %9206 = vst.msk [vmem:[%s7 + $0x98] sm:$0xff] %vm1492, %v9174
  %9207 = vst.msk [vmem:[%s7 + $0xa0] sm:$0xff] %vm1492, %v9175
  %9208 = vst.msk [vmem:[%s7 + $0xa8] sm:$0xff] %vm1492, %v9176
  %9209 = vst.msk [vmem:[%s7 + $0xb0] sm:$0xff] %vm1492, %v9177
  %9210 = vst.msk [vmem:[%s7 + $0xb8] sm:$0xff] %vm1492, %v9178
  %9211 = vst.msk [vmem:[%s7 + $0xc0] sm:$0xff] %vm1492, %v9179
  %9212 = vst.msk [vmem:[%s7 + $0xc8] sm:$0xff] %vm1492, %v9180
  %9213 = vst.msk [vmem:[%s7 + $0xd0] sm:$0xff] %vm1492, %v9181
  %9214 = vst.msk [vmem:[%s7 + $0xd8] sm:$0xff] %vm1492, %v9182
  %9215 = vst.msk [vmem:[%s7 + $0xe0] sm:$0xff] %vm1492, %v9183
  %9216 = vst.msk [vmem:[%s7 + $0xe8] sm:$0xff] %vm1492, %v9184
  %9217 = vst.msk [vmem:[%s7 + $0xf0] sm:$0xff] %vm1492, %v9185
  %9218 = vst.msk [vmem:[%s7 + $0xf8] sm:$0xff] %vm1492, %v9186
  %v9219 = vld [vmem:[%s4220] sm:$0xff]
  %v9220 = vld [vmem:[%s4220 + $0x8] sm:$0xff]
  %v9221 = vld [vmem:[%s4220 + $0x10] sm:$0xff]
  %v9222 = vld [vmem:[%s4220 + $0x18] sm:$0xff]
  %v9223 = vld [vmem:[%s4220 + $0x20] sm:$0xff]
  %v9224 = vld [vmem:[%s4220 + $0x28] sm:$0xff]
  %v9225 = vld [vmem:[%s4220 + $0x30] sm:$0xff]
  %v9226 = vld [vmem:[%s4220 + $0x38] sm:$0xff]
  %v9227 = vld [vmem:[%s4220 + $0x40] sm:$0xff]
  %v9228 = vld [vmem:[%s4220 + $0x48] sm:$0xff]
  %v9229 = vld [vmem:[%s4220 + $0x50] sm:$0xff]
  %v9230 = vld [vmem:[%s4220 + $0x58] sm:$0xff]
  %v9231 = vld [vmem:[%s4220 + $0x60] sm:$0xff]
  %v9232 = vld [vmem:[%s4220 + $0x68] sm:$0xff]
  %v9233 = vld [vmem:[%s4220 + $0x70] sm:$0xff]
  %v9234 = vld [vmem:[%s4220 + $0x78] sm:$0xff]
  %v9235 = vld [vmem:[%s4220 + $0x80] sm:$0xff]
  %v9236 = vld [vmem:[%s4220 + $0x88] sm:$0xff]
  %v9237 = vld [vmem:[%s4220 + $0x90] sm:$0xff]
  %v9238 = vld [vmem:[%s4220 + $0x98] sm:$0xff]
  %v9239 = vld [vmem:[%s4220 + $0xa0] sm:$0xff]
  %v9240 = vld [vmem:[%s4220 + $0xa8] sm:$0xff]
  %v9241 = vld [vmem:[%s4220 + $0xb0] sm:$0xff]
  %v9242 = vld [vmem:[%s4220 + $0xb8] sm:$0xff]
  %v9243 = vld [vmem:[%s4220 + $0xc0] sm:$0xff]
  %v9244 = vld [vmem:[%s4220 + $0xc8] sm:$0xff]
  %v9245 = vld [vmem:[%s4220 + $0xd0] sm:$0xff]
  %v9246 = vld [vmem:[%s4220 + $0xd8] sm:$0xff]
  %v9247 = vld [vmem:[%s4220 + $0xe0] sm:$0xff]
  %v9248 = vld [vmem:[%s4220 + $0xe8] sm:$0xff]
  %v9249 = vld [vmem:[%s4220 + $0xf0] sm:$0xff]
  %v9250 = vld [vmem:[%s4220 + $0xf8] sm:$0xff]
  %v9251 = vmul.f32 %v9219, %v9083
  %v9252 = vmul.f32 %v9220, %v9083
  %v9253 = vmul.f32 %v9221, %v9083
  %v9254 = vmul.f32 %v9222, %v9083
  %v9255 = vmul.f32 %v9223, %v9083
  %v9256 = vmul.f32 %v9224, %v9083
  %v9257 = vmul.f32 %v9225, %v9083
  %v9258 = vmul.f32 %v9226, %v9083
  %v9259 = vmul.f32 %v9227, %v9083
  %v9260 = vmul.f32 %v9228, %v9083
  %v9261 = vmul.f32 %v9229, %v9083
  %v9262 = vmul.f32 %v9230, %v9083
  %v9263 = vmul.f32 %v9231, %v9083
  %v9264 = vmul.f32 %v9232, %v9083
  %v9265 = vmul.f32 %v9233, %v9083
  %v9266 = vmul.f32 %v9234, %v9083
  %v9267 = vmul.f32 %v9235, %v9083
  %v9268 = vmul.f32 %v9236, %v9083
  %v9269 = vmul.f32 %v9237, %v9083
  %v9270 = vmul.f32 %v9238, %v9083
  %v9271 = vmul.f32 %v9239, %v9083
  %v9272 = vmul.f32 %v9240, %v9083
  %v9273 = vmul.f32 %v9241, %v9083
  %v9274 = vmul.f32 %v9242, %v9083
  %v9275 = vmul.f32 %v9243, %v9083
  %v9276 = vmul.f32 %v9244, %v9083
  %v9277 = vmul.f32 %v9245, %v9083
  %v9278 = vmul.f32 %v9246, %v9083
  %v9279 = vmul.f32 %v9247, %v9083
  %v9280 = vmul.f32 %v9248, %v9083
  %v9281 = vmul.f32 %v9249, %v9083
  %v9282 = vmul.f32 %v9250, %v9083
  %v9283 = vadd.f32 %v9251, %v9121
  %v9284 = vadd.f32 %v9252, %v9121
  %v9285 = vadd.f32 %v9253, %v9121
  %v9286 = vadd.f32 %v9254, %v9121
  %v9287 = vadd.f32 %v9255, %v9121
  %v9288 = vadd.f32 %v9256, %v9121
  %v9289 = vadd.f32 %v9257, %v9121
  %v9290 = vadd.f32 %v9258, %v9121
  %v9291 = vadd.f32 %v9259, %v9121
  %v9292 = vadd.f32 %v9260, %v9121
  %v9293 = vadd.f32 %v9261, %v9121
  %v9294 = vadd.f32 %v9262, %v9121
  %v9295 = vadd.f32 %v9263, %v9121
  %v9296 = vadd.f32 %v9264, %v9121
  %v9297 = vadd.f32 %v9265, %v9121
  %v9298 = vadd.f32 %v9266, %v9121
  %v9299 = vadd.f32 %v9267, %v9121
  %v9300 = vadd.f32 %v9268, %v9121
  %v9301 = vadd.f32 %v9269, %v9121
  %v9302 = vadd.f32 %v9270, %v9121
  %v9303 = vadd.f32 %v9271, %v9121
  %v9304 = vadd.f32 %v9272, %v9121
  %v9305 = vadd.f32 %v9273, %v9121
  %v9306 = vadd.f32 %v9274, %v9121
  %v9307 = vadd.f32 %v9275, %v9121
  %v9308 = vadd.f32 %v9276, %v9121
  %v9309 = vadd.f32 %v9277, %v9121
  %v9310 = vadd.f32 %v9278, %v9121
  %v9311 = vadd.f32 %v9279, %v9121
  %v9312 = vadd.f32 %v9280, %v9121
  %v9313 = vadd.f32 %v9281, %v9121
  %v9314 = vadd.f32 %v9282, %v9121
  %v9315 = vmax.f32 %v9283, 0.0
  %v9316 = vmax.f32 %v9284, 0.0
  %v9317 = vmax.f32 %v9285, 0.0
  %v9318 = vmax.f32 %v9286, 0.0
  %v9319 = vmax.f32 %v9287, 0.0
  %v9320 = vmax.f32 %v9288, 0.0
  %v9321 = vmax.f32 %v9289, 0.0
  %v9322 = vmax.f32 %v9290, 0.0
  %v9323 = vmax.f32 %v9291, 0.0
  %v9324 = vmax.f32 %v9292, 0.0
  %v9325 = vmax.f32 %v9293, 0.0
  %v9326 = vmax.f32 %v9294, 0.0
  %v9327 = vmax.f32 %v9295, 0.0
  %v9328 = vmax.f32 %v9296, 0.0
  %v9329 = vmax.f32 %v9297, 0.0
  %v9330 = vmax.f32 %v9298, 0.0
  %v9331 = vmax.f32 %v9299, 0.0
  %v9332 = vmax.f32 %v9300, 0.0
  %v9333 = vmax.f32 %v9301, 0.0
  %v9334 = vmax.f32 %v9302, 0.0
  %v9335 = vmax.f32 %v9303, 0.0
  %v9336 = vmax.f32 %v9304, 0.0
  %v9337 = vmax.f32 %v9305, 0.0
  %v9338 = vmax.f32 %v9306, 0.0
  %v9339 = vmax.f32 %v9307, 0.0
  %v9340 = vmax.f32 %v9308, 0.0
  %v9341 = vmax.f32 %v9309, 0.0
  %v9342 = vmax.f32 %v9310, 0.0
  %v9343 = vmax.f32 %v9311, 0.0
  %v9344 = vmax.f32 %v9312, 0.0
  %v9345 = vmax.f32 %v9313, 0.0
  %v9346 = vmax.f32 %v9314, 0.0
  %s9347 = scalar_lea.vmem %s7, 256
  %9348 = vst.msk [vmem:[%s9347] sm:$0xff] %vm1492, %v9315
  %9349 = vst.msk [vmem:[%s9347 + $0x8] sm:$0xff] %vm1492, %v9316
  %9350 = vst.msk [vmem:[%s9347 + $0x10] sm:$0xff] %vm1492, %v9317
  %9351 = vst.msk [vmem:[%s9347 + $0x18] sm:$0xff] %vm1492, %v9318
  %9352 = vst.msk [vmem:[%s9347 + $0x20] sm:$0xff] %vm1492, %v9319
  %9353 = vst.msk [vmem:[%s9347 + $0x28] sm:$0xff] %vm1492, %v9320
  %9354 = vst.msk [vmem:[%s9347 + $0x30] sm:$0xff] %vm1492, %v9321
  %9355 = vst.msk [vmem:[%s9347 + $0x38] sm:$0xff] %vm1492, %v9322
  %9356 = vst.msk [vmem:[%s9347 + $0x40] sm:$0xff] %vm1492, %v9323
  %9357 = vst.msk [vmem:[%s9347 + $0x48] sm:$0xff] %vm1492, %v9324
  %9358 = vst.msk [vmem:[%s9347 + $0x50] sm:$0xff] %vm1492, %v9325
  %9359 = vst.msk [vmem:[%s9347 + $0x58] sm:$0xff] %vm1492, %v9326
  %9360 = vst.msk [vmem:[%s9347 + $0x60] sm:$0xff] %vm1492, %v9327
  %9361 = vst.msk [vmem:[%s9347 + $0x68] sm:$0xff] %vm1492, %v9328
  %9362 = vst.msk [vmem:[%s9347 + $0x70] sm:$0xff] %vm1492, %v9329
  %9363 = vst.msk [vmem:[%s9347 + $0x78] sm:$0xff] %vm1492, %v9330
  %9364 = vst.msk [vmem:[%s9347 + $0x80] sm:$0xff] %vm1492, %v9331
  %9365 = vst.msk [vmem:[%s9347 + $0x88] sm:$0xff] %vm1492, %v9332
  %9366 = vst.msk [vmem:[%s9347 + $0x90] sm:$0xff] %vm1492, %v9333
  %9367 = vst.msk [vmem:[%s9347 + $0x98] sm:$0xff] %vm1492, %v9334
  %9368 = vst.msk [vmem:[%s9347 + $0xa0] sm:$0xff] %vm1492, %v9335
  %9369 = vst.msk [vmem:[%s9347 + $0xa8] sm:$0xff] %vm1492, %v9336
  %9370 = vst.msk [vmem:[%s9347 + $0xb0] sm:$0xff] %vm1492, %v9337
  %9371 = vst.msk [vmem:[%s9347 + $0xb8] sm:$0xff] %vm1492, %v9338
  %9372 = vst.msk [vmem:[%s9347 + $0xc0] sm:$0xff] %vm1492, %v9339
  %9373 = vst.msk [vmem:[%s9347 + $0xc8] sm:$0xff] %vm1492, %v9340
  %9374 = vst.msk [vmem:[%s9347 + $0xd0] sm:$0xff] %vm1492, %v9341
  %9375 = vst.msk [vmem:[%s9347 + $0xd8] sm:$0xff] %vm1492, %v9342
  %9376 = vst.msk [vmem:[%s9347 + $0xe0] sm:$0xff] %vm1492, %v9343
  %9377 = vst.msk [vmem:[%s9347 + $0xe8] sm:$0xff] %vm1492, %v9344
  %9378 = vst.msk [vmem:[%s9347 + $0xf0] sm:$0xff] %vm1492, %v9345
  %9379 = vst.msk [vmem:[%s9347 + $0xf8] sm:$0xff] %vm1492, %v9346
  // Predicated region
  $region30: #{double_conv.1} parent=0 // pred_check
    _
  $region31: #{double_conv.1} parent=0 // pred_check_branch
    %9381 = sbr.rel (0) target = $region33
  $region32: #{double_conv.1} parent=0 // pred_region
    _
  $region33: #{double_conv.1} parent=0 // pred_fallthru
    _
  // Predicated region
  $region34: #{double_conv.1} parent=0 // pred_check
    _
  $region35: #{double_conv.1} parent=0 // pred_check_branch
    %9383 = sbr.rel (0) target = $region37
  $region36: #{double_conv.1} parent=0 // pred_region
    _
  $region37: #{double_conv.1} parent=0 // pred_fallthru
    _

</llo_original>
